<compile_context>
chip_gen: v5e
topology: v5e:2x2
jax: 0.10.0
libtpu: 0.0.40
codegen_flags: <defaults>
</compile_context>

<pallas_src>
import jax
import jax.numpy as jnp
from jax.experimental import pallas as pl
from jax.experimental.pallas import tpu as pltpu

EPS = 1e-5


def _make_kernel(H, W, C, compute_dtype):
    Wp = W + 2                    # reflection-padded width
    M = H * Wp                    # rows of the flattened "wide" conv-output grid
    R = (H + 2) * Wp + 2          # rows of the padded wide input (+2 slack rows)
    inv_n = 1.0 / float(H * W)

    def shift_rows(v, k):
        """s[r] = v[r + k]; rows wrap at the edges (wrapped rows never used)."""
        k = k % R
        if k == 0:
            return v
        return jnp.concatenate([v[k:, :], v[:k, :]], axis=0)

    def conv3x3_bias_inorm(tap, w_ref, b_ref):
        """3x3 valid conv on the wide layout + bias + masked InstanceNorm.

        tap(o) -> (M, C) compute-dtype slice of the padded image at wide-row
        offset o.  Returns (M, C) float32; rows with (r % Wp) >= W are garbage
        columns (masked out of the stats, never stored).
        """
        offs = [ky * Wp + kx for ky in range(3) for kx in range(3)]
        if C % 128 == 0:
            # Lane-aligned im2col: the MXU does all of the accumulation.
            patches = jnp.concatenate([tap(o) for o in offs], axis=1)  # (M, 9C)
            acc = jnp.dot(patches, w_ref[...],
                          preferred_element_type=jnp.float32)
        else:
            # Small / unaligned C: proven 9-dot accumulation path.
            acc = jnp.zeros((M, C), jnp.float32)
            for k, o in enumerate(offs):
                acc = acc + jnp.dot(tap(o), w_ref[k * C:(k + 1) * C, :],
                                    preferred_element_type=jnp.float32)
        acc = acc + b_ref[...].astype(jnp.float32)        # hoisted bias broadcast

        # Masked two-pass InstanceNorm over the H*W valid positions.
        rows = jax.lax.broadcasted_iota(jnp.int32, (M, 1), 0)
        maskb = jnp.broadcast_to(((rows % Wp) < W).astype(jnp.float32), (M, C))
        mean = jnp.sum(acc * maskb, axis=0, keepdims=True) * inv_n
        diff = acc - mean
        dm = diff * maskb
        var = jnp.sum(dm * dm, axis=0, keepdims=True) * inv_n
        return diff * jax.lax.rsqrt(var + EPS)

    def reflect_pad_wide(h):
        """(M, C) wide activation -> (R, C) ReflectionPad2d(1) in wide layout.

        Fully vectorised (concat + shifted copies + selects), no per-row
        stores.  Cells that receive h's garbage columns land exactly on pad
        cells and are overwritten by the column/row fixes below.
        """
        zpad = jnp.zeros((Wp + 1, C), h.dtype)
        body = jnp.concatenate([zpad, h, zpad], axis=0)               # (R, C)
        rows = jax.lax.broadcasted_iota(jnp.int32, (R, 1), 0)
        col = rows % Wp
        # left/right pad columns reflect padded columns 2 / W-1
        v1 = jnp.where(col == 0, shift_rows(body, 2),
                       jnp.where(col == W + 1, shift_rows(body, -2), body))
        # top/bottom pad rows reflect padded rows 2 / H-1 (built on v1 so the
        # corners pick up the already-fixed columns)
        is_top = rows < Wp
        is_bot = (rows >= (H + 1) * Wp) & (rows < (H + 2) * Wp)
        return jnp.where(is_top, shift_rows(v1, 2 * Wp),
                         jnp.where(is_bot, shift_rows(v1, -2 * Wp), v1))

    def kernel(x_ref, xw_ref, w1_ref, b1_ref, w2_ref, b2_ref, o_ref):
        # ---- stage 1: conv3x3 + bias + InstanceNorm + ReLU; taps read the
        #      wrapper-padded wide input straight from the pipelined block ----
        h1 = jnp.maximum(
            conv3x3_bias_inorm(lambda o: xw_ref[0, o:o + M, :], w1_ref, b1_ref),
            0.0)

        # ---- stage 2: in-register reflection pad + conv3x3 + InstanceNorm ----
        hpad = reflect_pad_wide(h1.astype(compute_dtype))
        h2 = conv3x3_bias_inorm(lambda o: hpad[o:o + M, :], w2_ref, b2_ref)

        # ---- residual add (exact f32 skip path) + valid-width NHWC stores ----
        for i in range(H):
            strip = x_ref[0, i].astype(jnp.float32) + h2[i * Wp:i * Wp + W, :]
            o_ref[0, i, :, :] = strip.astype(o_ref.dtype)

    return kernel, M, R


def _vmem_limit_bytes(H, W, C, M, R, compute_dtype):
    esz = jnp.dtype(compute_dtype).itemsize
    need = (2 * R * C * esz                      # wide padded input (dbuf)
            + 4 * H * W * C * 4                  # x + out blocks (dbuf)
            + 4 * (9 * C * C + C) * esz          # weights/biases, both stages, dbuf
            + 9 * M * C * esz                    # im2col patches
            + 4 * M * C * 4                      # acc / h1 / diff / h2 f32 values
            + 5 * R * C * esz)                   # padded h1 + shifted temporaries
    try:
        cap = pltpu.get_tpu_info().vmem_capacity_bytes
    except Exception:                            # older jax / no device info
        cap = 64 * 2 ** 20                       # conservative (v7x per-core VMEM)
    return int(min(cap * 3 // 4, max(32 * 2 ** 20, 2 * need)))


def _resnet_block_nhwc_impl(x_nhwc, w1, b1, w2, b2, *, compute_dtype=jnp.float32):
    """ResnetBlock forward, NHWC in / NHWC out (no layout epilogue).

    x_nhwc: (N, H, W, C) f32; w*: (3, 3, C, C) HWIO; b*: (C,).
    """
    N, H, W, C = x_nhwc.shape
    Wp = W + 2
    kernel, M, R = _make_kernel(H, W, C, compute_dtype)

    x = x_nhwc.astype(jnp.float32)
    # Stage-1 ReflectionPad2d(1) done once in the wrapper and flattened to the
    # wide (rows, C) layout (+2 zero slack rows that only ever feed garbage
    # columns), so the kernel's conv taps are plain contiguous row slices.
    xp = jnp.pad(x, ((0, 0), (1, 1), (1, 1), (0, 0)), mode="reflect")
    xw = jnp.pad(xp.reshape(N, (H + 2) * Wp, C), ((0, 0), (0, 2), (0, 0)))
    xw = xw.astype(compute_dtype)

    w1f = w1.reshape(9 * C, C).astype(compute_dtype)
    w2f = w2.reshape(9 * C, C).astype(compute_dtype)
    b1r = b1.reshape(1, C).astype(compute_dtype)
    b2r = b2.reshape(1, C).astype(compute_dtype)

    return pl.pallas_call(
        kernel,
        out_shape=jax.ShapeDtypeStruct((N, H, W, C), jnp.float32),
        grid=(N,),
        in_specs=[
            pl.BlockSpec((1, H, W, C), lambda n: (n, 0, 0, 0)),   # x (f32 residual)
            pl.BlockSpec((1, R, C), lambda n: (n, 0, 0)),         # padded wide x
            pl.BlockSpec((9 * C, C), lambda n: (0, 0)),           # w1
            pl.BlockSpec((1, C), lambda n: (0, 0)),               # b1
            pl.BlockSpec((9 * C, C), lambda n: (0, 0)),           # w2
            pl.BlockSpec((1, C), lambda n: (0, 0)),               # b2
        ],
        out_specs=pl.BlockSpec((1, H, W, C), lambda n: (n, 0, 0, 0)),
        compiler_params=pltpu.CompilerParams(
            dimension_semantics=("parallel",),   # batch shards across v7x TCs
            vmem_limit_bytes=_vmem_limit_bytes(H, W, C, M, R, compute_dtype)),
    )(x, xw, w1f, b1r, w2f, b2r)


def _resnet_block_impl(x_nchw, w1, b1, w2, b2, *, compute_dtype=jnp.float32):
    """NCHW interface matching the PyTorch module."""
    x = jnp.transpose(x_nchw, (0, 2, 3, 1))
    out = _resnet_block_nhwc_impl(x, w1, b1, w2, b2, compute_dtype=compute_dtype)
    return jnp.transpose(out, (0, 3, 1, 2))


resnet_block = jax.jit(_resnet_block_impl, static_argnames=("compute_dtype",))
resnet_block_nhwc = jax.jit(_resnet_block_nhwc_impl,
                            static_argnames=("compute_dtype",))


def ref_forward(x_nchw, w1, b1, w2, b2):
    """Pure-JAX reference (same math as the PyTorch module)."""
    x = jnp.transpose(x_nchw, (0, 2, 3, 1)).astype(jnp.float32)

    def conv(xin, w, b):
        xp = jnp.pad(xin, ((0, 0), (1, 1), (1, 1), (0, 0)), mode="reflect")
        y = jax.lax.conv_general_dilated(
            xp, w, window_strides=(1, 1), padding="VALID",
            dimension_numbers=("NHWC", "HWIO", "NHWC"))
        return y + b.reshape(1, 1, 1, -1)

    def inorm(h):
        mean = jnp.mean(h, axis=(1, 2), keepdims=True)
        var = jnp.mean((h - mean) ** 2, axis=(1, 2), keepdims=True)
        return (h - mean) * jax.lax.rsqrt(var + EPS)

    h = jnp.maximum(inorm(conv(x, w1, b1)), 0.0)
    h = inorm(conv(h, w2, b2))
    return jnp.transpose(x + h, (0, 3, 1, 2))


if __name__ == "__main__":
    key = jax.random.PRNGKey(0)
    k1, k2, k3, k4, kx = jax.random.split(key, 5)

    # ---- small config (exercises the 9-dot accumulation path, C < 128) ----
    N, C, H, W = 2, 4, 16, 16
    x = jax.random.normal(kx, (N, C, H, W), dtype=jnp.float32)
    w1 = 0.1 * jax.random.normal(k1, (3, 3, C, C), dtype=jnp.float32)
    b1 = 0.1 * jax.random.normal(k2, (C,), dtype=jnp.float32)
    w2 = 0.1 * jax.random.normal(k3, (3, 3, C, C), dtype=jnp.float32)
    b2 = 0.1 * jax.random.normal(k4, (C,), dtype=jnp.float32)

    out = jax.block_until_ready(resnet_block(x, w1, b1, w2, b2))
    ref = ref_forward(x, w1, b1, w2, b2)
    assert out.shape == (N, C, H, W), out.shape
    max_err = float(jnp.max(jnp.abs(out - ref)))
    assert jnp.allclose(out, ref, atol=2e-4, rtol=2e-4), f"f32 max_err={max_err}"

    # bf16 MXU path (f32 accumulation, f32 norm math, exact f32 residual).
    out_bf16 = jax.block_until_ready(
        resnet_block(x, w1, b1, w2, b2, compute_dtype=jnp.bfloat16))
    bf16_err = float(jnp.max(jnp.abs(out_bf16 - ref)))
    assert bool(jnp.all(jnp.isfinite(out_bf16))) and bf16_err < 0.25, (
        f"bf16 max_err={bf16_err}")

    # ---- lane-aligned config (exercises the single-dot im2col MXU path) ----
    N2, C2, H2, W2 = 1, 128, 8, 8
    kk = jax.random.split(jax.random.PRNGKey(1), 5)
    x2 = jax.random.normal(kk[0], (N2, C2, H2, W2), dtype=jnp.float32)
    w1b = 0.05 * jax.random.normal(kk[1], (3, 3, C2, C2), dtype=jnp.float32)
    b1b = 0.05 * jax.random.normal(kk[2], (C2,), dtype=jnp.float32)
    w2b = 0.05 * jax.random.normal(kk[3], (3, 3, C2, C2), dtype=jnp.float32)
    b2b = 0.05 * jax.random.normal(kk[4], (C2,), dtype=jnp.float32)
    out2 = jax.block_until_ready(resnet_block(x2, w1b, b1b, w2b, b2b))
    ref2 = ref_forward(x2, w1b, b1b, w2b, b2b)
    err2 = float(jnp.max(jnp.abs(out2 - ref2)))
    assert jnp.allclose(out2, ref2, atol=2e-3, rtol=2e-3), f"C128 max_err={err2}"

    print("KERNEL_OK")
</pallas_src>

<mosaic_0001>
module attributes {stable_mosaic.version = 11 : i64} {
  func.func @kernel(%arg0: i32, %arg1: memref<1x16x16x4xf32, #tpu.memory_space<vmem>>, %arg2: memref<1x326x4xf32, #tpu.memory_space<vmem>>, %arg3: memref<36x4xf32, #tpu.memory_space<vmem>>, %arg4: memref<1x4xf32, #tpu.memory_space<vmem>>, %arg5: memref<36x4xf32, #tpu.memory_space<vmem>>, %arg6: memref<1x4xf32, #tpu.memory_space<vmem>>, %arg7: memref<1x16x16x4xf32, #tpu.memory_space<vmem>>) attributes {dimension_semantics = [#tpu.dimension_semantics<parallel>], iteration_bounds = array<i64: 2>, scalar_prefetch = 0 : i64, scratch_operands = 0 : i64, tpu.core_type = #tpu.core_type<tc>, window_params = [{transform_indices = @transform_0, window_bounds = array<i64: 1, 16, 16, 4>}, {transform_indices = @transform_1, window_bounds = array<i64: 1, 326, 4>}, {pipeline_mode = #tpu.pipeline_mode<synchronous>, transform_indices = @transform_2, window_bounds = array<i64: 36, 4>}, {pipeline_mode = #tpu.pipeline_mode<synchronous>, transform_indices = @transform_3, window_bounds = array<i64: 1, 4>}, {pipeline_mode = #tpu.pipeline_mode<synchronous>, transform_indices = @transform_4, window_bounds = array<i64: 36, 4>}, {pipeline_mode = #tpu.pipeline_mode<synchronous>, transform_indices = @transform_5, window_bounds = array<i64: 1, 4>}, {transform_indices = @transform_6, window_bounds = array<i64: 1, 16, 16, 4>}]} {
    %cst = arith.constant 0.000000e+00 : f32
    %0 = vector.broadcast %cst : f32 to vector<288x4xf32>
    %c0 = arith.constant 0 : index
    %c0_0 = arith.constant 0 : index
    %c0_1 = arith.constant 0 : index
    %1 = vector.load %arg2[%c0, %c0_0, %c0_1] : memref<1x326x4xf32, #tpu.memory_space<vmem>>, vector<1x288x4xf32>
    %2 = vector.shape_cast %1 : vector<1x288x4xf32> to vector<288x4xf32>
    %c0_2 = arith.constant 0 : index
    %c0_3 = arith.constant 0 : index
    %3 = vector.load %arg3[%c0_2, %c0_3] : memref<36x4xf32, #tpu.memory_space<vmem>>, vector<4x4xf32>
    %cst_4 = arith.constant dense<0.000000e+00> : vector<288x4xf32>
    %4 = tpu.matmul %2, %3, %cst_4 {dimension_numbers = #tpu.dot_dimension_numbers<[1], [0], [0], [1], [0, 0, 1, 1], [], []>} : vector<288x4xf32>, vector<4x4xf32>, vector<288x4xf32> -> vector<288x4xf32>
    %5 = arith.addf %0, %4 : vector<288x4xf32>
    %c0_5 = arith.constant 0 : index
    %c1 = arith.constant 1 : index
    %c0_6 = arith.constant 0 : index
    %6 = vector.load %arg2[%c0_5, %c1, %c0_6] : memref<1x326x4xf32, #tpu.memory_space<vmem>>, vector<1x288x4xf32>
    %7 = vector.shape_cast %6 : vector<1x288x4xf32> to vector<288x4xf32>
    %c4 = arith.constant 4 : index
    %c0_7 = arith.constant 0 : index
    %8 = vector.load %arg3[%c4, %c0_7] : memref<36x4xf32, #tpu.memory_space<vmem>>, vector<4x4xf32>
    %cst_8 = arith.constant dense<0.000000e+00> : vector<288x4xf32>
    %9 = tpu.matmul %7, %8, %cst_8 {dimension_numbers = #tpu.dot_dimension_numbers<[1], [0], [0], [1], [0, 0, 1, 1], [], []>} : vector<288x4xf32>, vector<4x4xf32>, vector<288x4xf32> -> vector<288x4xf32>
    %10 = arith.addf %5, %9 : vector<288x4xf32>
    %c0_9 = arith.constant 0 : index
    %c2 = arith.constant 2 : index
    %c0_10 = arith.constant 0 : index
    %11 = vector.load %arg2[%c0_9, %c2, %c0_10] : memref<1x326x4xf32, #tpu.memory_space<vmem>>, vector<1x288x4xf32>
    %12 = vector.shape_cast %11 : vector<1x288x4xf32> to vector<288x4xf32>
    %c8 = arith.constant 8 : index
    %c0_11 = arith.constant 0 : index
    %13 = vector.load %arg3[%c8, %c0_11] : memref<36x4xf32, #tpu.memory_space<vmem>>, vector<4x4xf32>
    %cst_12 = arith.constant dense<0.000000e+00> : vector<288x4xf32>
    %14 = tpu.matmul %12, %13, %cst_12 {dimension_numbers = #tpu.dot_dimension_numbers<[1], [0], [0], [1], [0, 0, 1, 1], [], []>} : vector<288x4xf32>, vector<4x4xf32>, vector<288x4xf32> -> vector<288x4xf32>
    %15 = arith.addf %10, %14 : vector<288x4xf32>
    %c0_13 = arith.constant 0 : index
    %c18 = arith.constant 18 : index
    %c0_14 = arith.constant 0 : index
    %16 = vector.load %arg2[%c0_13, %c18, %c0_14] : memref<1x326x4xf32, #tpu.memory_space<vmem>>, vector<1x288x4xf32>
    %17 = vector.shape_cast %16 : vector<1x288x4xf32> to vector<288x4xf32>
    %c12 = arith.constant 12 : index
    %c0_15 = arith.constant 0 : index
    %18 = vector.load %arg3[%c12, %c0_15] : memref<36x4xf32, #tpu.memory_space<vmem>>, vector<4x4xf32>
    %cst_16 = arith.constant dense<0.000000e+00> : vector<288x4xf32>
    %19 = tpu.matmul %17, %18, %cst_16 {dimension_numbers = #tpu.dot_dimension_numbers<[1], [0], [0], [1], [0, 0, 1, 1], [], []>} : vector<288x4xf32>, vector<4x4xf32>, vector<288x4xf32> -> vector<288x4xf32>
    %20 = arith.addf %15, %19 : vector<288x4xf32>
    %c0_17 = arith.constant 0 : index
    %c19 = arith.constant 19 : index
    %c0_18 = arith.constant 0 : index
    %21 = vector.load %arg2[%c0_17, %c19, %c0_18] : memref<1x326x4xf32, #tpu.memory_space<vmem>>, vector<1x288x4xf32>
    %22 = vector.shape_cast %21 : vector<1x288x4xf32> to vector<288x4xf32>
    %c16 = arith.constant 16 : index
    %c0_19 = arith.constant 0 : index
    %23 = vector.load %arg3[%c16, %c0_19] : memref<36x4xf32, #tpu.memory_space<vmem>>, vector<4x4xf32>
    %cst_20 = arith.constant dense<0.000000e+00> : vector<288x4xf32>
    %24 = tpu.matmul %22, %23, %cst_20 {dimension_numbers = #tpu.dot_dimension_numbers<[1], [0], [0], [1], [0, 0, 1, 1], [], []>} : vector<288x4xf32>, vector<4x4xf32>, vector<288x4xf32> -> vector<288x4xf32>
    %25 = arith.addf %20, %24 : vector<288x4xf32>
    %c0_21 = arith.constant 0 : index
    %c20 = arith.constant 20 : index
    %c0_22 = arith.constant 0 : index
    %26 = vector.load %arg2[%c0_21, %c20, %c0_22] : memref<1x326x4xf32, #tpu.memory_space<vmem>>, vector<1x288x4xf32>
    %27 = vector.shape_cast %26 : vector<1x288x4xf32> to vector<288x4xf32>
    %c20_23 = arith.constant 20 : index
    %c0_24 = arith.constant 0 : index
    %28 = vector.load %arg3[%c20_23, %c0_24] : memref<36x4xf32, #tpu.memory_space<vmem>>, vector<4x4xf32>
    %cst_25 = arith.constant dense<0.000000e+00> : vector<288x4xf32>
    %29 = tpu.matmul %27, %28, %cst_25 {dimension_numbers = #tpu.dot_dimension_numbers<[1], [0], [0], [1], [0, 0, 1, 1], [], []>} : vector<288x4xf32>, vector<4x4xf32>, vector<288x4xf32> -> vector<288x4xf32>
    %30 = arith.addf %25, %29 : vector<288x4xf32>
    %c0_26 = arith.constant 0 : index
    %c36 = arith.constant 36 : index
    %c0_27 = arith.constant 0 : index
    %31 = vector.load %arg2[%c0_26, %c36, %c0_27] : memref<1x326x4xf32, #tpu.memory_space<vmem>>, vector<1x288x4xf32>
    %32 = vector.shape_cast %31 : vector<1x288x4xf32> to vector<288x4xf32>
    %c24 = arith.constant 24 : index
    %c0_28 = arith.constant 0 : index
    %33 = vector.load %arg3[%c24, %c0_28] : memref<36x4xf32, #tpu.memory_space<vmem>>, vector<4x4xf32>
    %cst_29 = arith.constant dense<0.000000e+00> : vector<288x4xf32>
    %34 = tpu.matmul %32, %33, %cst_29 {dimension_numbers = #tpu.dot_dimension_numbers<[1], [0], [0], [1], [0, 0, 1, 1], [], []>} : vector<288x4xf32>, vector<4x4xf32>, vector<288x4xf32> -> vector<288x4xf32>
    %35 = arith.addf %30, %34 : vector<288x4xf32>
    %c0_30 = arith.constant 0 : index
    %c37 = arith.constant 37 : index
    %c0_31 = arith.constant 0 : index
    %36 = vector.load %arg2[%c0_30, %c37, %c0_31] : memref<1x326x4xf32, #tpu.memory_space<vmem>>, vector<1x288x4xf32>
    %37 = vector.shape_cast %36 : vector<1x288x4xf32> to vector<288x4xf32>
    %c28 = arith.constant 28 : index
    %c0_32 = arith.constant 0 : index
    %38 = vector.load %arg3[%c28, %c0_32] : memref<36x4xf32, #tpu.memory_space<vmem>>, vector<4x4xf32>
    %cst_33 = arith.constant dense<0.000000e+00> : vector<288x4xf32>
    %39 = tpu.matmul %37, %38, %cst_33 {dimension_numbers = #tpu.dot_dimension_numbers<[1], [0], [0], [1], [0, 0, 1, 1], [], []>} : vector<288x4xf32>, vector<4x4xf32>, vector<288x4xf32> -> vector<288x4xf32>
    %40 = arith.addf %35, %39 : vector<288x4xf32>
    %c0_34 = arith.constant 0 : index
    %c38 = arith.constant 38 : index
    %c0_35 = arith.constant 0 : index
    %41 = vector.load %arg2[%c0_34, %c38, %c0_35] : memref<1x326x4xf32, #tpu.memory_space<vmem>>, vector<1x288x4xf32>
    %42 = vector.shape_cast %41 : vector<1x288x4xf32> to vector<288x4xf32>
    %c32 = arith.constant 32 : index
    %c0_36 = arith.constant 0 : index
    %43 = vector.load %arg3[%c32, %c0_36] : memref<36x4xf32, #tpu.memory_space<vmem>>, vector<4x4xf32>
    %cst_37 = arith.constant dense<0.000000e+00> : vector<288x4xf32>
    %44 = tpu.matmul %42, %43, %cst_37 {dimension_numbers = #tpu.dot_dimension_numbers<[1], [0], [0], [1], [0, 0, 1, 1], [], []>} : vector<288x4xf32>, vector<4x4xf32>, vector<288x4xf32> -> vector<288x4xf32>
    %45 = arith.addf %40, %44 : vector<288x4xf32>
    %c0_38 = arith.constant 0 : index
    %c0_39 = arith.constant 0 : index
    %46 = vector.load %arg4[%c0_38, %c0_39] : memref<1x4xf32, #tpu.memory_space<vmem>>, vector<1x4xf32>
    %47 = vector.broadcast %46 : vector<1x4xf32> to vector<288x4xf32>
    %48 = arith.addf %45, %47 : vector<288x4xf32>
    %49 = tpu.iota {dimensions = array<i32: 0>} : vector<288x1xi32>
    %c18_i32 = arith.constant 18 : i32
    %c0_i32 = arith.constant 0 : i32
    %50 = arith.cmpi eq, %c18_i32, %c0_i32 : i32
    %c1_i32 = arith.constant 1 : i32
    %51 = arith.select %50, %c1_i32, %c18_i32 : i32
    %52 = vector.broadcast %51 : i32 to vector<288x1xi32>
    %53 = arith.remsi %49, %52 : vector<288x1xi32>
    %c0_i32_40 = arith.constant 0 : i32
    %54 = vector.broadcast %c0_i32_40 : i32 to vector<288x1xi32>
    %55 = arith.cmpi ne, %53, %54 : vector<288x1xi32>
    %c0_i32_41 = arith.constant 0 : i32
    %56 = vector.broadcast %c0_i32_41 : i32 to vector<288x1xi32>
    %57 = arith.cmpi slt, %53, %56 : vector<288x1xi32>
    %c0_i32_42 = arith.constant 0 : i32
    %58 = arith.cmpi slt, %51, %c0_i32_42 : i32
    %59 = vector.broadcast %58 : i1 to vector<288x1xi1>
    %60 = vector.broadcast %59 : vector<288x1xi1> to vector<288x1xi1>
    %61 = arith.xori %57, %60 : vector<288x1xi1>
    %62 = arith.andi %61, %55 : vector<288x1xi1>
    %63 = vector.broadcast %51 : i32 to vector<288x1xi32>
    %64 = arith.addi %53, %63 : vector<288x1xi32>
    %65 = arith.select %62, %64, %53 : vector<288x1xi1>, vector<288x1xi32>
    %c16_i32 = arith.constant 16 : i32
    %66 = vector.broadcast %c16_i32 : i32 to vector<288x1xi32>
    %67 = arith.cmpi slt, %65, %66 : vector<288x1xi32>
    %68 = arith.extui %67 : vector<288x1xi1> to vector<288x1xi32>
    %69 = arith.sitofp %68 : vector<288x1xi32> to vector<288x1xf32>
    %70 = vector.shape_cast %69 : vector<288x1xf32> to vector<288x1xf32>
    %71 = vector.broadcast %70 : vector<288x1xf32> to vector<288x4xf32>
    %72 = arith.mulf %48, %71 : vector<288x4xf32>
    %cst_43 = arith.constant dense<0.000000e+00> : vector<4xf32>
    %73 = vector.multi_reduction <add>, %72, %cst_43 [0] : vector<288x4xf32> to vector<4xf32>
    %74 = vector.shape_cast %73 : vector<4xf32> to vector<1x4xf32>
    %cst_44 = arith.constant 3.906250e-03 : f32
    %75 = vector.broadcast %cst_44 : f32 to vector<1x4xf32>
    %76 = arith.mulf %74, %75 : vector<1x4xf32>
    %77 = vector.broadcast %76 : vector<1x4xf32> to vector<288x4xf32>
    %78 = arith.subf %48, %77 : vector<288x4xf32>
    %79 = arith.mulf %78, %71 : vector<288x4xf32>
    %80 = arith.mulf %79, %79 : vector<288x4xf32>
    %cst_45 = arith.constant dense<0.000000e+00> : vector<4xf32>
    %81 = vector.multi_reduction <add>, %80, %cst_45 [0] : vector<288x4xf32> to vector<4xf32>
    %82 = vector.shape_cast %81 : vector<4xf32> to vector<1x4xf32>
    %cst_46 = arith.constant 3.906250e-03 : f32
    %83 = vector.broadcast %cst_46 : f32 to vector<1x4xf32>
    %84 = arith.mulf %82, %83 : vector<1x4xf32>
    %cst_47 = arith.constant 9.99999974E-6 : f32
    %85 = vector.broadcast %cst_47 : f32 to vector<1x4xf32>
    %86 = arith.addf %84, %85 : vector<1x4xf32>
    %87 = math.rsqrt %86 : vector<1x4xf32>
    %88 = vector.broadcast %87 : vector<1x4xf32> to vector<288x4xf32>
    %89 = arith.mulf %78, %88 : vector<288x4xf32>
    %cst_48 = arith.constant 0.000000e+00 : f32
    %90 = vector.broadcast %cst_48 : f32 to vector<288x4xf32>
    %91 = arith.maximumf %89, %90 : vector<288x4xf32>
    %cst_49 = arith.constant 0.000000e+00 : f32
    %92 = vector.broadcast %cst_49 : f32 to vector<19x4xf32>
    %93 = tpu.concatenate %92, %91, %92 in 0 : vector<19x4xf32>, vector<288x4xf32>, vector<19x4xf32> -> vector<326x4xf32>
    %94 = tpu.iota {dimensions = array<i32: 0>} : vector<326x1xi32>
    %c18_i32_50 = arith.constant 18 : i32
    %c0_i32_51 = arith.constant 0 : i32
    %95 = arith.cmpi eq, %c18_i32_50, %c0_i32_51 : i32
    %c1_i32_52 = arith.constant 1 : i32
    %96 = arith.select %95, %c1_i32_52, %c18_i32_50 : i32
    %97 = vector.broadcast %96 : i32 to vector<326x1xi32>
    %98 = arith.remsi %94, %97 : vector<326x1xi32>
    %c0_i32_53 = arith.constant 0 : i32
    %99 = vector.broadcast %c0_i32_53 : i32 to vector<326x1xi32>
    %100 = arith.cmpi ne, %98, %99 : vector<326x1xi32>
    %c0_i32_54 = arith.constant 0 : i32
    %101 = vector.broadcast %c0_i32_54 : i32 to vector<326x1xi32>
    %102 = arith.cmpi slt, %98, %101 : vector<326x1xi32>
    %c0_i32_55 = arith.constant 0 : i32
    %103 = arith.cmpi slt, %96, %c0_i32_55 : i32
    %104 = vector.broadcast %103 : i1 to vector<326x1xi1>
    %105 = vector.broadcast %104 : vector<326x1xi1> to vector<326x1xi1>
    %106 = arith.xori %102, %105 : vector<326x1xi1>
    %107 = arith.andi %106, %100 : vector<326x1xi1>
    %108 = vector.broadcast %96 : i32 to vector<326x1xi32>
    %109 = arith.addi %98, %108 : vector<326x1xi32>
    %110 = arith.select %107, %109, %98 : vector<326x1xi1>, vector<326x1xi32>
    %c0_i32_56 = arith.constant 0 : i32
    %111 = vector.broadcast %c0_i32_56 : i32 to vector<326x1xi32>
    %112 = arith.cmpi eq, %110, %111 : vector<326x1xi32>
    %113 = vector.extract_strided_slice %93 {offsets = [2, 0], sizes = [324, 4], strides = [1, 1]} : vector<326x4xf32> to vector<324x4xf32>
    %114 = vector.extract_strided_slice %93 {offsets = [0, 0], sizes = [2, 4], strides = [1, 1]} : vector<326x4xf32> to vector<2x4xf32>
    %115 = tpu.concatenate %113, %114 in 0 : vector<324x4xf32>, vector<2x4xf32> -> vector<326x4xf32>
    %c17_i32 = arith.constant 17 : i32
    %116 = vector.broadcast %c17_i32 : i32 to vector<326x1xi32>
    %117 = arith.cmpi eq, %110, %116 : vector<326x1xi32>
    %118 = vector.extract_strided_slice %93 {offsets = [324, 0], sizes = [2, 4], strides = [1, 1]} : vector<326x4xf32> to vector<2x4xf32>
    %119 = vector.extract_strided_slice %93 {offsets = [0, 0], sizes = [324, 4], strides = [1, 1]} : vector<326x4xf32> to vector<324x4xf32>
    %120 = tpu.concatenate %118, %119 in 0 : vector<2x4xf32>, vector<324x4xf32> -> vector<326x4xf32>
    %121 = vector.shape_cast %117 : vector<326x1xi1> to vector<326x1xi1>
    %122 = vector.broadcast %121 : vector<326x1xi1> to vector<326x4xi1>
    %123 = arith.select %122, %120, %93 : vector<326x4xi1>, vector<326x4xf32>
    %124 = vector.shape_cast %112 : vector<326x1xi1> to vector<326x1xi1>
    %125 = vector.broadcast %124 : vector<326x1xi1> to vector<326x4xi1>
    %126 = arith.select %125, %115, %123 : vector<326x4xi1>, vector<326x4xf32>
    %c18_i32_57 = arith.constant 18 : i32
    %127 = vector.broadcast %c18_i32_57 : i32 to vector<326x1xi32>
    %128 = arith.cmpi slt, %94, %127 : vector<326x1xi32>
    %c306_i32 = arith.constant 306 : i32
    %129 = vector.broadcast %c306_i32 : i32 to vector<326x1xi32>
    %130 = arith.cmpi sge, %94, %129 : vector<326x1xi32>
    %c324_i32 = arith.constant 324 : i32
    %131 = vector.broadcast %c324_i32 : i32 to vector<326x1xi32>
    %132 = arith.cmpi slt, %94, %131 : vector<326x1xi32>
    %133 = arith.andi %130, %132 : vector<326x1xi1>
    %134 = vector.extract_strided_slice %126 {offsets = [36, 0], sizes = [290, 4], strides = [1, 1]} : vector<326x4xf32> to vector<290x4xf32>
    %135 = vector.extract_strided_slice %126 {offsets = [0, 0], sizes = [36, 4], strides = [1, 1]} : vector<326x4xf32> to vector<36x4xf32>
    %136 = tpu.concatenate %134, %135 in 0 : vector<290x4xf32>, vector<36x4xf32> -> vector<326x4xf32>
    %137 = vector.extract_strided_slice %126 {offsets = [290, 0], sizes = [36, 4], strides = [1, 1]} : vector<326x4xf32> to vector<36x4xf32>
    %138 = vector.extract_strided_slice %126 {offsets = [0, 0], sizes = [290, 4], strides = [1, 1]} : vector<326x4xf32> to vector<290x4xf32>
    %139 = tpu.concatenate %137, %138 in 0 : vector<36x4xf32>, vector<290x4xf32> -> vector<326x4xf32>
    %140 = vector.shape_cast %133 : vector<326x1xi1> to vector<326x1xi1>
    %141 = vector.broadcast %140 : vector<326x1xi1> to vector<326x4xi1>
    %142 = arith.select %141, %139, %126 : vector<326x4xi1>, vector<326x4xf32>
    %143 = vector.shape_cast %128 : vector<326x1xi1> to vector<326x1xi1>
    %144 = vector.broadcast %143 : vector<326x1xi1> to vector<326x4xi1>
    %145 = arith.select %144, %136, %142 : vector<326x4xi1>, vector<326x4xf32>
    %cst_58 = arith.constant 0.000000e+00 : f32
    %146 = vector.broadcast %cst_58 : f32 to vector<288x4xf32>
    %147 = vector.extract_strided_slice %145 {offsets = [0, 0], sizes = [288, 4], strides = [1, 1]} : vector<326x4xf32> to vector<288x4xf32>
    %c0_59 = arith.constant 0 : index
    %c0_60 = arith.constant 0 : index
    %148 = vector.load %arg5[%c0_59, %c0_60] : memref<36x4xf32, #tpu.memory_space<vmem>>, vector<4x4xf32>
    %cst_61 = arith.constant dense<0.000000e+00> : vector<288x4xf32>
    %149 = tpu.matmul %147, %148, %cst_61 {dimension_numbers = #tpu.dot_dimension_numbers<[1], [0], [0], [1], [0, 0, 1, 1], [], []>} : vector<288x4xf32>, vector<4x4xf32>, vector<288x4xf32> -> vector<288x4xf32>
    %150 = arith.addf %146, %149 : vector<288x4xf32>
    %151 = vector.extract_strided_slice %145 {offsets = [1, 0], sizes = [288, 4], strides = [1, 1]} : vector<326x4xf32> to vector<288x4xf32>
    %c4_62 = arith.constant 4 : index
    %c0_63 = arith.constant 0 : index
    %152 = vector.load %arg5[%c4_62, %c0_63] : memref<36x4xf32, #tpu.memory_space<vmem>>, vector<4x4xf32>
    %cst_64 = arith.constant dense<0.000000e+00> : vector<288x4xf32>
    %153 = tpu.matmul %151, %152, %cst_64 {dimension_numbers = #tpu.dot_dimension_numbers<[1], [0], [0], [1], [0, 0, 1, 1], [], []>} : vector<288x4xf32>, vector<4x4xf32>, vector<288x4xf32> -> vector<288x4xf32>
    %154 = arith.addf %150, %153 : vector<288x4xf32>
    %155 = vector.extract_strided_slice %145 {offsets = [2, 0], sizes = [288, 4], strides = [1, 1]} : vector<326x4xf32> to vector<288x4xf32>
    %c8_65 = arith.constant 8 : index
    %c0_66 = arith.constant 0 : index
    %156 = vector.load %arg5[%c8_65, %c0_66] : memref<36x4xf32, #tpu.memory_space<vmem>>, vector<4x4xf32>
    %cst_67 = arith.constant dense<0.000000e+00> : vector<288x4xf32>
    %157 = tpu.matmul %155, %156, %cst_67 {dimension_numbers = #tpu.dot_dimension_numbers<[1], [0], [0], [1], [0, 0, 1, 1], [], []>} : vector<288x4xf32>, vector<4x4xf32>, vector<288x4xf32> -> vector<288x4xf32>
    %158 = arith.addf %154, %157 : vector<288x4xf32>
    %159 = vector.extract_strided_slice %145 {offsets = [18, 0], sizes = [288, 4], strides = [1, 1]} : vector<326x4xf32> to vector<288x4xf32>
    %c12_68 = arith.constant 12 : index
    %c0_69 = arith.constant 0 : index
    %160 = vector.load %arg5[%c12_68, %c0_69] : memref<36x4xf32, #tpu.memory_space<vmem>>, vector<4x4xf32>
    %cst_70 = arith.constant dense<0.000000e+00> : vector<288x4xf32>
    %161 = tpu.matmul %159, %160, %cst_70 {dimension_numbers = #tpu.dot_dimension_numbers<[1], [0], [0], [1], [0, 0, 1, 1], [], []>} : vector<288x4xf32>, vector<4x4xf32>, vector<288x4xf32> -> vector<288x4xf32>
    %162 = arith.addf %158, %161 : vector<288x4xf32>
    %163 = vector.extract_strided_slice %145 {offsets = [19, 0], sizes = [288, 4], strides = [1, 1]} : vector<326x4xf32> to vector<288x4xf32>
    %c16_71 = arith.constant 16 : index
    %c0_72 = arith.constant 0 : index
    %164 = vector.load %arg5[%c16_71, %c0_72] : memref<36x4xf32, #tpu.memory_space<vmem>>, vector<4x4xf32>
    %cst_73 = arith.constant dense<0.000000e+00> : vector<288x4xf32>
    %165 = tpu.matmul %163, %164, %cst_73 {dimension_numbers = #tpu.dot_dimension_numbers<[1], [0], [0], [1], [0, 0, 1, 1], [], []>} : vector<288x4xf32>, vector<4x4xf32>, vector<288x4xf32> -> vector<288x4xf32>
    %166 = arith.addf %162, %165 : vector<288x4xf32>
    %167 = vector.extract_strided_slice %145 {offsets = [20, 0], sizes = [288, 4], strides = [1, 1]} : vector<326x4xf32> to vector<288x4xf32>
    %c20_74 = arith.constant 20 : index
    %c0_75 = arith.constant 0 : index
    %168 = vector.load %arg5[%c20_74, %c0_75] : memref<36x4xf32, #tpu.memory_space<vmem>>, vector<4x4xf32>
    %cst_76 = arith.constant dense<0.000000e+00> : vector<288x4xf32>
    %169 = tpu.matmul %167, %168, %cst_76 {dimension_numbers = #tpu.dot_dimension_numbers<[1], [0], [0], [1], [0, 0, 1, 1], [], []>} : vector<288x4xf32>, vector<4x4xf32>, vector<288x4xf32> -> vector<288x4xf32>
    %170 = arith.addf %166, %169 : vector<288x4xf32>
    %171 = vector.extract_strided_slice %145 {offsets = [36, 0], sizes = [288, 4], strides = [1, 1]} : vector<326x4xf32> to vector<288x4xf32>
    %c24_77 = arith.constant 24 : index
    %c0_78 = arith.constant 0 : index
    %172 = vector.load %arg5[%c24_77, %c0_78] : memref<36x4xf32, #tpu.memory_space<vmem>>, vector<4x4xf32>
    %cst_79 = arith.constant dense<0.000000e+00> : vector<288x4xf32>
    %173 = tpu.matmul %171, %172, %cst_79 {dimension_numbers = #tpu.dot_dimension_numbers<[1], [0], [0], [1], [0, 0, 1, 1], [], []>} : vector<288x4xf32>, vector<4x4xf32>, vector<288x4xf32> -> vector<288x4xf32>
    %174 = arith.addf %170, %173 : vector<288x4xf32>
    %175 = vector.extract_strided_slice %145 {offsets = [37, 0], sizes = [288, 4], strides = [1, 1]} : vector<326x4xf32> to vector<288x4xf32>
    %c28_80 = arith.constant 28 : index
    %c0_81 = arith.constant 0 : index
    %176 = vector.load %arg5[%c28_80, %c0_81] : memref<36x4xf32, #tpu.memory_space<vmem>>, vector<4x4xf32>
    %cst_82 = arith.constant dense<0.000000e+00> : vector<288x4xf32>
    %177 = tpu.matmul %175, %176, %cst_82 {dimension_numbers = #tpu.dot_dimension_numbers<[1], [0], [0], [1], [0, 0, 1, 1], [], []>} : vector<288x4xf32>, vector<4x4xf32>, vector<288x4xf32> -> vector<288x4xf32>
    %178 = arith.addf %174, %177 : vector<288x4xf32>
    %179 = vector.extract_strided_slice %145 {offsets = [38, 0], sizes = [288, 4], strides = [1, 1]} : vector<326x4xf32> to vector<288x4xf32>
    %c32_83 = arith.constant 32 : index
    %c0_84 = arith.constant 0 : index
    %180 = vector.load %arg5[%c32_83, %c0_84] : memref<36x4xf32, #tpu.memory_space<vmem>>, vector<4x4xf32>
    %cst_85 = arith.constant dense<0.000000e+00> : vector<288x4xf32>
    %181 = tpu.matmul %179, %180, %cst_85 {dimension_numbers = #tpu.dot_dimension_numbers<[1], [0], [0], [1], [0, 0, 1, 1], [], []>} : vector<288x4xf32>, vector<4x4xf32>, vector<288x4xf32> -> vector<288x4xf32>
    %182 = arith.addf %178, %181 : vector<288x4xf32>
    %c0_86 = arith.constant 0 : index
    %c0_87 = arith.constant 0 : index
    %183 = vector.load %arg6[%c0_86, %c0_87] : memref<1x4xf32, #tpu.memory_space<vmem>>, vector<1x4xf32>
    %184 = vector.broadcast %183 : vector<1x4xf32> to vector<288x4xf32>
    %185 = arith.addf %182, %184 : vector<288x4xf32>
    %186 = tpu.iota {dimensions = array<i32: 0>} : vector<288x1xi32>
    %c18_i32_88 = arith.constant 18 : i32
    %c0_i32_89 = arith.constant 0 : i32
    %187 = arith.cmpi eq, %c18_i32_88, %c0_i32_89 : i32
    %c1_i32_90 = arith.constant 1 : i32
    %188 = arith.select %187, %c1_i32_90, %c18_i32_88 : i32
    %189 = vector.broadcast %188 : i32 to vector<288x1xi32>
    %190 = arith.remsi %186, %189 : vector<288x1xi32>
    %c0_i32_91 = arith.constant 0 : i32
    %191 = vector.broadcast %c0_i32_91 : i32 to vector<288x1xi32>
    %192 = arith.cmpi ne, %190, %191 : vector<288x1xi32>
    %c0_i32_92 = arith.constant 0 : i32
    %193 = vector.broadcast %c0_i32_92 : i32 to vector<288x1xi32>
    %194 = arith.cmpi slt, %190, %193 : vector<288x1xi32>
    %c0_i32_93 = arith.constant 0 : i32
    %195 = arith.cmpi slt, %188, %c0_i32_93 : i32
    %196 = vector.broadcast %195 : i1 to vector<288x1xi1>
    %197 = vector.broadcast %196 : vector<288x1xi1> to vector<288x1xi1>
    %198 = arith.xori %194, %197 : vector<288x1xi1>
    %199 = arith.andi %198, %192 : vector<288x1xi1>
    %200 = vector.broadcast %188 : i32 to vector<288x1xi32>
    %201 = arith.addi %190, %200 : vector<288x1xi32>
    %202 = arith.select %199, %201, %190 : vector<288x1xi1>, vector<288x1xi32>
    %c16_i32_94 = arith.constant 16 : i32
    %203 = vector.broadcast %c16_i32_94 : i32 to vector<288x1xi32>
    %204 = arith.cmpi slt, %202, %203 : vector<288x1xi32>
    %205 = arith.extui %204 : vector<288x1xi1> to vector<288x1xi32>
    %206 = arith.sitofp %205 : vector<288x1xi32> to vector<288x1xf32>
    %207 = vector.shape_cast %206 : vector<288x1xf32> to vector<288x1xf32>
    %208 = vector.broadcast %207 : vector<288x1xf32> to vector<288x4xf32>
    %209 = arith.mulf %185, %208 : vector<288x4xf32>
    %cst_95 = arith.constant dense<0.000000e+00> : vector<4xf32>
    %210 = vector.multi_reduction <add>, %209, %cst_95 [0] : vector<288x4xf32> to vector<4xf32>
    %211 = vector.shape_cast %210 : vector<4xf32> to vector<1x4xf32>
    %cst_96 = arith.constant 3.906250e-03 : f32
    %212 = vector.broadcast %cst_96 : f32 to vector<1x4xf32>
    %213 = arith.mulf %211, %212 : vector<1x4xf32>
    %214 = vector.broadcast %213 : vector<1x4xf32> to vector<288x4xf32>
    %215 = arith.subf %185, %214 : vector<288x4xf32>
    %216 = arith.mulf %215, %208 : vector<288x4xf32>
    %217 = arith.mulf %216, %216 : vector<288x4xf32>
    %cst_97 = arith.constant dense<0.000000e+00> : vector<4xf32>
    %218 = vector.multi_reduction <add>, %217, %cst_97 [0] : vector<288x4xf32> to vector<4xf32>
    %219 = vector.shape_cast %218 : vector<4xf32> to vector<1x4xf32>
    %cst_98 = arith.constant 3.906250e-03 : f32
    %220 = vector.broadcast %cst_98 : f32 to vector<1x4xf32>
    %221 = arith.mulf %219, %220 : vector<1x4xf32>
    %cst_99 = arith.constant 9.99999974E-6 : f32
    %222 = vector.broadcast %cst_99 : f32 to vector<1x4xf32>
    %223 = arith.addf %221, %222 : vector<1x4xf32>
    %224 = math.rsqrt %223 : vector<1x4xf32>
    %225 = vector.broadcast %224 : vector<1x4xf32> to vector<288x4xf32>
    %226 = arith.mulf %215, %225 : vector<288x4xf32>
    %c0_100 = arith.constant 0 : index
    %c0_101 = arith.constant 0 : index
    %c0_102 = arith.constant 0 : index
    %c0_103 = arith.constant 0 : index
    %227 = vector.load %arg1[%c0_100, %c0_101, %c0_102, %c0_103] : memref<1x16x16x4xf32, #tpu.memory_space<vmem>>, vector<1x1x16x4xf32>
    %228 = vector.shape_cast %227 : vector<1x1x16x4xf32> to vector<16x4xf32>
    %229 = vector.extract_strided_slice %226 {offsets = [0, 0], sizes = [16, 4], strides = [1, 1]} : vector<288x4xf32> to vector<16x4xf32>
    %230 = arith.addf %228, %229 : vector<16x4xf32>
    %c0_104 = arith.constant 0 : index
    %c0_105 = arith.constant 0 : index
    %c0_106 = arith.constant 0 : index
    %c0_107 = arith.constant 0 : index
    %231 = vector.load %arg7[%c0_104, %c0_105, %c0_106, %c0_107] : memref<1x16x16x4xf32, #tpu.memory_space<vmem>>, vector<1x1x16x4xf32>
    %232 = vector.shape_cast %231 : vector<1x1x16x4xf32> to vector<16x4xf32>
    %233 = vector.shape_cast %230 : vector<16x4xf32> to vector<1x1x16x4xf32>
    tpu.vector_store %arg7[%c0_104, %c0_105, %c0_106, %c0_107], %233 {strides = array<i32>} : memref<1x16x16x4xf32, #tpu.memory_space<vmem>>, vector<1x1x16x4xf32>,
    %c0_108 = arith.constant 0 : index
    %c1_109 = arith.constant 1 : index
    %c0_110 = arith.constant 0 : index
    %c0_111 = arith.constant 0 : index
    %234 = vector.load %arg1[%c0_108, %c1_109, %c0_110, %c0_111] : memref<1x16x16x4xf32, #tpu.memory_space<vmem>>, vector<1x1x16x4xf32>
    %235 = vector.shape_cast %234 : vector<1x1x16x4xf32> to vector<16x4xf32>
    %236 = vector.extract_strided_slice %226 {offsets = [18, 0], sizes = [16, 4], strides = [1, 1]} : vector<288x4xf32> to vector<16x4xf32>
    %237 = arith.addf %235, %236 : vector<16x4xf32>
    %c0_112 = arith.constant 0 : index
    %c1_113 = arith.constant 1 : index
    %c0_114 = arith.constant 0 : index
    %c0_115 = arith.constant 0 : index
    %238 = vector.load %arg7[%c0_112, %c1_113, %c0_114, %c0_115] : memref<1x16x16x4xf32, #tpu.memory_space<vmem>>, vector<1x1x16x4xf32>
    %239 = vector.shape_cast %238 : vector<1x1x16x4xf32> to vector<16x4xf32>
    %240 = vector.shape_cast %237 : vector<16x4xf32> to vector<1x1x16x4xf32>
    tpu.vector_store %arg7[%c0_112, %c1_113, %c0_114, %c0_115], %240 {strides = array<i32>} : memref<1x16x16x4xf32, #tpu.memory_space<vmem>>, vector<1x1x16x4xf32>,
    %c0_116 = arith.constant 0 : index
    %c2_117 = arith.constant 2 : index
    %c0_118 = arith.constant 0 : index
    %c0_119 = arith.constant 0 : index
    %241 = vector.load %arg1[%c0_116, %c2_117, %c0_118, %c0_119] : memref<1x16x16x4xf32, #tpu.memory_space<vmem>>, vector<1x1x16x4xf32>
    %242 = vector.shape_cast %241 : vector<1x1x16x4xf32> to vector<16x4xf32>
    %243 = vector.extract_strided_slice %226 {offsets = [36, 0], sizes = [16, 4], strides = [1, 1]} : vector<288x4xf32> to vector<16x4xf32>
    %244 = arith.addf %242, %243 : vector<16x4xf32>
    %c0_120 = arith.constant 0 : index
    %c2_121 = arith.constant 2 : index
    %c0_122 = arith.constant 0 : index
    %c0_123 = arith.constant 0 : index
    %245 = vector.load %arg7[%c0_120, %c2_121, %c0_122, %c0_123] : memref<1x16x16x4xf32, #tpu.memory_space<vmem>>, vector<1x1x16x4xf32>
    %246 = vector.shape_cast %245 : vector<1x1x16x4xf32> to vector<16x4xf32>
    %247 = vector.shape_cast %244 : vector<16x4xf32> to vector<1x1x16x4xf32>
    tpu.vector_store %arg7[%c0_120, %c2_121, %c0_122, %c0_123], %247 {strides = array<i32>} : memref<1x16x16x4xf32, #tpu.memory_space<vmem>>, vector<1x1x16x4xf32>,
    %c0_124 = arith.constant 0 : index
    %c3 = arith.constant 3 : index
    %c0_125 = arith.constant 0 : index
    %c0_126 = arith.constant 0 : index
    %248 = vector.load %arg1[%c0_124, %c3, %c0_125, %c0_126] : memref<1x16x16x4xf32, #tpu.memory_space<vmem>>, vector<1x1x16x4xf32>
    %249 = vector.shape_cast %248 : vector<1x1x16x4xf32> to vector<16x4xf32>
    %250 = vector.extract_strided_slice %226 {offsets = [54, 0], sizes = [16, 4], strides = [1, 1]} : vector<288x4xf32> to vector<16x4xf32>
    %251 = arith.addf %249, %250 : vector<16x4xf32>
    %c0_127 = arith.constant 0 : index
    %c3_128 = arith.constant 3 : index
    %c0_129 = arith.constant 0 : index
    %c0_130 = arith.constant 0 : index
    %252 = vector.load %arg7[%c0_127, %c3_128, %c0_129, %c0_130] : memref<1x16x16x4xf32, #tpu.memory_space<vmem>>, vector<1x1x16x4xf32>
    %253 = vector.shape_cast %252 : vector<1x1x16x4xf32> to vector<16x4xf32>
    %254 = vector.shape_cast %251 : vector<16x4xf32> to vector<1x1x16x4xf32>
    tpu.vector_store %arg7[%c0_127, %c3_128, %c0_129, %c0_130], %254 {strides = array<i32>} : memref<1x16x16x4xf32, #tpu.memory_space<vmem>>, vector<1x1x16x4xf32>,
    %c0_131 = arith.constant 0 : index
    %c4_132 = arith.constant 4 : index
    %c0_133 = arith.constant 0 : index
    %c0_134 = arith.constant 0 : index
    %255 = vector.load %arg1[%c0_131, %c4_132, %c0_133, %c0_134] : memref<1x16x16x4xf32, #tpu.memory_space<vmem>>, vector<1x1x16x4xf32>
    %256 = vector.shape_cast %255 : vector<1x1x16x4xf32> to vector<16x4xf32>
    %257 = vector.extract_strided_slice %226 {offsets = [72, 0], sizes = [16, 4], strides = [1, 1]} : vector<288x4xf32> to vector<16x4xf32>
    %258 = arith.addf %256, %257 : vector<16x4xf32>
    %c0_135 = arith.constant 0 : index
    %c4_136 = arith.constant 4 : index
    %c0_137 = arith.constant 0 : index
    %c0_138 = arith.constant 0 : index
    %259 = vector.load %arg7[%c0_135, %c4_136, %c0_137, %c0_138] : memref<1x16x16x4xf32, #tpu.memory_space<vmem>>, vector<1x1x16x4xf32>
    %260 = vector.shape_cast %259 : vector<1x1x16x4xf32> to vector<16x4xf32>
    %261 = vector.shape_cast %258 : vector<16x4xf32> to vector<1x1x16x4xf32>
    tpu.vector_store %arg7[%c0_135, %c4_136, %c0_137, %c0_138], %261 {strides = array<i32>} : memref<1x16x16x4xf32, #tpu.memory_space<vmem>>, vector<1x1x16x4xf32>,
    %c0_139 = arith.constant 0 : index
    %c5 = arith.constant 5 : index
    %c0_140 = arith.constant 0 : index
    %c0_141 = arith.constant 0 : index
    %262 = vector.load %arg1[%c0_139, %c5, %c0_140, %c0_141] : memref<1x16x16x4xf32, #tpu.memory_space<vmem>>, vector<1x1x16x4xf32>
    %263 = vector.shape_cast %262 : vector<1x1x16x4xf32> to vector<16x4xf32>
    %264 = vector.extract_strided_slice %226 {offsets = [90, 0], sizes = [16, 4], strides = [1, 1]} : vector<288x4xf32> to vector<16x4xf32>
    %265 = arith.addf %263, %264 : vector<16x4xf32>
    %c0_142 = arith.constant 0 : index
    %c5_143 = arith.constant 5 : index
    %c0_144 = arith.constant 0 : index
    %c0_145 = arith.constant 0 : index
    %266 = vector.load %arg7[%c0_142, %c5_143, %c0_144, %c0_145] : memref<1x16x16x4xf32, #tpu.memory_space<vmem>>, vector<1x1x16x4xf32>
    %267 = vector.shape_cast %266 : vector<1x1x16x4xf32> to vector<16x4xf32>
    %268 = vector.shape_cast %265 : vector<16x4xf32> to vector<1x1x16x4xf32>
    tpu.vector_store %arg7[%c0_142, %c5_143, %c0_144, %c0_145], %268 {strides = array<i32>} : memref<1x16x16x4xf32, #tpu.memory_space<vmem>>, vector<1x1x16x4xf32>,
    %c0_146 = arith.constant 0 : index
    %c6 = arith.constant 6 : index
    %c0_147 = arith.constant 0 : index
    %c0_148 = arith.constant 0 : index
    %269 = vector.load %arg1[%c0_146, %c6, %c0_147, %c0_148] : memref<1x16x16x4xf32, #tpu.memory_space<vmem>>, vector<1x1x16x4xf32>
    %270 = vector.shape_cast %269 : vector<1x1x16x4xf32> to vector<16x4xf32>
    %271 = vector.extract_strided_slice %226 {offsets = [108, 0], sizes = [16, 4], strides = [1, 1]} : vector<288x4xf32> to vector<16x4xf32>
    %272 = arith.addf %270, %271 : vector<16x4xf32>
    %c0_149 = arith.constant 0 : index
    %c6_150 = arith.constant 6 : index
    %c0_151 = arith.constant 0 : index
    %c0_152 = arith.constant 0 : index
    %273 = vector.load %arg7[%c0_149, %c6_150, %c0_151, %c0_152] : memref<1x16x16x4xf32, #tpu.memory_space<vmem>>, vector<1x1x16x4xf32>
    %274 = vector.shape_cast %273 : vector<1x1x16x4xf32> to vector<16x4xf32>
    %275 = vector.shape_cast %272 : vector<16x4xf32> to vector<1x1x16x4xf32>
    tpu.vector_store %arg7[%c0_149, %c6_150, %c0_151, %c0_152], %275 {strides = array<i32>} : memref<1x16x16x4xf32, #tpu.memory_space<vmem>>, vector<1x1x16x4xf32>,
    %c0_153 = arith.constant 0 : index
    %c7 = arith.constant 7 : index
    %c0_154 = arith.constant 0 : index
    %c0_155 = arith.constant 0 : index
    %276 = vector.load %arg1[%c0_153, %c7, %c0_154, %c0_155] : memref<1x16x16x4xf32, #tpu.memory_space<vmem>>, vector<1x1x16x4xf32>
    %277 = vector.shape_cast %276 : vector<1x1x16x4xf32> to vector<16x4xf32>
    %278 = vector.extract_strided_slice %226 {offsets = [126, 0], sizes = [16, 4], strides = [1, 1]} : vector<288x4xf32> to vector<16x4xf32>
    %279 = arith.addf %277, %278 : vector<16x4xf32>
    %c0_156 = arith.constant 0 : index
    %c7_157 = arith.constant 7 : index
    %c0_158 = arith.constant 0 : index
    %c0_159 = arith.constant 0 : index
    %280 = vector.load %arg7[%c0_156, %c7_157, %c0_158, %c0_159] : memref<1x16x16x4xf32, #tpu.memory_space<vmem>>, vector<1x1x16x4xf32>
    %281 = vector.shape_cast %280 : vector<1x1x16x4xf32> to vector<16x4xf32>
    %282 = vector.shape_cast %279 : vector<16x4xf32> to vector<1x1x16x4xf32>
    tpu.vector_store %arg7[%c0_156, %c7_157, %c0_158, %c0_159], %282 {strides = array<i32>} : memref<1x16x16x4xf32, #tpu.memory_space<vmem>>, vector<1x1x16x4xf32>,
    %c0_160 = arith.constant 0 : index
    %c8_161 = arith.constant 8 : index
    %c0_162 = arith.constant 0 : index
    %c0_163 = arith.constant 0 : index
    %283 = vector.load %arg1[%c0_160, %c8_161, %c0_162, %c0_163] : memref<1x16x16x4xf32, #tpu.memory_space<vmem>>, vector<1x1x16x4xf32>
    %284 = vector.shape_cast %283 : vector<1x1x16x4xf32> to vector<16x4xf32>
    %285 = vector.extract_strided_slice %226 {offsets = [144, 0], sizes = [16, 4], strides = [1, 1]} : vector<288x4xf32> to vector<16x4xf32>
    %286 = arith.addf %284, %285 : vector<16x4xf32>
    %c0_164 = arith.constant 0 : index
    %c8_165 = arith.constant 8 : index
    %c0_166 = arith.constant 0 : index
    %c0_167 = arith.constant 0 : index
    %287 = vector.load %arg7[%c0_164, %c8_165, %c0_166, %c0_167] : memref<1x16x16x4xf32, #tpu.memory_space<vmem>>, vector<1x1x16x4xf32>
    %288 = vector.shape_cast %287 : vector<1x1x16x4xf32> to vector<16x4xf32>
    %289 = vector.shape_cast %286 : vector<16x4xf32> to vector<1x1x16x4xf32>
    tpu.vector_store %arg7[%c0_164, %c8_165, %c0_166, %c0_167], %289 {strides = array<i32>} : memref<1x16x16x4xf32, #tpu.memory_space<vmem>>, vector<1x1x16x4xf32>,
    %c0_168 = arith.constant 0 : index
    %c9 = arith.constant 9 : index
    %c0_169 = arith.constant 0 : index
    %c0_170 = arith.constant 0 : index
    %290 = vector.load %arg1[%c0_168, %c9, %c0_169, %c0_170] : memref<1x16x16x4xf32, #tpu.memory_space<vmem>>, vector<1x1x16x4xf32>
    %291 = vector.shape_cast %290 : vector<1x1x16x4xf32> to vector<16x4xf32>
    %292 = vector.extract_strided_slice %226 {offsets = [162, 0], sizes = [16, 4], strides = [1, 1]} : vector<288x4xf32> to vector<16x4xf32>
    %293 = arith.addf %291, %292 : vector<16x4xf32>
    %c0_171 = arith.constant 0 : index
    %c9_172 = arith.constant 9 : index
    %c0_173 = arith.constant 0 : index
    %c0_174 = arith.constant 0 : index
    %294 = vector.load %arg7[%c0_171, %c9_172, %c0_173, %c0_174] : memref<1x16x16x4xf32, #tpu.memory_space<vmem>>, vector<1x1x16x4xf32>
    %295 = vector.shape_cast %294 : vector<1x1x16x4xf32> to vector<16x4xf32>
    %296 = vector.shape_cast %293 : vector<16x4xf32> to vector<1x1x16x4xf32>
    tpu.vector_store %arg7[%c0_171, %c9_172, %c0_173, %c0_174], %296 {strides = array<i32>} : memref<1x16x16x4xf32, #tpu.memory_space<vmem>>, vector<1x1x16x4xf32>,
    %c0_175 = arith.constant 0 : index
    %c10 = arith.constant 10 : index
    %c0_176 = arith.constant 0 : index
    %c0_177 = arith.constant 0 : index
    %297 = vector.load %arg1[%c0_175, %c10, %c0_176, %c0_177] : memref<1x16x16x4xf32, #tpu.memory_space<vmem>>, vector<1x1x16x4xf32>
    %298 = vector.shape_cast %297 : vector<1x1x16x4xf32> to vector<16x4xf32>
    %299 = vector.extract_strided_slice %226 {offsets = [180, 0], sizes = [16, 4], strides = [1, 1]} : vector<288x4xf32> to vector<16x4xf32>
    %300 = arith.addf %298, %299 : vector<16x4xf32>
    %c0_178 = arith.constant 0 : index
    %c10_179 = arith.constant 10 : index
    %c0_180 = arith.constant 0 : index
    %c0_181 = arith.constant 0 : index
    %301 = vector.load %arg7[%c0_178, %c10_179, %c0_180, %c0_181] : memref<1x16x16x4xf32, #tpu.memory_space<vmem>>, vector<1x1x16x4xf32>
    %302 = vector.shape_cast %301 : vector<1x1x16x4xf32> to vector<16x4xf32>
    %303 = vector.shape_cast %300 : vector<16x4xf32> to vector<1x1x16x4xf32>
    tpu.vector_store %arg7[%c0_178, %c10_179, %c0_180, %c0_181], %303 {strides = array<i32>} : memref<1x16x16x4xf32, #tpu.memory_space<vmem>>, vector<1x1x16x4xf32>,
    %c0_182 = arith.constant 0 : index
    %c11 = arith.constant 11 : index
    %c0_183 = arith.constant 0 : index
    %c0_184 = arith.constant 0 : index
    %304 = vector.load %arg1[%c0_182, %c11, %c0_183, %c0_184] : memref<1x16x16x4xf32, #tpu.memory_space<vmem>>, vector<1x1x16x4xf32>
    %305 = vector.shape_cast %304 : vector<1x1x16x4xf32> to vector<16x4xf32>
    %306 = vector.extract_strided_slice %226 {offsets = [198, 0], sizes = [16, 4], strides = [1, 1]} : vector<288x4xf32> to vector<16x4xf32>
    %307 = arith.addf %305, %306 : vector<16x4xf32>
    %c0_185 = arith.constant 0 : index
    %c11_186 = arith.constant 11 : index
    %c0_187 = arith.constant 0 : index
    %c0_188 = arith.constant 0 : index
    %308 = vector.load %arg7[%c0_185, %c11_186, %c0_187, %c0_188] : memref<1x16x16x4xf32, #tpu.memory_space<vmem>>, vector<1x1x16x4xf32>
    %309 = vector.shape_cast %308 : vector<1x1x16x4xf32> to vector<16x4xf32>
    %310 = vector.shape_cast %307 : vector<16x4xf32> to vector<1x1x16x4xf32>
    tpu.vector_store %arg7[%c0_185, %c11_186, %c0_187, %c0_188], %310 {strides = array<i32>} : memref<1x16x16x4xf32, #tpu.memory_space<vmem>>, vector<1x1x16x4xf32>,
    %c0_189 = arith.constant 0 : index
    %c12_190 = arith.constant 12 : index
    %c0_191 = arith.constant 0 : index
    %c0_192 = arith.constant 0 : index
    %311 = vector.load %arg1[%c0_189, %c12_190, %c0_191, %c0_192] : memref<1x16x16x4xf32, #tpu.memory_space<vmem>>, vector<1x1x16x4xf32>
    %312 = vector.shape_cast %311 : vector<1x1x16x4xf32> to vector<16x4xf32>
    %313 = vector.extract_strided_slice %226 {offsets = [216, 0], sizes = [16, 4], strides = [1, 1]} : vector<288x4xf32> to vector<16x4xf32>
    %314 = arith.addf %312, %313 : vector<16x4xf32>
    %c0_193 = arith.constant 0 : index
    %c12_194 = arith.constant 12 : index
    %c0_195 = arith.constant 0 : index
    %c0_196 = arith.constant 0 : index
    %315 = vector.load %arg7[%c0_193, %c12_194, %c0_195, %c0_196] : memref<1x16x16x4xf32, #tpu.memory_space<vmem>>, vector<1x1x16x4xf32>
    %316 = vector.shape_cast %315 : vector<1x1x16x4xf32> to vector<16x4xf32>
    %317 = vector.shape_cast %314 : vector<16x4xf32> to vector<1x1x16x4xf32>
    tpu.vector_store %arg7[%c0_193, %c12_194, %c0_195, %c0_196], %317 {strides = array<i32>} : memref<1x16x16x4xf32, #tpu.memory_space<vmem>>, vector<1x1x16x4xf32>,
    %c0_197 = arith.constant 0 : index
    %c13 = arith.constant 13 : index
    %c0_198 = arith.constant 0 : index
    %c0_199 = arith.constant 0 : index
    %318 = vector.load %arg1[%c0_197, %c13, %c0_198, %c0_199] : memref<1x16x16x4xf32, #tpu.memory_space<vmem>>, vector<1x1x16x4xf32>
    %319 = vector.shape_cast %318 : vector<1x1x16x4xf32> to vector<16x4xf32>
    %320 = vector.extract_strided_slice %226 {offsets = [234, 0], sizes = [16, 4], strides = [1, 1]} : vector<288x4xf32> to vector<16x4xf32>
    %321 = arith.addf %319, %320 : vector<16x4xf32>
    %c0_200 = arith.constant 0 : index
    %c13_201 = arith.constant 13 : index
    %c0_202 = arith.constant 0 : index
    %c0_203 = arith.constant 0 : index
    %322 = vector.load %arg7[%c0_200, %c13_201, %c0_202, %c0_203] : memref<1x16x16x4xf32, #tpu.memory_space<vmem>>, vector<1x1x16x4xf32>
    %323 = vector.shape_cast %322 : vector<1x1x16x4xf32> to vector<16x4xf32>
    %324 = vector.shape_cast %321 : vector<16x4xf32> to vector<1x1x16x4xf32>
    tpu.vector_store %arg7[%c0_200, %c13_201, %c0_202, %c0_203], %324 {strides = array<i32>} : memref<1x16x16x4xf32, #tpu.memory_space<vmem>>, vector<1x1x16x4xf32>,
    %c0_204 = arith.constant 0 : index
    %c14 = arith.constant 14 : index
    %c0_205 = arith.constant 0 : index
    %c0_206 = arith.constant 0 : index
    %325 = vector.load %arg1[%c0_204, %c14, %c0_205, %c0_206] : memref<1x16x16x4xf32, #tpu.memory_space<vmem>>, vector<1x1x16x4xf32>
    %326 = vector.shape_cast %325 : vector<1x1x16x4xf32> to vector<16x4xf32>
    %327 = vector.extract_strided_slice %226 {offsets = [252, 0], sizes = [16, 4], strides = [1, 1]} : vector<288x4xf32> to vector<16x4xf32>
    %328 = arith.addf %326, %327 : vector<16x4xf32>
    %c0_207 = arith.constant 0 : index
    %c14_208 = arith.constant 14 : index
    %c0_209 = arith.constant 0 : index
    %c0_210 = arith.constant 0 : index
    %329 = vector.load %arg7[%c0_207, %c14_208, %c0_209, %c0_210] : memref<1x16x16x4xf32, #tpu.memory_space<vmem>>, vector<1x1x16x4xf32>
    %330 = vector.shape_cast %329 : vector<1x1x16x4xf32> to vector<16x4xf32>
    %331 = vector.shape_cast %328 : vector<16x4xf32> to vector<1x1x16x4xf32>
    tpu.vector_store %arg7[%c0_207, %c14_208, %c0_209, %c0_210], %331 {strides = array<i32>} : memref<1x16x16x4xf32, #tpu.memory_space<vmem>>, vector<1x1x16x4xf32>,
    %c0_211 = arith.constant 0 : index
    %c15 = arith.constant 15 : index
    %c0_212 = arith.constant 0 : index
    %c0_213 = arith.constant 0 : index
    %332 = vector.load %arg1[%c0_211, %c15, %c0_212, %c0_213] : memref<1x16x16x4xf32, #tpu.memory_space<vmem>>, vector<1x1x16x4xf32>
    %333 = vector.shape_cast %332 : vector<1x1x16x4xf32> to vector<16x4xf32>
    %334 = vector.extract_strided_slice %226 {offsets = [270, 0], sizes = [16, 4], strides = [1, 1]} : vector<288x4xf32> to vector<16x4xf32>
    %335 = arith.addf %333, %334 : vector<16x4xf32>
    %c0_214 = arith.constant 0 : index
    %c15_215 = arith.constant 15 : index
    %c0_216 = arith.constant 0 : index
    %c0_217 = arith.constant 0 : index
    %336 = vector.load %arg7[%c0_214, %c15_215, %c0_216, %c0_217] : memref<1x16x16x4xf32, #tpu.memory_space<vmem>>, vector<1x1x16x4xf32>
    %337 = vector.shape_cast %336 : vector<1x1x16x4xf32> to vector<16x4xf32>
    %338 = vector.shape_cast %335 : vector<16x4xf32> to vector<1x1x16x4xf32>
    tpu.vector_store %arg7[%c0_214, %c15_215, %c0_216, %c0_217], %338 {strides = array<i32>} : memref<1x16x16x4xf32, #tpu.memory_space<vmem>>, vector<1x1x16x4xf32>,
    return
  }
  func.func @transform_0(%arg0: i32) -> (i32, i32, i32, i32) {
    %c0_i32 = arith.constant 0 : i32
    %c0_i32_0 = arith.constant 0 : i32
    %c0_i32_1 = arith.constant 0 : i32
    %c0_i32_2 = arith.constant 0 : i32
    return %arg0, %c0_i32, %c0_i32_0, %c0_i32_1 : i32, i32, i32, i32
  }
  func.func @transform_1(%arg0: i32) -> (i32, i32, i32) {
    %c0_i32 = arith.constant 0 : i32
    %c0_i32_0 = arith.constant 0 : i32
    %c0_i32_1 = arith.constant 0 : i32
    return %arg0, %c0_i32, %c0_i32_0 : i32, i32, i32
  }
  func.func @transform_2(%arg0: i32) -> (i32, i32) {
    %c0_i32 = arith.constant 0 : i32
    %c0_i32_0 = arith.constant 0 : i32
    %c0_i32_1 = arith.constant 0 : i32
    return %c0_i32, %c0_i32_0 : i32, i32
  }
  func.func @transform_3(%arg0: i32) -> (i32, i32) {
    %c0_i32 = arith.constant 0 : i32
    %c0_i32_0 = arith.constant 0 : i32
    %c0_i32_1 = arith.constant 0 : i32
    return %c0_i32, %c0_i32_0 : i32, i32
  }
  func.func @transform_4(%arg0: i32) -> (i32, i32) {
    %c0_i32 = arith.constant 0 : i32
    %c0_i32_0 = arith.constant 0 : i32
    %c0_i32_1 = arith.constant 0 : i32
    return %c0_i32, %c0_i32_0 : i32, i32
  }
  func.func @transform_5(%arg0: i32) -> (i32, i32) {
    %c0_i32 = arith.constant 0 : i32
    %c0_i32_0 = arith.constant 0 : i32
    %c0_i32_1 = arith.constant 0 : i32
    return %c0_i32, %c0_i32_0 : i32, i32
  }
  func.func @transform_6(%arg0: i32) -> (i32, i32, i32, i32) {
    %c0_i32 = arith.constant 0 : i32
    %c0_i32_0 = arith.constant 0 : i32
    %c0_i32_1 = arith.constant 0 : i32
    %c0_i32_2 = arith.constant 0 : i32
    return %arg0, %c0_i32, %c0_i32_0, %c0_i32_1 : i32, i32, i32, i32
  }
}

</mosaic_0001>

<llo_original>
// kernel: _resnet_block_impl.1
$region0: #{_resnet_block_impl.1}
  #allocation0 [shape = 'u32[]', space=smem, size = 0x4, offset = 0x4, fixed_abs, tag = 'smem constant byte address 0x4 - core index']
  #allocation1 [shape = 'u32[72,128]{1,0:T(1,128)}', space=vmem, size = 0x9000, scoped, tag = 'internal scratch']
  %s0 = inlined_call_operand.vmem [shape: f32[2,16,16,4], index: 0, kind: input, shape index: {}]
  %s1 = inlined_call_operand.vmem [shape: f32[2,326,4], index: 1, kind: input, shape index: {}]
  %s2 = inlined_call_operand.vmem [shape: f32[36,4], index: 2, kind: input, shape index: {}]
  %s3 = inlined_call_operand.vmem [shape: f32[1,4], index: 3, kind: input, shape index: {}]
  %s4 = inlined_call_operand.vmem [shape: f32[36,4], index: 4, kind: input, shape index: {}]
  %s5 = inlined_call_operand.vmem [shape: f32[1,4], index: 5, kind: input, shape index: {}]
  %s6 = inlined_call_operand.vmem [shape: f32[2,16,16,4], index: 6, kind: output, shape index: {}]
  %s7 = sld [smem:[#allocation0]]
  $region57: #{_resnet_block_impl.1} parent=0
    _
  %s9 = ssub.s32 1, %s7
  %s10 = scalar_select 0, %s9, %s7
  loop: start=0, step=1, limit=4
  $region2: #{_resnet_block_impl.1} parent=0 // loop_pre_header
    _
  $region3: #{_resnet_block_impl.1} parent=0 // loop_header
    %s12 = sphi 0, %s16
    %p13 = scmp.ge.s32.totalorder %s12, 4
    %s22 = sphi 0, %s24
    %s25 = sphi 0, %s22
    %s26 = sphi 0, %s25
    %s42 = sphi 0, %s26
    %s48 = sphi 0, %s50
    %s51 = sphi 0, %s48
    %s52 = sphi 0, %s51
    %s68 = sphi 0, %s52
    %s72 = sphi 0, %s72
    %s74 = sphi 0, %s72
    %s75 = sphi 0, %s74
    %s89 = sphi 0, %s75
    %s93 = sphi 0, %s93
    %s95 = sphi 0, %s93
    %s96 = sphi 0, %s95
    %s110 = sphi 0, %s96
    %s114 = sphi 0, %s114
    %s116 = sphi 0, %s114
    %s117 = sphi 0, %s116
    %s131 = sphi 0, %s117
    %s135 = sphi 0, %s135
    %s137 = sphi 0, %s135
    %s138 = sphi 0, %s137
    %s152 = sphi 0, %s138
    %s158 = sphi 0, %s160
    %s161 = sphi 0, %s158
    %s162 = sphi 0, %s161
    %s178 = sphi 0, %s162
  $region4: #{_resnet_block_impl.1} parent=0 // loop_header_branch
    %15 = sbr.rel (%p13) target = $region8
  $region5: #{_resnet_block_impl.1} parent=0 // loop_body
    %s17 = ssub.s32 %s12, 1
    %s18 = ssub.s32 %s12, 2
    %s19 = sadd.s32 %s12, 1
    %s20 = ssub.s32 %s12, %s19
    %p21 = scmp.eq.s32.totalorder %s20, 0
    %s23 = sadd.s32 %s22, 1
    %s24 = scalar_select %p21, %s22, %s23
    %p27 = pneg %p21
    %p28 = scmp.eq.s32.totalorder %s12, 1
    %p29 = por %p27, %p28
    %p30 = scmp.ne.s32.totalorder %s22, %s25
    %p31 = scmp.eq.s32.totalorder %s12, 0
    %p32 = por %p30, %p31
    %p33 = scmp.ne.s32.totalorder %s22, %s25
    %p34 = scmp.eq.s32.totalorder %s17, 1
    %p35 = por %p33, %p34
    %p36 = scmp.ne.s32.totalorder %s25, %s26
    %p37 = scmp.eq.s32.totalorder %s17, 0
    %p38 = por %p36, %p37
    %p39 = scmp.ne.s32.totalorder %s25, %s26
    %p40 = scmp.eq.s32.totalorder %s18, 1
    %p41 = por %p39, %p40
    %p43 = scmp.ne.s32.totalorder %s26, %s42
    %p44 = scmp.eq.s32.totalorder %s18, 0
    %p45 = por %p43, %p44
    %s46 = ssub.s32 %s12, %s19
    %p47 = scmp.eq.s32.totalorder %s46, 0
    %s49 = sadd.s32 %s48, 1
    %s50 = scalar_select %p47, %s48, %s49
    %p53 = pneg %p47
    %p54 = scmp.eq.s32.totalorder %s12, 1
    %p55 = por %p53, %p54
    %p56 = scmp.ne.s32.totalorder %s48, %s51
    %p57 = scmp.eq.s32.totalorder %s12, 0
    %p58 = por %p56, %p57
    %p59 = scmp.ne.s32.totalorder %s48, %s51
    %p60 = scmp.eq.s32.totalorder %s17, 1
    %p61 = por %p59, %p60
    %p62 = scmp.ne.s32.totalorder %s51, %s52
    %p63 = scmp.eq.s32.totalorder %s17, 0
    %p64 = por %p62, %p63
    %p65 = scmp.ne.s32.totalorder %s51, %s52
    %p66 = scmp.eq.s32.totalorder %s18, 1
    %p67 = por %p65, %p66
    %p69 = scmp.ne.s32.totalorder %s52, %s68
    %p70 = scmp.eq.s32.totalorder %s18, 0
    %p71 = por %p69, %p70
    %s73 = sadd.s32 %s72, 1
    %p76 = scmp.eq.s32.totalorder %s12, 1
    %p77 = scmp.ne.s32.totalorder %s72, %s74
    %p78 = scmp.eq.s32.totalorder %s12, 0
    %p79 = por %p77, %p78
    %p80 = scmp.ne.s32.totalorder %s72, %s74
    %p81 = scmp.eq.s32.totalorder %s17, 1
    %p82 = por %p80, %p81
    %p83 = scmp.ne.s32.totalorder %s74, %s75
    %p84 = scmp.eq.s32.totalorder %s17, 0
    %p85 = por %p83, %p84
    %p86 = scmp.ne.s32.totalorder %s74, %s75
    %p87 = scmp.eq.s32.totalorder %s18, 1
    %p88 = por %p86, %p87
    %p90 = scmp.ne.s32.totalorder %s75, %s89
    %p91 = scmp.eq.s32.totalorder %s18, 0
    %p92 = por %p90, %p91
    %s94 = sadd.s32 %s93, 1
    %p97 = scmp.eq.s32.totalorder %s12, 1
    %p98 = scmp.ne.s32.totalorder %s93, %s95
    %p99 = scmp.eq.s32.totalorder %s12, 0
    %p100 = por %p98, %p99
    %p101 = scmp.ne.s32.totalorder %s93, %s95
    %p102 = scmp.eq.s32.totalorder %s17, 1
    %p103 = por %p101, %p102
    %p104 = scmp.ne.s32.totalorder %s95, %s96
    %p105 = scmp.eq.s32.totalorder %s17, 0
    %p106 = por %p104, %p105
    %p107 = scmp.ne.s32.totalorder %s95, %s96
    %p108 = scmp.eq.s32.totalorder %s18, 1
    %p109 = por %p107, %p108
    %p111 = scmp.ne.s32.totalorder %s96, %s110
    %p112 = scmp.eq.s32.totalorder %s18, 0
    %p113 = por %p111, %p112
    %s115 = sadd.s32 %s114, 1
    %p118 = scmp.eq.s32.totalorder %s12, 1
    %p119 = scmp.ne.s32.totalorder %s114, %s116
    %p120 = scmp.eq.s32.totalorder %s12, 0
    %p121 = por %p119, %p120
    %p122 = scmp.ne.s32.totalorder %s114, %s116
    %p123 = scmp.eq.s32.totalorder %s17, 1
    %p124 = por %p122, %p123
    %p125 = scmp.ne.s32.totalorder %s116, %s117
    %p126 = scmp.eq.s32.totalorder %s17, 0
    %p127 = por %p125, %p126
    %p128 = scmp.ne.s32.totalorder %s116, %s117
    %p129 = scmp.eq.s32.totalorder %s18, 1
    %p130 = por %p128, %p129
    %p132 = scmp.ne.s32.totalorder %s117, %s131
    %p133 = scmp.eq.s32.totalorder %s18, 0
    %p134 = por %p132, %p133
    %s136 = sadd.s32 %s135, 1
    %p139 = scmp.eq.s32.totalorder %s12, 1
    %p140 = scmp.ne.s32.totalorder %s135, %s137
    %p141 = scmp.eq.s32.totalorder %s12, 0
    %p142 = por %p140, %p141
    %p143 = scmp.ne.s32.totalorder %s135, %s137
    %p144 = scmp.eq.s32.totalorder %s17, 1
    %p145 = por %p143, %p144
    %p146 = scmp.ne.s32.totalorder %s137, %s138
    %p147 = scmp.eq.s32.totalorder %s17, 0
    %p148 = por %p146, %p147
    %p149 = scmp.ne.s32.totalorder %s137, %s138
    %p150 = scmp.eq.s32.totalorder %s18, 1
    %p151 = por %p149, %p150
    %p153 = scmp.ne.s32.totalorder %s138, %s152
    %p154 = scmp.eq.s32.totalorder %s18, 0
    %p155 = por %p153, %p154
    %s156 = ssub.s32 %s12, %s19
    %p157 = scmp.eq.s32.totalorder %s156, 0
    %s159 = sadd.s32 %s158, 1
    %s160 = scalar_select %p157, %s158, %s159
    %p163 = pneg %p157
    %p164 = scmp.eq.s32.totalorder %s12, 1
    %p165 = por %p163, %p164
    %p166 = scmp.ne.s32.totalorder %s158, %s161
    %p167 = scmp.eq.s32.totalorder %s12, 0
    %p168 = por %p166, %p167
    %p169 = scmp.ne.s32.totalorder %s158, %s161
    %p170 = scmp.eq.s32.totalorder %s17, 1
    %p171 = por %p169, %p170
    %p172 = scmp.ne.s32.totalorder %s161, %s162
    %p173 = scmp.eq.s32.totalorder %s17, 0
    %p174 = por %p172, %p173
    %p175 = scmp.ne.s32.totalorder %s161, %s162
    %p176 = scmp.eq.s32.totalorder %s18, 1
    %p177 = por %p175, %p176
    %p179 = scmp.ne.s32.totalorder %s162, %s178
    %p180 = scmp.eq.s32.totalorder %s18, 0
    %p181 = por %p179, %p180
    %p182 = scmp.le.s32.totalorder 1, %s12
    %p183 = scmp.lt.s32.totalorder %s12, 3
    %p184 = pnand %p182, %p183
    %p185 = pneg %p184
    // Predicated region
    $region9: #{_resnet_block_impl.1} parent=5 // pred_check
      _
    $region10: #{_resnet_block_impl.1} parent=5 // pred_check_branch
      %187 = sbr.rel (%p184) target = $region12
    $region11: #{_resnet_block_impl.1} parent=5 // pred_region
      %s188 = ssub.s32 %s12, 1
      // Predicated region
      $region13: #{_resnet_block_impl.1} parent=11 // pred_check
        %p189 = pneg %p85
      $region14: #{_resnet_block_impl.1} parent=11 // pred_check_branch
        %191 = sbr.rel (%p189) target = $region16
      $region15: #{_resnet_block_impl.1} parent=11 // pred_region
        _
      $region16: #{_resnet_block_impl.1} parent=11 // pred_fallthru
        _
      // Predicated region
      $region17: #{_resnet_block_impl.1} parent=11 // pred_check
        %p192 = pneg %p106
      $region18: #{_resnet_block_impl.1} parent=11 // pred_check_branch
        %194 = sbr.rel (%p192) target = $region20
      $region19: #{_resnet_block_impl.1} parent=11 // pred_region
        _
      $region20: #{_resnet_block_impl.1} parent=11 // pred_fallthru
        _
      // Predicated region
      $region21: #{_resnet_block_impl.1} parent=11 // pred_check
        %p195 = pneg %p127
      $region22: #{_resnet_block_impl.1} parent=11 // pred_check_branch
        %197 = sbr.rel (%p195) target = $region24
      $region23: #{_resnet_block_impl.1} parent=11 // pred_region
        _
      $region24: #{_resnet_block_impl.1} parent=11 // pred_fallthru
        _
      // Predicated region
      $region25: #{_resnet_block_impl.1} parent=11 // pred_check
        %p198 = pneg %p148
      $region26: #{_resnet_block_impl.1} parent=11 // pred_check_branch
        %200 = sbr.rel (%p198) target = $region28
      $region27: #{_resnet_block_impl.1} parent=11 // pred_region
        _
      $region28: #{_resnet_block_impl.1} parent=11 // pred_fallthru
        _
    $region12: #{_resnet_block_impl.1} parent=5 // pred_fallthru
      _
    %p201 = scmp.lt.s32.totalorder %s12, 2
    // Predicated region
    $region29: #{_resnet_block_impl.1} parent=5 // pred_check
      %p202 = pneg %p201
    $region30: #{_resnet_block_impl.1} parent=5 // pred_check_branch
      %204 = sbr.rel (%p202) target = $region32
    $region31: #{_resnet_block_impl.1} parent=5 // pred_region
      // Predicated region
      $region33: #{_resnet_block_impl.1} parent=31 // pred_check
        %p205 = pneg %p32
      $region34: #{_resnet_block_impl.1} parent=31 // pred_check_branch
        %207 = sbr.rel (%p205) target = $region36
      $region35: #{_resnet_block_impl.1} parent=31 // pred_region
        %p208 = scmp.lt.s32.totalorder %s12, 1
        %s209 = scalar_select %p208, %s12, 1
        %s210 = smul.addr %s209, 32
        %s211 = smul.addr %s210, 8
        %s212 = scalar_lea.vmem %s0, %s211
      $region36: #{_resnet_block_impl.1} parent=31 // pred_fallthru
        _
      // Predicated region
      $region37: #{_resnet_block_impl.1} parent=31 // pred_check
        %p213 = pneg %p58
      $region38: #{_resnet_block_impl.1} parent=31 // pred_check_branch
        %215 = sbr.rel (%p213) target = $region40
      $region39: #{_resnet_block_impl.1} parent=31 // pred_region
        %p216 = scmp.lt.s32.totalorder %s12, 1
        %s217 = scalar_select %p216, %s12, 1
        %s218 = smul.addr %s217, 41
        %s219 = smul.addr %s218, 8
        %s220 = scalar_lea.vmem %s1, %s219
      $region40: #{_resnet_block_impl.1} parent=31 // pred_fallthru
        _
    $region32: #{_resnet_block_impl.1} parent=5 // pred_fallthru
      _
    %p221 = scmp.le.s32.totalorder 1, %s12
    %p222 = scmp.lt.s32.totalorder %s12, 3
    %p223 = pnand %p221, %p222
    %p224 = pneg %p223
    // Predicated region
    $region41: #{_resnet_block_impl.1} parent=5 // pred_check
      _
    $region42: #{_resnet_block_impl.1} parent=5 // pred_check_branch
      %226 = sbr.rel (%p223) target = $region44
    $region43: #{_resnet_block_impl.1} parent=5 // pred_region
      %s227 = ssub.s32 %s12, 1
      %p228 = scmp.lt.s32.totalorder %s17, 1
      %s229 = scalar_select %p228, %s17, 1
      %s230 = smul.addr %s229, 32
      %s231 = smul.addr %s230, 8
      %s232 = scalar_lea.vmem %s0, %s231
      %p233 = pneg %p38
      %p234 = pneg %p35
      %p235 = scmp.lt.s32.totalorder %s17, 1
      %s236 = scalar_select %p235, %s17, 1
      %s237 = smul.addr %s236, 41
      %s238 = smul.addr %s237, 8
      %s239 = scalar_lea.vmem %s1, %s238
      %p240 = pneg %p64
      %p241 = pneg %p61
      %p242 = pneg %p85
      %p243 = pneg %p82
      %p244 = pneg %p106
      %p245 = pneg %p103
      %p246 = pneg %p127
      %p247 = pneg %p124
      %p248 = pneg %p148
      %p249 = pneg %p145
      %p250 = pneg %p174
      %p251 = pneg %p171
      %p252 = scmp.lt.s32.totalorder %s17, 1
      %s253 = scalar_select %p252, %s17, 1
      %s254 = smul.addr %s253, 32
      %s255 = smul.addr %s254, 8
      %s256 = scalar_lea.vmem %s6, %s255
      %p257 = scmp.lt.s32.totalorder %s17, 1
      %s258 = scalar_select %p257, %s17, 1
      %s259 = smul.addr %s258, 32
      %s260 = smul.addr %s259, 8
      %s261 = scalar_lea.vmem %s0, %s260
      %p262 = scmp.lt.s32.totalorder %s17, 1
      %s263 = scalar_select %p262, %s17, 1
      %s264 = smul.addr %s263, 41
      %s265 = smul.addr %s264, 8
      %s266 = scalar_lea.vmem %s1, %s265
      %p267 = scmp.lt.s32.totalorder %s17, 1
      %s268 = scalar_select %p267, %s17, 1
      %s269 = smul.addr %s268, 32
      %s270 = smul.addr %s269, 8
      %s271 = scalar_lea.vmem %s6, %s270
      %v272 = vld [vmem:[%s266] sm:$0xff]
      %v273 = vld [vmem:[%s266 + $0x8] sm:$0xff]
      %v274 = vld [vmem:[%s266 + $0x10] sm:$0xff]
      %v275 = vld [vmem:[%s266 + $0x18] sm:$0xff]
      %v276 = vld [vmem:[%s266 + $0x20] sm:$0xff]
      %v277 = vld [vmem:[%s266 + $0x28] sm:$0xff]
      %v278 = vld [vmem:[%s266 + $0x30] sm:$0xff]
      %v279 = vld [vmem:[%s266 + $0x38] sm:$0xff]
      %v280 = vld [vmem:[%s266 + $0x40] sm:$0xff]
      %v281 = vld [vmem:[%s266 + $0x48] sm:$0xff]
      %v282 = vld [vmem:[%s266 + $0x50] sm:$0xff]
      %v283 = vld [vmem:[%s266 + $0x58] sm:$0xff]
      %v284 = vld [vmem:[%s266 + $0x60] sm:$0xff]
      %v285 = vld [vmem:[%s266 + $0x68] sm:$0xff]
      %v286 = vld [vmem:[%s266 + $0x70] sm:$0xff]
      %v287 = vld [vmem:[%s266 + $0x78] sm:$0xff]
      %v288 = vld [vmem:[%s266 + $0x80] sm:$0xff]
      %v289 = vld [vmem:[%s266 + $0x88] sm:$0xff]
      %v290 = vld [vmem:[%s266 + $0x90] sm:$0xff]
      %v291 = vld [vmem:[%s266 + $0x98] sm:$0xff]
      %v292 = vld [vmem:[%s266 + $0xa0] sm:$0xff]
      %v293 = vld [vmem:[%s266 + $0xa8] sm:$0xff]
      %v294 = vld [vmem:[%s266 + $0xb0] sm:$0xff]
      %v295 = vld [vmem:[%s266 + $0xb8] sm:$0xff]
      %v296 = vld [vmem:[%s266 + $0xc0] sm:$0xff]
      %v297 = vld [vmem:[%s266 + $0xc8] sm:$0xff]
      %v298 = vld [vmem:[%s266 + $0xd0] sm:$0xff]
      %v299 = vld [vmem:[%s266 + $0xd8] sm:$0xff]
      %v300 = vld [vmem:[%s266 + $0xe0] sm:$0xff]
      %v301 = vld [vmem:[%s266 + $0xe8] sm:$0xff]
      %v302 = vld [vmem:[%s266 + $0xf0] sm:$0xff]
      %v303 = vld [vmem:[%s266 + $0xf8] sm:$0xff]
      %v304 = vld [vmem:[%s266 + $0x100] sm:$0xff]
      %v305 = vld [vmem:[%s266 + $0x108] sm:$0xff]
      %v306 = vld [vmem:[%s266 + $0x110] sm:$0xff]
      %v307 = vld [vmem:[%s266 + $0x118] sm:$0xff]
      %v308 = vld [vmem:[%s2] sm:$0xf]
      %v309 = vld [vmem:[%s266 + $0x1] sm:$0xff]
      %v310 = vld [vmem:[%s266 + $0x9] sm:$0xff]
      %v311 = vld [vmem:[%s266 + $0x11] sm:$0xff]
      %v312 = vld [vmem:[%s266 + $0x19] sm:$0xff]
      %v313 = vld [vmem:[%s266 + $0x21] sm:$0xff]
      %v314 = vld [vmem:[%s266 + $0x29] sm:$0xff]
      %v315 = vld [vmem:[%s266 + $0x31] sm:$0xff]
      %v316 = vld [vmem:[%s266 + $0x39] sm:$0xff]
      %v317 = vld [vmem:[%s266 + $0x41] sm:$0xff]
      %v318 = vld [vmem:[%s266 + $0x49] sm:$0xff]
      %v319 = vld [vmem:[%s266 + $0x51] sm:$0xff]
      %v320 = vld [vmem:[%s266 + $0x59] sm:$0xff]
      %v321 = vld [vmem:[%s266 + $0x61] sm:$0xff]
      %v322 = vld [vmem:[%s266 + $0x69] sm:$0xff]
      %v323 = vld [vmem:[%s266 + $0x71] sm:$0xff]
      %v324 = vld [vmem:[%s266 + $0x79] sm:$0xff]
      %v325 = vld [vmem:[%s266 + $0x81] sm:$0xff]
      %v326 = vld [vmem:[%s266 + $0x89] sm:$0xff]
      %v327 = vld [vmem:[%s266 + $0x91] sm:$0xff]
      %v328 = vld [vmem:[%s266 + $0x99] sm:$0xff]
      %v329 = vld [vmem:[%s266 + $0xa1] sm:$0xff]
      %v330 = vld [vmem:[%s266 + $0xa9] sm:$0xff]
      %v331 = vld [vmem:[%s266 + $0xb1] sm:$0xff]
      %v332 = vld [vmem:[%s266 + $0xb9] sm:$0xff]
      %v333 = vld [vmem:[%s266 + $0xc1] sm:$0xff]
      %v334 = vld [vmem:[%s266 + $0xc9] sm:$0xff]
      %v335 = vld [vmem:[%s266 + $0xd1] sm:$0xff]
      %v336 = vld [vmem:[%s266 + $0xd9] sm:$0xff]
      %v337 = vld [vmem:[%s266 + $0xe1] sm:$0xff]
      %v338 = vld [vmem:[%s266 + $0xe9] sm:$0xff]
      %v339 = vld [vmem:[%s266 + $0xf1] sm:$0xff]
      %v340 = vld [vmem:[%s266 + $0xf9] sm:$0xff]
      %v341 = vld [vmem:[%s266 + $0x101] sm:$0xff]
      %v342 = vld [vmem:[%s266 + $0x109] sm:$0xff]
      %v343 = vld [vmem:[%s266 + $0x111] sm:$0xff]
      %v344 = vld [vmem:[%s266 + $0x119] sm:$0xff]
      %v345 = vld [vmem:[%s2 + $0x4] sm:$0xf]
      %vm346 = vcmask 31744
      %v348 = vsel %vm346, %v309, 0
      %v351 = vsel %vm346, %v310, 0
      %v354 = vsel %vm346, %v311, 0
      %v357 = vsel %vm346, %v312, 0
      %v360 = vsel %vm346, %v313, 0
      %v363 = vsel %vm346, %v314, 0
      %v366 = vsel %vm346, %v315, 0
      %v369 = vsel %vm346, %v316, 0
      %v372 = vsel %vm346, %v317, 0
      %v375 = vsel %vm346, %v318, 0
      %v378 = vsel %vm346, %v319, 0
      %v381 = vsel %vm346, %v320, 0
      %v384 = vsel %vm346, %v321, 0
      %v387 = vsel %vm346, %v322, 0
      %v390 = vsel %vm346, %v323, 0
      %v393 = vsel %vm346, %v324, 0
      %v396 = vsel %vm346, %v325, 0
      %v399 = vsel %vm346, %v326, 0
      %v402 = vsel %vm346, %v327, 0
      %v405 = vsel %vm346, %v328, 0
      %v408 = vsel %vm346, %v329, 0
      %v411 = vsel %vm346, %v330, 0
      %v414 = vsel %vm346, %v331, 0
      %v417 = vsel %vm346, %v332, 0
      %v420 = vsel %vm346, %v333, 0
      %v423 = vsel %vm346, %v334, 0
      %v426 = vsel %vm346, %v335, 0
      %v429 = vsel %vm346, %v336, 0
      %v432 = vsel %vm346, %v337, 0
      %v435 = vsel %vm346, %v338, 0
      %v438 = vsel %vm346, %v339, 0
      %v441 = vsel %vm346, %v340, 0
      %v444 = vsel %vm346, %v341, 0
      %v447 = vsel %vm346, %v342, 0
      %v450 = vsel %vm346, %v343, 0
      %v453 = vsel %vm346, %v344, 0
      %vm455 = vcmask 1043456
      %v457 = vsel %vm455, %v345, 0
      %459 = vmatpush.msra.mxu0 0.0
      %460 = vmatpush.msra.mxu0 0.0
      %461 = vmatpush.msra.mxu0 0.0
      %462 = vmatpush.msra.mxu0 0.0
      %463 = vmatpush.msra.mxu0 0.0
      %464 = vmatpush.msra.mxu0 0.0
      %465 = vmatpush.msra.mxu0 0.0
      %466 = vmatpush.msra.mxu0 0.0
      %467 = vmatpush.msra.mxu0 0.0
      %468 = vmatpush.msra.mxu0 0.0
      %469 = vmatpush.msra.mxu0 0.0
      %470 = vmatpush.msra.mxu0 0.0
      %471 = vmatpush.msra.mxu0 0.0
      %472 = vmatpush.msra.mxu0 0.0
      %473 = vmatpush.msra.mxu0 0.0
      %474 = vmatpush.msra.mxu0 %v457
      %475 = vmatmul.f32.gmra.mxu0 %v348
      %v476 = vpop.f32.mrf.mxu0
      %v477 = vadd.f32 0.0, %v476
      %478 = vmatmul.f32.gmra.mxu0 %v351
      %v479 = vpop.f32.mrf.mxu0
      %v480 = vadd.f32 0.0, %v479
      %481 = vmatmul.f32.gmra.mxu0 %v354
      %v482 = vpop.f32.mrf.mxu0
      %v483 = vadd.f32 0.0, %v482
      %484 = vmatmul.f32.gmra.mxu0 %v357
      %v485 = vpop.f32.mrf.mxu0
      %v486 = vadd.f32 0.0, %v485
      %487 = vmatmul.f32.gmra.mxu0 %v360
      %v488 = vpop.f32.mrf.mxu0
      %v489 = vadd.f32 0.0, %v488
      %490 = vmatmul.f32.gmra.mxu0 %v363
      %v491 = vpop.f32.mrf.mxu0
      %v492 = vadd.f32 0.0, %v491
      %493 = vmatmul.f32.gmra.mxu0 %v366
      %v494 = vpop.f32.mrf.mxu0
      %v495 = vadd.f32 0.0, %v494
      %496 = vmatmul.f32.gmra.mxu0 %v369
      %v497 = vpop.f32.mrf.mxu0
      %v498 = vadd.f32 0.0, %v497
      %499 = vmatmul.f32.gmra.mxu0 %v372
      %v500 = vpop.f32.mrf.mxu0
      %v501 = vadd.f32 0.0, %v500
      %502 = vmatmul.f32.gmra.mxu0 %v375
      %v503 = vpop.f32.mrf.mxu0
      %v504 = vadd.f32 0.0, %v503
      %505 = vmatmul.f32.gmra.mxu0 %v378
      %v506 = vpop.f32.mrf.mxu0
      %v507 = vadd.f32 0.0, %v506
      %508 = vmatmul.f32.gmra.mxu0 %v381
      %v509 = vpop.f32.mrf.mxu0
      %v510 = vadd.f32 0.0, %v509
      %511 = vmatmul.f32.gmra.mxu0 %v384
      %v512 = vpop.f32.mrf.mxu0
      %v513 = vadd.f32 0.0, %v512
      %514 = vmatmul.f32.gmra.mxu0 %v387
      %v515 = vpop.f32.mrf.mxu0
      %v516 = vadd.f32 0.0, %v515
      %517 = vmatmul.f32.gmra.mxu0 %v390
      %v518 = vpop.f32.mrf.mxu0
      %v519 = vadd.f32 0.0, %v518
      %520 = vmatmul.f32.gmra.mxu0 %v393
      %v521 = vpop.f32.mrf.mxu0
      %v522 = vadd.f32 0.0, %v521
      %523 = vmatmul.f32.gmra.mxu0 %v396
      %v524 = vpop.f32.mrf.mxu0
      %v525 = vadd.f32 0.0, %v524
      %526 = vmatmul.f32.gmra.mxu0 %v399
      %v527 = vpop.f32.mrf.mxu0
      %v528 = vadd.f32 0.0, %v527
      %529 = vmatmul.f32.gmra.mxu0 %v402
      %v530 = vpop.f32.mrf.mxu0
      %v531 = vadd.f32 0.0, %v530
      %532 = vmatmul.f32.gmra.mxu0 %v405
      %v533 = vpop.f32.mrf.mxu0
      %v534 = vadd.f32 0.0, %v533
      %535 = vmatmul.f32.gmra.mxu0 %v408
      %v536 = vpop.f32.mrf.mxu0
      %v537 = vadd.f32 0.0, %v536
      %538 = vmatmul.f32.gmra.mxu0 %v411
      %v539 = vpop.f32.mrf.mxu0
      %v540 = vadd.f32 0.0, %v539
      %541 = vmatmul.f32.gmra.mxu0 %v414
      %v542 = vpop.f32.mrf.mxu0
      %v543 = vadd.f32 0.0, %v542
      %544 = vmatmul.f32.gmra.mxu0 %v417
      %v545 = vpop.f32.mrf.mxu0
      %v546 = vadd.f32 0.0, %v545
      %547 = vmatmul.f32.gmra.mxu0 %v420
      %v548 = vpop.f32.mrf.mxu0
      %v549 = vadd.f32 0.0, %v548
      %550 = vmatmul.f32.gmra.mxu0 %v423
      %v551 = vpop.f32.mrf.mxu0
      %v552 = vadd.f32 0.0, %v551
      %553 = vmatmul.f32.gmra.mxu0 %v426
      %v554 = vpop.f32.mrf.mxu0
      %v555 = vadd.f32 0.0, %v554
      %556 = vmatmul.f32.gmra.mxu0 %v429
      %v557 = vpop.f32.mrf.mxu0
      %v558 = vadd.f32 0.0, %v557
      %559 = vmatmul.f32.gmra.mxu0 %v432
      %v560 = vpop.f32.mrf.mxu0
      %v561 = vadd.f32 0.0, %v560
      %562 = vmatmul.f32.gmra.mxu0 %v435
      %v563 = vpop.f32.mrf.mxu0
      %v564 = vadd.f32 0.0, %v563
      %565 = vmatmul.f32.gmra.mxu0 %v438
      %v566 = vpop.f32.mrf.mxu0
      %v567 = vadd.f32 0.0, %v566
      %568 = vmatmul.f32.gmra.mxu0 %v441
      %v569 = vpop.f32.mrf.mxu0
      %v570 = vadd.f32 0.0, %v569
      %571 = vmatmul.f32.gmra.mxu0 %v444
      %v572 = vpop.f32.mrf.mxu0
      %v573 = vadd.f32 0.0, %v572
      %574 = vmatmul.f32.gmra.mxu0 %v447
      %v575 = vpop.f32.mrf.mxu0
      %v576 = vadd.f32 0.0, %v575
      %577 = vmatmul.f32.gmra.mxu0 %v450
      %v578 = vpop.f32.mrf.mxu0
      %v579 = vadd.f32 0.0, %v578
      %580 = vmatmul.f32.gmra.mxu0 %v453
      %v581 = vpop.f32.mrf.mxu0
      %v582 = vadd.f32 0.0, %v581
      %583 = vdwg.mxu0
      %v585 = vsel %vm346, %v272, 0
      %v588 = vsel %vm346, %v273, 0
      %v591 = vsel %vm346, %v274, 0
      %v594 = vsel %vm346, %v275, 0
      %v597 = vsel %vm346, %v276, 0
      %v600 = vsel %vm346, %v277, 0
      %v603 = vsel %vm346, %v278, 0
      %v606 = vsel %vm346, %v279, 0
      %v609 = vsel %vm346, %v280, 0
      %v612 = vsel %vm346, %v281, 0
      %v615 = vsel %vm346, %v282, 0
      %v618 = vsel %vm346, %v283, 0
      %v621 = vsel %vm346, %v284, 0
      %v624 = vsel %vm346, %v285, 0
      %v627 = vsel %vm346, %v286, 0
      %v630 = vsel %vm346, %v287, 0
      %v633 = vsel %vm346, %v288, 0
      %v636 = vsel %vm346, %v289, 0
      %v639 = vsel %vm346, %v290, 0
      %v642 = vsel %vm346, %v291, 0
      %v645 = vsel %vm346, %v292, 0
      %v648 = vsel %vm346, %v293, 0
      %v651 = vsel %vm346, %v294, 0
      %v654 = vsel %vm346, %v295, 0
      %v657 = vsel %vm346, %v296, 0
      %v660 = vsel %vm346, %v297, 0
      %v663 = vsel %vm346, %v298, 0
      %v666 = vsel %vm346, %v299, 0
      %v669 = vsel %vm346, %v300, 0
      %v672 = vsel %vm346, %v301, 0
      %v675 = vsel %vm346, %v302, 0
      %v678 = vsel %vm346, %v303, 0
      %v681 = vsel %vm346, %v304, 0
      %v684 = vsel %vm346, %v305, 0
      %v687 = vsel %vm346, %v306, 0
      %v690 = vsel %vm346, %v307, 0
      %v693 = vsel %vm455, %v308, 0
      %695 = vmatpush.msra.mxu0 0.0
      %696 = vmatpush.msra.mxu0 0.0
      %697 = vmatpush.msra.mxu0 0.0
      %698 = vmatpush.msra.mxu0 0.0
      %699 = vmatpush.msra.mxu0 0.0
      %700 = vmatpush.msra.mxu0 0.0
      %701 = vmatpush.msra.mxu0 0.0
      %702 = vmatpush.msra.mxu0 0.0
      %703 = vmatpush.msra.mxu0 0.0
      %704 = vmatpush.msra.mxu0 0.0
      %705 = vmatpush.msra.mxu0 0.0
      %706 = vmatpush.msra.mxu0 0.0
      %707 = vmatpush.msra.mxu0 0.0
      %708 = vmatpush.msra.mxu0 0.0
      %709 = vmatpush.msra.mxu0 0.0
      %710 = vmatpush.msra.mxu0 %v693
      %711 = vmatmul.f32.gmra.mxu0 %v585
      %v712 = vpop.f32.mrf.mxu0
      %v713 = vadd.f32 %v477, %v712
      %714 = vmatmul.f32.gmra.mxu0 %v588
      %v715 = vpop.f32.mrf.mxu0
      %v716 = vadd.f32 %v480, %v715
      %717 = vmatmul.f32.gmra.mxu0 %v591
      %v718 = vpop.f32.mrf.mxu0
      %v719 = vadd.f32 %v483, %v718
      %720 = vmatmul.f32.gmra.mxu0 %v594
      %v721 = vpop.f32.mrf.mxu0
      %v722 = vadd.f32 %v486, %v721
      %723 = vmatmul.f32.gmra.mxu0 %v597
      %v724 = vpop.f32.mrf.mxu0
      %v725 = vadd.f32 %v489, %v724
      %726 = vmatmul.f32.gmra.mxu0 %v600
      %v727 = vpop.f32.mrf.mxu0
      %v728 = vadd.f32 %v492, %v727
      %729 = vmatmul.f32.gmra.mxu0 %v603
      %v730 = vpop.f32.mrf.mxu0
      %v731 = vadd.f32 %v495, %v730
      %732 = vmatmul.f32.gmra.mxu0 %v606
      %v733 = vpop.f32.mrf.mxu0
      %v734 = vadd.f32 %v498, %v733
      %735 = vmatmul.f32.gmra.mxu0 %v609
      %v736 = vpop.f32.mrf.mxu0
      %v737 = vadd.f32 %v501, %v736
      %738 = vmatmul.f32.gmra.mxu0 %v612
      %v739 = vpop.f32.mrf.mxu0
      %v740 = vadd.f32 %v504, %v739
      %741 = vmatmul.f32.gmra.mxu0 %v615
      %v742 = vpop.f32.mrf.mxu0
      %v743 = vadd.f32 %v507, %v742
      %744 = vmatmul.f32.gmra.mxu0 %v618
      %v745 = vpop.f32.mrf.mxu0
      %v746 = vadd.f32 %v510, %v745
      %747 = vmatmul.f32.gmra.mxu0 %v621
      %v748 = vpop.f32.mrf.mxu0
      %v749 = vadd.f32 %v513, %v748
      %750 = vmatmul.f32.gmra.mxu0 %v624
      %v751 = vpop.f32.mrf.mxu0
      %v752 = vadd.f32 %v516, %v751
      %753 = vmatmul.f32.gmra.mxu0 %v627
      %v754 = vpop.f32.mrf.mxu0
      %v755 = vadd.f32 %v519, %v754
      %756 = vmatmul.f32.gmra.mxu0 %v630
      %v757 = vpop.f32.mrf.mxu0
      %v758 = vadd.f32 %v522, %v757
      %759 = vmatmul.f32.gmra.mxu0 %v633
      %v760 = vpop.f32.mrf.mxu0
      %v761 = vadd.f32 %v525, %v760
      %762 = vmatmul.f32.gmra.mxu0 %v636
      %v763 = vpop.f32.mrf.mxu0
      %v764 = vadd.f32 %v528, %v763
      %765 = vmatmul.f32.gmra.mxu0 %v639
      %v766 = vpop.f32.mrf.mxu0
      %v767 = vadd.f32 %v531, %v766
      %768 = vmatmul.f32.gmra.mxu0 %v642
      %v769 = vpop.f32.mrf.mxu0
      %v770 = vadd.f32 %v534, %v769
      %771 = vmatmul.f32.gmra.mxu0 %v645
      %v772 = vpop.f32.mrf.mxu0
      %v773 = vadd.f32 %v537, %v772
      %774 = vmatmul.f32.gmra.mxu0 %v648
      %v775 = vpop.f32.mrf.mxu0
      %v776 = vadd.f32 %v540, %v775
      %777 = vmatmul.f32.gmra.mxu0 %v651
      %v778 = vpop.f32.mrf.mxu0
      %v779 = vadd.f32 %v543, %v778
      %780 = vmatmul.f32.gmra.mxu0 %v654
      %v781 = vpop.f32.mrf.mxu0
      %v782 = vadd.f32 %v546, %v781
      %783 = vmatmul.f32.gmra.mxu0 %v657
      %v784 = vpop.f32.mrf.mxu0
      %v785 = vadd.f32 %v549, %v784
      %786 = vmatmul.f32.gmra.mxu0 %v660
      %v787 = vpop.f32.mrf.mxu0
      %v788 = vadd.f32 %v552, %v787
      %789 = vmatmul.f32.gmra.mxu0 %v663
      %v790 = vpop.f32.mrf.mxu0
      %v791 = vadd.f32 %v555, %v790
      %792 = vmatmul.f32.gmra.mxu0 %v666
      %v793 = vpop.f32.mrf.mxu0
      %v794 = vadd.f32 %v558, %v793
      %795 = vmatmul.f32.gmra.mxu0 %v669
      %v796 = vpop.f32.mrf.mxu0
      %v797 = vadd.f32 %v561, %v796
      %798 = vmatmul.f32.gmra.mxu0 %v672
      %v799 = vpop.f32.mrf.mxu0
      %v800 = vadd.f32 %v564, %v799
      %801 = vmatmul.f32.gmra.mxu0 %v675
      %v802 = vpop.f32.mrf.mxu0
      %v803 = vadd.f32 %v567, %v802
      %804 = vmatmul.f32.gmra.mxu0 %v678
      %v805 = vpop.f32.mrf.mxu0
      %v806 = vadd.f32 %v570, %v805
      %807 = vmatmul.f32.gmra.mxu0 %v681
      %v808 = vpop.f32.mrf.mxu0
      %v809 = vadd.f32 %v573, %v808
      %810 = vmatmul.f32.gmra.mxu0 %v684
      %v811 = vpop.f32.mrf.mxu0
      %v812 = vadd.f32 %v576, %v811
      %813 = vmatmul.f32.gmra.mxu0 %v687
      %v814 = vpop.f32.mrf.mxu0
      %v815 = vadd.f32 %v579, %v814
      %816 = vmatmul.f32.gmra.mxu0 %v690
      %v817 = vpop.f32.mrf.mxu0
      %v818 = vadd.f32 %v582, %v817
      %819 = vdwg.mxu0
      %v820 = vld [vmem:[%s266 + $0x2] sm:$0xff]
      %v821 = vld [vmem:[%s266 + $0xa] sm:$0xff]
      %v822 = vld [vmem:[%s266 + $0x12] sm:$0xff]
      %v823 = vld [vmem:[%s266 + $0x1a] sm:$0xff]
      %v824 = vld [vmem:[%s266 + $0x22] sm:$0xff]
      %v825 = vld [vmem:[%s266 + $0x2a] sm:$0xff]
      %v826 = vld [vmem:[%s266 + $0x32] sm:$0xff]
      %v827 = vld [vmem:[%s266 + $0x3a] sm:$0xff]
      %v828 = vld [vmem:[%s266 + $0x42] sm:$0xff]
      %v829 = vld [vmem:[%s266 + $0x4a] sm:$0xff]
      %v830 = vld [vmem:[%s266 + $0x52] sm:$0xff]
      %v831 = vld [vmem:[%s266 + $0x5a] sm:$0xff]
      %v832 = vld [vmem:[%s266 + $0x62] sm:$0xff]
      %v833 = vld [vmem:[%s266 + $0x6a] sm:$0xff]
      %v834 = vld [vmem:[%s266 + $0x72] sm:$0xff]
      %v835 = vld [vmem:[%s266 + $0x7a] sm:$0xff]
      %v836 = vld [vmem:[%s266 + $0x82] sm:$0xff]
      %v837 = vld [vmem:[%s266 + $0x8a] sm:$0xff]
      %v838 = vld [vmem:[%s266 + $0x92] sm:$0xff]
      %v839 = vld [vmem:[%s266 + $0x9a] sm:$0xff]
      %v840 = vld [vmem:[%s266 + $0xa2] sm:$0xff]
      %v841 = vld [vmem:[%s266 + $0xaa] sm:$0xff]
      %v842 = vld [vmem:[%s266 + $0xb2] sm:$0xff]
      %v843 = vld [vmem:[%s266 + $0xba] sm:$0xff]
      %v844 = vld [vmem:[%s266 + $0xc2] sm:$0xff]
      %v845 = vld [vmem:[%s266 + $0xca] sm:$0xff]
      %v846 = vld [vmem:[%s266 + $0xd2] sm:$0xff]
      %v847 = vld [vmem:[%s266 + $0xda] sm:$0xff]
      %v848 = vld [vmem:[%s266 + $0xe2] sm:$0xff]
      %v849 = vld [vmem:[%s266 + $0xea] sm:$0xff]
      %v850 = vld [vmem:[%s266 + $0xf2] sm:$0xff]
      %v851 = vld [vmem:[%s266 + $0xfa] sm:$0xff]
      %v852 = vld [vmem:[%s266 + $0x102] sm:$0xff]
      %v853 = vld [vmem:[%s266 + $0x10a] sm:$0xff]
      %v854 = vld [vmem:[%s266 + $0x112] sm:$0xff]
      %v855 = vld [vmem:[%s266 + $0x11a] sm:$0xff]
      %v856 = vld [vmem:[%s2 + $0x8] sm:$0xf]
      %v858 = vsel %vm346, %v820, 0
      %v861 = vsel %vm346, %v821, 0
      %v864 = vsel %vm346, %v822, 0
      %v867 = vsel %vm346, %v823, 0
      %v870 = vsel %vm346, %v824, 0
      %v873 = vsel %vm346, %v825, 0
      %v876 = vsel %vm346, %v826, 0
      %v879 = vsel %vm346, %v827, 0
      %v882 = vsel %vm346, %v828, 0
      %v885 = vsel %vm346, %v829, 0
      %v888 = vsel %vm346, %v830, 0
      %v891 = vsel %vm346, %v831, 0
      %v894 = vsel %vm346, %v832, 0
      %v897 = vsel %vm346, %v833, 0
      %v900 = vsel %vm346, %v834, 0
      %v903 = vsel %vm346, %v835, 0
      %v906 = vsel %vm346, %v836, 0
      %v909 = vsel %vm346, %v837, 0
      %v912 = vsel %vm346, %v838, 0
      %v915 = vsel %vm346, %v839, 0
      %v918 = vsel %vm346, %v840, 0
      %v921 = vsel %vm346, %v841, 0
      %v924 = vsel %vm346, %v842, 0
      %v927 = vsel %vm346, %v843, 0
      %v930 = vsel %vm346, %v844, 0
      %v933 = vsel %vm346, %v845, 0
      %v936 = vsel %vm346, %v846, 0
      %v939 = vsel %vm346, %v847, 0
      %v942 = vsel %vm346, %v848, 0
      %v945 = vsel %vm346, %v849, 0
      %v948 = vsel %vm346, %v850, 0
      %v951 = vsel %vm346, %v851, 0
      %v954 = vsel %vm346, %v852, 0
      %v957 = vsel %vm346, %v853, 0
      %v960 = vsel %vm346, %v854, 0
      %v963 = vsel %vm346, %v855, 0
      %v966 = vsel %vm455, %v856, 0
      %968 = vmatpush.msra.mxu0 0.0
      %969 = vmatpush.msra.mxu0 0.0
      %970 = vmatpush.msra.mxu0 0.0
      %971 = vmatpush.msra.mxu0 0.0
      %972 = vmatpush.msra.mxu0 0.0
      %973 = vmatpush.msra.mxu0 0.0
      %974 = vmatpush.msra.mxu0 0.0
      %975 = vmatpush.msra.mxu0 0.0
      %976 = vmatpush.msra.mxu0 0.0
      %977 = vmatpush.msra.mxu0 0.0
      %978 = vmatpush.msra.mxu0 0.0
      %979 = vmatpush.msra.mxu0 0.0
      %980 = vmatpush.msra.mxu0 0.0
      %981 = vmatpush.msra.mxu0 0.0
      %982 = vmatpush.msra.mxu0 0.0
      %983 = vmatpush.msra.mxu0 %v966
      %984 = vmatmul.f32.gmra.mxu0 %v858
      %v985 = vpop.f32.mrf.mxu0
      %v986 = vadd.f32 0.0, %v985
      %987 = vmatmul.f32.gmra.mxu0 %v861
      %v988 = vpop.f32.mrf.mxu0
      %v989 = vadd.f32 0.0, %v988
      %990 = vmatmul.f32.gmra.mxu0 %v864
      %v991 = vpop.f32.mrf.mxu0
      %v992 = vadd.f32 0.0, %v991
      %993 = vmatmul.f32.gmra.mxu0 %v867
      %v994 = vpop.f32.mrf.mxu0
      %v995 = vadd.f32 0.0, %v994
      %996 = vmatmul.f32.gmra.mxu0 %v870
      %v997 = vpop.f32.mrf.mxu0
      %v998 = vadd.f32 0.0, %v997
      %999 = vmatmul.f32.gmra.mxu0 %v873
      %v1000 = vpop.f32.mrf.mxu0
      %v1001 = vadd.f32 0.0, %v1000
      %1002 = vmatmul.f32.gmra.mxu0 %v876
      %v1003 = vpop.f32.mrf.mxu0
      %v1004 = vadd.f32 0.0, %v1003
      %1005 = vmatmul.f32.gmra.mxu0 %v879
      %v1006 = vpop.f32.mrf.mxu0
      %v1007 = vadd.f32 0.0, %v1006
      %1008 = vmatmul.f32.gmra.mxu0 %v882
      %v1009 = vpop.f32.mrf.mxu0
      %v1010 = vadd.f32 0.0, %v1009
      %1011 = vmatmul.f32.gmra.mxu0 %v885
      %v1012 = vpop.f32.mrf.mxu0
      %v1013 = vadd.f32 0.0, %v1012
      %1014 = vmatmul.f32.gmra.mxu0 %v888
      %v1015 = vpop.f32.mrf.mxu0
      %v1016 = vadd.f32 0.0, %v1015
      %1017 = vmatmul.f32.gmra.mxu0 %v891
      %v1018 = vpop.f32.mrf.mxu0
      %v1019 = vadd.f32 0.0, %v1018
      %1020 = vmatmul.f32.gmra.mxu0 %v894
      %v1021 = vpop.f32.mrf.mxu0
      %v1022 = vadd.f32 0.0, %v1021
      %1023 = vmatmul.f32.gmra.mxu0 %v897
      %v1024 = vpop.f32.mrf.mxu0
      %v1025 = vadd.f32 0.0, %v1024
      %1026 = vmatmul.f32.gmra.mxu0 %v900
      %v1027 = vpop.f32.mrf.mxu0
      %v1028 = vadd.f32 0.0, %v1027
      %1029 = vmatmul.f32.gmra.mxu0 %v903
      %v1030 = vpop.f32.mrf.mxu0
      %v1031 = vadd.f32 0.0, %v1030
      %1032 = vmatmul.f32.gmra.mxu0 %v906
      %v1033 = vpop.f32.mrf.mxu0
      %v1034 = vadd.f32 0.0, %v1033
      %1035 = vmatmul.f32.gmra.mxu0 %v909
      %v1036 = vpop.f32.mrf.mxu0
      %v1037 = vadd.f32 0.0, %v1036
      %1038 = vmatmul.f32.gmra.mxu0 %v912
      %v1039 = vpop.f32.mrf.mxu0
      %v1040 = vadd.f32 0.0, %v1039
      %1041 = vmatmul.f32.gmra.mxu0 %v915
      %v1042 = vpop.f32.mrf.mxu0
      %v1043 = vadd.f32 0.0, %v1042
      %1044 = vmatmul.f32.gmra.mxu0 %v918
      %v1045 = vpop.f32.mrf.mxu0
      %v1046 = vadd.f32 0.0, %v1045
      %1047 = vmatmul.f32.gmra.mxu0 %v921
      %v1048 = vpop.f32.mrf.mxu0
      %v1049 = vadd.f32 0.0, %v1048
      %1050 = vmatmul.f32.gmra.mxu0 %v924
      %v1051 = vpop.f32.mrf.mxu0
      %v1052 = vadd.f32 0.0, %v1051
      %1053 = vmatmul.f32.gmra.mxu0 %v927
      %v1054 = vpop.f32.mrf.mxu0
      %v1055 = vadd.f32 0.0, %v1054
      %1056 = vmatmul.f32.gmra.mxu0 %v930
      %v1057 = vpop.f32.mrf.mxu0
      %v1058 = vadd.f32 0.0, %v1057
      %1059 = vmatmul.f32.gmra.mxu0 %v933
      %v1060 = vpop.f32.mrf.mxu0
      %v1061 = vadd.f32 0.0, %v1060
      %1062 = vmatmul.f32.gmra.mxu0 %v936
      %v1063 = vpop.f32.mrf.mxu0
      %v1064 = vadd.f32 0.0, %v1063
      %1065 = vmatmul.f32.gmra.mxu0 %v939
      %v1066 = vpop.f32.mrf.mxu0
      %v1067 = vadd.f32 0.0, %v1066
      %1068 = vmatmul.f32.gmra.mxu0 %v942
      %v1069 = vpop.f32.mrf.mxu0
      %v1070 = vadd.f32 0.0, %v1069
      %1071 = vmatmul.f32.gmra.mxu0 %v945
      %v1072 = vpop.f32.mrf.mxu0
      %v1073 = vadd.f32 0.0, %v1072
      %1074 = vmatmul.f32.gmra.mxu0 %v948
      %v1075 = vpop.f32.mrf.mxu0
      %v1076 = vadd.f32 0.0, %v1075
      %1077 = vmatmul.f32.gmra.mxu0 %v951
      %v1078 = vpop.f32.mrf.mxu0
      %v1079 = vadd.f32 0.0, %v1078
      %1080 = vmatmul.f32.gmra.mxu0 %v954
      %v1081 = vpop.f32.mrf.mxu0
      %v1082 = vadd.f32 0.0, %v1081
      %1083 = vmatmul.f32.gmra.mxu0 %v957
      %v1084 = vpop.f32.mrf.mxu0
      %v1085 = vadd.f32 0.0, %v1084
      %1086 = vmatmul.f32.gmra.mxu0 %v960
      %v1087 = vpop.f32.mrf.mxu0
      %v1088 = vadd.f32 0.0, %v1087
      %1089 = vmatmul.f32.gmra.mxu0 %v963
      %v1090 = vpop.f32.mrf.mxu0
      %v1091 = vadd.f32 0.0, %v1090
      %1092 = vdwg.mxu0
      %v1093 = vadd.f32 %v713, %v986
      %v1094 = vadd.f32 %v716, %v989
      %v1095 = vadd.f32 %v719, %v992
      %v1096 = vadd.f32 %v722, %v995
      %v1097 = vadd.f32 %v725, %v998
      %v1098 = vadd.f32 %v728, %v1001
      %v1099 = vadd.f32 %v731, %v1004
      %v1100 = vadd.f32 %v734, %v1007
      %v1101 = vadd.f32 %v737, %v1010
      %v1102 = vadd.f32 %v740, %v1013
      %v1103 = vadd.f32 %v743, %v1016
      %v1104 = vadd.f32 %v746, %v1019
      %v1105 = vadd.f32 %v749, %v1022
      %v1106 = vadd.f32 %v752, %v1025
      %v1107 = vadd.f32 %v755, %v1028
      %v1108 = vadd.f32 %v758, %v1031
      %v1109 = vadd.f32 %v761, %v1034
      %v1110 = vadd.f32 %v764, %v1037
      %v1111 = vadd.f32 %v767, %v1040
      %v1112 = vadd.f32 %v770, %v1043
      %v1113 = vadd.f32 %v773, %v1046
      %v1114 = vadd.f32 %v776, %v1049
      %v1115 = vadd.f32 %v779, %v1052
      %v1116 = vadd.f32 %v782, %v1055
      %v1117 = vadd.f32 %v785, %v1058
      %v1118 = vadd.f32 %v788, %v1061
      %v1119 = vadd.f32 %v791, %v1064
      %v1120 = vadd.f32 %v794, %v1067
      %v1121 = vadd.f32 %v797, %v1070
      %v1122 = vadd.f32 %v800, %v1073
      %v1123 = vadd.f32 %v803, %v1076
      %v1124 = vadd.f32 %v806, %v1079
      %v1125 = vadd.f32 %v809, %v1082
      %v1126 = vadd.f32 %v812, %v1085
      %v1127 = vadd.f32 %v815, %v1088
      %v1128 = vadd.f32 %v818, %v1091
      %v1129 = vld [vmem:[%s266 + $0x12] sm:$0xff]
      %v1130 = vld [vmem:[%s266 + $0x1a] sm:$0xff]
      %v1131 = vld [vmem:[%s266 + $0x22] sm:$0xff]
      %v1132 = vld [vmem:[%s266 + $0x2a] sm:$0xff]
      %v1133 = vld [vmem:[%s266 + $0x32] sm:$0xff]
      %v1134 = vld [vmem:[%s266 + $0x3a] sm:$0xff]
      %v1135 = vld [vmem:[%s266 + $0x42] sm:$0xff]
      %v1136 = vld [vmem:[%s266 + $0x4a] sm:$0xff]
      %v1137 = vld [vmem:[%s266 + $0x52] sm:$0xff]
      %v1138 = vld [vmem:[%s266 + $0x5a] sm:$0xff]
      %v1139 = vld [vmem:[%s266 + $0x62] sm:$0xff]
      %v1140 = vld [vmem:[%s266 + $0x6a] sm:$0xff]
      %v1141 = vld [vmem:[%s266 + $0x72] sm:$0xff]
      %v1142 = vld [vmem:[%s266 + $0x7a] sm:$0xff]
      %v1143 = vld [vmem:[%s266 + $0x82] sm:$0xff]
      %v1144 = vld [vmem:[%s266 + $0x8a] sm:$0xff]
      %v1145 = vld [vmem:[%s266 + $0x92] sm:$0xff]
      %v1146 = vld [vmem:[%s266 + $0x9a] sm:$0xff]
      %v1147 = vld [vmem:[%s266 + $0xa2] sm:$0xff]
      %v1148 = vld [vmem:[%s266 + $0xaa] sm:$0xff]
      %v1149 = vld [vmem:[%s266 + $0xb2] sm:$0xff]
      %v1150 = vld [vmem:[%s266 + $0xba] sm:$0xff]
      %v1151 = vld [vmem:[%s266 + $0xc2] sm:$0xff]
      %v1152 = vld [vmem:[%s266 + $0xca] sm:$0xff]
      %v1153 = vld [vmem:[%s266 + $0xd2] sm:$0xff]
      %v1154 = vld [vmem:[%s266 + $0xda] sm:$0xff]
      %v1155 = vld [vmem:[%s266 + $0xe2] sm:$0xff]
      %v1156 = vld [vmem:[%s266 + $0xea] sm:$0xff]
      %v1157 = vld [vmem:[%s266 + $0xf2] sm:$0xff]
      %v1158 = vld [vmem:[%s266 + $0xfa] sm:$0xff]
      %v1159 = vld [vmem:[%s266 + $0x102] sm:$0xff]
      %v1160 = vld [vmem:[%s266 + $0x10a] sm:$0xff]
      %v1161 = vld [vmem:[%s266 + $0x112] sm:$0xff]
      %v1162 = vld [vmem:[%s266 + $0x11a] sm:$0xff]
      %v1163 = vld [vmem:[%s266 + $0x122] sm:$0xff]
      %v1164 = vld [vmem:[%s266 + $0x12a] sm:$0xff]
      %v1165 = vld [vmem:[%s2 + $0xc] sm:$0xf]
      %v1167 = vsel %vm346, %v1129, 0
      %v1170 = vsel %vm346, %v1130, 0
      %v1173 = vsel %vm346, %v1131, 0
      %v1176 = vsel %vm346, %v1132, 0
      %v1179 = vsel %vm346, %v1133, 0
      %v1182 = vsel %vm346, %v1134, 0
      %v1185 = vsel %vm346, %v1135, 0
      %v1188 = vsel %vm346, %v1136, 0
      %v1191 = vsel %vm346, %v1137, 0
      %v1194 = vsel %vm346, %v1138, 0
      %v1197 = vsel %vm346, %v1139, 0
      %v1200 = vsel %vm346, %v1140, 0
      %v1203 = vsel %vm346, %v1141, 0
      %v1206 = vsel %vm346, %v1142, 0
      %v1209 = vsel %vm346, %v1143, 0
      %v1212 = vsel %vm346, %v1144, 0
      %v1215 = vsel %vm346, %v1145, 0
      %v1218 = vsel %vm346, %v1146, 0
      %v1221 = vsel %vm346, %v1147, 0
      %v1224 = vsel %vm346, %v1148, 0
      %v1227 = vsel %vm346, %v1149, 0
      %v1230 = vsel %vm346, %v1150, 0
      %v1233 = vsel %vm346, %v1151, 0
      %v1236 = vsel %vm346, %v1152, 0
      %v1239 = vsel %vm346, %v1153, 0
      %v1242 = vsel %vm346, %v1154, 0
      %v1245 = vsel %vm346, %v1155, 0
      %v1248 = vsel %vm346, %v1156, 0
      %v1251 = vsel %vm346, %v1157, 0
      %v1254 = vsel %vm346, %v1158, 0
      %v1257 = vsel %vm346, %v1159, 0
      %v1260 = vsel %vm346, %v1160, 0
      %v1263 = vsel %vm346, %v1161, 0
      %v1266 = vsel %vm346, %v1162, 0
      %v1269 = vsel %vm346, %v1163, 0
      %v1272 = vsel %vm346, %v1164, 0
      %v1275 = vsel %vm455, %v1165, 0
      %1277 = vmatpush.msra.mxu0 0.0
      %1278 = vmatpush.msra.mxu0 0.0
      %1279 = vmatpush.msra.mxu0 0.0
      %1280 = vmatpush.msra.mxu0 0.0
      %1281 = vmatpush.msra.mxu0 0.0
      %1282 = vmatpush.msra.mxu0 0.0
      %1283 = vmatpush.msra.mxu0 0.0
      %1284 = vmatpush.msra.mxu0 0.0
      %1285 = vmatpush.msra.mxu0 0.0
      %1286 = vmatpush.msra.mxu0 0.0
      %1287 = vmatpush.msra.mxu0 0.0
      %1288 = vmatpush.msra.mxu0 0.0
      %1289 = vmatpush.msra.mxu0 0.0
      %1290 = vmatpush.msra.mxu0 0.0
      %1291 = vmatpush.msra.mxu0 0.0
      %1292 = vmatpush.msra.mxu0 %v1275
      %1293 = vmatmul.f32.gmra.mxu0 %v1167
      %v1294 = vpop.f32.mrf.mxu0
      %v1295 = vadd.f32 0.0, %v1294
      %1296 = vmatmul.f32.gmra.mxu0 %v1170
      %v1297 = vpop.f32.mrf.mxu0
      %v1298 = vadd.f32 0.0, %v1297
      %1299 = vmatmul.f32.gmra.mxu0 %v1173
      %v1300 = vpop.f32.mrf.mxu0
      %v1301 = vadd.f32 0.0, %v1300
      %1302 = vmatmul.f32.gmra.mxu0 %v1176
      %v1303 = vpop.f32.mrf.mxu0
      %v1304 = vadd.f32 0.0, %v1303
      %1305 = vmatmul.f32.gmra.mxu0 %v1179
      %v1306 = vpop.f32.mrf.mxu0
      %v1307 = vadd.f32 0.0, %v1306
      %1308 = vmatmul.f32.gmra.mxu0 %v1182
      %v1309 = vpop.f32.mrf.mxu0
      %v1310 = vadd.f32 0.0, %v1309
      %1311 = vmatmul.f32.gmra.mxu0 %v1185
      %v1312 = vpop.f32.mrf.mxu0
      %v1313 = vadd.f32 0.0, %v1312
      %1314 = vmatmul.f32.gmra.mxu0 %v1188
      %v1315 = vpop.f32.mrf.mxu0
      %v1316 = vadd.f32 0.0, %v1315
      %1317 = vmatmul.f32.gmra.mxu0 %v1191
      %v1318 = vpop.f32.mrf.mxu0
      %v1319 = vadd.f32 0.0, %v1318
      %1320 = vmatmul.f32.gmra.mxu0 %v1194
      %v1321 = vpop.f32.mrf.mxu0
      %v1322 = vadd.f32 0.0, %v1321
      %1323 = vmatmul.f32.gmra.mxu0 %v1197
      %v1324 = vpop.f32.mrf.mxu0
      %v1325 = vadd.f32 0.0, %v1324
      %1326 = vmatmul.f32.gmra.mxu0 %v1200
      %v1327 = vpop.f32.mrf.mxu0
      %v1328 = vadd.f32 0.0, %v1327
      %1329 = vmatmul.f32.gmra.mxu0 %v1203
      %v1330 = vpop.f32.mrf.mxu0
      %v1331 = vadd.f32 0.0, %v1330
      %1332 = vmatmul.f32.gmra.mxu0 %v1206
      %v1333 = vpop.f32.mrf.mxu0
      %v1334 = vadd.f32 0.0, %v1333
      %1335 = vmatmul.f32.gmra.mxu0 %v1209
      %v1336 = vpop.f32.mrf.mxu0
      %v1337 = vadd.f32 0.0, %v1336
      %1338 = vmatmul.f32.gmra.mxu0 %v1212
      %v1339 = vpop.f32.mrf.mxu0
      %v1340 = vadd.f32 0.0, %v1339
      %1341 = vmatmul.f32.gmra.mxu0 %v1215
      %v1342 = vpop.f32.mrf.mxu0
      %v1343 = vadd.f32 0.0, %v1342
      %1344 = vmatmul.f32.gmra.mxu0 %v1218
      %v1345 = vpop.f32.mrf.mxu0
      %v1346 = vadd.f32 0.0, %v1345
      %1347 = vmatmul.f32.gmra.mxu0 %v1221
      %v1348 = vpop.f32.mrf.mxu0
      %v1349 = vadd.f32 0.0, %v1348
      %1350 = vmatmul.f32.gmra.mxu0 %v1224
      %v1351 = vpop.f32.mrf.mxu0
      %v1352 = vadd.f32 0.0, %v1351
      %1353 = vmatmul.f32.gmra.mxu0 %v1227
      %v1354 = vpop.f32.mrf.mxu0
      %v1355 = vadd.f32 0.0, %v1354
      %1356 = vmatmul.f32.gmra.mxu0 %v1230
      %v1357 = vpop.f32.mrf.mxu0
      %v1358 = vadd.f32 0.0, %v1357
      %1359 = vmatmul.f32.gmra.mxu0 %v1233
      %v1360 = vpop.f32.mrf.mxu0
      %v1361 = vadd.f32 0.0, %v1360
      %1362 = vmatmul.f32.gmra.mxu0 %v1236
      %v1363 = vpop.f32.mrf.mxu0
      %v1364 = vadd.f32 0.0, %v1363
      %1365 = vmatmul.f32.gmra.mxu0 %v1239
      %v1366 = vpop.f32.mrf.mxu0
      %v1367 = vadd.f32 0.0, %v1366
      %1368 = vmatmul.f32.gmra.mxu0 %v1242
      %v1369 = vpop.f32.mrf.mxu0
      %v1370 = vadd.f32 0.0, %v1369
      %1371 = vmatmul.f32.gmra.mxu0 %v1245
      %v1372 = vpop.f32.mrf.mxu0
      %v1373 = vadd.f32 0.0, %v1372
      %1374 = vmatmul.f32.gmra.mxu0 %v1248
      %v1375 = vpop.f32.mrf.mxu0
      %v1376 = vadd.f32 0.0, %v1375
      %1377 = vmatmul.f32.gmra.mxu0 %v1251
      %v1378 = vpop.f32.mrf.mxu0
      %v1379 = vadd.f32 0.0, %v1378
      %1380 = vmatmul.f32.gmra.mxu0 %v1254
      %v1381 = vpop.f32.mrf.mxu0
      %v1382 = vadd.f32 0.0, %v1381
      %1383 = vmatmul.f32.gmra.mxu0 %v1257
      %v1384 = vpop.f32.mrf.mxu0
      %v1385 = vadd.f32 0.0, %v1384
      %1386 = vmatmul.f32.gmra.mxu0 %v1260
      %v1387 = vpop.f32.mrf.mxu0
      %v1388 = vadd.f32 0.0, %v1387
      %1389 = vmatmul.f32.gmra.mxu0 %v1263
      %v1390 = vpop.f32.mrf.mxu0
      %v1391 = vadd.f32 0.0, %v1390
      %1392 = vmatmul.f32.gmra.mxu0 %v1266
      %v1393 = vpop.f32.mrf.mxu0
      %v1394 = vadd.f32 0.0, %v1393
      %1395 = vmatmul.f32.gmra.mxu0 %v1269
      %v1396 = vpop.f32.mrf.mxu0
      %v1397 = vadd.f32 0.0, %v1396
      %1398 = vmatmul.f32.gmra.mxu0 %v1272
      %v1399 = vpop.f32.mrf.mxu0
      %v1400 = vadd.f32 0.0, %v1399
      %1401 = vdwg.mxu0
      %v1402 = vadd.f32 %v1093, %v1295
      %v1403 = vadd.f32 %v1094, %v1298
      %v1404 = vadd.f32 %v1095, %v1301
      %v1405 = vadd.f32 %v1096, %v1304
      %v1406 = vadd.f32 %v1097, %v1307
      %v1407 = vadd.f32 %v1098, %v1310
      %v1408 = vadd.f32 %v1099, %v1313
      %v1409 = vadd.f32 %v1100, %v1316
      %v1410 = vadd.f32 %v1101, %v1319
      %v1411 = vadd.f32 %v1102, %v1322
      %v1412 = vadd.f32 %v1103, %v1325
      %v1413 = vadd.f32 %v1104, %v1328
      %v1414 = vadd.f32 %v1105, %v1331
      %v1415 = vadd.f32 %v1106, %v1334
      %v1416 = vadd.f32 %v1107, %v1337
      %v1417 = vadd.f32 %v1108, %v1340
      %v1418 = vadd.f32 %v1109, %v1343
      %v1419 = vadd.f32 %v1110, %v1346
      %v1420 = vadd.f32 %v1111, %v1349
      %v1421 = vadd.f32 %v1112, %v1352
      %v1422 = vadd.f32 %v1113, %v1355
      %v1423 = vadd.f32 %v1114, %v1358
      %v1424 = vadd.f32 %v1115, %v1361
      %v1425 = vadd.f32 %v1116, %v1364
      %v1426 = vadd.f32 %v1117, %v1367
      %v1427 = vadd.f32 %v1118, %v1370
      %v1428 = vadd.f32 %v1119, %v1373
      %v1429 = vadd.f32 %v1120, %v1376
      %v1430 = vadd.f32 %v1121, %v1379
      %v1431 = vadd.f32 %v1122, %v1382
      %v1432 = vadd.f32 %v1123, %v1385
      %v1433 = vadd.f32 %v1124, %v1388
      %v1434 = vadd.f32 %v1125, %v1391
      %v1435 = vadd.f32 %v1126, %v1394
      %v1436 = vadd.f32 %v1127, %v1397
      %v1437 = vadd.f32 %v1128, %v1400
      %v1438 = vld [vmem:[%s266 + $0x13] sm:$0xff]
      %v1439 = vld [vmem:[%s266 + $0x1b] sm:$0xff]
      %v1440 = vld [vmem:[%s266 + $0x23] sm:$0xff]
      %v1441 = vld [vmem:[%s266 + $0x2b] sm:$0xff]
      %v1442 = vld [vmem:[%s266 + $0x33] sm:$0xff]
      %v1443 = vld [vmem:[%s266 + $0x3b] sm:$0xff]
      %v1444 = vld [vmem:[%s266 + $0x43] sm:$0xff]
      %v1445 = vld [vmem:[%s266 + $0x4b] sm:$0xff]
      %v1446 = vld [vmem:[%s266 + $0x53] sm:$0xff]
      %v1447 = vld [vmem:[%s266 + $0x5b] sm:$0xff]
      %v1448 = vld [vmem:[%s266 + $0x63] sm:$0xff]
      %v1449 = vld [vmem:[%s266 + $0x6b] sm:$0xff]
      %v1450 = vld [vmem:[%s266 + $0x73] sm:$0xff]
      %v1451 = vld [vmem:[%s266 + $0x7b] sm:$0xff]
      %v1452 = vld [vmem:[%s266 + $0x83] sm:$0xff]
      %v1453 = vld [vmem:[%s266 + $0x8b] sm:$0xff]
      %v1454 = vld [vmem:[%s266 + $0x93] sm:$0xff]
      %v1455 = vld [vmem:[%s266 + $0x9b] sm:$0xff]
      %v1456 = vld [vmem:[%s266 + $0xa3] sm:$0xff]
      %v1457 = vld [vmem:[%s266 + $0xab] sm:$0xff]
      %v1458 = vld [vmem:[%s266 + $0xb3] sm:$0xff]
      %v1459 = vld [vmem:[%s266 + $0xbb] sm:$0xff]
      %v1460 = vld [vmem:[%s266 + $0xc3] sm:$0xff]
      %v1461 = vld [vmem:[%s266 + $0xcb] sm:$0xff]
      %v1462 = vld [vmem:[%s266 + $0xd3] sm:$0xff]
      %v1463 = vld [vmem:[%s266 + $0xdb] sm:$0xff]
      %v1464 = vld [vmem:[%s266 + $0xe3] sm:$0xff]
      %v1465 = vld [vmem:[%s266 + $0xeb] sm:$0xff]
      %v1466 = vld [vmem:[%s266 + $0xf3] sm:$0xff]
      %v1467 = vld [vmem:[%s266 + $0xfb] sm:$0xff]
      %v1468 = vld [vmem:[%s266 + $0x103] sm:$0xff]
      %v1469 = vld [vmem:[%s266 + $0x10b] sm:$0xff]
      %v1470 = vld [vmem:[%s266 + $0x113] sm:$0xff]
      %v1471 = vld [vmem:[%s266 + $0x11b] sm:$0xff]
      %v1472 = vld [vmem:[%s266 + $0x123] sm:$0xff]
      %v1473 = vld [vmem:[%s266 + $0x12b] sm:$0xff]
      %v1474 = vld [vmem:[%s2 + $0x10] sm:$0xf]
      %v1476 = vsel %vm346, %v1438, 0
      %v1479 = vsel %vm346, %v1439, 0
      %v1482 = vsel %vm346, %v1440, 0
      %v1485 = vsel %vm346, %v1441, 0
      %v1488 = vsel %vm346, %v1442, 0
      %v1491 = vsel %vm346, %v1443, 0
      %v1494 = vsel %vm346, %v1444, 0
      %v1497 = vsel %vm346, %v1445, 0
      %v1500 = vsel %vm346, %v1446, 0
      %v1503 = vsel %vm346, %v1447, 0
      %v1506 = vsel %vm346, %v1448, 0
      %v1509 = vsel %vm346, %v1449, 0
      %v1512 = vsel %vm346, %v1450, 0
      %v1515 = vsel %vm346, %v1451, 0
      %v1518 = vsel %vm346, %v1452, 0
      %v1521 = vsel %vm346, %v1453, 0
      %v1524 = vsel %vm346, %v1454, 0
      %v1527 = vsel %vm346, %v1455, 0
      %v1530 = vsel %vm346, %v1456, 0
      %v1533 = vsel %vm346, %v1457, 0
      %v1536 = vsel %vm346, %v1458, 0
      %v1539 = vsel %vm346, %v1459, 0
      %v1542 = vsel %vm346, %v1460, 0
      %v1545 = vsel %vm346, %v1461, 0
      %v1548 = vsel %vm346, %v1462, 0
      %v1551 = vsel %vm346, %v1463, 0
      %v1554 = vsel %vm346, %v1464, 0
      %v1557 = vsel %vm346, %v1465, 0
      %v1560 = vsel %vm346, %v1466, 0
      %v1563 = vsel %vm346, %v1467, 0
      %v1566 = vsel %vm346, %v1468, 0
      %v1569 = vsel %vm346, %v1469, 0
      %v1572 = vsel %vm346, %v1470, 0
      %v1575 = vsel %vm346, %v1471, 0
      %v1578 = vsel %vm346, %v1472, 0
      %v1581 = vsel %vm346, %v1473, 0
      %v1584 = vsel %vm455, %v1474, 0
      %1586 = vmatpush.msra.mxu0 0.0
      %1587 = vmatpush.msra.mxu0 0.0
      %1588 = vmatpush.msra.mxu0 0.0
      %1589 = vmatpush.msra.mxu0 0.0
      %1590 = vmatpush.msra.mxu0 0.0
      %1591 = vmatpush.msra.mxu0 0.0
      %1592 = vmatpush.msra.mxu0 0.0
      %1593 = vmatpush.msra.mxu0 0.0
      %1594 = vmatpush.msra.mxu0 0.0
      %1595 = vmatpush.msra.mxu0 0.0
      %1596 = vmatpush.msra.mxu0 0.0
      %1597 = vmatpush.msra.mxu0 0.0
      %1598 = vmatpush.msra.mxu0 0.0
      %1599 = vmatpush.msra.mxu0 0.0
      %1600 = vmatpush.msra.mxu0 0.0
      %1601 = vmatpush.msra.mxu0 %v1584
      %1602 = vmatmul.f32.gmra.mxu0 %v1476
      %v1603 = vpop.f32.mrf.mxu0
      %v1604 = vadd.f32 0.0, %v1603
      %1605 = vmatmul.f32.gmra.mxu0 %v1479
      %v1606 = vpop.f32.mrf.mxu0
      %v1607 = vadd.f32 0.0, %v1606
      %1608 = vmatmul.f32.gmra.mxu0 %v1482
      %v1609 = vpop.f32.mrf.mxu0
      %v1610 = vadd.f32 0.0, %v1609
      %1611 = vmatmul.f32.gmra.mxu0 %v1485
      %v1612 = vpop.f32.mrf.mxu0
      %v1613 = vadd.f32 0.0, %v1612
      %1614 = vmatmul.f32.gmra.mxu0 %v1488
      %v1615 = vpop.f32.mrf.mxu0
      %v1616 = vadd.f32 0.0, %v1615
      %1617 = vmatmul.f32.gmra.mxu0 %v1491
      %v1618 = vpop.f32.mrf.mxu0
      %v1619 = vadd.f32 0.0, %v1618
      %1620 = vmatmul.f32.gmra.mxu0 %v1494
      %v1621 = vpop.f32.mrf.mxu0
      %v1622 = vadd.f32 0.0, %v1621
      %1623 = vmatmul.f32.gmra.mxu0 %v1497
      %v1624 = vpop.f32.mrf.mxu0
      %v1625 = vadd.f32 0.0, %v1624
      %1626 = vmatmul.f32.gmra.mxu0 %v1500
      %v1627 = vpop.f32.mrf.mxu0
      %v1628 = vadd.f32 0.0, %v1627
      %1629 = vmatmul.f32.gmra.mxu0 %v1503
      %v1630 = vpop.f32.mrf.mxu0
      %v1631 = vadd.f32 0.0, %v1630
      %1632 = vmatmul.f32.gmra.mxu0 %v1506
      %v1633 = vpop.f32.mrf.mxu0
      %v1634 = vadd.f32 0.0, %v1633
      %1635 = vmatmul.f32.gmra.mxu0 %v1509
      %v1636 = vpop.f32.mrf.mxu0
      %v1637 = vadd.f32 0.0, %v1636
      %1638 = vmatmul.f32.gmra.mxu0 %v1512
      %v1639 = vpop.f32.mrf.mxu0
      %v1640 = vadd.f32 0.0, %v1639
      %1641 = vmatmul.f32.gmra.mxu0 %v1515
      %v1642 = vpop.f32.mrf.mxu0
      %v1643 = vadd.f32 0.0, %v1642
      %1644 = vmatmul.f32.gmra.mxu0 %v1518
      %v1645 = vpop.f32.mrf.mxu0
      %v1646 = vadd.f32 0.0, %v1645
      %1647 = vmatmul.f32.gmra.mxu0 %v1521
      %v1648 = vpop.f32.mrf.mxu0
      %v1649 = vadd.f32 0.0, %v1648
      %1650 = vmatmul.f32.gmra.mxu0 %v1524
      %v1651 = vpop.f32.mrf.mxu0
      %v1652 = vadd.f32 0.0, %v1651
      %1653 = vmatmul.f32.gmra.mxu0 %v1527
      %v1654 = vpop.f32.mrf.mxu0
      %v1655 = vadd.f32 0.0, %v1654
      %1656 = vmatmul.f32.gmra.mxu0 %v1530
      %v1657 = vpop.f32.mrf.mxu0
      %v1658 = vadd.f32 0.0, %v1657
      %1659 = vmatmul.f32.gmra.mxu0 %v1533
      %v1660 = vpop.f32.mrf.mxu0
      %v1661 = vadd.f32 0.0, %v1660
      %1662 = vmatmul.f32.gmra.mxu0 %v1536
      %v1663 = vpop.f32.mrf.mxu0
      %v1664 = vadd.f32 0.0, %v1663
      %1665 = vmatmul.f32.gmra.mxu0 %v1539
      %v1666 = vpop.f32.mrf.mxu0
      %v1667 = vadd.f32 0.0, %v1666
      %1668 = vmatmul.f32.gmra.mxu0 %v1542
      %v1669 = vpop.f32.mrf.mxu0
      %v1670 = vadd.f32 0.0, %v1669
      %1671 = vmatmul.f32.gmra.mxu0 %v1545
      %v1672 = vpop.f32.mrf.mxu0
      %v1673 = vadd.f32 0.0, %v1672
      %1674 = vmatmul.f32.gmra.mxu0 %v1548
      %v1675 = vpop.f32.mrf.mxu0
      %v1676 = vadd.f32 0.0, %v1675
      %1677 = vmatmul.f32.gmra.mxu0 %v1551
      %v1678 = vpop.f32.mrf.mxu0
      %v1679 = vadd.f32 0.0, %v1678
      %1680 = vmatmul.f32.gmra.mxu0 %v1554
      %v1681 = vpop.f32.mrf.mxu0
      %v1682 = vadd.f32 0.0, %v1681
      %1683 = vmatmul.f32.gmra.mxu0 %v1557
      %v1684 = vpop.f32.mrf.mxu0
      %v1685 = vadd.f32 0.0, %v1684
      %1686 = vmatmul.f32.gmra.mxu0 %v1560
      %v1687 = vpop.f32.mrf.mxu0
      %v1688 = vadd.f32 0.0, %v1687
      %1689 = vmatmul.f32.gmra.mxu0 %v1563
      %v1690 = vpop.f32.mrf.mxu0
      %v1691 = vadd.f32 0.0, %v1690
      %1692 = vmatmul.f32.gmra.mxu0 %v1566
      %v1693 = vpop.f32.mrf.mxu0
      %v1694 = vadd.f32 0.0, %v1693
      %1695 = vmatmul.f32.gmra.mxu0 %v1569
      %v1696 = vpop.f32.mrf.mxu0
      %v1697 = vadd.f32 0.0, %v1696
      %1698 = vmatmul.f32.gmra.mxu0 %v1572
      %v1699 = vpop.f32.mrf.mxu0
      %v1700 = vadd.f32 0.0, %v1699
      %1701 = vmatmul.f32.gmra.mxu0 %v1575
      %v1702 = vpop.f32.mrf.mxu0
      %v1703 = vadd.f32 0.0, %v1702
      %1704 = vmatmul.f32.gmra.mxu0 %v1578
      %v1705 = vpop.f32.mrf.mxu0
      %v1706 = vadd.f32 0.0, %v1705
      %1707 = vmatmul.f32.gmra.mxu0 %v1581
      %v1708 = vpop.f32.mrf.mxu0
      %v1709 = vadd.f32 0.0, %v1708
      %1710 = vdwg.mxu0
      %v1711 = vadd.f32 %v1402, %v1604
      %v1712 = vadd.f32 %v1403, %v1607
      %v1713 = vadd.f32 %v1404, %v1610
      %v1714 = vadd.f32 %v1405, %v1613
      %v1715 = vadd.f32 %v1406, %v1616
      %v1716 = vadd.f32 %v1407, %v1619
      %v1717 = vadd.f32 %v1408, %v1622
      %v1718 = vadd.f32 %v1409, %v1625
      %v1719 = vadd.f32 %v1410, %v1628
      %v1720 = vadd.f32 %v1411, %v1631
      %v1721 = vadd.f32 %v1412, %v1634
      %v1722 = vadd.f32 %v1413, %v1637
      %v1723 = vadd.f32 %v1414, %v1640
      %v1724 = vadd.f32 %v1415, %v1643
      %v1725 = vadd.f32 %v1416, %v1646
      %v1726 = vadd.f32 %v1417, %v1649
      %v1727 = vadd.f32 %v1418, %v1652
      %v1728 = vadd.f32 %v1419, %v1655
      %v1729 = vadd.f32 %v1420, %v1658
      %v1730 = vadd.f32 %v1421, %v1661
      %v1731 = vadd.f32 %v1422, %v1664
      %v1732 = vadd.f32 %v1423, %v1667
      %v1733 = vadd.f32 %v1424, %v1670
      %v1734 = vadd.f32 %v1425, %v1673
      %v1735 = vadd.f32 %v1426, %v1676
      %v1736 = vadd.f32 %v1427, %v1679
      %v1737 = vadd.f32 %v1428, %v1682
      %v1738 = vadd.f32 %v1429, %v1685
      %v1739 = vadd.f32 %v1430, %v1688
      %v1740 = vadd.f32 %v1431, %v1691
      %v1741 = vadd.f32 %v1432, %v1694
      %v1742 = vadd.f32 %v1433, %v1697
      %v1743 = vadd.f32 %v1434, %v1700
      %v1744 = vadd.f32 %v1435, %v1703
      %v1745 = vadd.f32 %v1436, %v1706
      %v1746 = vadd.f32 %v1437, %v1709
      %v1747 = vld [vmem:[%s266 + $0x14] sm:$0xff]
      %v1748 = vld [vmem:[%s266 + $0x1c] sm:$0xff]
      %v1749 = vld [vmem:[%s266 + $0x24] sm:$0xff]
      %v1750 = vld [vmem:[%s266 + $0x2c] sm:$0xff]
      %v1751 = vld [vmem:[%s266 + $0x34] sm:$0xff]
      %v1752 = vld [vmem:[%s266 + $0x3c] sm:$0xff]
      %v1753 = vld [vmem:[%s266 + $0x44] sm:$0xff]
      %v1754 = vld [vmem:[%s266 + $0x4c] sm:$0xff]
      %v1755 = vld [vmem:[%s266 + $0x54] sm:$0xff]
      %v1756 = vld [vmem:[%s266 + $0x5c] sm:$0xff]
      %v1757 = vld [vmem:[%s266 + $0x64] sm:$0xff]
      %v1758 = vld [vmem:[%s266 + $0x6c] sm:$0xff]
      %v1759 = vld [vmem:[%s266 + $0x74] sm:$0xff]
      %v1760 = vld [vmem:[%s266 + $0x7c] sm:$0xff]
      %v1761 = vld [vmem:[%s266 + $0x84] sm:$0xff]
      %v1762 = vld [vmem:[%s266 + $0x8c] sm:$0xff]
      %v1763 = vld [vmem:[%s266 + $0x94] sm:$0xff]
      %v1764 = vld [vmem:[%s266 + $0x9c] sm:$0xff]
      %v1765 = vld [vmem:[%s266 + $0xa4] sm:$0xff]
      %v1766 = vld [vmem:[%s266 + $0xac] sm:$0xff]
      %v1767 = vld [vmem:[%s266 + $0xb4] sm:$0xff]
      %v1768 = vld [vmem:[%s266 + $0xbc] sm:$0xff]
      %v1769 = vld [vmem:[%s266 + $0xc4] sm:$0xff]
      %v1770 = vld [vmem:[%s266 + $0xcc] sm:$0xff]
      %v1771 = vld [vmem:[%s266 + $0xd4] sm:$0xff]
      %v1772 = vld [vmem:[%s266 + $0xdc] sm:$0xff]
      %v1773 = vld [vmem:[%s266 + $0xe4] sm:$0xff]
      %v1774 = vld [vmem:[%s266 + $0xec] sm:$0xff]
      %v1775 = vld [vmem:[%s266 + $0xf4] sm:$0xff]
      %v1776 = vld [vmem:[%s266 + $0xfc] sm:$0xff]
      %v1777 = vld [vmem:[%s266 + $0x104] sm:$0xff]
      %v1778 = vld [vmem:[%s266 + $0x10c] sm:$0xff]
      %v1779 = vld [vmem:[%s266 + $0x114] sm:$0xff]
      %v1780 = vld [vmem:[%s266 + $0x11c] sm:$0xff]
      %v1781 = vld [vmem:[%s266 + $0x124] sm:$0xff]
      %v1782 = vld [vmem:[%s266 + $0x12c] sm:$0xff]
      %v1783 = vld [vmem:[%s2 + $0x14] sm:$0xf]
      %v1785 = vsel %vm346, %v1747, 0
      %v1788 = vsel %vm346, %v1748, 0
      %v1791 = vsel %vm346, %v1749, 0
      %v1794 = vsel %vm346, %v1750, 0
      %v1797 = vsel %vm346, %v1751, 0
      %v1800 = vsel %vm346, %v1752, 0
      %v1803 = vsel %vm346, %v1753, 0
      %v1806 = vsel %vm346, %v1754, 0
      %v1809 = vsel %vm346, %v1755, 0
      %v1812 = vsel %vm346, %v1756, 0
      %v1815 = vsel %vm346, %v1757, 0
      %v1818 = vsel %vm346, %v1758, 0
      %v1821 = vsel %vm346, %v1759, 0
      %v1824 = vsel %vm346, %v1760, 0
      %v1827 = vsel %vm346, %v1761, 0
      %v1830 = vsel %vm346, %v1762, 0
      %v1833 = vsel %vm346, %v1763, 0
      %v1836 = vsel %vm346, %v1764, 0
      %v1839 = vsel %vm346, %v1765, 0
      %v1842 = vsel %vm346, %v1766, 0
      %v1845 = vsel %vm346, %v1767, 0
      %v1848 = vsel %vm346, %v1768, 0
      %v1851 = vsel %vm346, %v1769, 0
      %v1854 = vsel %vm346, %v1770, 0
      %v1857 = vsel %vm346, %v1771, 0
      %v1860 = vsel %vm346, %v1772, 0
      %v1863 = vsel %vm346, %v1773, 0
      %v1866 = vsel %vm346, %v1774, 0
      %v1869 = vsel %vm346, %v1775, 0
      %v1872 = vsel %vm346, %v1776, 0
      %v1875 = vsel %vm346, %v1777, 0
      %v1878 = vsel %vm346, %v1778, 0
      %v1881 = vsel %vm346, %v1779, 0
      %v1884 = vsel %vm346, %v1780, 0
      %v1887 = vsel %vm346, %v1781, 0
      %v1890 = vsel %vm346, %v1782, 0
      %v1893 = vsel %vm455, %v1783, 0
      %1895 = vmatpush.msra.mxu0 0.0
      %1896 = vmatpush.msra.mxu0 0.0
      %1897 = vmatpush.msra.mxu0 0.0
      %1898 = vmatpush.msra.mxu0 0.0
      %1899 = vmatpush.msra.mxu0 0.0
      %1900 = vmatpush.msra.mxu0 0.0
      %1901 = vmatpush.msra.mxu0 0.0
      %1902 = vmatpush.msra.mxu0 0.0
      %1903 = vmatpush.msra.mxu0 0.0
      %1904 = vmatpush.msra.mxu0 0.0
      %1905 = vmatpush.msra.mxu0 0.0
      %1906 = vmatpush.msra.mxu0 0.0
      %1907 = vmatpush.msra.mxu0 0.0
      %1908 = vmatpush.msra.mxu0 0.0
      %1909 = vmatpush.msra.mxu0 0.0
      %1910 = vmatpush.msra.mxu0 %v1893
      %1911 = vmatmul.f32.gmra.mxu0 %v1785
      %v1912 = vpop.f32.mrf.mxu0
      %v1913 = vadd.f32 0.0, %v1912
      %1914 = vmatmul.f32.gmra.mxu0 %v1788
      %v1915 = vpop.f32.mrf.mxu0
      %v1916 = vadd.f32 0.0, %v1915
      %1917 = vmatmul.f32.gmra.mxu0 %v1791
      %v1918 = vpop.f32.mrf.mxu0
      %v1919 = vadd.f32 0.0, %v1918
      %1920 = vmatmul.f32.gmra.mxu0 %v1794
      %v1921 = vpop.f32.mrf.mxu0
      %v1922 = vadd.f32 0.0, %v1921
      %1923 = vmatmul.f32.gmra.mxu0 %v1797
      %v1924 = vpop.f32.mrf.mxu0
      %v1925 = vadd.f32 0.0, %v1924
      %1926 = vmatmul.f32.gmra.mxu0 %v1800
      %v1927 = vpop.f32.mrf.mxu0
      %v1928 = vadd.f32 0.0, %v1927
      %1929 = vmatmul.f32.gmra.mxu0 %v1803
      %v1930 = vpop.f32.mrf.mxu0
      %v1931 = vadd.f32 0.0, %v1930
      %1932 = vmatmul.f32.gmra.mxu0 %v1806
      %v1933 = vpop.f32.mrf.mxu0
      %v1934 = vadd.f32 0.0, %v1933
      %1935 = vmatmul.f32.gmra.mxu0 %v1809
      %v1936 = vpop.f32.mrf.mxu0
      %v1937 = vadd.f32 0.0, %v1936
      %1938 = vmatmul.f32.gmra.mxu0 %v1812
      %v1939 = vpop.f32.mrf.mxu0
      %v1940 = vadd.f32 0.0, %v1939
      %1941 = vmatmul.f32.gmra.mxu0 %v1815
      %v1942 = vpop.f32.mrf.mxu0
      %v1943 = vadd.f32 0.0, %v1942
      %1944 = vmatmul.f32.gmra.mxu0 %v1818
      %v1945 = vpop.f32.mrf.mxu0
      %v1946 = vadd.f32 0.0, %v1945
      %1947 = vmatmul.f32.gmra.mxu0 %v1821
      %v1948 = vpop.f32.mrf.mxu0
      %v1949 = vadd.f32 0.0, %v1948
      %1950 = vmatmul.f32.gmra.mxu0 %v1824
      %v1951 = vpop.f32.mrf.mxu0
      %v1952 = vadd.f32 0.0, %v1951
      %1953 = vmatmul.f32.gmra.mxu0 %v1827
      %v1954 = vpop.f32.mrf.mxu0
      %v1955 = vadd.f32 0.0, %v1954
      %1956 = vmatmul.f32.gmra.mxu0 %v1830
      %v1957 = vpop.f32.mrf.mxu0
      %v1958 = vadd.f32 0.0, %v1957
      %1959 = vmatmul.f32.gmra.mxu0 %v1833
      %v1960 = vpop.f32.mrf.mxu0
      %v1961 = vadd.f32 0.0, %v1960
      %1962 = vmatmul.f32.gmra.mxu0 %v1836
      %v1963 = vpop.f32.mrf.mxu0
      %v1964 = vadd.f32 0.0, %v1963
      %1965 = vmatmul.f32.gmra.mxu0 %v1839
      %v1966 = vpop.f32.mrf.mxu0
      %v1967 = vadd.f32 0.0, %v1966
      %1968 = vmatmul.f32.gmra.mxu0 %v1842
      %v1969 = vpop.f32.mrf.mxu0
      %v1970 = vadd.f32 0.0, %v1969
      %1971 = vmatmul.f32.gmra.mxu0 %v1845
      %v1972 = vpop.f32.mrf.mxu0
      %v1973 = vadd.f32 0.0, %v1972
      %1974 = vmatmul.f32.gmra.mxu0 %v1848
      %v1975 = vpop.f32.mrf.mxu0
      %v1976 = vadd.f32 0.0, %v1975
      %1977 = vmatmul.f32.gmra.mxu0 %v1851
      %v1978 = vpop.f32.mrf.mxu0
      %v1979 = vadd.f32 0.0, %v1978
      %1980 = vmatmul.f32.gmra.mxu0 %v1854
      %v1981 = vpop.f32.mrf.mxu0
      %v1982 = vadd.f32 0.0, %v1981
      %1983 = vmatmul.f32.gmra.mxu0 %v1857
      %v1984 = vpop.f32.mrf.mxu0
      %v1985 = vadd.f32 0.0, %v1984
      %1986 = vmatmul.f32.gmra.mxu0 %v1860
      %v1987 = vpop.f32.mrf.mxu0
      %v1988 = vadd.f32 0.0, %v1987
      %1989 = vmatmul.f32.gmra.mxu0 %v1863
      %v1990 = vpop.f32.mrf.mxu0
      %v1991 = vadd.f32 0.0, %v1990
      %1992 = vmatmul.f32.gmra.mxu0 %v1866
      %v1993 = vpop.f32.mrf.mxu0
      %v1994 = vadd.f32 0.0, %v1993
      %1995 = vmatmul.f32.gmra.mxu0 %v1869
      %v1996 = vpop.f32.mrf.mxu0
      %v1997 = vadd.f32 0.0, %v1996
      %1998 = vmatmul.f32.gmra.mxu0 %v1872
      %v1999 = vpop.f32.mrf.mxu0
      %v2000 = vadd.f32 0.0, %v1999
      %2001 = vmatmul.f32.gmra.mxu0 %v1875
      %v2002 = vpop.f32.mrf.mxu0
      %v2003 = vadd.f32 0.0, %v2002
      %2004 = vmatmul.f32.gmra.mxu0 %v1878
      %v2005 = vpop.f32.mrf.mxu0
      %v2006 = vadd.f32 0.0, %v2005
      %2007 = vmatmul.f32.gmra.mxu0 %v1881
      %v2008 = vpop.f32.mrf.mxu0
      %v2009 = vadd.f32 0.0, %v2008
      %2010 = vmatmul.f32.gmra.mxu0 %v1884
      %v2011 = vpop.f32.mrf.mxu0
      %v2012 = vadd.f32 0.0, %v2011
      %2013 = vmatmul.f32.gmra.mxu0 %v1887
      %v2014 = vpop.f32.mrf.mxu0
      %v2015 = vadd.f32 0.0, %v2014
      %2016 = vmatmul.f32.gmra.mxu0 %v1890
      %v2017 = vpop.f32.mrf.mxu0
      %v2018 = vadd.f32 0.0, %v2017
      %2019 = vdwg.mxu0
      %v2020 = vadd.f32 %v1711, %v1913
      %v2021 = vadd.f32 %v1712, %v1916
      %v2022 = vadd.f32 %v1713, %v1919
      %v2023 = vadd.f32 %v1714, %v1922
      %v2024 = vadd.f32 %v1715, %v1925
      %v2025 = vadd.f32 %v1716, %v1928
      %v2026 = vadd.f32 %v1717, %v1931
      %v2027 = vadd.f32 %v1718, %v1934
      %v2028 = vadd.f32 %v1719, %v1937
      %v2029 = vadd.f32 %v1720, %v1940
      %v2030 = vadd.f32 %v1721, %v1943
      %v2031 = vadd.f32 %v1722, %v1946
      %v2032 = vadd.f32 %v1723, %v1949
      %v2033 = vadd.f32 %v1724, %v1952
      %v2034 = vadd.f32 %v1725, %v1955
      %v2035 = vadd.f32 %v1726, %v1958
      %v2036 = vadd.f32 %v1727, %v1961
      %v2037 = vadd.f32 %v1728, %v1964
      %v2038 = vadd.f32 %v1729, %v1967
      %v2039 = vadd.f32 %v1730, %v1970
      %v2040 = vadd.f32 %v1731, %v1973
      %v2041 = vadd.f32 %v1732, %v1976
      %v2042 = vadd.f32 %v1733, %v1979
      %v2043 = vadd.f32 %v1734, %v1982
      %v2044 = vadd.f32 %v1735, %v1985
      %v2045 = vadd.f32 %v1736, %v1988
      %v2046 = vadd.f32 %v1737, %v1991
      %v2047 = vadd.f32 %v1738, %v1994
      %v2048 = vadd.f32 %v1739, %v1997
      %v2049 = vadd.f32 %v1740, %v2000
      %v2050 = vadd.f32 %v1741, %v2003
      %v2051 = vadd.f32 %v1742, %v2006
      %v2052 = vadd.f32 %v1743, %v2009
      %v2053 = vadd.f32 %v1744, %v2012
      %v2054 = vadd.f32 %v1745, %v2015
      %v2055 = vadd.f32 %v1746, %v2018
      %v2056 = vld [vmem:[%s266 + $0x24] sm:$0xff]
      %v2057 = vld [vmem:[%s266 + $0x2c] sm:$0xff]
      %v2058 = vld [vmem:[%s266 + $0x34] sm:$0xff]
      %v2059 = vld [vmem:[%s266 + $0x3c] sm:$0xff]
      %v2060 = vld [vmem:[%s266 + $0x44] sm:$0xff]
      %v2061 = vld [vmem:[%s266 + $0x4c] sm:$0xff]
      %v2062 = vld [vmem:[%s266 + $0x54] sm:$0xff]
      %v2063 = vld [vmem:[%s266 + $0x5c] sm:$0xff]
      %v2064 = vld [vmem:[%s266 + $0x64] sm:$0xff]
      %v2065 = vld [vmem:[%s266 + $0x6c] sm:$0xff]
      %v2066 = vld [vmem:[%s266 + $0x74] sm:$0xff]
      %v2067 = vld [vmem:[%s266 + $0x7c] sm:$0xff]
      %v2068 = vld [vmem:[%s266 + $0x84] sm:$0xff]
      %v2069 = vld [vmem:[%s266 + $0x8c] sm:$0xff]
      %v2070 = vld [vmem:[%s266 + $0x94] sm:$0xff]
      %v2071 = vld [vmem:[%s266 + $0x9c] sm:$0xff]
      %v2072 = vld [vmem:[%s266 + $0xa4] sm:$0xff]
      %v2073 = vld [vmem:[%s266 + $0xac] sm:$0xff]
      %v2074 = vld [vmem:[%s266 + $0xb4] sm:$0xff]
      %v2075 = vld [vmem:[%s266 + $0xbc] sm:$0xff]
      %v2076 = vld [vmem:[%s266 + $0xc4] sm:$0xff]
      %v2077 = vld [vmem:[%s266 + $0xcc] sm:$0xff]
      %v2078 = vld [vmem:[%s266 + $0xd4] sm:$0xff]
      %v2079 = vld [vmem:[%s266 + $0xdc] sm:$0xff]
      %v2080 = vld [vmem:[%s266 + $0xe4] sm:$0xff]
      %v2081 = vld [vmem:[%s266 + $0xec] sm:$0xff]
      %v2082 = vld [vmem:[%s266 + $0xf4] sm:$0xff]
      %v2083 = vld [vmem:[%s266 + $0xfc] sm:$0xff]
      %v2084 = vld [vmem:[%s266 + $0x104] sm:$0xff]
      %v2085 = vld [vmem:[%s266 + $0x10c] sm:$0xff]
      %v2086 = vld [vmem:[%s266 + $0x114] sm:$0xff]
      %v2087 = vld [vmem:[%s266 + $0x11c] sm:$0xff]
      %v2088 = vld [vmem:[%s266 + $0x124] sm:$0xff]
      %v2089 = vld [vmem:[%s266 + $0x12c] sm:$0xff]
      %v2090 = vld [vmem:[%s266 + $0x134] sm:$0xff]
      %v2091 = vld [vmem:[%s266 + $0x13c] sm:$0xff]
      %v2092 = vld [vmem:[%s2 + $0x18] sm:$0xf]
      %v2094 = vsel %vm346, %v2056, 0
      %v2097 = vsel %vm346, %v2057, 0
      %v2100 = vsel %vm346, %v2058, 0
      %v2103 = vsel %vm346, %v2059, 0
      %v2106 = vsel %vm346, %v2060, 0
      %v2109 = vsel %vm346, %v2061, 0
      %v2112 = vsel %vm346, %v2062, 0
      %v2115 = vsel %vm346, %v2063, 0
      %v2118 = vsel %vm346, %v2064, 0
      %v2121 = vsel %vm346, %v2065, 0
      %v2124 = vsel %vm346, %v2066, 0
      %v2127 = vsel %vm346, %v2067, 0
      %v2130 = vsel %vm346, %v2068, 0
      %v2133 = vsel %vm346, %v2069, 0
      %v2136 = vsel %vm346, %v2070, 0
      %v2139 = vsel %vm346, %v2071, 0
      %v2142 = vsel %vm346, %v2072, 0
      %v2145 = vsel %vm346, %v2073, 0
      %v2148 = vsel %vm346, %v2074, 0
      %v2151 = vsel %vm346, %v2075, 0
      %v2154 = vsel %vm346, %v2076, 0
      %v2157 = vsel %vm346, %v2077, 0
      %v2160 = vsel %vm346, %v2078, 0
      %v2163 = vsel %vm346, %v2079, 0
      %v2166 = vsel %vm346, %v2080, 0
      %v2169 = vsel %vm346, %v2081, 0
      %v2172 = vsel %vm346, %v2082, 0
      %v2175 = vsel %vm346, %v2083, 0
      %v2178 = vsel %vm346, %v2084, 0
      %v2181 = vsel %vm346, %v2085, 0
      %v2184 = vsel %vm346, %v2086, 0
      %v2187 = vsel %vm346, %v2087, 0
      %v2190 = vsel %vm346, %v2088, 0
      %v2193 = vsel %vm346, %v2089, 0
      %v2196 = vsel %vm346, %v2090, 0
      %v2199 = vsel %vm346, %v2091, 0
      %v2202 = vsel %vm455, %v2092, 0
      %2204 = vmatpush.msra.mxu0 0.0
      %2205 = vmatpush.msra.mxu0 0.0
      %2206 = vmatpush.msra.mxu0 0.0
      %2207 = vmatpush.msra.mxu0 0.0
      %2208 = vmatpush.msra.mxu0 0.0
      %2209 = vmatpush.msra.mxu0 0.0
      %2210 = vmatpush.msra.mxu0 0.0
      %2211 = vmatpush.msra.mxu0 0.0
      %2212 = vmatpush.msra.mxu0 0.0
      %2213 = vmatpush.msra.mxu0 0.0
      %2214 = vmatpush.msra.mxu0 0.0
      %2215 = vmatpush.msra.mxu0 0.0
      %2216 = vmatpush.msra.mxu0 0.0
      %2217 = vmatpush.msra.mxu0 0.0
      %2218 = vmatpush.msra.mxu0 0.0
      %2219 = vmatpush.msra.mxu0 %v2202
      %2220 = vmatmul.f32.gmra.mxu0 %v2094
      %v2221 = vpop.f32.mrf.mxu0
      %v2222 = vadd.f32 0.0, %v2221
      %2223 = vmatmul.f32.gmra.mxu0 %v2097
      %v2224 = vpop.f32.mrf.mxu0
      %v2225 = vadd.f32 0.0, %v2224
      %2226 = vmatmul.f32.gmra.mxu0 %v2100
      %v2227 = vpop.f32.mrf.mxu0
      %v2228 = vadd.f32 0.0, %v2227
      %2229 = vmatmul.f32.gmra.mxu0 %v2103
      %v2230 = vpop.f32.mrf.mxu0
      %v2231 = vadd.f32 0.0, %v2230
      %2232 = vmatmul.f32.gmra.mxu0 %v2106
      %v2233 = vpop.f32.mrf.mxu0
      %v2234 = vadd.f32 0.0, %v2233
      %2235 = vmatmul.f32.gmra.mxu0 %v2109
      %v2236 = vpop.f32.mrf.mxu0
      %v2237 = vadd.f32 0.0, %v2236
      %2238 = vmatmul.f32.gmra.mxu0 %v2112
      %v2239 = vpop.f32.mrf.mxu0
      %v2240 = vadd.f32 0.0, %v2239
      %2241 = vmatmul.f32.gmra.mxu0 %v2115
      %v2242 = vpop.f32.mrf.mxu0
      %v2243 = vadd.f32 0.0, %v2242
      %2244 = vmatmul.f32.gmra.mxu0 %v2118
      %v2245 = vpop.f32.mrf.mxu0
      %v2246 = vadd.f32 0.0, %v2245
      %2247 = vmatmul.f32.gmra.mxu0 %v2121
      %v2248 = vpop.f32.mrf.mxu0
      %v2249 = vadd.f32 0.0, %v2248
      %2250 = vmatmul.f32.gmra.mxu0 %v2124
      %v2251 = vpop.f32.mrf.mxu0
      %v2252 = vadd.f32 0.0, %v2251
      %2253 = vmatmul.f32.gmra.mxu0 %v2127
      %v2254 = vpop.f32.mrf.mxu0
      %v2255 = vadd.f32 0.0, %v2254
      %2256 = vmatmul.f32.gmra.mxu0 %v2130
      %v2257 = vpop.f32.mrf.mxu0
      %v2258 = vadd.f32 0.0, %v2257
      %2259 = vmatmul.f32.gmra.mxu0 %v2133
      %v2260 = vpop.f32.mrf.mxu0
      %v2261 = vadd.f32 0.0, %v2260
      %2262 = vmatmul.f32.gmra.mxu0 %v2136
      %v2263 = vpop.f32.mrf.mxu0
      %v2264 = vadd.f32 0.0, %v2263
      %2265 = vmatmul.f32.gmra.mxu0 %v2139
      %v2266 = vpop.f32.mrf.mxu0
      %v2267 = vadd.f32 0.0, %v2266
      %2268 = vmatmul.f32.gmra.mxu0 %v2142
      %v2269 = vpop.f32.mrf.mxu0
      %v2270 = vadd.f32 0.0, %v2269
      %2271 = vmatmul.f32.gmra.mxu0 %v2145
      %v2272 = vpop.f32.mrf.mxu0
      %v2273 = vadd.f32 0.0, %v2272
      %2274 = vmatmul.f32.gmra.mxu0 %v2148
      %v2275 = vpop.f32.mrf.mxu0
      %v2276 = vadd.f32 0.0, %v2275
      %2277 = vmatmul.f32.gmra.mxu0 %v2151
      %v2278 = vpop.f32.mrf.mxu0
      %v2279 = vadd.f32 0.0, %v2278
      %2280 = vmatmul.f32.gmra.mxu0 %v2154
      %v2281 = vpop.f32.mrf.mxu0
      %v2282 = vadd.f32 0.0, %v2281
      %2283 = vmatmul.f32.gmra.mxu0 %v2157
      %v2284 = vpop.f32.mrf.mxu0
      %v2285 = vadd.f32 0.0, %v2284
      %2286 = vmatmul.f32.gmra.mxu0 %v2160
      %v2287 = vpop.f32.mrf.mxu0
      %v2288 = vadd.f32 0.0, %v2287
      %2289 = vmatmul.f32.gmra.mxu0 %v2163
      %v2290 = vpop.f32.mrf.mxu0
      %v2291 = vadd.f32 0.0, %v2290
      %2292 = vmatmul.f32.gmra.mxu0 %v2166
      %v2293 = vpop.f32.mrf.mxu0
      %v2294 = vadd.f32 0.0, %v2293
      %2295 = vmatmul.f32.gmra.mxu0 %v2169
      %v2296 = vpop.f32.mrf.mxu0
      %v2297 = vadd.f32 0.0, %v2296
      %2298 = vmatmul.f32.gmra.mxu0 %v2172
      %v2299 = vpop.f32.mrf.mxu0
      %v2300 = vadd.f32 0.0, %v2299
      %2301 = vmatmul.f32.gmra.mxu0 %v2175
      %v2302 = vpop.f32.mrf.mxu0
      %v2303 = vadd.f32 0.0, %v2302
      %2304 = vmatmul.f32.gmra.mxu0 %v2178
      %v2305 = vpop.f32.mrf.mxu0
      %v2306 = vadd.f32 0.0, %v2305
      %2307 = vmatmul.f32.gmra.mxu0 %v2181
      %v2308 = vpop.f32.mrf.mxu0
      %v2309 = vadd.f32 0.0, %v2308
      %2310 = vmatmul.f32.gmra.mxu0 %v2184
      %v2311 = vpop.f32.mrf.mxu0
      %v2312 = vadd.f32 0.0, %v2311
      %2313 = vmatmul.f32.gmra.mxu0 %v2187
      %v2314 = vpop.f32.mrf.mxu0
      %v2315 = vadd.f32 0.0, %v2314
      %2316 = vmatmul.f32.gmra.mxu0 %v2190
      %v2317 = vpop.f32.mrf.mxu0
      %v2318 = vadd.f32 0.0, %v2317
      %2319 = vmatmul.f32.gmra.mxu0 %v2193
      %v2320 = vpop.f32.mrf.mxu0
      %v2321 = vadd.f32 0.0, %v2320
      %2322 = vmatmul.f32.gmra.mxu0 %v2196
      %v2323 = vpop.f32.mrf.mxu0
      %v2324 = vadd.f32 0.0, %v2323
      %2325 = vmatmul.f32.gmra.mxu0 %v2199
      %v2326 = vpop.f32.mrf.mxu0
      %v2327 = vadd.f32 0.0, %v2326
      %2328 = vdwg.mxu0
      %v2329 = vadd.f32 %v2020, %v2222
      %v2330 = vadd.f32 %v2021, %v2225
      %v2331 = vadd.f32 %v2022, %v2228
      %v2332 = vadd.f32 %v2023, %v2231
      %v2333 = vadd.f32 %v2024, %v2234
      %v2334 = vadd.f32 %v2025, %v2237
      %v2335 = vadd.f32 %v2026, %v2240
      %v2336 = vadd.f32 %v2027, %v2243
      %v2337 = vadd.f32 %v2028, %v2246
      %v2338 = vadd.f32 %v2029, %v2249
      %v2339 = vadd.f32 %v2030, %v2252
      %v2340 = vadd.f32 %v2031, %v2255
      %v2341 = vadd.f32 %v2032, %v2258
      %v2342 = vadd.f32 %v2033, %v2261
      %v2343 = vadd.f32 %v2034, %v2264
      %v2344 = vadd.f32 %v2035, %v2267
      %v2345 = vadd.f32 %v2036, %v2270
      %v2346 = vadd.f32 %v2037, %v2273
      %v2347 = vadd.f32 %v2038, %v2276
      %v2348 = vadd.f32 %v2039, %v2279
      %v2349 = vadd.f32 %v2040, %v2282
      %v2350 = vadd.f32 %v2041, %v2285
      %v2351 = vadd.f32 %v2042, %v2288
      %v2352 = vadd.f32 %v2043, %v2291
      %v2353 = vadd.f32 %v2044, %v2294
      %v2354 = vadd.f32 %v2045, %v2297
      %v2355 = vadd.f32 %v2046, %v2300
      %v2356 = vadd.f32 %v2047, %v2303
      %v2357 = vadd.f32 %v2048, %v2306
      %v2358 = vadd.f32 %v2049, %v2309
      %v2359 = vadd.f32 %v2050, %v2312
      %v2360 = vadd.f32 %v2051, %v2315
      %v2361 = vadd.f32 %v2052, %v2318
      %v2362 = vadd.f32 %v2053, %v2321
      %v2363 = vadd.f32 %v2054, %v2324
      %v2364 = vadd.f32 %v2055, %v2327
      %v2365 = vld [vmem:[%s266 + $0x25] sm:$0xff]
      %v2366 = vld [vmem:[%s266 + $0x2d] sm:$0xff]
      %v2367 = vld [vmem:[%s266 + $0x35] sm:$0xff]
      %v2368 = vld [vmem:[%s266 + $0x3d] sm:$0xff]
      %v2369 = vld [vmem:[%s266 + $0x45] sm:$0xff]
      %v2370 = vld [vmem:[%s266 + $0x4d] sm:$0xff]
      %v2371 = vld [vmem:[%s266 + $0x55] sm:$0xff]
      %v2372 = vld [vmem:[%s266 + $0x5d] sm:$0xff]
      %v2373 = vld [vmem:[%s266 + $0x65] sm:$0xff]
      %v2374 = vld [vmem:[%s266 + $0x6d] sm:$0xff]
      %v2375 = vld [vmem:[%s266 + $0x75] sm:$0xff]
      %v2376 = vld [vmem:[%s266 + $0x7d] sm:$0xff]
      %v2377 = vld [vmem:[%s266 + $0x85] sm:$0xff]
      %v2378 = vld [vmem:[%s266 + $0x8d] sm:$0xff]
      %v2379 = vld [vmem:[%s266 + $0x95] sm:$0xff]
      %v2380 = vld [vmem:[%s266 + $0x9d] sm:$0xff]
      %v2381 = vld [vmem:[%s266 + $0xa5] sm:$0xff]
      %v2382 = vld [vmem:[%s266 + $0xad] sm:$0xff]
      %v2383 = vld [vmem:[%s266 + $0xb5] sm:$0xff]
      %v2384 = vld [vmem:[%s266 + $0xbd] sm:$0xff]
      %v2385 = vld [vmem:[%s266 + $0xc5] sm:$0xff]
      %v2386 = vld [vmem:[%s266 + $0xcd] sm:$0xff]
      %v2387 = vld [vmem:[%s266 + $0xd5] sm:$0xff]
      %v2388 = vld [vmem:[%s266 + $0xdd] sm:$0xff]
      %v2389 = vld [vmem:[%s266 + $0xe5] sm:$0xff]
      %v2390 = vld [vmem:[%s266 + $0xed] sm:$0xff]
      %v2391 = vld [vmem:[%s266 + $0xf5] sm:$0xff]
      %v2392 = vld [vmem:[%s266 + $0xfd] sm:$0xff]
      %v2393 = vld [vmem:[%s266 + $0x105] sm:$0xff]
      %v2394 = vld [vmem:[%s266 + $0x10d] sm:$0xff]
      %v2395 = vld [vmem:[%s266 + $0x115] sm:$0xff]
      %v2396 = vld [vmem:[%s266 + $0x11d] sm:$0xff]
      %v2397 = vld [vmem:[%s266 + $0x125] sm:$0xff]
      %v2398 = vld [vmem:[%s266 + $0x12d] sm:$0xff]
      %v2399 = vld [vmem:[%s266 + $0x135] sm:$0xff]
      %v2400 = vld [vmem:[%s266 + $0x13d] sm:$0xff]
      %v2401 = vld [vmem:[%s2 + $0x1c] sm:$0xf]
      %v2403 = vsel %vm346, %v2365, 0
      %v2406 = vsel %vm346, %v2366, 0
      %v2409 = vsel %vm346, %v2367, 0
      %v2412 = vsel %vm346, %v2368, 0
      %v2415 = vsel %vm346, %v2369, 0
      %v2418 = vsel %vm346, %v2370, 0
      %v2421 = vsel %vm346, %v2371, 0
      %v2424 = vsel %vm346, %v2372, 0
      %v2427 = vsel %vm346, %v2373, 0
      %v2430 = vsel %vm346, %v2374, 0
      %v2433 = vsel %vm346, %v2375, 0
      %v2436 = vsel %vm346, %v2376, 0
      %v2439 = vsel %vm346, %v2377, 0
      %v2442 = vsel %vm346, %v2378, 0
      %v2445 = vsel %vm346, %v2379, 0
      %v2448 = vsel %vm346, %v2380, 0
      %v2451 = vsel %vm346, %v2381, 0
      %v2454 = vsel %vm346, %v2382, 0
      %v2457 = vsel %vm346, %v2383, 0
      %v2460 = vsel %vm346, %v2384, 0
      %v2463 = vsel %vm346, %v2385, 0
      %v2466 = vsel %vm346, %v2386, 0
      %v2469 = vsel %vm346, %v2387, 0
      %v2472 = vsel %vm346, %v2388, 0
      %v2475 = vsel %vm346, %v2389, 0
      %v2478 = vsel %vm346, %v2390, 0
      %v2481 = vsel %vm346, %v2391, 0
      %v2484 = vsel %vm346, %v2392, 0
      %v2487 = vsel %vm346, %v2393, 0
      %v2490 = vsel %vm346, %v2394, 0
      %v2493 = vsel %vm346, %v2395, 0
      %v2496 = vsel %vm346, %v2396, 0
      %v2499 = vsel %vm346, %v2397, 0
      %v2502 = vsel %vm346, %v2398, 0
      %v2505 = vsel %vm346, %v2399, 0
      %v2508 = vsel %vm346, %v2400, 0
      %v2511 = vsel %vm455, %v2401, 0
      %2513 = vmatpush.msra.mxu0 0.0
      %2514 = vmatpush.msra.mxu0 0.0
      %2515 = vmatpush.msra.mxu0 0.0
      %2516 = vmatpush.msra.mxu0 0.0
      %2517 = vmatpush.msra.mxu0 0.0
      %2518 = vmatpush.msra.mxu0 0.0
      %2519 = vmatpush.msra.mxu0 0.0
      %2520 = vmatpush.msra.mxu0 0.0
      %2521 = vmatpush.msra.mxu0 0.0
      %2522 = vmatpush.msra.mxu0 0.0
      %2523 = vmatpush.msra.mxu0 0.0
      %2524 = vmatpush.msra.mxu0 0.0
      %2525 = vmatpush.msra.mxu0 0.0
      %2526 = vmatpush.msra.mxu0 0.0
      %2527 = vmatpush.msra.mxu0 0.0
      %2528 = vmatpush.msra.mxu0 %v2511
      %2529 = vmatmul.f32.gmra.mxu0 %v2403
      %v2530 = vpop.f32.mrf.mxu0
      %v2531 = vadd.f32 0.0, %v2530
      %2532 = vmatmul.f32.gmra.mxu0 %v2406
      %v2533 = vpop.f32.mrf.mxu0
      %v2534 = vadd.f32 0.0, %v2533
      %2535 = vmatmul.f32.gmra.mxu0 %v2409
      %v2536 = vpop.f32.mrf.mxu0
      %v2537 = vadd.f32 0.0, %v2536
      %2538 = vmatmul.f32.gmra.mxu0 %v2412
      %v2539 = vpop.f32.mrf.mxu0
      %v2540 = vadd.f32 0.0, %v2539
      %2541 = vmatmul.f32.gmra.mxu0 %v2415
      %v2542 = vpop.f32.mrf.mxu0
      %v2543 = vadd.f32 0.0, %v2542
      %2544 = vmatmul.f32.gmra.mxu0 %v2418
      %v2545 = vpop.f32.mrf.mxu0
      %v2546 = vadd.f32 0.0, %v2545
      %2547 = vmatmul.f32.gmra.mxu0 %v2421
      %v2548 = vpop.f32.mrf.mxu0
      %v2549 = vadd.f32 0.0, %v2548
      %2550 = vmatmul.f32.gmra.mxu0 %v2424
      %v2551 = vpop.f32.mrf.mxu0
      %v2552 = vadd.f32 0.0, %v2551
      %2553 = vmatmul.f32.gmra.mxu0 %v2427
      %v2554 = vpop.f32.mrf.mxu0
      %v2555 = vadd.f32 0.0, %v2554
      %2556 = vmatmul.f32.gmra.mxu0 %v2430
      %v2557 = vpop.f32.mrf.mxu0
      %v2558 = vadd.f32 0.0, %v2557
      %2559 = vmatmul.f32.gmra.mxu0 %v2433
      %v2560 = vpop.f32.mrf.mxu0
      %v2561 = vadd.f32 0.0, %v2560
      %2562 = vmatmul.f32.gmra.mxu0 %v2436
      %v2563 = vpop.f32.mrf.mxu0
      %v2564 = vadd.f32 0.0, %v2563
      %2565 = vmatmul.f32.gmra.mxu0 %v2439
      %v2566 = vpop.f32.mrf.mxu0
      %v2567 = vadd.f32 0.0, %v2566
      %2568 = vmatmul.f32.gmra.mxu0 %v2442
      %v2569 = vpop.f32.mrf.mxu0
      %v2570 = vadd.f32 0.0, %v2569
      %2571 = vmatmul.f32.gmra.mxu0 %v2445
      %v2572 = vpop.f32.mrf.mxu0
      %v2573 = vadd.f32 0.0, %v2572
      %2574 = vmatmul.f32.gmra.mxu0 %v2448
      %v2575 = vpop.f32.mrf.mxu0
      %v2576 = vadd.f32 0.0, %v2575
      %2577 = vmatmul.f32.gmra.mxu0 %v2451
      %v2578 = vpop.f32.mrf.mxu0
      %v2579 = vadd.f32 0.0, %v2578
      %2580 = vmatmul.f32.gmra.mxu0 %v2454
      %v2581 = vpop.f32.mrf.mxu0
      %v2582 = vadd.f32 0.0, %v2581
      %2583 = vmatmul.f32.gmra.mxu0 %v2457
      %v2584 = vpop.f32.mrf.mxu0
      %v2585 = vadd.f32 0.0, %v2584
      %2586 = vmatmul.f32.gmra.mxu0 %v2460
      %v2587 = vpop.f32.mrf.mxu0
      %v2588 = vadd.f32 0.0, %v2587
      %2589 = vmatmul.f32.gmra.mxu0 %v2463
      %v2590 = vpop.f32.mrf.mxu0
      %v2591 = vadd.f32 0.0, %v2590
      %2592 = vmatmul.f32.gmra.mxu0 %v2466
      %v2593 = vpop.f32.mrf.mxu0
      %v2594 = vadd.f32 0.0, %v2593
      %2595 = vmatmul.f32.gmra.mxu0 %v2469
      %v2596 = vpop.f32.mrf.mxu0
      %v2597 = vadd.f32 0.0, %v2596
      %2598 = vmatmul.f32.gmra.mxu0 %v2472
      %v2599 = vpop.f32.mrf.mxu0
      %v2600 = vadd.f32 0.0, %v2599
      %2601 = vmatmul.f32.gmra.mxu0 %v2475
      %v2602 = vpop.f32.mrf.mxu0
      %v2603 = vadd.f32 0.0, %v2602
      %2604 = vmatmul.f32.gmra.mxu0 %v2478
      %v2605 = vpop.f32.mrf.mxu0
      %v2606 = vadd.f32 0.0, %v2605
      %2607 = vmatmul.f32.gmra.mxu0 %v2481
      %v2608 = vpop.f32.mrf.mxu0
      %v2609 = vadd.f32 0.0, %v2608
      %2610 = vmatmul.f32.gmra.mxu0 %v2484
      %v2611 = vpop.f32.mrf.mxu0
      %v2612 = vadd.f32 0.0, %v2611
      %2613 = vmatmul.f32.gmra.mxu0 %v2487
      %v2614 = vpop.f32.mrf.mxu0
      %v2615 = vadd.f32 0.0, %v2614
      %2616 = vmatmul.f32.gmra.mxu0 %v2490
      %v2617 = vpop.f32.mrf.mxu0
      %v2618 = vadd.f32 0.0, %v2617
      %2619 = vmatmul.f32.gmra.mxu0 %v2493
      %v2620 = vpop.f32.mrf.mxu0
      %v2621 = vadd.f32 0.0, %v2620
      %2622 = vmatmul.f32.gmra.mxu0 %v2496
      %v2623 = vpop.f32.mrf.mxu0
      %v2624 = vadd.f32 0.0, %v2623
      %2625 = vmatmul.f32.gmra.mxu0 %v2499
      %v2626 = vpop.f32.mrf.mxu0
      %v2627 = vadd.f32 0.0, %v2626
      %2628 = vmatmul.f32.gmra.mxu0 %v2502
      %v2629 = vpop.f32.mrf.mxu0
      %v2630 = vadd.f32 0.0, %v2629
      %2631 = vmatmul.f32.gmra.mxu0 %v2505
      %v2632 = vpop.f32.mrf.mxu0
      %v2633 = vadd.f32 0.0, %v2632
      %2634 = vmatmul.f32.gmra.mxu0 %v2508
      %v2635 = vpop.f32.mrf.mxu0
      %v2636 = vadd.f32 0.0, %v2635
      %2637 = vdwg.mxu0
      %v2638 = vadd.f32 %v2329, %v2531
      %v2639 = vadd.f32 %v2330, %v2534
      %v2640 = vadd.f32 %v2331, %v2537
      %v2641 = vadd.f32 %v2332, %v2540
      %v2642 = vadd.f32 %v2333, %v2543
      %v2643 = vadd.f32 %v2334, %v2546
      %v2644 = vadd.f32 %v2335, %v2549
      %v2645 = vadd.f32 %v2336, %v2552
      %v2646 = vadd.f32 %v2337, %v2555
      %v2647 = vadd.f32 %v2338, %v2558
      %v2648 = vadd.f32 %v2339, %v2561
      %v2649 = vadd.f32 %v2340, %v2564
      %v2650 = vadd.f32 %v2341, %v2567
      %v2651 = vadd.f32 %v2342, %v2570
      %v2652 = vadd.f32 %v2343, %v2573
      %v2653 = vadd.f32 %v2344, %v2576
      %v2654 = vadd.f32 %v2345, %v2579
      %v2655 = vadd.f32 %v2346, %v2582
      %v2656 = vadd.f32 %v2347, %v2585
      %v2657 = vadd.f32 %v2348, %v2588
      %v2658 = vadd.f32 %v2349, %v2591
      %v2659 = vadd.f32 %v2350, %v2594
      %v2660 = vadd.f32 %v2351, %v2597
      %v2661 = vadd.f32 %v2352, %v2600
      %v2662 = vadd.f32 %v2353, %v2603
      %v2663 = vadd.f32 %v2354, %v2606
      %v2664 = vadd.f32 %v2355, %v2609
      %v2665 = vadd.f32 %v2356, %v2612
      %v2666 = vadd.f32 %v2357, %v2615
      %v2667 = vadd.f32 %v2358, %v2618
      %v2668 = vadd.f32 %v2359, %v2621
      %v2669 = vadd.f32 %v2360, %v2624
      %v2670 = vadd.f32 %v2361, %v2627
      %v2671 = vadd.f32 %v2362, %v2630
      %v2672 = vadd.f32 %v2363, %v2633
      %v2673 = vadd.f32 %v2364, %v2636
      %v2674 = vld [vmem:[%s266 + $0x26] sm:$0xff]
      %v2675 = vld [vmem:[%s266 + $0x2e] sm:$0xff]
      %v2676 = vld [vmem:[%s266 + $0x36] sm:$0xff]
      %v2677 = vld [vmem:[%s266 + $0x3e] sm:$0xff]
      %v2678 = vld [vmem:[%s266 + $0x46] sm:$0xff]
      %v2679 = vld [vmem:[%s266 + $0x4e] sm:$0xff]
      %v2680 = vld [vmem:[%s266 + $0x56] sm:$0xff]
      %v2681 = vld [vmem:[%s266 + $0x5e] sm:$0xff]
      %v2682 = vld [vmem:[%s266 + $0x66] sm:$0xff]
      %v2683 = vld [vmem:[%s266 + $0x6e] sm:$0xff]
      %v2684 = vld [vmem:[%s266 + $0x76] sm:$0xff]
      %v2685 = vld [vmem:[%s266 + $0x7e] sm:$0xff]
      %v2686 = vld [vmem:[%s266 + $0x86] sm:$0xff]
      %v2687 = vld [vmem:[%s266 + $0x8e] sm:$0xff]
      %v2688 = vld [vmem:[%s266 + $0x96] sm:$0xff]
      %v2689 = vld [vmem:[%s266 + $0x9e] sm:$0xff]
      %v2690 = vld [vmem:[%s266 + $0xa6] sm:$0xff]
      %v2691 = vld [vmem:[%s266 + $0xae] sm:$0xff]
      %v2692 = vld [vmem:[%s266 + $0xb6] sm:$0xff]
      %v2693 = vld [vmem:[%s266 + $0xbe] sm:$0xff]
      %v2694 = vld [vmem:[%s266 + $0xc6] sm:$0xff]
      %v2695 = vld [vmem:[%s266 + $0xce] sm:$0xff]
      %v2696 = vld [vmem:[%s266 + $0xd6] sm:$0xff]
      %v2697 = vld [vmem:[%s266 + $0xde] sm:$0xff]
      %v2698 = vld [vmem:[%s266 + $0xe6] sm:$0xff]
      %v2699 = vld [vmem:[%s266 + $0xee] sm:$0xff]
      %v2700 = vld [vmem:[%s266 + $0xf6] sm:$0xff]
      %v2701 = vld [vmem:[%s266 + $0xfe] sm:$0xff]
      %v2702 = vld [vmem:[%s266 + $0x106] sm:$0xff]
      %v2703 = vld [vmem:[%s266 + $0x10e] sm:$0xff]
      %v2704 = vld [vmem:[%s266 + $0x116] sm:$0xff]
      %v2705 = vld [vmem:[%s266 + $0x11e] sm:$0xff]
      %v2706 = vld [vmem:[%s266 + $0x126] sm:$0xff]
      %v2707 = vld [vmem:[%s266 + $0x12e] sm:$0xff]
      %v2708 = vld [vmem:[%s266 + $0x136] sm:$0xff]
      %v2709 = vld [vmem:[%s266 + $0x13e] sm:$0xff]
      %v2710 = vld [vmem:[%s2 + $0x20] sm:$0xf]
      %v2712 = vsel %vm346, %v2674, 0
      %v2715 = vsel %vm346, %v2675, 0
      %v2718 = vsel %vm346, %v2676, 0
      %v2721 = vsel %vm346, %v2677, 0
      %v2724 = vsel %vm346, %v2678, 0
      %v2727 = vsel %vm346, %v2679, 0
      %v2730 = vsel %vm346, %v2680, 0
      %v2733 = vsel %vm346, %v2681, 0
      %v2736 = vsel %vm346, %v2682, 0
      %v2739 = vsel %vm346, %v2683, 0
      %v2742 = vsel %vm346, %v2684, 0
      %v2745 = vsel %vm346, %v2685, 0
      %v2748 = vsel %vm346, %v2686, 0
      %v2751 = vsel %vm346, %v2687, 0
      %v2754 = vsel %vm346, %v2688, 0
      %v2757 = vsel %vm346, %v2689, 0
      %v2760 = vsel %vm346, %v2690, 0
      %v2763 = vsel %vm346, %v2691, 0
      %v2766 = vsel %vm346, %v2692, 0
      %v2769 = vsel %vm346, %v2693, 0
      %v2772 = vsel %vm346, %v2694, 0
      %v2775 = vsel %vm346, %v2695, 0
      %v2778 = vsel %vm346, %v2696, 0
      %v2781 = vsel %vm346, %v2697, 0
      %v2784 = vsel %vm346, %v2698, 0
      %v2787 = vsel %vm346, %v2699, 0
      %v2790 = vsel %vm346, %v2700, 0
      %v2793 = vsel %vm346, %v2701, 0
      %v2796 = vsel %vm346, %v2702, 0
      %v2799 = vsel %vm346, %v2703, 0
      %v2802 = vsel %vm346, %v2704, 0
      %v2805 = vsel %vm346, %v2705, 0
      %v2808 = vsel %vm346, %v2706, 0
      %v2811 = vsel %vm346, %v2707, 0
      %v2814 = vsel %vm346, %v2708, 0
      %v2817 = vsel %vm346, %v2709, 0
      %v2820 = vsel %vm455, %v2710, 0
      %2822 = vmatpush.msra.mxu0 0.0
      %2823 = vmatpush.msra.mxu0 0.0
      %2824 = vmatpush.msra.mxu0 0.0
      %2825 = vmatpush.msra.mxu0 0.0
      %2826 = vmatpush.msra.mxu0 0.0
      %2827 = vmatpush.msra.mxu0 0.0
      %2828 = vmatpush.msra.mxu0 0.0
      %2829 = vmatpush.msra.mxu0 0.0
      %2830 = vmatpush.msra.mxu0 0.0
      %2831 = vmatpush.msra.mxu0 0.0
      %2832 = vmatpush.msra.mxu0 0.0
      %2833 = vmatpush.msra.mxu0 0.0
      %2834 = vmatpush.msra.mxu0 0.0
      %2835 = vmatpush.msra.mxu0 0.0
      %2836 = vmatpush.msra.mxu0 0.0
      %2837 = vmatpush.msra.mxu0 %v2820
      %2838 = vmatmul.f32.gmra.mxu0 %v2712
      %v2839 = vpop.f32.mrf.mxu0
      %v2840 = vadd.f32 0.0, %v2839
      %2841 = vmatmul.f32.gmra.mxu0 %v2715
      %v2842 = vpop.f32.mrf.mxu0
      %v2843 = vadd.f32 0.0, %v2842
      %2844 = vmatmul.f32.gmra.mxu0 %v2718
      %v2845 = vpop.f32.mrf.mxu0
      %v2846 = vadd.f32 0.0, %v2845
      %2847 = vmatmul.f32.gmra.mxu0 %v2721
      %v2848 = vpop.f32.mrf.mxu0
      %v2849 = vadd.f32 0.0, %v2848
      %2850 = vmatmul.f32.gmra.mxu0 %v2724
      %v2851 = vpop.f32.mrf.mxu0
      %v2852 = vadd.f32 0.0, %v2851
      %2853 = vmatmul.f32.gmra.mxu0 %v2727
      %v2854 = vpop.f32.mrf.mxu0
      %v2855 = vadd.f32 0.0, %v2854
      %2856 = vmatmul.f32.gmra.mxu0 %v2730
      %v2857 = vpop.f32.mrf.mxu0
      %v2858 = vadd.f32 0.0, %v2857
      %2859 = vmatmul.f32.gmra.mxu0 %v2733
      %v2860 = vpop.f32.mrf.mxu0
      %v2861 = vadd.f32 0.0, %v2860
      %2862 = vmatmul.f32.gmra.mxu0 %v2736
      %v2863 = vpop.f32.mrf.mxu0
      %v2864 = vadd.f32 0.0, %v2863
      %2865 = vmatmul.f32.gmra.mxu0 %v2739
      %v2866 = vpop.f32.mrf.mxu0
      %v2867 = vadd.f32 0.0, %v2866
      %2868 = vmatmul.f32.gmra.mxu0 %v2742
      %v2869 = vpop.f32.mrf.mxu0
      %v2870 = vadd.f32 0.0, %v2869
      %2871 = vmatmul.f32.gmra.mxu0 %v2745
      %v2872 = vpop.f32.mrf.mxu0
      %v2873 = vadd.f32 0.0, %v2872
      %2874 = vmatmul.f32.gmra.mxu0 %v2748
      %v2875 = vpop.f32.mrf.mxu0
      %v2876 = vadd.f32 0.0, %v2875
      %2877 = vmatmul.f32.gmra.mxu0 %v2751
      %v2878 = vpop.f32.mrf.mxu0
      %v2879 = vadd.f32 0.0, %v2878
      %2880 = vmatmul.f32.gmra.mxu0 %v2754
      %v2881 = vpop.f32.mrf.mxu0
      %v2882 = vadd.f32 0.0, %v2881
      %2883 = vmatmul.f32.gmra.mxu0 %v2757
      %v2884 = vpop.f32.mrf.mxu0
      %v2885 = vadd.f32 0.0, %v2884
      %2886 = vmatmul.f32.gmra.mxu0 %v2760
      %v2887 = vpop.f32.mrf.mxu0
      %v2888 = vadd.f32 0.0, %v2887
      %2889 = vmatmul.f32.gmra.mxu0 %v2763
      %v2890 = vpop.f32.mrf.mxu0
      %v2891 = vadd.f32 0.0, %v2890
      %2892 = vmatmul.f32.gmra.mxu0 %v2766
      %v2893 = vpop.f32.mrf.mxu0
      %v2894 = vadd.f32 0.0, %v2893
      %2895 = vmatmul.f32.gmra.mxu0 %v2769
      %v2896 = vpop.f32.mrf.mxu0
      %v2897 = vadd.f32 0.0, %v2896
      %2898 = vmatmul.f32.gmra.mxu0 %v2772
      %v2899 = vpop.f32.mrf.mxu0
      %v2900 = vadd.f32 0.0, %v2899
      %2901 = vmatmul.f32.gmra.mxu0 %v2775
      %v2902 = vpop.f32.mrf.mxu0
      %v2903 = vadd.f32 0.0, %v2902
      %2904 = vmatmul.f32.gmra.mxu0 %v2778
      %v2905 = vpop.f32.mrf.mxu0
      %v2906 = vadd.f32 0.0, %v2905
      %2907 = vmatmul.f32.gmra.mxu0 %v2781
      %v2908 = vpop.f32.mrf.mxu0
      %v2909 = vadd.f32 0.0, %v2908
      %2910 = vmatmul.f32.gmra.mxu0 %v2784
      %v2911 = vpop.f32.mrf.mxu0
      %v2912 = vadd.f32 0.0, %v2911
      %2913 = vmatmul.f32.gmra.mxu0 %v2787
      %v2914 = vpop.f32.mrf.mxu0
      %v2915 = vadd.f32 0.0, %v2914
      %2916 = vmatmul.f32.gmra.mxu0 %v2790
      %v2917 = vpop.f32.mrf.mxu0
      %v2918 = vadd.f32 0.0, %v2917
      %2919 = vmatmul.f32.gmra.mxu0 %v2793
      %v2920 = vpop.f32.mrf.mxu0
      %v2921 = vadd.f32 0.0, %v2920
      %2922 = vmatmul.f32.gmra.mxu0 %v2796
      %v2923 = vpop.f32.mrf.mxu0
      %v2924 = vadd.f32 0.0, %v2923
      %2925 = vmatmul.f32.gmra.mxu0 %v2799
      %v2926 = vpop.f32.mrf.mxu0
      %v2927 = vadd.f32 0.0, %v2926
      %2928 = vmatmul.f32.gmra.mxu0 %v2802
      %v2929 = vpop.f32.mrf.mxu0
      %v2930 = vadd.f32 0.0, %v2929
      %2931 = vmatmul.f32.gmra.mxu0 %v2805
      %v2932 = vpop.f32.mrf.mxu0
      %v2933 = vadd.f32 0.0, %v2932
      %2934 = vmatmul.f32.gmra.mxu0 %v2808
      %v2935 = vpop.f32.mrf.mxu0
      %v2936 = vadd.f32 0.0, %v2935
      %2937 = vmatmul.f32.gmra.mxu0 %v2811
      %v2938 = vpop.f32.mrf.mxu0
      %v2939 = vadd.f32 0.0, %v2938
      %2940 = vmatmul.f32.gmra.mxu0 %v2814
      %v2941 = vpop.f32.mrf.mxu0
      %v2942 = vadd.f32 0.0, %v2941
      %2943 = vmatmul.f32.gmra.mxu0 %v2817
      %v2944 = vpop.f32.mrf.mxu0
      %v2945 = vadd.f32 0.0, %v2944
      %2946 = vdwg.mxu0
      %v2947 = vadd.f32 %v2638, %v2840
      %v2948 = vadd.f32 %v2639, %v2843
      %v2949 = vadd.f32 %v2640, %v2846
      %v2950 = vadd.f32 %v2641, %v2849
      %v2951 = vadd.f32 %v2642, %v2852
      %v2952 = vadd.f32 %v2643, %v2855
      %v2953 = vadd.f32 %v2644, %v2858
      %v2954 = vadd.f32 %v2645, %v2861
      %v2955 = vadd.f32 %v2646, %v2864
      %v2956 = vadd.f32 %v2647, %v2867
      %v2957 = vadd.f32 %v2648, %v2870
      %v2958 = vadd.f32 %v2649, %v2873
      %v2959 = vadd.f32 %v2650, %v2876
      %v2960 = vadd.f32 %v2651, %v2879
      %v2961 = vadd.f32 %v2652, %v2882
      %v2962 = vadd.f32 %v2653, %v2885
      %v2963 = vadd.f32 %v2654, %v2888
      %v2964 = vadd.f32 %v2655, %v2891
      %v2965 = vadd.f32 %v2656, %v2894
      %v2966 = vadd.f32 %v2657, %v2897
      %v2967 = vadd.f32 %v2658, %v2900
      %v2968 = vadd.f32 %v2659, %v2903
      %v2969 = vadd.f32 %v2660, %v2906
      %v2970 = vadd.f32 %v2661, %v2909
      %v2971 = vadd.f32 %v2662, %v2912
      %v2972 = vadd.f32 %v2663, %v2915
      %v2973 = vadd.f32 %v2664, %v2918
      %v2974 = vadd.f32 %v2665, %v2921
      %v2975 = vadd.f32 %v2666, %v2924
      %v2976 = vadd.f32 %v2667, %v2927
      %v2977 = vadd.f32 %v2668, %v2930
      %v2978 = vadd.f32 %v2669, %v2933
      %v2979 = vadd.f32 %v2670, %v2936
      %v2980 = vadd.f32 %v2671, %v2939
      %v2981 = vadd.f32 %v2672, %v2942
      %v2982 = vadd.f32 %v2673, %v2945
      %v2983 = vld [vmem:[%s3] sm:$0x1]
      %v2985 = vperm.slane %v2983, 0
      %v2987 = vadd.f32 %v2947, %v2985
      %v2988 = vadd.f32 %v2948, %v2985
      %v2989 = vadd.f32 %v2949, %v2985
      %v2990 = vadd.f32 %v2950, %v2985
      %v2991 = vadd.f32 %v2951, %v2985
      %v2992 = vadd.f32 %v2952, %v2985
      %v2993 = vadd.f32 %v2953, %v2985
      %v2994 = vadd.f32 %v2954, %v2985
      %v2995 = vadd.f32 %v2955, %v2985
      %v2996 = vadd.f32 %v2956, %v2985
      %v2997 = vadd.f32 %v2957, %v2985
      %v2998 = vadd.f32 %v2958, %v2985
      %v2999 = vadd.f32 %v2959, %v2985
      %v3000 = vadd.f32 %v2960, %v2985
      %v3001 = vadd.f32 %v2961, %v2985
      %v3002 = vadd.f32 %v2962, %v2985
      %v3003 = vadd.f32 %v2963, %v2985
      %v3004 = vadd.f32 %v2964, %v2985
      %v3005 = vadd.f32 %v2965, %v2985
      %v3006 = vadd.f32 %v2966, %v2985
      %v3007 = vadd.f32 %v2967, %v2985
      %v3008 = vadd.f32 %v2968, %v2985
      %v3009 = vadd.f32 %v2969, %v2985
      %v3010 = vadd.f32 %v2970, %v2985
      %v3011 = vadd.f32 %v2971, %v2985
      %v3012 = vadd.f32 %v2972, %v2985
      %v3013 = vadd.f32 %v2973, %v2985
      %v3014 = vadd.f32 %v2974, %v2985
      %v3015 = vadd.f32 %v2975, %v2985
      %v3016 = vadd.f32 %v2976, %v2985
      %v3017 = vadd.f32 %v2977, %v2985
      %v3018 = vadd.f32 %v2978, %v2985
      %v3019 = vadd.f32 %v2979, %v2985
      %v3020 = vadd.f32 %v2980, %v2985
      %v3021 = vadd.f32 %v2981, %v2985
      %v3022 = vadd.f32 %v2982, %v2985
      %v3023 = vlaneseq
      %v3024 = vshrl.u32 %v3023, 7
      %v3025 = vadd.s32 %v3024, 8
      %v3026 = vadd.s32 %v3024, 16
      %v3027 = vadd.s32 %v3024, 24
      %v3028 = vadd.s32 %v3024, 32
      %v3029 = vadd.s32 %v3024, 40
      %v3030 = vadd.s32 %v3024, 48
      %v3031 = vadd.s32 %v3024, 56
      %v3032 = vadd.s32 %v3024, 64
      %v3033 = vadd.s32 %v3024, 72
      %v3034 = vadd.s32 %v3024, 80
      %v3035 = vadd.s32 %v3024, 88
      %v3036 = vadd.s32 %v3024, 96
      %v3037 = vadd.s32 %v3024, 104
      %v3038 = vadd.s32 %v3024, 112
      %v3039 = vadd.s32 %v3024, 120
      %v3040 = vadd.s32 %v3024, 128
      %v3041 = vadd.s32 %v3024, 136
      %v3042 = vadd.s32 %v3024, 144
      %v3043 = vadd.s32 %v3024, 152
      %v3044 = vadd.s32 %v3024, 160
      %v3045 = vadd.s32 %v3024, 168
      %v3046 = vadd.s32 %v3024, 176
      %v3047 = vadd.s32 %v3024, 184
      %v3048 = vadd.s32 %v3024, 192
      %v3049 = vadd.s32 %v3024, 200
      %v3050 = vadd.s32 %v3024, 208
      %v3051 = vadd.s32 %v3024, 216
      %v3052 = vadd.s32 %v3024, 224
      %v3053 = vadd.s32 %v3024, 232
      %v3054 = vadd.s32 %v3024, 240
      %v3055 = vadd.s32 %v3024, 248
      %v3056 = vadd.s32 %v3024, 256
      %v3057 = vadd.s32 %v3024, 264
      %v3058 = vadd.s32 %v3024, 272
      %v3059 = vadd.s32 %v3024, 280
      %vm3060 = vcmp.lt.s32.totalorder %v3024, 0
      %v3061 = vsub.s32 0, %v3024
      %v3062 = vsel %vm3060, %v3061, %v3024
      %v3063 = vand.u32 %v3062, 65535
      %v3064 = vshrl.u32 %v3062, 16
      %v3066 = vmul.u32 %v3063, 14564
      %v3067 = vmul.u32 %v3063, 58254
      %v3068 = vmul.u32 %v3064, 14564
      %v3069 = vmul.u32 %v3064, 58254
      %v3070 = vshll.u32 %v3067, 16
      %v3071 = vshrl.u32 %v3067, 16
      %v3072 = vshll.u32 %v3068, 16
      %v3073 = vshrl.u32 %v3068, 16
      %vm3074 = vc.u32 %v3066, %v3070
      %v3075 = vsel %vm3074, 1, 0
      %v3076 = vadd.s32 %v3066, %v3070
      %v3077 = vadd.s32 %v3069, %v3075
      %vm3078 = vc.u32 %v3076, %v3072
      %v3079 = vsel %vm3078, 1, 0
      %v3080 = vadd.s32 %v3076, %v3072
      %v3081 = vadd.s32 %v3077, %v3079
      %v3082 = vadd.s32 %v3081, %v3071
      %v3083 = vadd.s32 %v3082, %v3073
      %v3084 = vshrl.u32 %v3083, 4
      %v3085 = vmul.u32 %v3084, 18
      %v3086 = vsub.s32 %v3062, %v3085
      %v3087 = vsub.s32 0, %v3086
      %v3088 = vsel %vm3060, %v3087, %v3086
      %vm3089 = vcmp.lt.s32.totalorder %v3025, 0
      %v3090 = vsub.s32 0, %v3025
      %v3091 = vsel %vm3089, %v3090, %v3025
      %v3092 = vand.u32 %v3091, 65535
      %v3093 = vshrl.u32 %v3091, 16
      %v3095 = vmul.u32 %v3092, 14564
      %v3096 = vmul.u32 %v3092, 58254
      %v3097 = vmul.u32 %v3093, 14564
      %v3098 = vmul.u32 %v3093, 58254
      %v3099 = vshll.u32 %v3096, 16
      %v3100 = vshrl.u32 %v3096, 16
      %v3101 = vshll.u32 %v3097, 16
      %v3102 = vshrl.u32 %v3097, 16
      %vm3103 = vc.u32 %v3095, %v3099
      %v3104 = vsel %vm3103, 1, 0
      %v3105 = vadd.s32 %v3095, %v3099
      %v3106 = vadd.s32 %v3098, %v3104
      %vm3107 = vc.u32 %v3105, %v3101
      %v3108 = vsel %vm3107, 1, 0
      %v3109 = vadd.s32 %v3105, %v3101
      %v3110 = vadd.s32 %v3106, %v3108
      %v3111 = vadd.s32 %v3110, %v3100
      %v3112 = vadd.s32 %v3111, %v3102
      %v3113 = vshrl.u32 %v3112, 4
      %v3114 = vmul.u32 %v3113, 18
      %v3115 = vsub.s32 %v3091, %v3114
      %v3116 = vsub.s32 0, %v3115
      %v3117 = vsel %vm3089, %v3116, %v3115
      %vm3118 = vcmp.lt.s32.totalorder %v3026, 0
      %v3119 = vsub.s32 0, %v3026
      %v3120 = vsel %vm3118, %v3119, %v3026
      %v3121 = vand.u32 %v3120, 65535
      %v3122 = vshrl.u32 %v3120, 16
      %v3124 = vmul.u32 %v3121, 14564
      %v3125 = vmul.u32 %v3121, 58254
      %v3126 = vmul.u32 %v3122, 14564
      %v3127 = vmul.u32 %v3122, 58254
      %v3128 = vshll.u32 %v3125, 16
      %v3129 = vshrl.u32 %v3125, 16
      %v3130 = vshll.u32 %v3126, 16
      %v3131 = vshrl.u32 %v3126, 16
      %vm3132 = vc.u32 %v3124, %v3128
      %v3133 = vsel %vm3132, 1, 0
      %v3134 = vadd.s32 %v3124, %v3128
      %v3135 = vadd.s32 %v3127, %v3133
      %vm3136 = vc.u32 %v3134, %v3130
      %v3137 = vsel %vm3136, 1, 0
      %v3138 = vadd.s32 %v3134, %v3130
      %v3139 = vadd.s32 %v3135, %v3137
      %v3140 = vadd.s32 %v3139, %v3129
      %v3141 = vadd.s32 %v3140, %v3131
      %v3142 = vshrl.u32 %v3141, 4
      %v3143 = vmul.u32 %v3142, 18
      %v3144 = vsub.s32 %v3120, %v3143
      %v3145 = vsub.s32 0, %v3144
      %v3146 = vsel %vm3118, %v3145, %v3144
      %vm3147 = vcmp.lt.s32.totalorder %v3027, 0
      %v3148 = vsub.s32 0, %v3027
      %v3149 = vsel %vm3147, %v3148, %v3027
      %v3150 = vand.u32 %v3149, 65535
      %v3151 = vshrl.u32 %v3149, 16
      %v3153 = vmul.u32 %v3150, 14564
      %v3154 = vmul.u32 %v3150, 58254
      %v3155 = vmul.u32 %v3151, 14564
      %v3156 = vmul.u32 %v3151, 58254
      %v3157 = vshll.u32 %v3154, 16
      %v3158 = vshrl.u32 %v3154, 16
      %v3159 = vshll.u32 %v3155, 16
      %v3160 = vshrl.u32 %v3155, 16
      %vm3161 = vc.u32 %v3153, %v3157
      %v3162 = vsel %vm3161, 1, 0
      %v3163 = vadd.s32 %v3153, %v3157
      %v3164 = vadd.s32 %v3156, %v3162
      %vm3165 = vc.u32 %v3163, %v3159
      %v3166 = vsel %vm3165, 1, 0
      %v3167 = vadd.s32 %v3163, %v3159
      %v3168 = vadd.s32 %v3164, %v3166
      %v3169 = vadd.s32 %v3168, %v3158
      %v3170 = vadd.s32 %v3169, %v3160
      %v3171 = vshrl.u32 %v3170, 4
      %v3172 = vmul.u32 %v3171, 18
      %v3173 = vsub.s32 %v3149, %v3172
      %v3174 = vsub.s32 0, %v3173
      %v3175 = vsel %vm3147, %v3174, %v3173
      %vm3176 = vcmp.lt.s32.totalorder %v3028, 0
      %v3177 = vsub.s32 0, %v3028
      %v3178 = vsel %vm3176, %v3177, %v3028
      %v3179 = vand.u32 %v3178, 65535
      %v3180 = vshrl.u32 %v3178, 16
      %v3182 = vmul.u32 %v3179, 14564
      %v3183 = vmul.u32 %v3179, 58254
      %v3184 = vmul.u32 %v3180, 14564
      %v3185 = vmul.u32 %v3180, 58254
      %v3186 = vshll.u32 %v3183, 16
      %v3187 = vshrl.u32 %v3183, 16
      %v3188 = vshll.u32 %v3184, 16
      %v3189 = vshrl.u32 %v3184, 16
      %vm3190 = vc.u32 %v3182, %v3186
      %v3191 = vsel %vm3190, 1, 0
      %v3192 = vadd.s32 %v3182, %v3186
      %v3193 = vadd.s32 %v3185, %v3191
      %vm3194 = vc.u32 %v3192, %v3188
      %v3195 = vsel %vm3194, 1, 0
      %v3196 = vadd.s32 %v3192, %v3188
      %v3197 = vadd.s32 %v3193, %v3195
      %v3198 = vadd.s32 %v3197, %v3187
      %v3199 = vadd.s32 %v3198, %v3189
      %v3200 = vshrl.u32 %v3199, 4
      %v3201 = vmul.u32 %v3200, 18
      %v3202 = vsub.s32 %v3178, %v3201
      %v3203 = vsub.s32 0, %v3202
      %v3204 = vsel %vm3176, %v3203, %v3202
      %vm3205 = vcmp.lt.s32.totalorder %v3029, 0
      %v3206 = vsub.s32 0, %v3029
      %v3207 = vsel %vm3205, %v3206, %v3029
      %v3208 = vand.u32 %v3207, 65535
      %v3209 = vshrl.u32 %v3207, 16
      %v3211 = vmul.u32 %v3208, 14564
      %v3212 = vmul.u32 %v3208, 58254
      %v3213 = vmul.u32 %v3209, 14564
      %v3214 = vmul.u32 %v3209, 58254
      %v3215 = vshll.u32 %v3212, 16
      %v3216 = vshrl.u32 %v3212, 16
      %v3217 = vshll.u32 %v3213, 16
      %v3218 = vshrl.u32 %v3213, 16
      %vm3219 = vc.u32 %v3211, %v3215
      %v3220 = vsel %vm3219, 1, 0
      %v3221 = vadd.s32 %v3211, %v3215
      %v3222 = vadd.s32 %v3214, %v3220
      %vm3223 = vc.u32 %v3221, %v3217
      %v3224 = vsel %vm3223, 1, 0
      %v3225 = vadd.s32 %v3221, %v3217
      %v3226 = vadd.s32 %v3222, %v3224
      %v3227 = vadd.s32 %v3226, %v3216
      %v3228 = vadd.s32 %v3227, %v3218
      %v3229 = vshrl.u32 %v3228, 4
      %v3230 = vmul.u32 %v3229, 18
      %v3231 = vsub.s32 %v3207, %v3230
      %v3232 = vsub.s32 0, %v3231
      %v3233 = vsel %vm3205, %v3232, %v3231
      %vm3234 = vcmp.lt.s32.totalorder %v3030, 0
      %v3235 = vsub.s32 0, %v3030
      %v3236 = vsel %vm3234, %v3235, %v3030
      %v3237 = vand.u32 %v3236, 65535
      %v3238 = vshrl.u32 %v3236, 16
      %v3240 = vmul.u32 %v3237, 14564
      %v3241 = vmul.u32 %v3237, 58254
      %v3242 = vmul.u32 %v3238, 14564
      %v3243 = vmul.u32 %v3238, 58254
      %v3244 = vshll.u32 %v3241, 16
      %v3245 = vshrl.u32 %v3241, 16
      %v3246 = vshll.u32 %v3242, 16
      %v3247 = vshrl.u32 %v3242, 16
      %vm3248 = vc.u32 %v3240, %v3244
      %v3249 = vsel %vm3248, 1, 0
      %v3250 = vadd.s32 %v3240, %v3244
      %v3251 = vadd.s32 %v3243, %v3249
      %vm3252 = vc.u32 %v3250, %v3246
      %v3253 = vsel %vm3252, 1, 0
      %v3254 = vadd.s32 %v3250, %v3246
      %v3255 = vadd.s32 %v3251, %v3253
      %v3256 = vadd.s32 %v3255, %v3245
      %v3257 = vadd.s32 %v3256, %v3247
      %v3258 = vshrl.u32 %v3257, 4
      %v3259 = vmul.u32 %v3258, 18
      %v3260 = vsub.s32 %v3236, %v3259
      %v3261 = vsub.s32 0, %v3260
      %v3262 = vsel %vm3234, %v3261, %v3260
      %vm3263 = vcmp.lt.s32.totalorder %v3031, 0
      %v3264 = vsub.s32 0, %v3031
      %v3265 = vsel %vm3263, %v3264, %v3031
      %v3266 = vand.u32 %v3265, 65535
      %v3267 = vshrl.u32 %v3265, 16
      %v3269 = vmul.u32 %v3266, 14564
      %v3270 = vmul.u32 %v3266, 58254
      %v3271 = vmul.u32 %v3267, 14564
      %v3272 = vmul.u32 %v3267, 58254
      %v3273 = vshll.u32 %v3270, 16
      %v3274 = vshrl.u32 %v3270, 16
      %v3275 = vshll.u32 %v3271, 16
      %v3276 = vshrl.u32 %v3271, 16
      %vm3277 = vc.u32 %v3269, %v3273
      %v3278 = vsel %vm3277, 1, 0
      %v3279 = vadd.s32 %v3269, %v3273
      %v3280 = vadd.s32 %v3272, %v3278
      %vm3281 = vc.u32 %v3279, %v3275
      %v3282 = vsel %vm3281, 1, 0
      %v3283 = vadd.s32 %v3279, %v3275
      %v3284 = vadd.s32 %v3280, %v3282
      %v3285 = vadd.s32 %v3284, %v3274
      %v3286 = vadd.s32 %v3285, %v3276
      %v3287 = vshrl.u32 %v3286, 4
      %v3288 = vmul.u32 %v3287, 18
      %v3289 = vsub.s32 %v3265, %v3288
      %v3290 = vsub.s32 0, %v3289
      %v3291 = vsel %vm3263, %v3290, %v3289
      %vm3292 = vcmp.lt.s32.totalorder %v3032, 0
      %v3293 = vsub.s32 0, %v3032
      %v3294 = vsel %vm3292, %v3293, %v3032
      %v3295 = vand.u32 %v3294, 65535
      %v3296 = vshrl.u32 %v3294, 16
      %v3298 = vmul.u32 %v3295, 14564
      %v3299 = vmul.u32 %v3295, 58254
      %v3300 = vmul.u32 %v3296, 14564
      %v3301 = vmul.u32 %v3296, 58254
      %v3302 = vshll.u32 %v3299, 16
      %v3303 = vshrl.u32 %v3299, 16
      %v3304 = vshll.u32 %v3300, 16
      %v3305 = vshrl.u32 %v3300, 16
      %vm3306 = vc.u32 %v3298, %v3302
      %v3307 = vsel %vm3306, 1, 0
      %v3308 = vadd.s32 %v3298, %v3302
      %v3309 = vadd.s32 %v3301, %v3307
      %vm3310 = vc.u32 %v3308, %v3304
      %v3311 = vsel %vm3310, 1, 0
      %v3312 = vadd.s32 %v3308, %v3304
      %v3313 = vadd.s32 %v3309, %v3311
      %v3314 = vadd.s32 %v3313, %v3303
      %v3315 = vadd.s32 %v3314, %v3305
      %v3316 = vshrl.u32 %v3315, 4
      %v3317 = vmul.u32 %v3316, 18
      %v3318 = vsub.s32 %v3294, %v3317
      %v3319 = vsub.s32 0, %v3318
      %v3320 = vsel %vm3292, %v3319, %v3318
      %vm3321 = vcmp.lt.s32.totalorder %v3033, 0
      %v3322 = vsub.s32 0, %v3033
      %v3323 = vsel %vm3321, %v3322, %v3033
      %v3324 = vand.u32 %v3323, 65535
      %v3325 = vshrl.u32 %v3323, 16
      %v3327 = vmul.u32 %v3324, 14564
      %v3328 = vmul.u32 %v3324, 58254
      %v3329 = vmul.u32 %v3325, 14564
      %v3330 = vmul.u32 %v3325, 58254
      %v3331 = vshll.u32 %v3328, 16
      %v3332 = vshrl.u32 %v3328, 16
      %v3333 = vshll.u32 %v3329, 16
      %v3334 = vshrl.u32 %v3329, 16
      %vm3335 = vc.u32 %v3327, %v3331
      %v3336 = vsel %vm3335, 1, 0
      %v3337 = vadd.s32 %v3327, %v3331
      %v3338 = vadd.s32 %v3330, %v3336
      %vm3339 = vc.u32 %v3337, %v3333
      %v3340 = vsel %vm3339, 1, 0
      %v3341 = vadd.s32 %v3337, %v3333
      %v3342 = vadd.s32 %v3338, %v3340
      %v3343 = vadd.s32 %v3342, %v3332
      %v3344 = vadd.s32 %v3343, %v3334
      %v3345 = vshrl.u32 %v3344, 4
      %v3346 = vmul.u32 %v3345, 18
      %v3347 = vsub.s32 %v3323, %v3346
      %v3348 = vsub.s32 0, %v3347
      %v3349 = vsel %vm3321, %v3348, %v3347
      %vm3350 = vcmp.lt.s32.totalorder %v3034, 0
      %v3351 = vsub.s32 0, %v3034
      %v3352 = vsel %vm3350, %v3351, %v3034
      %v3353 = vand.u32 %v3352, 65535
      %v3354 = vshrl.u32 %v3352, 16
      %v3356 = vmul.u32 %v3353, 14564
      %v3357 = vmul.u32 %v3353, 58254
      %v3358 = vmul.u32 %v3354, 14564
      %v3359 = vmul.u32 %v3354, 58254
      %v3360 = vshll.u32 %v3357, 16
      %v3361 = vshrl.u32 %v3357, 16
      %v3362 = vshll.u32 %v3358, 16
      %v3363 = vshrl.u32 %v3358, 16
      %vm3364 = vc.u32 %v3356, %v3360
      %v3365 = vsel %vm3364, 1, 0
      %v3366 = vadd.s32 %v3356, %v3360
      %v3367 = vadd.s32 %v3359, %v3365
      %vm3368 = vc.u32 %v3366, %v3362
      %v3369 = vsel %vm3368, 1, 0
      %v3370 = vadd.s32 %v3366, %v3362
      %v3371 = vadd.s32 %v3367, %v3369
      %v3372 = vadd.s32 %v3371, %v3361
      %v3373 = vadd.s32 %v3372, %v3363
      %v3374 = vshrl.u32 %v3373, 4
      %v3375 = vmul.u32 %v3374, 18
      %v3376 = vsub.s32 %v3352, %v3375
      %v3377 = vsub.s32 0, %v3376
      %v3378 = vsel %vm3350, %v3377, %v3376
      %vm3379 = vcmp.lt.s32.totalorder %v3035, 0
      %v3380 = vsub.s32 0, %v3035
      %v3381 = vsel %vm3379, %v3380, %v3035
      %v3382 = vand.u32 %v3381, 65535
      %v3383 = vshrl.u32 %v3381, 16
      %v3385 = vmul.u32 %v3382, 14564
      %v3386 = vmul.u32 %v3382, 58254
      %v3387 = vmul.u32 %v3383, 14564
      %v3388 = vmul.u32 %v3383, 58254
      %v3389 = vshll.u32 %v3386, 16
      %v3390 = vshrl.u32 %v3386, 16
      %v3391 = vshll.u32 %v3387, 16
      %v3392 = vshrl.u32 %v3387, 16
      %vm3393 = vc.u32 %v3385, %v3389
      %v3394 = vsel %vm3393, 1, 0
      %v3395 = vadd.s32 %v3385, %v3389
      %v3396 = vadd.s32 %v3388, %v3394
      %vm3397 = vc.u32 %v3395, %v3391
      %v3398 = vsel %vm3397, 1, 0
      %v3399 = vadd.s32 %v3395, %v3391
      %v3400 = vadd.s32 %v3396, %v3398
      %v3401 = vadd.s32 %v3400, %v3390
      %v3402 = vadd.s32 %v3401, %v3392
      %v3403 = vshrl.u32 %v3402, 4
      %v3404 = vmul.u32 %v3403, 18
      %v3405 = vsub.s32 %v3381, %v3404
      %v3406 = vsub.s32 0, %v3405
      %v3407 = vsel %vm3379, %v3406, %v3405
      %vm3408 = vcmp.lt.s32.totalorder %v3036, 0
      %v3409 = vsub.s32 0, %v3036
      %v3410 = vsel %vm3408, %v3409, %v3036
      %v3411 = vand.u32 %v3410, 65535
      %v3412 = vshrl.u32 %v3410, 16
      %v3414 = vmul.u32 %v3411, 14564
      %v3415 = vmul.u32 %v3411, 58254
      %v3416 = vmul.u32 %v3412, 14564
      %v3417 = vmul.u32 %v3412, 58254
      %v3418 = vshll.u32 %v3415, 16
      %v3419 = vshrl.u32 %v3415, 16
      %v3420 = vshll.u32 %v3416, 16
      %v3421 = vshrl.u32 %v3416, 16
      %vm3422 = vc.u32 %v3414, %v3418
      %v3423 = vsel %vm3422, 1, 0
      %v3424 = vadd.s32 %v3414, %v3418
      %v3425 = vadd.s32 %v3417, %v3423
      %vm3426 = vc.u32 %v3424, %v3420
      %v3427 = vsel %vm3426, 1, 0
      %v3428 = vadd.s32 %v3424, %v3420
      %v3429 = vadd.s32 %v3425, %v3427
      %v3430 = vadd.s32 %v3429, %v3419
      %v3431 = vadd.s32 %v3430, %v3421
      %v3432 = vshrl.u32 %v3431, 4
      %v3433 = vmul.u32 %v3432, 18
      %v3434 = vsub.s32 %v3410, %v3433
      %v3435 = vsub.s32 0, %v3434
      %v3436 = vsel %vm3408, %v3435, %v3434
      %vm3437 = vcmp.lt.s32.totalorder %v3037, 0
      %v3438 = vsub.s32 0, %v3037
      %v3439 = vsel %vm3437, %v3438, %v3037
      %v3440 = vand.u32 %v3439, 65535
      %v3441 = vshrl.u32 %v3439, 16
      %v3443 = vmul.u32 %v3440, 14564
      %v3444 = vmul.u32 %v3440, 58254
      %v3445 = vmul.u32 %v3441, 14564
      %v3446 = vmul.u32 %v3441, 58254
      %v3447 = vshll.u32 %v3444, 16
      %v3448 = vshrl.u32 %v3444, 16
      %v3449 = vshll.u32 %v3445, 16
      %v3450 = vshrl.u32 %v3445, 16
      %vm3451 = vc.u32 %v3443, %v3447
      %v3452 = vsel %vm3451, 1, 0
      %v3453 = vadd.s32 %v3443, %v3447
      %v3454 = vadd.s32 %v3446, %v3452
      %vm3455 = vc.u32 %v3453, %v3449
      %v3456 = vsel %vm3455, 1, 0
      %v3457 = vadd.s32 %v3453, %v3449
      %v3458 = vadd.s32 %v3454, %v3456
      %v3459 = vadd.s32 %v3458, %v3448
      %v3460 = vadd.s32 %v3459, %v3450
      %v3461 = vshrl.u32 %v3460, 4
      %v3462 = vmul.u32 %v3461, 18
      %v3463 = vsub.s32 %v3439, %v3462
      %v3464 = vsub.s32 0, %v3463
      %v3465 = vsel %vm3437, %v3464, %v3463
      %vm3466 = vcmp.lt.s32.totalorder %v3038, 0
      %v3467 = vsub.s32 0, %v3038
      %v3468 = vsel %vm3466, %v3467, %v3038
      %v3469 = vand.u32 %v3468, 65535
      %v3470 = vshrl.u32 %v3468, 16
      %v3472 = vmul.u32 %v3469, 14564
      %v3473 = vmul.u32 %v3469, 58254
      %v3474 = vmul.u32 %v3470, 14564
      %v3475 = vmul.u32 %v3470, 58254
      %v3476 = vshll.u32 %v3473, 16
      %v3477 = vshrl.u32 %v3473, 16
      %v3478 = vshll.u32 %v3474, 16
      %v3479 = vshrl.u32 %v3474, 16
      %vm3480 = vc.u32 %v3472, %v3476
      %v3481 = vsel %vm3480, 1, 0
      %v3482 = vadd.s32 %v3472, %v3476
      %v3483 = vadd.s32 %v3475, %v3481
      %vm3484 = vc.u32 %v3482, %v3478
      %v3485 = vsel %vm3484, 1, 0
      %v3486 = vadd.s32 %v3482, %v3478
      %v3487 = vadd.s32 %v3483, %v3485
      %v3488 = vadd.s32 %v3487, %v3477
      %v3489 = vadd.s32 %v3488, %v3479
      %v3490 = vshrl.u32 %v3489, 4
      %v3491 = vmul.u32 %v3490, 18
      %v3492 = vsub.s32 %v3468, %v3491
      %v3493 = vsub.s32 0, %v3492
      %v3494 = vsel %vm3466, %v3493, %v3492
      %vm3495 = vcmp.lt.s32.totalorder %v3039, 0
      %v3496 = vsub.s32 0, %v3039
      %v3497 = vsel %vm3495, %v3496, %v3039
      %v3498 = vand.u32 %v3497, 65535
      %v3499 = vshrl.u32 %v3497, 16
      %v3501 = vmul.u32 %v3498, 14564
      %v3502 = vmul.u32 %v3498, 58254
      %v3503 = vmul.u32 %v3499, 14564
      %v3504 = vmul.u32 %v3499, 58254
      %v3505 = vshll.u32 %v3502, 16
      %v3506 = vshrl.u32 %v3502, 16
      %v3507 = vshll.u32 %v3503, 16
      %v3508 = vshrl.u32 %v3503, 16
      %vm3509 = vc.u32 %v3501, %v3505
      %v3510 = vsel %vm3509, 1, 0
      %v3511 = vadd.s32 %v3501, %v3505
      %v3512 = vadd.s32 %v3504, %v3510
      %vm3513 = vc.u32 %v3511, %v3507
      %v3514 = vsel %vm3513, 1, 0
      %v3515 = vadd.s32 %v3511, %v3507
      %v3516 = vadd.s32 %v3512, %v3514
      %v3517 = vadd.s32 %v3516, %v3506
      %v3518 = vadd.s32 %v3517, %v3508
      %v3519 = vshrl.u32 %v3518, 4
      %v3520 = vmul.u32 %v3519, 18
      %v3521 = vsub.s32 %v3497, %v3520
      %v3522 = vsub.s32 0, %v3521
      %v3523 = vsel %vm3495, %v3522, %v3521
      %vm3524 = vcmp.lt.s32.totalorder %v3040, 0
      %v3525 = vsub.s32 0, %v3040
      %v3526 = vsel %vm3524, %v3525, %v3040
      %v3527 = vand.u32 %v3526, 65535
      %v3528 = vshrl.u32 %v3526, 16
      %v3530 = vmul.u32 %v3527, 14564
      %v3531 = vmul.u32 %v3527, 58254
      %v3532 = vmul.u32 %v3528, 14564
      %v3533 = vmul.u32 %v3528, 58254
      %v3534 = vshll.u32 %v3531, 16
      %v3535 = vshrl.u32 %v3531, 16
      %v3536 = vshll.u32 %v3532, 16
      %v3537 = vshrl.u32 %v3532, 16
      %vm3538 = vc.u32 %v3530, %v3534
      %v3539 = vsel %vm3538, 1, 0
      %v3540 = vadd.s32 %v3530, %v3534
      %v3541 = vadd.s32 %v3533, %v3539
      %vm3542 = vc.u32 %v3540, %v3536
      %v3543 = vsel %vm3542, 1, 0
      %v3544 = vadd.s32 %v3540, %v3536
      %v3545 = vadd.s32 %v3541, %v3543
      %v3546 = vadd.s32 %v3545, %v3535
      %v3547 = vadd.s32 %v3546, %v3537
      %v3548 = vshrl.u32 %v3547, 4
      %v3549 = vmul.u32 %v3548, 18
      %v3550 = vsub.s32 %v3526, %v3549
      %v3551 = vsub.s32 0, %v3550
      %v3552 = vsel %vm3524, %v3551, %v3550
      %vm3553 = vcmp.lt.s32.totalorder %v3041, 0
      %v3554 = vsub.s32 0, %v3041
      %v3555 = vsel %vm3553, %v3554, %v3041
      %v3556 = vand.u32 %v3555, 65535
      %v3557 = vshrl.u32 %v3555, 16
      %v3559 = vmul.u32 %v3556, 14564
      %v3560 = vmul.u32 %v3556, 58254
      %v3561 = vmul.u32 %v3557, 14564
      %v3562 = vmul.u32 %v3557, 58254
      %v3563 = vshll.u32 %v3560, 16
      %v3564 = vshrl.u32 %v3560, 16
      %v3565 = vshll.u32 %v3561, 16
      %v3566 = vshrl.u32 %v3561, 16
      %vm3567 = vc.u32 %v3559, %v3563
      %v3568 = vsel %vm3567, 1, 0
      %v3569 = vadd.s32 %v3559, %v3563
      %v3570 = vadd.s32 %v3562, %v3568
      %vm3571 = vc.u32 %v3569, %v3565
      %v3572 = vsel %vm3571, 1, 0
      %v3573 = vadd.s32 %v3569, %v3565
      %v3574 = vadd.s32 %v3570, %v3572
      %v3575 = vadd.s32 %v3574, %v3564
      %v3576 = vadd.s32 %v3575, %v3566
      %v3577 = vshrl.u32 %v3576, 4
      %v3578 = vmul.u32 %v3577, 18
      %v3579 = vsub.s32 %v3555, %v3578
      %v3580 = vsub.s32 0, %v3579
      %v3581 = vsel %vm3553, %v3580, %v3579
      %vm3582 = vcmp.lt.s32.totalorder %v3042, 0
      %v3583 = vsub.s32 0, %v3042
      %v3584 = vsel %vm3582, %v3583, %v3042
      %v3585 = vand.u32 %v3584, 65535
      %v3586 = vshrl.u32 %v3584, 16
      %v3588 = vmul.u32 %v3585, 14564
      %v3589 = vmul.u32 %v3585, 58254
      %v3590 = vmul.u32 %v3586, 14564
      %v3591 = vmul.u32 %v3586, 58254
      %v3592 = vshll.u32 %v3589, 16
      %v3593 = vshrl.u32 %v3589, 16
      %v3594 = vshll.u32 %v3590, 16
      %v3595 = vshrl.u32 %v3590, 16
      %vm3596 = vc.u32 %v3588, %v3592
      %v3597 = vsel %vm3596, 1, 0
      %v3598 = vadd.s32 %v3588, %v3592
      %v3599 = vadd.s32 %v3591, %v3597
      %vm3600 = vc.u32 %v3598, %v3594
      %v3601 = vsel %vm3600, 1, 0
      %v3602 = vadd.s32 %v3598, %v3594
      %v3603 = vadd.s32 %v3599, %v3601
      %v3604 = vadd.s32 %v3603, %v3593
      %v3605 = vadd.s32 %v3604, %v3595
      %v3606 = vshrl.u32 %v3605, 4
      %v3607 = vmul.u32 %v3606, 18
      %v3608 = vsub.s32 %v3584, %v3607
      %v3609 = vsub.s32 0, %v3608
      %v3610 = vsel %vm3582, %v3609, %v3608
      %vm3611 = vcmp.lt.s32.totalorder %v3043, 0
      %v3612 = vsub.s32 0, %v3043
      %v3613 = vsel %vm3611, %v3612, %v3043
      %v3614 = vand.u32 %v3613, 65535
      %v3615 = vshrl.u32 %v3613, 16
      %v3617 = vmul.u32 %v3614, 14564
      %v3618 = vmul.u32 %v3614, 58254
      %v3619 = vmul.u32 %v3615, 14564
      %v3620 = vmul.u32 %v3615, 58254
      %v3621 = vshll.u32 %v3618, 16
      %v3622 = vshrl.u32 %v3618, 16
      %v3623 = vshll.u32 %v3619, 16
      %v3624 = vshrl.u32 %v3619, 16
      %vm3625 = vc.u32 %v3617, %v3621
      %v3626 = vsel %vm3625, 1, 0
      %v3627 = vadd.s32 %v3617, %v3621
      %v3628 = vadd.s32 %v3620, %v3626
      %vm3629 = vc.u32 %v3627, %v3623
      %v3630 = vsel %vm3629, 1, 0
      %v3631 = vadd.s32 %v3627, %v3623
      %v3632 = vadd.s32 %v3628, %v3630
      %v3633 = vadd.s32 %v3632, %v3622
      %v3634 = vadd.s32 %v3633, %v3624
      %v3635 = vshrl.u32 %v3634, 4
      %v3636 = vmul.u32 %v3635, 18
      %v3637 = vsub.s32 %v3613, %v3636
      %v3638 = vsub.s32 0, %v3637
      %v3639 = vsel %vm3611, %v3638, %v3637
      %vm3640 = vcmp.lt.s32.totalorder %v3044, 0
      %v3641 = vsub.s32 0, %v3044
      %v3642 = vsel %vm3640, %v3641, %v3044
      %v3643 = vand.u32 %v3642, 65535
      %v3644 = vshrl.u32 %v3642, 16
      %v3646 = vmul.u32 %v3643, 14564
      %v3647 = vmul.u32 %v3643, 58254
      %v3648 = vmul.u32 %v3644, 14564
      %v3649 = vmul.u32 %v3644, 58254
      %v3650 = vshll.u32 %v3647, 16
      %v3651 = vshrl.u32 %v3647, 16
      %v3652 = vshll.u32 %v3648, 16
      %v3653 = vshrl.u32 %v3648, 16
      %vm3654 = vc.u32 %v3646, %v3650
      %v3655 = vsel %vm3654, 1, 0
      %v3656 = vadd.s32 %v3646, %v3650
      %v3657 = vadd.s32 %v3649, %v3655
      %vm3658 = vc.u32 %v3656, %v3652
      %v3659 = vsel %vm3658, 1, 0
      %v3660 = vadd.s32 %v3656, %v3652
      %v3661 = vadd.s32 %v3657, %v3659
      %v3662 = vadd.s32 %v3661, %v3651
      %v3663 = vadd.s32 %v3662, %v3653
      %v3664 = vshrl.u32 %v3663, 4
      %v3665 = vmul.u32 %v3664, 18
      %v3666 = vsub.s32 %v3642, %v3665
      %v3667 = vsub.s32 0, %v3666
      %v3668 = vsel %vm3640, %v3667, %v3666
      %vm3669 = vcmp.lt.s32.totalorder %v3045, 0
      %v3670 = vsub.s32 0, %v3045
      %v3671 = vsel %vm3669, %v3670, %v3045
      %v3672 = vand.u32 %v3671, 65535
      %v3673 = vshrl.u32 %v3671, 16
      %v3675 = vmul.u32 %v3672, 14564
      %v3676 = vmul.u32 %v3672, 58254
      %v3677 = vmul.u32 %v3673, 14564
      %v3678 = vmul.u32 %v3673, 58254
      %v3679 = vshll.u32 %v3676, 16
      %v3680 = vshrl.u32 %v3676, 16
      %v3681 = vshll.u32 %v3677, 16
      %v3682 = vshrl.u32 %v3677, 16
      %vm3683 = vc.u32 %v3675, %v3679
      %v3684 = vsel %vm3683, 1, 0
      %v3685 = vadd.s32 %v3675, %v3679
      %v3686 = vadd.s32 %v3678, %v3684
      %vm3687 = vc.u32 %v3685, %v3681
      %v3688 = vsel %vm3687, 1, 0
      %v3689 = vadd.s32 %v3685, %v3681
      %v3690 = vadd.s32 %v3686, %v3688
      %v3691 = vadd.s32 %v3690, %v3680
      %v3692 = vadd.s32 %v3691, %v3682
      %v3693 = vshrl.u32 %v3692, 4
      %v3694 = vmul.u32 %v3693, 18
      %v3695 = vsub.s32 %v3671, %v3694
      %v3696 = vsub.s32 0, %v3695
      %v3697 = vsel %vm3669, %v3696, %v3695
      %vm3698 = vcmp.lt.s32.totalorder %v3046, 0
      %v3699 = vsub.s32 0, %v3046
      %v3700 = vsel %vm3698, %v3699, %v3046
      %v3701 = vand.u32 %v3700, 65535
      %v3702 = vshrl.u32 %v3700, 16
      %v3704 = vmul.u32 %v3701, 14564
      %v3705 = vmul.u32 %v3701, 58254
      %v3706 = vmul.u32 %v3702, 14564
      %v3707 = vmul.u32 %v3702, 58254
      %v3708 = vshll.u32 %v3705, 16
      %v3709 = vshrl.u32 %v3705, 16
      %v3710 = vshll.u32 %v3706, 16
      %v3711 = vshrl.u32 %v3706, 16
      %vm3712 = vc.u32 %v3704, %v3708
      %v3713 = vsel %vm3712, 1, 0
      %v3714 = vadd.s32 %v3704, %v3708
      %v3715 = vadd.s32 %v3707, %v3713
      %vm3716 = vc.u32 %v3714, %v3710
      %v3717 = vsel %vm3716, 1, 0
      %v3718 = vadd.s32 %v3714, %v3710
      %v3719 = vadd.s32 %v3715, %v3717
      %v3720 = vadd.s32 %v3719, %v3709
      %v3721 = vadd.s32 %v3720, %v3711
      %v3722 = vshrl.u32 %v3721, 4
      %v3723 = vmul.u32 %v3722, 18
      %v3724 = vsub.s32 %v3700, %v3723
      %v3725 = vsub.s32 0, %v3724
      %v3726 = vsel %vm3698, %v3725, %v3724
      %vm3727 = vcmp.lt.s32.totalorder %v3047, 0
      %v3728 = vsub.s32 0, %v3047
      %v3729 = vsel %vm3727, %v3728, %v3047
      %v3730 = vand.u32 %v3729, 65535
      %v3731 = vshrl.u32 %v3729, 16
      %v3733 = vmul.u32 %v3730, 14564
      %v3734 = vmul.u32 %v3730, 58254
      %v3735 = vmul.u32 %v3731, 14564
      %v3736 = vmul.u32 %v3731, 58254
      %v3737 = vshll.u32 %v3734, 16
      %v3738 = vshrl.u32 %v3734, 16
      %v3739 = vshll.u32 %v3735, 16
      %v3740 = vshrl.u32 %v3735, 16
      %vm3741 = vc.u32 %v3733, %v3737
      %v3742 = vsel %vm3741, 1, 0
      %v3743 = vadd.s32 %v3733, %v3737
      %v3744 = vadd.s32 %v3736, %v3742
      %vm3745 = vc.u32 %v3743, %v3739
      %v3746 = vsel %vm3745, 1, 0
      %v3747 = vadd.s32 %v3743, %v3739
      %v3748 = vadd.s32 %v3744, %v3746
      %v3749 = vadd.s32 %v3748, %v3738
      %v3750 = vadd.s32 %v3749, %v3740
      %v3751 = vshrl.u32 %v3750, 4
      %v3752 = vmul.u32 %v3751, 18
      %v3753 = vsub.s32 %v3729, %v3752
      %v3754 = vsub.s32 0, %v3753
      %v3755 = vsel %vm3727, %v3754, %v3753
      %vm3756 = vcmp.lt.s32.totalorder %v3048, 0
      %v3757 = vsub.s32 0, %v3048
      %v3758 = vsel %vm3756, %v3757, %v3048
      %v3759 = vand.u32 %v3758, 65535
      %v3760 = vshrl.u32 %v3758, 16
      %v3762 = vmul.u32 %v3759, 14564
      %v3763 = vmul.u32 %v3759, 58254
      %v3764 = vmul.u32 %v3760, 14564
      %v3765 = vmul.u32 %v3760, 58254
      %v3766 = vshll.u32 %v3763, 16
      %v3767 = vshrl.u32 %v3763, 16
      %v3768 = vshll.u32 %v3764, 16
      %v3769 = vshrl.u32 %v3764, 16
      %vm3770 = vc.u32 %v3762, %v3766
      %v3771 = vsel %vm3770, 1, 0
      %v3772 = vadd.s32 %v3762, %v3766
      %v3773 = vadd.s32 %v3765, %v3771
      %vm3774 = vc.u32 %v3772, %v3768
      %v3775 = vsel %vm3774, 1, 0
      %v3776 = vadd.s32 %v3772, %v3768
      %v3777 = vadd.s32 %v3773, %v3775
      %v3778 = vadd.s32 %v3777, %v3767
      %v3779 = vadd.s32 %v3778, %v3769
      %v3780 = vshrl.u32 %v3779, 4
      %v3781 = vmul.u32 %v3780, 18
      %v3782 = vsub.s32 %v3758, %v3781
      %v3783 = vsub.s32 0, %v3782
      %v3784 = vsel %vm3756, %v3783, %v3782
      %vm3785 = vcmp.lt.s32.totalorder %v3049, 0
      %v3786 = vsub.s32 0, %v3049
      %v3787 = vsel %vm3785, %v3786, %v3049
      %v3788 = vand.u32 %v3787, 65535
      %v3789 = vshrl.u32 %v3787, 16
      %v3791 = vmul.u32 %v3788, 14564
      %v3792 = vmul.u32 %v3788, 58254
      %v3793 = vmul.u32 %v3789, 14564
      %v3794 = vmul.u32 %v3789, 58254
      %v3795 = vshll.u32 %v3792, 16
      %v3796 = vshrl.u32 %v3792, 16
      %v3797 = vshll.u32 %v3793, 16
      %v3798 = vshrl.u32 %v3793, 16
      %vm3799 = vc.u32 %v3791, %v3795
      %v3800 = vsel %vm3799, 1, 0
      %v3801 = vadd.s32 %v3791, %v3795
      %v3802 = vadd.s32 %v3794, %v3800
      %vm3803 = vc.u32 %v3801, %v3797
      %v3804 = vsel %vm3803, 1, 0
      %v3805 = vadd.s32 %v3801, %v3797
      %v3806 = vadd.s32 %v3802, %v3804
      %v3807 = vadd.s32 %v3806, %v3796
      %v3808 = vadd.s32 %v3807, %v3798
      %v3809 = vshrl.u32 %v3808, 4
      %v3810 = vmul.u32 %v3809, 18
      %v3811 = vsub.s32 %v3787, %v3810
      %v3812 = vsub.s32 0, %v3811
      %v3813 = vsel %vm3785, %v3812, %v3811
      %vm3814 = vcmp.lt.s32.totalorder %v3050, 0
      %v3815 = vsub.s32 0, %v3050
      %v3816 = vsel %vm3814, %v3815, %v3050
      %v3817 = vand.u32 %v3816, 65535
      %v3818 = vshrl.u32 %v3816, 16
      %v3820 = vmul.u32 %v3817, 14564
      %v3821 = vmul.u32 %v3817, 58254
      %v3822 = vmul.u32 %v3818, 14564
      %v3823 = vmul.u32 %v3818, 58254
      %v3824 = vshll.u32 %v3821, 16
      %v3825 = vshrl.u32 %v3821, 16
      %v3826 = vshll.u32 %v3822, 16
      %v3827 = vshrl.u32 %v3822, 16
      %vm3828 = vc.u32 %v3820, %v3824
      %v3829 = vsel %vm3828, 1, 0
      %v3830 = vadd.s32 %v3820, %v3824
      %v3831 = vadd.s32 %v3823, %v3829
      %vm3832 = vc.u32 %v3830, %v3826
      %v3833 = vsel %vm3832, 1, 0
      %v3834 = vadd.s32 %v3830, %v3826
      %v3835 = vadd.s32 %v3831, %v3833
      %v3836 = vadd.s32 %v3835, %v3825
      %v3837 = vadd.s32 %v3836, %v3827
      %v3838 = vshrl.u32 %v3837, 4
      %v3839 = vmul.u32 %v3838, 18
      %v3840 = vsub.s32 %v3816, %v3839
      %v3841 = vsub.s32 0, %v3840
      %v3842 = vsel %vm3814, %v3841, %v3840
      %vm3843 = vcmp.lt.s32.totalorder %v3051, 0
      %v3844 = vsub.s32 0, %v3051
      %v3845 = vsel %vm3843, %v3844, %v3051
      %v3846 = vand.u32 %v3845, 65535
      %v3847 = vshrl.u32 %v3845, 16
      %v3849 = vmul.u32 %v3846, 14564
      %v3850 = vmul.u32 %v3846, 58254
      %v3851 = vmul.u32 %v3847, 14564
      %v3852 = vmul.u32 %v3847, 58254
      %v3853 = vshll.u32 %v3850, 16
      %v3854 = vshrl.u32 %v3850, 16
      %v3855 = vshll.u32 %v3851, 16
      %v3856 = vshrl.u32 %v3851, 16
      %vm3857 = vc.u32 %v3849, %v3853
      %v3858 = vsel %vm3857, 1, 0
      %v3859 = vadd.s32 %v3849, %v3853
      %v3860 = vadd.s32 %v3852, %v3858
      %vm3861 = vc.u32 %v3859, %v3855
      %v3862 = vsel %vm3861, 1, 0
      %v3863 = vadd.s32 %v3859, %v3855
      %v3864 = vadd.s32 %v3860, %v3862
      %v3865 = vadd.s32 %v3864, %v3854
      %v3866 = vadd.s32 %v3865, %v3856
      %v3867 = vshrl.u32 %v3866, 4
      %v3868 = vmul.u32 %v3867, 18
      %v3869 = vsub.s32 %v3845, %v3868
      %v3870 = vsub.s32 0, %v3869
      %v3871 = vsel %vm3843, %v3870, %v3869
      %vm3872 = vcmp.lt.s32.totalorder %v3052, 0
      %v3873 = vsub.s32 0, %v3052
      %v3874 = vsel %vm3872, %v3873, %v3052
      %v3875 = vand.u32 %v3874, 65535
      %v3876 = vshrl.u32 %v3874, 16
      %v3878 = vmul.u32 %v3875, 14564
      %v3879 = vmul.u32 %v3875, 58254
      %v3880 = vmul.u32 %v3876, 14564
      %v3881 = vmul.u32 %v3876, 58254
      %v3882 = vshll.u32 %v3879, 16
      %v3883 = vshrl.u32 %v3879, 16
      %v3884 = vshll.u32 %v3880, 16
      %v3885 = vshrl.u32 %v3880, 16
      %vm3886 = vc.u32 %v3878, %v3882
      %v3887 = vsel %vm3886, 1, 0
      %v3888 = vadd.s32 %v3878, %v3882
      %v3889 = vadd.s32 %v3881, %v3887
      %vm3890 = vc.u32 %v3888, %v3884
      %v3891 = vsel %vm3890, 1, 0
      %v3892 = vadd.s32 %v3888, %v3884
      %v3893 = vadd.s32 %v3889, %v3891
      %v3894 = vadd.s32 %v3893, %v3883
      %v3895 = vadd.s32 %v3894, %v3885
      %v3896 = vshrl.u32 %v3895, 4
      %v3897 = vmul.u32 %v3896, 18
      %v3898 = vsub.s32 %v3874, %v3897
      %v3899 = vsub.s32 0, %v3898
      %v3900 = vsel %vm3872, %v3899, %v3898
      %vm3901 = vcmp.lt.s32.totalorder %v3053, 0
      %v3902 = vsub.s32 0, %v3053
      %v3903 = vsel %vm3901, %v3902, %v3053
      %v3904 = vand.u32 %v3903, 65535
      %v3905 = vshrl.u32 %v3903, 16
      %v3907 = vmul.u32 %v3904, 14564
      %v3908 = vmul.u32 %v3904, 58254
      %v3909 = vmul.u32 %v3905, 14564
      %v3910 = vmul.u32 %v3905, 58254
      %v3911 = vshll.u32 %v3908, 16
      %v3912 = vshrl.u32 %v3908, 16
      %v3913 = vshll.u32 %v3909, 16
      %v3914 = vshrl.u32 %v3909, 16
      %vm3915 = vc.u32 %v3907, %v3911
      %v3916 = vsel %vm3915, 1, 0
      %v3917 = vadd.s32 %v3907, %v3911
      %v3918 = vadd.s32 %v3910, %v3916
      %vm3919 = vc.u32 %v3917, %v3913
      %v3920 = vsel %vm3919, 1, 0
      %v3921 = vadd.s32 %v3917, %v3913
      %v3922 = vadd.s32 %v3918, %v3920
      %v3923 = vadd.s32 %v3922, %v3912
      %v3924 = vadd.s32 %v3923, %v3914
      %v3925 = vshrl.u32 %v3924, 4
      %v3926 = vmul.u32 %v3925, 18
      %v3927 = vsub.s32 %v3903, %v3926
      %v3928 = vsub.s32 0, %v3927
      %v3929 = vsel %vm3901, %v3928, %v3927
      %vm3930 = vcmp.lt.s32.totalorder %v3054, 0
      %v3931 = vsub.s32 0, %v3054
      %v3932 = vsel %vm3930, %v3931, %v3054
      %v3933 = vand.u32 %v3932, 65535
      %v3934 = vshrl.u32 %v3932, 16
      %v3936 = vmul.u32 %v3933, 14564
      %v3937 = vmul.u32 %v3933, 58254
      %v3938 = vmul.u32 %v3934, 14564
      %v3939 = vmul.u32 %v3934, 58254
      %v3940 = vshll.u32 %v3937, 16
      %v3941 = vshrl.u32 %v3937, 16
      %v3942 = vshll.u32 %v3938, 16
      %v3943 = vshrl.u32 %v3938, 16
      %vm3944 = vc.u32 %v3936, %v3940
      %v3945 = vsel %vm3944, 1, 0
      %v3946 = vadd.s32 %v3936, %v3940
      %v3947 = vadd.s32 %v3939, %v3945
      %vm3948 = vc.u32 %v3946, %v3942
      %v3949 = vsel %vm3948, 1, 0
      %v3950 = vadd.s32 %v3946, %v3942
      %v3951 = vadd.s32 %v3947, %v3949
      %v3952 = vadd.s32 %v3951, %v3941
      %v3953 = vadd.s32 %v3952, %v3943
      %v3954 = vshrl.u32 %v3953, 4
      %v3955 = vmul.u32 %v3954, 18
      %v3956 = vsub.s32 %v3932, %v3955
      %v3957 = vsub.s32 0, %v3956
      %v3958 = vsel %vm3930, %v3957, %v3956
      %vm3959 = vcmp.lt.s32.totalorder %v3055, 0
      %v3960 = vsub.s32 0, %v3055
      %v3961 = vsel %vm3959, %v3960, %v3055
      %v3962 = vand.u32 %v3961, 65535
      %v3963 = vshrl.u32 %v3961, 16
      %v3965 = vmul.u32 %v3962, 14564
      %v3966 = vmul.u32 %v3962, 58254
      %v3967 = vmul.u32 %v3963, 14564
      %v3968 = vmul.u32 %v3963, 58254
      %v3969 = vshll.u32 %v3966, 16
      %v3970 = vshrl.u32 %v3966, 16
      %v3971 = vshll.u32 %v3967, 16
      %v3972 = vshrl.u32 %v3967, 16
      %vm3973 = vc.u32 %v3965, %v3969
      %v3974 = vsel %vm3973, 1, 0
      %v3975 = vadd.s32 %v3965, %v3969
      %v3976 = vadd.s32 %v3968, %v3974
      %vm3977 = vc.u32 %v3975, %v3971
      %v3978 = vsel %vm3977, 1, 0
      %v3979 = vadd.s32 %v3975, %v3971
      %v3980 = vadd.s32 %v3976, %v3978
      %v3981 = vadd.s32 %v3980, %v3970
      %v3982 = vadd.s32 %v3981, %v3972
      %v3983 = vshrl.u32 %v3982, 4
      %v3984 = vmul.u32 %v3983, 18
      %v3985 = vsub.s32 %v3961, %v3984
      %v3986 = vsub.s32 0, %v3985
      %v3987 = vsel %vm3959, %v3986, %v3985
      %vm3988 = vcmp.lt.s32.totalorder %v3056, 0
      %v3989 = vsub.s32 0, %v3056
      %v3990 = vsel %vm3988, %v3989, %v3056
      %v3991 = vand.u32 %v3990, 65535
      %v3992 = vshrl.u32 %v3990, 16
      %v3994 = vmul.u32 %v3991, 14564
      %v3995 = vmul.u32 %v3991, 58254
      %v3996 = vmul.u32 %v3992, 14564
      %v3997 = vmul.u32 %v3992, 58254
      %v3998 = vshll.u32 %v3995, 16
      %v3999 = vshrl.u32 %v3995, 16
      %v4000 = vshll.u32 %v3996, 16
      %v4001 = vshrl.u32 %v3996, 16
      %vm4002 = vc.u32 %v3994, %v3998
      %v4003 = vsel %vm4002, 1, 0
      %v4004 = vadd.s32 %v3994, %v3998
      %v4005 = vadd.s32 %v3997, %v4003
      %vm4006 = vc.u32 %v4004, %v4000
      %v4007 = vsel %vm4006, 1, 0
      %v4008 = vadd.s32 %v4004, %v4000
      %v4009 = vadd.s32 %v4005, %v4007
      %v4010 = vadd.s32 %v4009, %v3999
      %v4011 = vadd.s32 %v4010, %v4001
      %v4012 = vshrl.u32 %v4011, 4
      %v4013 = vmul.u32 %v4012, 18
      %v4014 = vsub.s32 %v3990, %v4013
      %v4015 = vsub.s32 0, %v4014
      %v4016 = vsel %vm3988, %v4015, %v4014
      %vm4017 = vcmp.lt.s32.totalorder %v3057, 0
      %v4018 = vsub.s32 0, %v3057
      %v4019 = vsel %vm4017, %v4018, %v3057
      %v4020 = vand.u32 %v4019, 65535
      %v4021 = vshrl.u32 %v4019, 16
      %v4023 = vmul.u32 %v4020, 14564
      %v4024 = vmul.u32 %v4020, 58254
      %v4025 = vmul.u32 %v4021, 14564
      %v4026 = vmul.u32 %v4021, 58254
      %v4027 = vshll.u32 %v4024, 16
      %v4028 = vshrl.u32 %v4024, 16
      %v4029 = vshll.u32 %v4025, 16
      %v4030 = vshrl.u32 %v4025, 16
      %vm4031 = vc.u32 %v4023, %v4027
      %v4032 = vsel %vm4031, 1, 0
      %v4033 = vadd.s32 %v4023, %v4027
      %v4034 = vadd.s32 %v4026, %v4032
      %vm4035 = vc.u32 %v4033, %v4029
      %v4036 = vsel %vm4035, 1, 0
      %v4037 = vadd.s32 %v4033, %v4029
      %v4038 = vadd.s32 %v4034, %v4036
      %v4039 = vadd.s32 %v4038, %v4028
      %v4040 = vadd.s32 %v4039, %v4030
      %v4041 = vshrl.u32 %v4040, 4
      %v4042 = vmul.u32 %v4041, 18
      %v4043 = vsub.s32 %v4019, %v4042
      %v4044 = vsub.s32 0, %v4043
      %v4045 = vsel %vm4017, %v4044, %v4043
      %vm4046 = vcmp.lt.s32.totalorder %v3058, 0
      %v4047 = vsub.s32 0, %v3058
      %v4048 = vsel %vm4046, %v4047, %v3058
      %v4049 = vand.u32 %v4048, 65535
      %v4050 = vshrl.u32 %v4048, 16
      %v4052 = vmul.u32 %v4049, 14564
      %v4053 = vmul.u32 %v4049, 58254
      %v4054 = vmul.u32 %v4050, 14564
      %v4055 = vmul.u32 %v4050, 58254
      %v4056 = vshll.u32 %v4053, 16
      %v4057 = vshrl.u32 %v4053, 16
      %v4058 = vshll.u32 %v4054, 16
      %v4059 = vshrl.u32 %v4054, 16
      %vm4060 = vc.u32 %v4052, %v4056
      %v4061 = vsel %vm4060, 1, 0
      %v4062 = vadd.s32 %v4052, %v4056
      %v4063 = vadd.s32 %v4055, %v4061
      %vm4064 = vc.u32 %v4062, %v4058
      %v4065 = vsel %vm4064, 1, 0
      %v4066 = vadd.s32 %v4062, %v4058
      %v4067 = vadd.s32 %v4063, %v4065
      %v4068 = vadd.s32 %v4067, %v4057
      %v4069 = vadd.s32 %v4068, %v4059
      %v4070 = vshrl.u32 %v4069, 4
      %v4071 = vmul.u32 %v4070, 18
      %v4072 = vsub.s32 %v4048, %v4071
      %v4073 = vsub.s32 0, %v4072
      %v4074 = vsel %vm4046, %v4073, %v4072
      %vm4075 = vcmp.lt.s32.totalorder %v3059, 0
      %v4076 = vsub.s32 0, %v3059
      %v4077 = vsel %vm4075, %v4076, %v3059
      %v4078 = vand.u32 %v4077, 65535
      %v4079 = vshrl.u32 %v4077, 16
      %v4081 = vmul.u32 %v4078, 14564
      %v4082 = vmul.u32 %v4078, 58254
      %v4083 = vmul.u32 %v4079, 14564
      %v4084 = vmul.u32 %v4079, 58254
      %v4085 = vshll.u32 %v4082, 16
      %v4086 = vshrl.u32 %v4082, 16
      %v4087 = vshll.u32 %v4083, 16
      %v4088 = vshrl.u32 %v4083, 16
      %vm4089 = vc.u32 %v4081, %v4085
      %v4090 = vsel %vm4089, 1, 0
      %v4091 = vadd.s32 %v4081, %v4085
      %v4092 = vadd.s32 %v4084, %v4090
      %vm4093 = vc.u32 %v4091, %v4087
      %v4094 = vsel %vm4093, 1, 0
      %v4095 = vadd.s32 %v4091, %v4087
      %v4096 = vadd.s32 %v4092, %v4094
      %v4097 = vadd.s32 %v4096, %v4086
      %v4098 = vadd.s32 %v4097, %v4088
      %v4099 = vshrl.u32 %v4098, 4
      %v4100 = vmul.u32 %v4099, 18
      %v4101 = vsub.s32 %v4077, %v4100
      %v4102 = vsub.s32 0, %v4101
      %v4103 = vsel %vm4075, %v4102, %v4101
      %vm4104 = vcmp.ne.s32.totalorder %v3088, 0
      %vm4105 = vcmp.ne.s32.totalorder %v3117, 0
      %vm4106 = vcmp.ne.s32.totalorder %v3146, 0
      %vm4107 = vcmp.ne.s32.totalorder %v3175, 0
      %vm4108 = vcmp.ne.s32.totalorder %v3204, 0
      %vm4109 = vcmp.ne.s32.totalorder %v3233, 0
      %vm4110 = vcmp.ne.s32.totalorder %v3262, 0
      %vm4111 = vcmp.ne.s32.totalorder %v3291, 0
      %vm4112 = vcmp.ne.s32.totalorder %v3320, 0
      %vm4113 = vcmp.ne.s32.totalorder %v3349, 0
      %vm4114 = vcmp.ne.s32.totalorder %v3378, 0
      %vm4115 = vcmp.ne.s32.totalorder %v3407, 0
      %vm4116 = vcmp.ne.s32.totalorder %v3436, 0
      %vm4117 = vcmp.ne.s32.totalorder %v3465, 0
      %vm4118 = vcmp.ne.s32.totalorder %v3494, 0
      %vm4119 = vcmp.ne.s32.totalorder %v3523, 0
      %vm4120 = vcmp.ne.s32.totalorder %v3552, 0
      %vm4121 = vcmp.ne.s32.totalorder %v3581, 0
      %vm4122 = vcmp.ne.s32.totalorder %v3610, 0
      %vm4123 = vcmp.ne.s32.totalorder %v3639, 0
      %vm4124 = vcmp.ne.s32.totalorder %v3668, 0
      %vm4125 = vcmp.ne.s32.totalorder %v3697, 0
      %vm4126 = vcmp.ne.s32.totalorder %v3726, 0
      %vm4127 = vcmp.ne.s32.totalorder %v3755, 0
      %vm4128 = vcmp.ne.s32.totalorder %v3784, 0
      %vm4129 = vcmp.ne.s32.totalorder %v3813, 0
      %vm4130 = vcmp.ne.s32.totalorder %v3842, 0
      %vm4131 = vcmp.ne.s32.totalorder %v3871, 0
      %vm4132 = vcmp.ne.s32.totalorder %v3900, 0
      %vm4133 = vcmp.ne.s32.totalorder %v3929, 0
      %vm4134 = vcmp.ne.s32.totalorder %v3958, 0
      %vm4135 = vcmp.ne.s32.totalorder %v3987, 0
      %vm4136 = vcmp.ne.s32.totalorder %v4016, 0
      %vm4137 = vcmp.ne.s32.totalorder %v4045, 0
      %vm4138 = vcmp.ne.s32.totalorder %v4074, 0
      %vm4139 = vcmp.ne.s32.totalorder %v4103, 0
      %vm4140 = vcmp.lt.s32.totalorder %v3088, 0
      %vm4141 = vcmp.lt.s32.totalorder %v3117, 0
      %vm4142 = vcmp.lt.s32.totalorder %v3146, 0
      %vm4143 = vcmp.lt.s32.totalorder %v3175, 0
      %vm4144 = vcmp.lt.s32.totalorder %v3204, 0
      %vm4145 = vcmp.lt.s32.totalorder %v3233, 0
      %vm4146 = vcmp.lt.s32.totalorder %v3262, 0
      %vm4147 = vcmp.lt.s32.totalorder %v3291, 0
      %vm4148 = vcmp.lt.s32.totalorder %v3320, 0
      %vm4149 = vcmp.lt.s32.totalorder %v3349, 0
      %vm4150 = vcmp.lt.s32.totalorder %v3378, 0
      %vm4151 = vcmp.lt.s32.totalorder %v3407, 0
      %vm4152 = vcmp.lt.s32.totalorder %v3436, 0
      %vm4153 = vcmp.lt.s32.totalorder %v3465, 0
      %vm4154 = vcmp.lt.s32.totalorder %v3494, 0
      %vm4155 = vcmp.lt.s32.totalorder %v3523, 0
      %vm4156 = vcmp.lt.s32.totalorder %v3552, 0
      %vm4157 = vcmp.lt.s32.totalorder %v3581, 0
      %vm4158 = vcmp.lt.s32.totalorder %v3610, 0
      %vm4159 = vcmp.lt.s32.totalorder %v3639, 0
      %vm4160 = vcmp.lt.s32.totalorder %v3668, 0
      %vm4161 = vcmp.lt.s32.totalorder %v3697, 0
      %vm4162 = vcmp.lt.s32.totalorder %v3726, 0
      %vm4163 = vcmp.lt.s32.totalorder %v3755, 0
      %vm4164 = vcmp.lt.s32.totalorder %v3784, 0
      %vm4165 = vcmp.lt.s32.totalorder %v3813, 0
      %vm4166 = vcmp.lt.s32.totalorder %v3842, 0
      %vm4167 = vcmp.lt.s32.totalorder %v3871, 0
      %vm4168 = vcmp.lt.s32.totalorder %v3900, 0
      %vm4169 = vcmp.lt.s32.totalorder %v3929, 0
      %vm4170 = vcmp.lt.s32.totalorder %v3958, 0
      %vm4171 = vcmp.lt.s32.totalorder %v3987, 0
      %vm4172 = vcmp.lt.s32.totalorder %v4016, 0
      %vm4173 = vcmp.lt.s32.totalorder %v4045, 0
      %vm4174 = vcmp.lt.s32.totalorder %v4074, 0
      %vm4175 = vcmp.lt.s32.totalorder %v4103, 0
      %vm4176 = vmand %vm4140, %vm4104
      %vm4177 = vmand %vm4141, %vm4105
      %vm4178 = vmand %vm4142, %vm4106
      %vm4179 = vmand %vm4143, %vm4107
      %vm4180 = vmand %vm4144, %vm4108
      %vm4181 = vmand %vm4145, %vm4109
      %vm4182 = vmand %vm4146, %vm4110
      %vm4183 = vmand %vm4147, %vm4111
      %vm4184 = vmand %vm4148, %vm4112
      %vm4185 = vmand %vm4149, %vm4113
      %vm4186 = vmand %vm4150, %vm4114
      %vm4187 = vmand %vm4151, %vm4115
      %vm4188 = vmand %vm4152, %vm4116
      %vm4189 = vmand %vm4153, %vm4117
      %vm4190 = vmand %vm4154, %vm4118
      %vm4191 = vmand %vm4155, %vm4119
      %vm4192 = vmand %vm4156, %vm4120
      %vm4193 = vmand %vm4157, %vm4121
      %vm4194 = vmand %vm4158, %vm4122
      %vm4195 = vmand %vm4159, %vm4123
      %vm4196 = vmand %vm4160, %vm4124
      %vm4197 = vmand %vm4161, %vm4125
      %vm4198 = vmand %vm4162, %vm4126
      %vm4199 = vmand %vm4163, %vm4127
      %vm4200 = vmand %vm4164, %vm4128
      %vm4201 = vmand %vm4165, %vm4129
      %vm4202 = vmand %vm4166, %vm4130
      %vm4203 = vmand %vm4167, %vm4131
      %vm4204 = vmand %vm4168, %vm4132
      %vm4205 = vmand %vm4169, %vm4133
      %vm4206 = vmand %vm4170, %vm4134
      %vm4207 = vmand %vm4171, %vm4135
      %vm4208 = vmand %vm4172, %vm4136
      %vm4209 = vmand %vm4173, %vm4137
      %vm4210 = vmand %vm4174, %vm4138
      %vm4211 = vmand %vm4175, %vm4139
      %v4212 = vadd.s32 %v3088, 18
      %v4213 = vadd.s32 %v3117, 18
      %v4214 = vadd.s32 %v3146, 18
      %v4215 = vadd.s32 %v3175, 18
      %v4216 = vadd.s32 %v3204, 18
      %v4217 = vadd.s32 %v3233, 18
      %v4218 = vadd.s32 %v3262, 18
      %v4219 = vadd.s32 %v3291, 18
      %v4220 = vadd.s32 %v3320, 18
      %v4221 = vadd.s32 %v3349, 18
      %v4222 = vadd.s32 %v3378, 18
      %v4223 = vadd.s32 %v3407, 18
      %v4224 = vadd.s32 %v3436, 18
      %v4225 = vadd.s32 %v3465, 18
      %v4226 = vadd.s32 %v3494, 18
      %v4227 = vadd.s32 %v3523, 18
      %v4228 = vadd.s32 %v3552, 18
      %v4229 = vadd.s32 %v3581, 18
      %v4230 = vadd.s32 %v3610, 18
      %v4231 = vadd.s32 %v3639, 18
      %v4232 = vadd.s32 %v3668, 18
      %v4233 = vadd.s32 %v3697, 18
      %v4234 = vadd.s32 %v3726, 18
      %v4235 = vadd.s32 %v3755, 18
      %v4236 = vadd.s32 %v3784, 18
      %v4237 = vadd.s32 %v3813, 18
      %v4238 = vadd.s32 %v3842, 18
      %v4239 = vadd.s32 %v3871, 18
      %v4240 = vadd.s32 %v3900, 18
      %v4241 = vadd.s32 %v3929, 18
      %v4242 = vadd.s32 %v3958, 18
      %v4243 = vadd.s32 %v3987, 18
      %v4244 = vadd.s32 %v4016, 18
      %v4245 = vadd.s32 %v4045, 18
      %v4246 = vadd.s32 %v4074, 18
      %v4247 = vadd.s32 %v4103, 18
      %v4248 = vsel %vm4176, %v4212, %v3088
      %v4249 = vsel %vm4177, %v4213, %v3117
      %v4250 = vsel %vm4178, %v4214, %v3146
      %v4251 = vsel %vm4179, %v4215, %v3175
      %v4252 = vsel %vm4180, %v4216, %v3204
      %v4253 = vsel %vm4181, %v4217, %v3233
      %v4254 = vsel %vm4182, %v4218, %v3262
      %v4255 = vsel %vm4183, %v4219, %v3291
      %v4256 = vsel %vm4184, %v4220, %v3320
      %v4257 = vsel %vm4185, %v4221, %v3349
      %v4258 = vsel %vm4186, %v4222, %v3378
      %v4259 = vsel %vm4187, %v4223, %v3407
      %v4260 = vsel %vm4188, %v4224, %v3436
      %v4261 = vsel %vm4189, %v4225, %v3465
      %v4262 = vsel %vm4190, %v4226, %v3494
      %v4263 = vsel %vm4191, %v4227, %v3523
      %v4264 = vsel %vm4192, %v4228, %v3552
      %v4265 = vsel %vm4193, %v4229, %v3581
      %v4266 = vsel %vm4194, %v4230, %v3610
      %v4267 = vsel %vm4195, %v4231, %v3639
      %v4268 = vsel %vm4196, %v4232, %v3668
      %v4269 = vsel %vm4197, %v4233, %v3697
      %v4270 = vsel %vm4198, %v4234, %v3726
      %v4271 = vsel %vm4199, %v4235, %v3755
      %v4272 = vsel %vm4200, %v4236, %v3784
      %v4273 = vsel %vm4201, %v4237, %v3813
      %v4274 = vsel %vm4202, %v4238, %v3842
      %v4275 = vsel %vm4203, %v4239, %v3871
      %v4276 = vsel %vm4204, %v4240, %v3900
      %v4277 = vsel %vm4205, %v4241, %v3929
      %v4278 = vsel %vm4206, %v4242, %v3958
      %v4279 = vsel %vm4207, %v4243, %v3987
      %v4280 = vsel %vm4208, %v4244, %v4016
      %v4281 = vsel %vm4209, %v4245, %v4045
      %v4282 = vsel %vm4210, %v4246, %v4074
      %v4283 = vsel %vm4211, %v4247, %v4103
      %vm4284 = vcmp.lt.s32.totalorder %v4248, 16
      %vm4285 = vcmp.lt.s32.totalorder %v4249, 16
      %vm4286 = vcmp.lt.s32.totalorder %v4250, 16
      %vm4287 = vcmp.lt.s32.totalorder %v4251, 16
      %vm4288 = vcmp.lt.s32.totalorder %v4252, 16
      %vm4289 = vcmp.lt.s32.totalorder %v4253, 16
      %vm4290 = vcmp.lt.s32.totalorder %v4254, 16
      %vm4291 = vcmp.lt.s32.totalorder %v4255, 16
      %vm4292 = vcmp.lt.s32.totalorder %v4256, 16
      %vm4293 = vcmp.lt.s32.totalorder %v4257, 16
      %vm4294 = vcmp.lt.s32.totalorder %v4258, 16
      %vm4295 = vcmp.lt.s32.totalorder %v4259, 16
      %vm4296 = vcmp.lt.s32.totalorder %v4260, 16
      %vm4297 = vcmp.lt.s32.totalorder %v4261, 16
      %vm4298 = vcmp.lt.s32.totalorder %v4262, 16
      %vm4299 = vcmp.lt.s32.totalorder %v4263, 16
      %vm4300 = vcmp.lt.s32.totalorder %v4264, 16
      %vm4301 = vcmp.lt.s32.totalorder %v4265, 16
      %vm4302 = vcmp.lt.s32.totalorder %v4266, 16
      %vm4303 = vcmp.lt.s32.totalorder %v4267, 16
      %vm4304 = vcmp.lt.s32.totalorder %v4268, 16
      %vm4305 = vcmp.lt.s32.totalorder %v4269, 16
      %vm4306 = vcmp.lt.s32.totalorder %v4270, 16
      %vm4307 = vcmp.lt.s32.totalorder %v4271, 16
      %vm4308 = vcmp.lt.s32.totalorder %v4272, 16
      %vm4309 = vcmp.lt.s32.totalorder %v4273, 16
      %vm4310 = vcmp.lt.s32.totalorder %v4274, 16
      %vm4311 = vcmp.lt.s32.totalorder %v4275, 16
      %vm4312 = vcmp.lt.s32.totalorder %v4276, 16
      %vm4313 = vcmp.lt.s32.totalorder %v4277, 16
      %vm4314 = vcmp.lt.s32.totalorder %v4278, 16
      %vm4315 = vcmp.lt.s32.totalorder %v4279, 16
      %vm4316 = vcmp.lt.s32.totalorder %v4280, 16
      %vm4317 = vcmp.lt.s32.totalorder %v4281, 16
      %vm4318 = vcmp.lt.s32.totalorder %v4282, 16
      %vm4319 = vcmp.lt.s32.totalorder %v4283, 16
      %v4320 = vsel %vm4284, 1, 0
      %v4321 = vsel %vm4285, 1, 0
      %v4322 = vsel %vm4286, 1, 0
      %v4323 = vsel %vm4287, 1, 0
      %v4324 = vsel %vm4288, 1, 0
      %v4325 = vsel %vm4289, 1, 0
      %v4326 = vsel %vm4290, 1, 0
      %v4327 = vsel %vm4291, 1, 0
      %v4328 = vsel %vm4292, 1, 0
      %v4329 = vsel %vm4293, 1, 0
      %v4330 = vsel %vm4294, 1, 0
      %v4331 = vsel %vm4295, 1, 0
      %v4332 = vsel %vm4296, 1, 0
      %v4333 = vsel %vm4297, 1, 0
      %v4334 = vsel %vm4298, 1, 0
      %v4335 = vsel %vm4299, 1, 0
      %v4336 = vsel %vm4300, 1, 0
      %v4337 = vsel %vm4301, 1, 0
      %v4338 = vsel %vm4302, 1, 0
      %v4339 = vsel %vm4303, 1, 0
      %v4340 = vsel %vm4304, 1, 0
      %v4341 = vsel %vm4305, 1, 0
      %v4342 = vsel %vm4306, 1, 0
      %v4343 = vsel %vm4307, 1, 0
      %v4344 = vsel %vm4308, 1, 0
      %v4345 = vsel %vm4309, 1, 0
      %v4346 = vsel %vm4310, 1, 0
      %v4347 = vsel %vm4311, 1, 0
      %v4348 = vsel %vm4312, 1, 0
      %v4349 = vsel %vm4313, 1, 0
      %v4350 = vsel %vm4314, 1, 0
      %v4351 = vsel %vm4315, 1, 0
      %v4352 = vsel %vm4316, 1, 0
      %v4353 = vsel %vm4317, 1, 0
      %v4354 = vsel %vm4318, 1, 0
      %v4355 = vsel %vm4319, 1, 0
      %v4356 = vcvt.s32.f32 %v4320
      %v4357 = vcvt.s32.f32 %v4321
      %v4358 = vcvt.s32.f32 %v4322
      %v4359 = vcvt.s32.f32 %v4323
      %v4360 = vcvt.s32.f32 %v4324
      %v4361 = vcvt.s32.f32 %v4325
      %v4362 = vcvt.s32.f32 %v4326
      %v4363 = vcvt.s32.f32 %v4327
      %v4364 = vcvt.s32.f32 %v4328
      %v4365 = vcvt.s32.f32 %v4329
      %v4366 = vcvt.s32.f32 %v4330
      %v4367 = vcvt.s32.f32 %v4331
      %v4368 = vcvt.s32.f32 %v4332
      %v4369 = vcvt.s32.f32 %v4333
      %v4370 = vcvt.s32.f32 %v4334
      %v4371 = vcvt.s32.f32 %v4335
      %v4372 = vcvt.s32.f32 %v4336
      %v4373 = vcvt.s32.f32 %v4337
      %v4374 = vcvt.s32.f32 %v4338
      %v4375 = vcvt.s32.f32 %v4339
      %v4376 = vcvt.s32.f32 %v4340
      %v4377 = vcvt.s32.f32 %v4341
      %v4378 = vcvt.s32.f32 %v4342
      %v4379 = vcvt.s32.f32 %v4343
      %v4380 = vcvt.s32.f32 %v4344
      %v4381 = vcvt.s32.f32 %v4345
      %v4382 = vcvt.s32.f32 %v4346
      %v4383 = vcvt.s32.f32 %v4347
      %v4384 = vcvt.s32.f32 %v4348
      %v4385 = vcvt.s32.f32 %v4349
      %v4386 = vcvt.s32.f32 %v4350
      %v4387 = vcvt.s32.f32 %v4351
      %v4388 = vcvt.s32.f32 %v4352
      %v4389 = vcvt.s32.f32 %v4353
      %v4390 = vcvt.s32.f32 %v4354
      %v4391 = vcvt.s32.f32 %v4355
      %v4392 = vmul.f32 %v2987, %v4356
      %v4393 = vmul.f32 %v2988, %v4357
      %v4394 = vmul.f32 %v2989, %v4358
      %v4395 = vmul.f32 %v2990, %v4359
      %v4396 = vmul.f32 %v2991, %v4360
      %v4397 = vmul.f32 %v2992, %v4361
      %v4398 = vmul.f32 %v2993, %v4362
      %v4399 = vmul.f32 %v2994, %v4363
      %v4400 = vmul.f32 %v2995, %v4364
      %v4401 = vmul.f32 %v2996, %v4365
      %v4402 = vmul.f32 %v2997, %v4366
      %v4403 = vmul.f32 %v2998, %v4367
      %v4404 = vmul.f32 %v2999, %v4368
      %v4405 = vmul.f32 %v3000, %v4369
      %v4406 = vmul.f32 %v3001, %v4370
      %v4407 = vmul.f32 %v3002, %v4371
      %v4408 = vmul.f32 %v3003, %v4372
      %v4409 = vmul.f32 %v3004, %v4373
      %v4410 = vmul.f32 %v3005, %v4374
      %v4411 = vmul.f32 %v3006, %v4375
      %v4412 = vmul.f32 %v3007, %v4376
      %v4413 = vmul.f32 %v3008, %v4377
      %v4414 = vmul.f32 %v3009, %v4378
      %v4415 = vmul.f32 %v3010, %v4379
      %v4416 = vmul.f32 %v3011, %v4380
      %v4417 = vmul.f32 %v3012, %v4381
      %v4418 = vmul.f32 %v3013, %v4382
      %v4419 = vmul.f32 %v3014, %v4383
      %v4420 = vmul.f32 %v3015, %v4384
      %v4421 = vmul.f32 %v3016, %v4385
      %v4422 = vmul.f32 %v3017, %v4386
      %v4423 = vmul.f32 %v3018, %v4387
      %v4424 = vmul.f32 %v3019, %v4388
      %v4425 = vmul.f32 %v3020, %v4389
      %v4426 = vmul.f32 %v3021, %v4390
      %v4427 = vmul.f32 %v3022, %v4391
      %v4428 = vsel %vm346, %v4392, 0.0
      %v4429 = vsel %vm346, %v4393, 0.0
      %v4430 = vadd.f32 %v4428, %v4429
      %v4431 = vsel %vm346, %v4394, 0.0
      %v4432 = vadd.f32 %v4430, %v4431
      %v4433 = vsel %vm346, %v4395, 0.0
      %v4434 = vadd.f32 %v4432, %v4433
      %v4435 = vsel %vm346, %v4396, 0.0
      %v4436 = vadd.f32 %v4434, %v4435
      %v4437 = vsel %vm346, %v4397, 0.0
      %v4438 = vadd.f32 %v4436, %v4437
      %v4439 = vsel %vm346, %v4398, 0.0
      %v4440 = vadd.f32 %v4438, %v4439
      %v4441 = vsel %vm346, %v4399, 0.0
      %v4442 = vadd.f32 %v4440, %v4441
      %v4443 = vsel %vm346, %v4400, 0.0
      %v4444 = vadd.f32 %v4442, %v4443
      %v4445 = vsel %vm346, %v4401, 0.0
      %v4446 = vadd.f32 %v4444, %v4445
      %v4447 = vsel %vm346, %v4402, 0.0
      %v4448 = vadd.f32 %v4446, %v4447
      %v4449 = vsel %vm346, %v4403, 0.0
      %v4450 = vadd.f32 %v4448, %v4449
      %v4451 = vsel %vm346, %v4404, 0.0
      %v4452 = vadd.f32 %v4450, %v4451
      %v4453 = vsel %vm346, %v4405, 0.0
      %v4454 = vadd.f32 %v4452, %v4453
      %v4455 = vsel %vm346, %v4406, 0.0
      %v4456 = vadd.f32 %v4454, %v4455
      %v4457 = vsel %vm346, %v4407, 0.0
      %v4458 = vadd.f32 %v4456, %v4457
      %v4459 = vsel %vm346, %v4408, 0.0
      %v4460 = vadd.f32 %v4458, %v4459
      %v4461 = vsel %vm346, %v4409, 0.0
      %v4462 = vadd.f32 %v4460, %v4461
      %v4463 = vsel %vm346, %v4410, 0.0
      %v4464 = vadd.f32 %v4462, %v4463
      %v4465 = vsel %vm346, %v4411, 0.0
      %v4466 = vadd.f32 %v4464, %v4465
      %v4467 = vsel %vm346, %v4412, 0.0
      %v4468 = vadd.f32 %v4466, %v4467
      %v4469 = vsel %vm346, %v4413, 0.0
      %v4470 = vadd.f32 %v4468, %v4469
      %v4471 = vsel %vm346, %v4414, 0.0
      %v4472 = vadd.f32 %v4470, %v4471
      %v4473 = vsel %vm346, %v4415, 0.0
      %v4474 = vadd.f32 %v4472, %v4473
      %v4475 = vsel %vm346, %v4416, 0.0
      %v4476 = vadd.f32 %v4474, %v4475
      %v4477 = vsel %vm346, %v4417, 0.0
      %v4478 = vadd.f32 %v4476, %v4477
      %v4479 = vsel %vm346, %v4418, 0.0
      %v4480 = vadd.f32 %v4478, %v4479
      %v4481 = vsel %vm346, %v4419, 0.0
      %v4482 = vadd.f32 %v4480, %v4481
      %v4483 = vsel %vm346, %v4420, 0.0
      %v4484 = vadd.f32 %v4482, %v4483
      %v4485 = vsel %vm346, %v4421, 0.0
      %v4486 = vadd.f32 %v4484, %v4485
      %v4487 = vsel %vm346, %v4422, 0.0
      %v4488 = vadd.f32 %v4486, %v4487
      %v4489 = vsel %vm346, %v4423, 0.0
      %v4490 = vadd.f32 %v4488, %v4489
      %v4491 = vsel %vm346, %v4424, 0.0
      %v4492 = vadd.f32 %v4490, %v4491
      %v4493 = vsel %vm346, %v4425, 0.0
      %v4494 = vadd.f32 %v4492, %v4493
      %v4495 = vsel %vm346, %v4426, 0.0
      %v4496 = vadd.f32 %v4494, %v4495
      %v4497 = vsel %vm346, %v4427, 0.0
      %v4498 = vadd.f32 %v4496, %v4497
      %v4499 = vrot.slane %v4498, 4
      %v4500 = vadd.f32 %v4498, %v4499
      %v4501 = vrot.slane %v4500, 2
      %v4502 = vadd.f32 %v4500, %v4501
      %v4503 = vrot.slane %v4502, 1
      %v4504 = vadd.f32 %v4502, %v4503
      %v4505 = vmul.f32 %v4504, 0.00390625
      %v4506 = vsub.f32 %v2987, %v4505
      %v4507 = vsub.f32 %v2988, %v4505
      %v4508 = vsub.f32 %v2989, %v4505
      %v4509 = vsub.f32 %v2990, %v4505
      %v4510 = vsub.f32 %v2991, %v4505
      %v4511 = vsub.f32 %v2992, %v4505
      %v4512 = vsub.f32 %v2993, %v4505
      %v4513 = vsub.f32 %v2994, %v4505
      %v4514 = vsub.f32 %v2995, %v4505
      %v4515 = vsub.f32 %v2996, %v4505
      %v4516 = vsub.f32 %v2997, %v4505
      %v4517 = vsub.f32 %v2998, %v4505
      %v4518 = vsub.f32 %v2999, %v4505
      %v4519 = vsub.f32 %v3000, %v4505
      %v4520 = vsub.f32 %v3001, %v4505
      %v4521 = vsub.f32 %v3002, %v4505
      %v4522 = vsub.f32 %v3003, %v4505
      %v4523 = vsub.f32 %v3004, %v4505
      %v4524 = vsub.f32 %v3005, %v4505
      %v4525 = vsub.f32 %v3006, %v4505
      %v4526 = vsub.f32 %v3007, %v4505
      %v4527 = vsub.f32 %v3008, %v4505
      %v4528 = vsub.f32 %v3009, %v4505
      %v4529 = vsub.f32 %v3010, %v4505
      %v4530 = vsub.f32 %v3011, %v4505
      %v4531 = vsub.f32 %v3012, %v4505
      %v4532 = vsub.f32 %v3013, %v4505
      %v4533 = vsub.f32 %v3014, %v4505
      %v4534 = vsub.f32 %v3015, %v4505
      %v4535 = vsub.f32 %v3016, %v4505
      %v4536 = vsub.f32 %v3017, %v4505
      %v4537 = vsub.f32 %v3018, %v4505
      %v4538 = vsub.f32 %v3019, %v4505
      %v4539 = vsub.f32 %v3020, %v4505
      %v4540 = vsub.f32 %v3021, %v4505
      %v4541 = vsub.f32 %v3022, %v4505
      %v4542 = vmul.f32 %v4506, %v4356
      %v4543 = vmul.f32 %v4507, %v4357
      %v4544 = vmul.f32 %v4508, %v4358
      %v4545 = vmul.f32 %v4509, %v4359
      %v4546 = vmul.f32 %v4510, %v4360
      %v4547 = vmul.f32 %v4511, %v4361
      %v4548 = vmul.f32 %v4512, %v4362
      %v4549 = vmul.f32 %v4513, %v4363
      %v4550 = vmul.f32 %v4514, %v4364
      %v4551 = vmul.f32 %v4515, %v4365
      %v4552 = vmul.f32 %v4516, %v4366
      %v4553 = vmul.f32 %v4517, %v4367
      %v4554 = vmul.f32 %v4518, %v4368
      %v4555 = vmul.f32 %v4519, %v4369
      %v4556 = vmul.f32 %v4520, %v4370
      %v4557 = vmul.f32 %v4521, %v4371
      %v4558 = vmul.f32 %v4522, %v4372
      %v4559 = vmul.f32 %v4523, %v4373
      %v4560 = vmul.f32 %v4524, %v4374
      %v4561 = vmul.f32 %v4525, %v4375
      %v4562 = vmul.f32 %v4526, %v4376
      %v4563 = vmul.f32 %v4527, %v4377
      %v4564 = vmul.f32 %v4528, %v4378
      %v4565 = vmul.f32 %v4529, %v4379
      %v4566 = vmul.f32 %v4530, %v4380
      %v4567 = vmul.f32 %v4531, %v4381
      %v4568 = vmul.f32 %v4532, %v4382
      %v4569 = vmul.f32 %v4533, %v4383
      %v4570 = vmul.f32 %v4534, %v4384
      %v4571 = vmul.f32 %v4535, %v4385
      %v4572 = vmul.f32 %v4536, %v4386
      %v4573 = vmul.f32 %v4537, %v4387
      %v4574 = vmul.f32 %v4538, %v4388
      %v4575 = vmul.f32 %v4539, %v4389
      %v4576 = vmul.f32 %v4540, %v4390
      %v4577 = vmul.f32 %v4541, %v4391
      %v4578 = vmul.f32 %v4542, %v4542
      %v4579 = vmul.f32 %v4543, %v4543
      %v4580 = vmul.f32 %v4544, %v4544
      %v4581 = vmul.f32 %v4545, %v4545
      %v4582 = vmul.f32 %v4546, %v4546
      %v4583 = vmul.f32 %v4547, %v4547
      %v4584 = vmul.f32 %v4548, %v4548
      %v4585 = vmul.f32 %v4549, %v4549
      %v4586 = vmul.f32 %v4550, %v4550
      %v4587 = vmul.f32 %v4551, %v4551
      %v4588 = vmul.f32 %v4552, %v4552
      %v4589 = vmul.f32 %v4553, %v4553
      %v4590 = vmul.f32 %v4554, %v4554
      %v4591 = vmul.f32 %v4555, %v4555
      %v4592 = vmul.f32 %v4556, %v4556
      %v4593 = vmul.f32 %v4557, %v4557
      %v4594 = vmul.f32 %v4558, %v4558
      %v4595 = vmul.f32 %v4559, %v4559
      %v4596 = vmul.f32 %v4560, %v4560
      %v4597 = vmul.f32 %v4561, %v4561
      %v4598 = vmul.f32 %v4562, %v4562
      %v4599 = vmul.f32 %v4563, %v4563
      %v4600 = vmul.f32 %v4564, %v4564
      %v4601 = vmul.f32 %v4565, %v4565
      %v4602 = vmul.f32 %v4566, %v4566
      %v4603 = vmul.f32 %v4567, %v4567
      %v4604 = vmul.f32 %v4568, %v4568
      %v4605 = vmul.f32 %v4569, %v4569
      %v4606 = vmul.f32 %v4570, %v4570
      %v4607 = vmul.f32 %v4571, %v4571
      %v4608 = vmul.f32 %v4572, %v4572
      %v4609 = vmul.f32 %v4573, %v4573
      %v4610 = vmul.f32 %v4574, %v4574
      %v4611 = vmul.f32 %v4575, %v4575
      %v4612 = vmul.f32 %v4576, %v4576
      %v4613 = vmul.f32 %v4577, %v4577
      %v4614 = vsel %vm346, %v4578, 0.0
      %v4615 = vsel %vm346, %v4579, 0.0
      %v4616 = vadd.f32 %v4614, %v4615
      %v4617 = vsel %vm346, %v4580, 0.0
      %v4618 = vadd.f32 %v4616, %v4617
      %v4619 = vsel %vm346, %v4581, 0.0
      %v4620 = vadd.f32 %v4618, %v4619
      %v4621 = vsel %vm346, %v4582, 0.0
      %v4622 = vadd.f32 %v4620, %v4621
      %v4623 = vsel %vm346, %v4583, 0.0
      %v4624 = vadd.f32 %v4622, %v4623
      %v4625 = vsel %vm346, %v4584, 0.0
      %v4626 = vadd.f32 %v4624, %v4625
      %v4627 = vsel %vm346, %v4585, 0.0
      %v4628 = vadd.f32 %v4626, %v4627
      %v4629 = vsel %vm346, %v4586, 0.0
      %v4630 = vadd.f32 %v4628, %v4629
      %v4631 = vsel %vm346, %v4587, 0.0
      %v4632 = vadd.f32 %v4630, %v4631
      %v4633 = vsel %vm346, %v4588, 0.0
      %v4634 = vadd.f32 %v4632, %v4633
      %v4635 = vsel %vm346, %v4589, 0.0
      %v4636 = vadd.f32 %v4634, %v4635
      %v4637 = vsel %vm346, %v4590, 0.0
      %v4638 = vadd.f32 %v4636, %v4637
      %v4639 = vsel %vm346, %v4591, 0.0
      %v4640 = vadd.f32 %v4638, %v4639
      %v4641 = vsel %vm346, %v4592, 0.0
      %v4642 = vadd.f32 %v4640, %v4641
      %v4643 = vsel %vm346, %v4593, 0.0
      %v4644 = vadd.f32 %v4642, %v4643
      %v4645 = vsel %vm346, %v4594, 0.0
      %v4646 = vadd.f32 %v4644, %v4645
      %v4647 = vsel %vm346, %v4595, 0.0
      %v4648 = vadd.f32 %v4646, %v4647
      %v4649 = vsel %vm346, %v4596, 0.0
      %v4650 = vadd.f32 %v4648, %v4649
      %v4651 = vsel %vm346, %v4597, 0.0
      %v4652 = vadd.f32 %v4650, %v4651
      %v4653 = vsel %vm346, %v4598, 0.0
      %v4654 = vadd.f32 %v4652, %v4653
      %v4655 = vsel %vm346, %v4599, 0.0
      %v4656 = vadd.f32 %v4654, %v4655
      %v4657 = vsel %vm346, %v4600, 0.0
      %v4658 = vadd.f32 %v4656, %v4657
      %v4659 = vsel %vm346, %v4601, 0.0
      %v4660 = vadd.f32 %v4658, %v4659
      %v4661 = vsel %vm346, %v4602, 0.0
      %v4662 = vadd.f32 %v4660, %v4661
      %v4663 = vsel %vm346, %v4603, 0.0
      %v4664 = vadd.f32 %v4662, %v4663
      %v4665 = vsel %vm346, %v4604, 0.0
      %v4666 = vadd.f32 %v4664, %v4665
      %v4667 = vsel %vm346, %v4605, 0.0
      %v4668 = vadd.f32 %v4666, %v4667
      %v4669 = vsel %vm346, %v4606, 0.0
      %v4670 = vadd.f32 %v4668, %v4669
      %v4671 = vsel %vm346, %v4607, 0.0
      %v4672 = vadd.f32 %v4670, %v4671
      %v4673 = vsel %vm346, %v4608, 0.0
      %v4674 = vadd.f32 %v4672, %v4673
      %v4675 = vsel %vm346, %v4609, 0.0
      %v4676 = vadd.f32 %v4674, %v4675
      %v4677 = vsel %vm346, %v4610, 0.0
      %v4678 = vadd.f32 %v4676, %v4677
      %v4679 = vsel %vm346, %v4611, 0.0
      %v4680 = vadd.f32 %v4678, %v4679
      %v4681 = vsel %vm346, %v4612, 0.0
      %v4682 = vadd.f32 %v4680, %v4681
      %v4683 = vsel %vm346, %v4613, 0.0
      %v4684 = vadd.f32 %v4682, %v4683
      %v4685 = vrot.slane %v4684, 4
      %v4686 = vadd.f32 %v4684, %v4685
      %v4687 = vrot.slane %v4686, 2
      %v4688 = vadd.f32 %v4686, %v4687
      %v4689 = vrot.slane %v4688, 1
      %v4690 = vadd.f32 %v4688, %v4689
      %v4691 = vmul.f32 %v4690, 0.00390625
      %v4692 = vadd.f32 %v4691, 1e-05
      %v4693 = vrsqrt.pop %v4692
      %v4694 = vmul.f32 %v4693, %v4692
      %v4695 = vmul.f32 %v4694, %v4693
      %v4696 = vmul.f32 0.5, %v4695
      %v4697 = vsub.f32 1.5, %v4696
      %v4698 = vmul.f32 %v4693, %v4697
      %vm4699 = vweird.f32 %v4692
      %vm4700 = vweird.f32 %v4693
      %vm4701 = vmor %vm4699, %vm4700
      %v4702 = vsel %vm4701, %v4693, %v4698
      %v4703 = vmul.f32 %v4506, %v4702
      %v4704 = vmul.f32 %v4507, %v4702
      %v4705 = vmul.f32 %v4508, %v4702
      %v4706 = vmul.f32 %v4509, %v4702
      %v4707 = vmul.f32 %v4510, %v4702
      %v4708 = vmul.f32 %v4511, %v4702
      %v4709 = vmul.f32 %v4512, %v4702
      %v4710 = vmul.f32 %v4513, %v4702
      %v4711 = vmul.f32 %v4514, %v4702
      %v4712 = vmul.f32 %v4515, %v4702
      %v4713 = vmul.f32 %v4516, %v4702
      %v4714 = vmul.f32 %v4517, %v4702
      %v4715 = vmul.f32 %v4518, %v4702
      %v4716 = vmul.f32 %v4519, %v4702
      %v4717 = vmul.f32 %v4520, %v4702
      %v4718 = vmul.f32 %v4521, %v4702
      %v4719 = vmul.f32 %v4522, %v4702
      %v4720 = vmul.f32 %v4523, %v4702
      %v4721 = vmul.f32 %v4524, %v4702
      %v4722 = vmul.f32 %v4525, %v4702
      %v4723 = vmul.f32 %v4526, %v4702
      %v4724 = vmul.f32 %v4527, %v4702
      %v4725 = vmul.f32 %v4528, %v4702
      %v4726 = vmul.f32 %v4529, %v4702
      %v4727 = vmul.f32 %v4530, %v4702
      %v4728 = vmul.f32 %v4531, %v4702
      %v4729 = vmul.f32 %v4532, %v4702
      %v4730 = vmul.f32 %v4533, %v4702
      %v4731 = vmul.f32 %v4534, %v4702
      %v4732 = vmul.f32 %v4535, %v4702
      %v4733 = vmul.f32 %v4536, %v4702
      %v4734 = vmul.f32 %v4537, %v4702
      %v4735 = vmul.f32 %v4538, %v4702
      %v4736 = vmul.f32 %v4539, %v4702
      %v4737 = vmul.f32 %v4540, %v4702
      %v4738 = vmul.f32 %v4541, %v4702
      %v4739 = vmax.f32 %v4703, 0.0
      %v4740 = vmax.f32 %v4704, 0.0
      %v4741 = vmax.f32 %v4705, 0.0
      %v4742 = vmax.f32 %v4706, 0.0
      %v4743 = vmax.f32 %v4707, 0.0
      %v4744 = vmax.f32 %v4708, 0.0
      %v4745 = vmax.f32 %v4709, 0.0
      %v4746 = vmax.f32 %v4710, 0.0
      %v4747 = vmax.f32 %v4711, 0.0
      %v4748 = vmax.f32 %v4712, 0.0
      %v4749 = vmax.f32 %v4713, 0.0
      %v4750 = vmax.f32 %v4714, 0.0
      %v4751 = vmax.f32 %v4715, 0.0
      %v4752 = vmax.f32 %v4716, 0.0
      %v4753 = vmax.f32 %v4717, 0.0
      %v4754 = vmax.f32 %v4718, 0.0
      %v4755 = vmax.f32 %v4719, 0.0
      %v4756 = vmax.f32 %v4720, 0.0
      %v4757 = vmax.f32 %v4721, 0.0
      %v4758 = vmax.f32 %v4722, 0.0
      %v4759 = vmax.f32 %v4723, 0.0
      %v4760 = vmax.f32 %v4724, 0.0
      %v4761 = vmax.f32 %v4725, 0.0
      %v4762 = vmax.f32 %v4726, 0.0
      %v4763 = vmax.f32 %v4727, 0.0
      %v4764 = vmax.f32 %v4728, 0.0
      %v4765 = vmax.f32 %v4729, 0.0
      %v4766 = vmax.f32 %v4730, 0.0
      %v4767 = vmax.f32 %v4731, 0.0
      %v4768 = vmax.f32 %v4732, 0.0
      %v4769 = vmax.f32 %v4733, 0.0
      %v4770 = vmax.f32 %v4734, 0.0
      %v4771 = vmax.f32 %v4735, 0.0
      %v4772 = vmax.f32 %v4736, 0.0
      %v4773 = vmax.f32 %v4737, 0.0
      %v4774 = vmax.f32 %v4738, 0.0
      %vm4811 = vcmask 1042432
      %v4812 = vrot.slane %v4739, 5
      %v4813 = vrot.slane %v4740, 5
      %v4814 = vsel %vm4811, %v4812, %v4813
      %v4815 = vrot.slane %v4741, 5
      %v4816 = vsel %vm4811, %v4813, %v4815
      %v4817 = vrot.slane %v4742, 5
      %v4818 = vsel %vm4811, %v4815, %v4817
      %v4819 = vrot.slane %v4743, 5
      %v4820 = vsel %vm4811, %v4817, %v4819
      %v4821 = vrot.slane %v4744, 5
      %v4822 = vsel %vm4811, %v4819, %v4821
      %v4823 = vrot.slane %v4745, 5
      %v4824 = vsel %vm4811, %v4821, %v4823
      %v4825 = vrot.slane %v4746, 5
      %v4826 = vsel %vm4811, %v4823, %v4825
      %v4827 = vrot.slane %v4747, 5
      %v4828 = vsel %vm4811, %v4825, %v4827
      %v4829 = vrot.slane %v4748, 5
      %v4830 = vsel %vm4811, %v4827, %v4829
      %v4831 = vrot.slane %v4749, 5
      %v4832 = vsel %vm4811, %v4829, %v4831
      %v4833 = vrot.slane %v4750, 5
      %v4834 = vsel %vm4811, %v4831, %v4833
      %v4835 = vrot.slane %v4751, 5
      %v4836 = vsel %vm4811, %v4833, %v4835
      %v4837 = vrot.slane %v4752, 5
      %v4838 = vsel %vm4811, %v4835, %v4837
      %v4839 = vrot.slane %v4753, 5
      %v4840 = vsel %vm4811, %v4837, %v4839
      %v4841 = vrot.slane %v4754, 5
      %v4842 = vsel %vm4811, %v4839, %v4841
      %v4843 = vrot.slane %v4755, 5
      %v4844 = vsel %vm4811, %v4841, %v4843
      %v4845 = vrot.slane %v4756, 5
      %v4846 = vsel %vm4811, %v4843, %v4845
      %v4847 = vrot.slane %v4757, 5
      %v4848 = vsel %vm4811, %v4845, %v4847
      %v4849 = vrot.slane %v4758, 5
      %v4850 = vsel %vm4811, %v4847, %v4849
      %v4851 = vrot.slane %v4759, 5
      %v4852 = vsel %vm4811, %v4849, %v4851
      %v4853 = vrot.slane %v4760, 5
      %v4854 = vsel %vm4811, %v4851, %v4853
      %v4855 = vrot.slane %v4761, 5
      %v4856 = vsel %vm4811, %v4853, %v4855
      %v4857 = vrot.slane %v4762, 5
      %v4858 = vsel %vm4811, %v4855, %v4857
      %v4859 = vrot.slane %v4763, 5
      %v4860 = vsel %vm4811, %v4857, %v4859
      %v4861 = vrot.slane %v4764, 5
      %v4862 = vsel %vm4811, %v4859, %v4861
      %v4863 = vrot.slane %v4765, 5
      %v4864 = vsel %vm4811, %v4861, %v4863
      %v4865 = vrot.slane %v4766, 5
      %v4866 = vsel %vm4811, %v4863, %v4865
      %v4867 = vrot.slane %v4767, 5
      %v4868 = vsel %vm4811, %v4865, %v4867
      %v4869 = vrot.slane %v4768, 5
      %v4870 = vsel %vm4811, %v4867, %v4869
      %v4871 = vrot.slane %v4769, 5
      %v4872 = vsel %vm4811, %v4869, %v4871
      %v4873 = vrot.slane %v4770, 5
      %v4874 = vsel %vm4811, %v4871, %v4873
      %v4875 = vrot.slane %v4771, 5
      %v4876 = vsel %vm4811, %v4873, %v4875
      %v4877 = vrot.slane %v4772, 5
      %v4878 = vsel %vm4811, %v4875, %v4877
      %v4879 = vrot.slane %v4773, 5
      %v4880 = vsel %vm4811, %v4877, %v4879
      %v4881 = vrot.slane %v4774, 5
      %v4882 = vsel %vm4811, %v4879, %v4881
      %v4920 = vsel %vm4811, 0.0, %v4812
      %v4921 = vsel %vm4811, %v4881, 0.0
      %v4922 = vadd.s32 %v3024, 288
      %v4923 = vadd.s32 %v3024, 296
      %v4924 = vadd.s32 %v3024, 304
      %v4925 = vadd.s32 %v3024, 312
      %v4926 = vadd.s32 %v3024, 320
      %vm4927 = vcmp.lt.s32.totalorder %v4922, 0
      %v4928 = vsub.s32 0, %v4922
      %v4929 = vsel %vm4927, %v4928, %v4922
      %v4930 = vand.u32 %v4929, 65535
      %v4931 = vshrl.u32 %v4929, 16
      %v4933 = vmul.u32 %v4930, 14564
      %v4934 = vmul.u32 %v4930, 58254
      %v4935 = vmul.u32 %v4931, 14564
      %v4936 = vmul.u32 %v4931, 58254
      %v4937 = vshll.u32 %v4934, 16
      %v4938 = vshrl.u32 %v4934, 16
      %v4939 = vshll.u32 %v4935, 16
      %v4940 = vshrl.u32 %v4935, 16
      %vm4941 = vc.u32 %v4933, %v4937
      %v4942 = vsel %vm4941, 1, 0
      %v4943 = vadd.s32 %v4933, %v4937
      %v4944 = vadd.s32 %v4936, %v4942
      %vm4945 = vc.u32 %v4943, %v4939
      %v4946 = vsel %vm4945, 1, 0
      %v4947 = vadd.s32 %v4943, %v4939
      %v4948 = vadd.s32 %v4944, %v4946
      %v4949 = vadd.s32 %v4948, %v4938
      %v4950 = vadd.s32 %v4949, %v4940
      %v4951 = vshrl.u32 %v4950, 4
      %v4952 = vmul.u32 %v4951, 18
      %v4953 = vsub.s32 %v4929, %v4952
      %v4954 = vsub.s32 0, %v4953
      %v4955 = vsel %vm4927, %v4954, %v4953
      %vm4956 = vcmp.lt.s32.totalorder %v4923, 0
      %v4957 = vsub.s32 0, %v4923
      %v4958 = vsel %vm4956, %v4957, %v4923
      %v4959 = vand.u32 %v4958, 65535
      %v4960 = vshrl.u32 %v4958, 16
      %v4962 = vmul.u32 %v4959, 14564
      %v4963 = vmul.u32 %v4959, 58254
      %v4964 = vmul.u32 %v4960, 14564
      %v4965 = vmul.u32 %v4960, 58254
      %v4966 = vshll.u32 %v4963, 16
      %v4967 = vshrl.u32 %v4963, 16
      %v4968 = vshll.u32 %v4964, 16
      %v4969 = vshrl.u32 %v4964, 16
      %vm4970 = vc.u32 %v4962, %v4966
      %v4971 = vsel %vm4970, 1, 0
      %v4972 = vadd.s32 %v4962, %v4966
      %v4973 = vadd.s32 %v4965, %v4971
      %vm4974 = vc.u32 %v4972, %v4968
      %v4975 = vsel %vm4974, 1, 0
      %v4976 = vadd.s32 %v4972, %v4968
      %v4977 = vadd.s32 %v4973, %v4975
      %v4978 = vadd.s32 %v4977, %v4967
      %v4979 = vadd.s32 %v4978, %v4969
      %v4980 = vshrl.u32 %v4979, 4
      %v4981 = vmul.u32 %v4980, 18
      %v4982 = vsub.s32 %v4958, %v4981
      %v4983 = vsub.s32 0, %v4982
      %v4984 = vsel %vm4956, %v4983, %v4982
      %vm4985 = vcmp.lt.s32.totalorder %v4924, 0
      %v4986 = vsub.s32 0, %v4924
      %v4987 = vsel %vm4985, %v4986, %v4924
      %v4988 = vand.u32 %v4987, 65535
      %v4989 = vshrl.u32 %v4987, 16
      %v4991 = vmul.u32 %v4988, 14564
      %v4992 = vmul.u32 %v4988, 58254
      %v4993 = vmul.u32 %v4989, 14564
      %v4994 = vmul.u32 %v4989, 58254
      %v4995 = vshll.u32 %v4992, 16
      %v4996 = vshrl.u32 %v4992, 16
      %v4997 = vshll.u32 %v4993, 16
      %v4998 = vshrl.u32 %v4993, 16
      %vm4999 = vc.u32 %v4991, %v4995
      %v5000 = vsel %vm4999, 1, 0
      %v5001 = vadd.s32 %v4991, %v4995
      %v5002 = vadd.s32 %v4994, %v5000
      %vm5003 = vc.u32 %v5001, %v4997
      %v5004 = vsel %vm5003, 1, 0
      %v5005 = vadd.s32 %v5001, %v4997
      %v5006 = vadd.s32 %v5002, %v5004
      %v5007 = vadd.s32 %v5006, %v4996
      %v5008 = vadd.s32 %v5007, %v4998
      %v5009 = vshrl.u32 %v5008, 4
      %v5010 = vmul.u32 %v5009, 18
      %v5011 = vsub.s32 %v4987, %v5010
      %v5012 = vsub.s32 0, %v5011
      %v5013 = vsel %vm4985, %v5012, %v5011
      %vm5014 = vcmp.lt.s32.totalorder %v4925, 0
      %v5015 = vsub.s32 0, %v4925
      %v5016 = vsel %vm5014, %v5015, %v4925
      %v5017 = vand.u32 %v5016, 65535
      %v5018 = vshrl.u32 %v5016, 16
      %v5020 = vmul.u32 %v5017, 14564
      %v5021 = vmul.u32 %v5017, 58254
      %v5022 = vmul.u32 %v5018, 14564
      %v5023 = vmul.u32 %v5018, 58254
      %v5024 = vshll.u32 %v5021, 16
      %v5025 = vshrl.u32 %v5021, 16
      %v5026 = vshll.u32 %v5022, 16
      %v5027 = vshrl.u32 %v5022, 16
      %vm5028 = vc.u32 %v5020, %v5024
      %v5029 = vsel %vm5028, 1, 0
      %v5030 = vadd.s32 %v5020, %v5024
      %v5031 = vadd.s32 %v5023, %v5029
      %vm5032 = vc.u32 %v5030, %v5026
      %v5033 = vsel %vm5032, 1, 0
      %v5034 = vadd.s32 %v5030, %v5026
      %v5035 = vadd.s32 %v5031, %v5033
      %v5036 = vadd.s32 %v5035, %v5025
      %v5037 = vadd.s32 %v5036, %v5027
      %v5038 = vshrl.u32 %v5037, 4
      %v5039 = vmul.u32 %v5038, 18
      %v5040 = vsub.s32 %v5016, %v5039
      %v5041 = vsub.s32 0, %v5040
      %v5042 = vsel %vm5014, %v5041, %v5040
      %vm5043 = vcmp.lt.s32.totalorder %v4926, 0
      %v5044 = vsub.s32 0, %v4926
      %v5045 = vsel %vm5043, %v5044, %v4926
      %v5046 = vand.u32 %v5045, 65535
      %v5047 = vshrl.u32 %v5045, 16
      %v5049 = vmul.u32 %v5046, 14564
      %v5050 = vmul.u32 %v5046, 58254
      %v5051 = vmul.u32 %v5047, 14564
      %v5052 = vmul.u32 %v5047, 58254
      %v5053 = vshll.u32 %v5050, 16
      %v5054 = vshrl.u32 %v5050, 16
      %v5055 = vshll.u32 %v5051, 16
      %v5056 = vshrl.u32 %v5051, 16
      %vm5057 = vc.u32 %v5049, %v5053
      %v5058 = vsel %vm5057, 1, 0
      %v5059 = vadd.s32 %v5049, %v5053
      %v5060 = vadd.s32 %v5052, %v5058
      %vm5061 = vc.u32 %v5059, %v5055
      %v5062 = vsel %vm5061, 1, 0
      %v5063 = vadd.s32 %v5059, %v5055
      %v5064 = vadd.s32 %v5060, %v5062
      %v5065 = vadd.s32 %v5064, %v5054
      %v5066 = vadd.s32 %v5065, %v5056
      %v5067 = vshrl.u32 %v5066, 4
      %v5068 = vmul.u32 %v5067, 18
      %v5069 = vsub.s32 %v5045, %v5068
      %v5070 = vsub.s32 0, %v5069
      %v5071 = vsel %vm5043, %v5070, %v5069
      %vm5072 = vcmp.ne.s32.totalorder %v4955, 0
      %vm5073 = vcmp.ne.s32.totalorder %v4984, 0
      %vm5074 = vcmp.ne.s32.totalorder %v5013, 0
      %vm5075 = vcmp.ne.s32.totalorder %v5042, 0
      %vm5076 = vcmp.ne.s32.totalorder %v5071, 0
      %vm5077 = vcmp.lt.s32.totalorder %v4955, 0
      %vm5078 = vcmp.lt.s32.totalorder %v4984, 0
      %vm5079 = vcmp.lt.s32.totalorder %v5013, 0
      %vm5080 = vcmp.lt.s32.totalorder %v5042, 0
      %vm5081 = vcmp.lt.s32.totalorder %v5071, 0
      %vm5082 = vmand %vm5077, %vm5072
      %vm5083 = vmand %vm5078, %vm5073
      %vm5084 = vmand %vm5079, %vm5074
      %vm5085 = vmand %vm5080, %vm5075
      %vm5086 = vmand %vm5081, %vm5076
      %v5087 = vadd.s32 %v4955, 18
      %v5088 = vadd.s32 %v4984, 18
      %v5089 = vadd.s32 %v5013, 18
      %v5090 = vadd.s32 %v5042, 18
      %v5091 = vadd.s32 %v5071, 18
      %v5092 = vsel %vm5082, %v5087, %v4955
      %v5093 = vsel %vm5083, %v5088, %v4984
      %v5094 = vsel %vm5084, %v5089, %v5013
      %v5095 = vsel %vm5085, %v5090, %v5042
      %v5096 = vsel %vm5086, %v5091, %v5071
      %vm5097 = vcmp.eq.s32.totalorder %v4248, 0
      %vm5098 = vcmp.eq.s32.totalorder %v4249, 0
      %vm5099 = vcmp.eq.s32.totalorder %v4250, 0
      %vm5100 = vcmp.eq.s32.totalorder %v4251, 0
      %vm5101 = vcmp.eq.s32.totalorder %v4252, 0
      %vm5102 = vcmp.eq.s32.totalorder %v4253, 0
      %vm5103 = vcmp.eq.s32.totalorder %v4254, 0
      %vm5104 = vcmp.eq.s32.totalorder %v4255, 0
      %vm5105 = vcmp.eq.s32.totalorder %v4256, 0
      %vm5106 = vcmp.eq.s32.totalorder %v4257, 0
      %vm5107 = vcmp.eq.s32.totalorder %v4258, 0
      %vm5108 = vcmp.eq.s32.totalorder %v4259, 0
      %vm5109 = vcmp.eq.s32.totalorder %v4260, 0
      %vm5110 = vcmp.eq.s32.totalorder %v4261, 0
      %vm5111 = vcmp.eq.s32.totalorder %v4262, 0
      %vm5112 = vcmp.eq.s32.totalorder %v4263, 0
      %vm5113 = vcmp.eq.s32.totalorder %v4264, 0
      %vm5114 = vcmp.eq.s32.totalorder %v4265, 0
      %vm5115 = vcmp.eq.s32.totalorder %v4266, 0
      %vm5116 = vcmp.eq.s32.totalorder %v4267, 0
      %vm5117 = vcmp.eq.s32.totalorder %v4268, 0
      %vm5118 = vcmp.eq.s32.totalorder %v4269, 0
      %vm5119 = vcmp.eq.s32.totalorder %v4270, 0
      %vm5120 = vcmp.eq.s32.totalorder %v4271, 0
      %vm5121 = vcmp.eq.s32.totalorder %v4272, 0
      %vm5122 = vcmp.eq.s32.totalorder %v4273, 0
      %vm5123 = vcmp.eq.s32.totalorder %v4274, 0
      %vm5124 = vcmp.eq.s32.totalorder %v4275, 0
      %vm5125 = vcmp.eq.s32.totalorder %v4276, 0
      %vm5126 = vcmp.eq.s32.totalorder %v4277, 0
      %vm5127 = vcmp.eq.s32.totalorder %v4278, 0
      %vm5128 = vcmp.eq.s32.totalorder %v4279, 0
      %vm5129 = vcmp.eq.s32.totalorder %v4280, 0
      %vm5130 = vcmp.eq.s32.totalorder %v4281, 0
      %vm5131 = vcmp.eq.s32.totalorder %v4282, 0
      %vm5132 = vcmp.eq.s32.totalorder %v4283, 0
      %vm5133 = vcmp.eq.s32.totalorder %v5092, 0
      %vm5134 = vcmp.eq.s32.totalorder %v5093, 0
      %vm5135 = vcmp.eq.s32.totalorder %v5094, 0
      %vm5136 = vcmp.eq.s32.totalorder %v5095, 0
      %vm5137 = vcmp.eq.s32.totalorder %v5096, 0
      %vm5141 = vcmask 1045504
      %v5142 = vrot.slane 0.0, 2
      %v5143 = vsel %vm5141, %v5142, %v5142
      %v5144 = vrot.slane %v4920, 2
      %v5145 = vsel %vm5141, %v5142, %v5144
      %v5146 = vrot.slane %v4814, 2
      %v5147 = vsel %vm5141, %v5144, %v5146
      %v5148 = vrot.slane %v4816, 2
      %v5149 = vsel %vm5141, %v5146, %v5148
      %v5150 = vrot.slane %v4818, 2
      %v5151 = vsel %vm5141, %v5148, %v5150
      %v5152 = vrot.slane %v4820, 2
      %v5153 = vsel %vm5141, %v5150, %v5152
      %v5154 = vrot.slane %v4822, 2
      %v5155 = vsel %vm5141, %v5152, %v5154
      %v5156 = vrot.slane %v4824, 2
      %v5157 = vsel %vm5141, %v5154, %v5156
      %v5158 = vrot.slane %v4826, 2
      %v5159 = vsel %vm5141, %v5156, %v5158
      %v5160 = vrot.slane %v4828, 2
      %v5161 = vsel %vm5141, %v5158, %v5160
      %v5162 = vrot.slane %v4830, 2
      %v5163 = vsel %vm5141, %v5160, %v5162
      %v5164 = vrot.slane %v4832, 2
      %v5165 = vsel %vm5141, %v5162, %v5164
      %v5166 = vrot.slane %v4834, 2
      %v5167 = vsel %vm5141, %v5164, %v5166
      %v5168 = vrot.slane %v4836, 2
      %v5169 = vsel %vm5141, %v5166, %v5168
      %v5170 = vrot.slane %v4838, 2
      %v5171 = vsel %vm5141, %v5168, %v5170
      %v5172 = vrot.slane %v4840, 2
      %v5173 = vsel %vm5141, %v5170, %v5172
      %v5174 = vrot.slane %v4842, 2
      %v5175 = vsel %vm5141, %v5172, %v5174
      %v5176 = vrot.slane %v4844, 2
      %v5177 = vsel %vm5141, %v5174, %v5176
      %v5178 = vrot.slane %v4846, 2
      %v5179 = vsel %vm5141, %v5176, %v5178
      %v5180 = vrot.slane %v4848, 2
      %v5181 = vsel %vm5141, %v5178, %v5180
      %v5182 = vrot.slane %v4850, 2
      %v5183 = vsel %vm5141, %v5180, %v5182
      %v5184 = vrot.slane %v4852, 2
      %v5185 = vsel %vm5141, %v5182, %v5184
      %v5186 = vrot.slane %v4854, 2
      %v5187 = vsel %vm5141, %v5184, %v5186
      %v5188 = vrot.slane %v4856, 2
      %v5189 = vsel %vm5141, %v5186, %v5188
      %v5190 = vrot.slane %v4858, 2
      %v5191 = vsel %vm5141, %v5188, %v5190
      %v5192 = vrot.slane %v4860, 2
      %v5193 = vsel %vm5141, %v5190, %v5192
      %v5194 = vrot.slane %v4862, 2
      %v5195 = vsel %vm5141, %v5192, %v5194
      %v5196 = vrot.slane %v4864, 2
      %v5197 = vsel %vm5141, %v5194, %v5196
      %v5198 = vrot.slane %v4866, 2
      %v5199 = vsel %vm5141, %v5196, %v5198
      %v5200 = vrot.slane %v4868, 2
      %v5201 = vsel %vm5141, %v5198, %v5200
      %v5202 = vrot.slane %v4870, 2
      %v5203 = vsel %vm5141, %v5200, %v5202
      %v5204 = vrot.slane %v4872, 2
      %v5205 = vsel %vm5141, %v5202, %v5204
      %v5206 = vrot.slane %v4874, 2
      %v5207 = vsel %vm5141, %v5204, %v5206
      %v5208 = vrot.slane %v4876, 2
      %v5209 = vsel %vm5141, %v5206, %v5208
      %v5210 = vrot.slane %v4878, 2
      %v5211 = vsel %vm5141, %v5208, %v5210
      %v5212 = vrot.slane %v4880, 2
      %v5213 = vsel %vm5141, %v5210, %v5212
      %v5214 = vrot.slane %v4882, 2
      %v5215 = vsel %vm5141, %v5212, %v5214
      %v5216 = vrot.slane %v4921, 2
      %v5217 = vsel %vm5141, %v5214, %v5216
      %v5218 = vsel %vm5141, %v5216, %v5142
      %v5259 = vrot.slane 0.0, 4
      %v5261 = vsel %vm455, %v5142, %v5259
      %vm5262 = vcmp.eq.s32.totalorder %v4248, 17
      %vm5263 = vcmp.eq.s32.totalorder %v4249, 17
      %vm5264 = vcmp.eq.s32.totalorder %v4250, 17
      %vm5265 = vcmp.eq.s32.totalorder %v4251, 17
      %vm5266 = vcmp.eq.s32.totalorder %v4252, 17
      %vm5267 = vcmp.eq.s32.totalorder %v4253, 17
      %vm5268 = vcmp.eq.s32.totalorder %v4254, 17
      %vm5269 = vcmp.eq.s32.totalorder %v4255, 17
      %vm5270 = vcmp.eq.s32.totalorder %v4256, 17
      %vm5271 = vcmp.eq.s32.totalorder %v4257, 17
      %vm5272 = vcmp.eq.s32.totalorder %v4258, 17
      %vm5273 = vcmp.eq.s32.totalorder %v4259, 17
      %vm5274 = vcmp.eq.s32.totalorder %v4260, 17
      %vm5275 = vcmp.eq.s32.totalorder %v4261, 17
      %vm5276 = vcmp.eq.s32.totalorder %v4262, 17
      %vm5277 = vcmp.eq.s32.totalorder %v4263, 17
      %vm5278 = vcmp.eq.s32.totalorder %v4264, 17
      %vm5279 = vcmp.eq.s32.totalorder %v4265, 17
      %vm5280 = vcmp.eq.s32.totalorder %v4266, 17
      %vm5281 = vcmp.eq.s32.totalorder %v4267, 17
      %vm5282 = vcmp.eq.s32.totalorder %v4268, 17
      %vm5283 = vcmp.eq.s32.totalorder %v4269, 17
      %vm5284 = vcmp.eq.s32.totalorder %v4270, 17
      %vm5285 = vcmp.eq.s32.totalorder %v4271, 17
      %vm5286 = vcmp.eq.s32.totalorder %v4272, 17
      %vm5287 = vcmp.eq.s32.totalorder %v4273, 17
      %vm5288 = vcmp.eq.s32.totalorder %v4274, 17
      %vm5289 = vcmp.eq.s32.totalorder %v4275, 17
      %vm5290 = vcmp.eq.s32.totalorder %v4276, 17
      %vm5291 = vcmp.eq.s32.totalorder %v4277, 17
      %vm5292 = vcmp.eq.s32.totalorder %v4278, 17
      %vm5293 = vcmp.eq.s32.totalorder %v4279, 17
      %vm5294 = vcmp.eq.s32.totalorder %v4280, 17
      %vm5295 = vcmp.eq.s32.totalorder %v4281, 17
      %vm5296 = vcmp.eq.s32.totalorder %v4282, 17
      %vm5297 = vcmp.eq.s32.totalorder %v4283, 17
      %vm5298 = vcmp.eq.s32.totalorder %v5092, 17
      %vm5299 = vcmp.eq.s32.totalorder %v5093, 17
      %vm5300 = vcmp.eq.s32.totalorder %v5094, 17
      %vm5301 = vcmp.eq.s32.totalorder %v5095, 17
      %vm5302 = vcmp.eq.s32.totalorder %v5096, 17
      %vm5303 = vcmask 1041408
      %v5304 = vrot.slane 0.0, 6
      %v5305 = vsel %vm5303, %v5304, %v5304
      %v5306 = vrot.slane %v4920, 6
      %v5307 = vsel %vm5303, %v5304, %v5306
      %v5308 = vrot.slane %v4814, 6
      %v5309 = vsel %vm5303, %v5306, %v5308
      %v5310 = vrot.slane %v4816, 6
      %v5311 = vsel %vm5303, %v5308, %v5310
      %v5312 = vrot.slane %v4818, 6
      %v5313 = vsel %vm5303, %v5310, %v5312
      %v5314 = vrot.slane %v4820, 6
      %v5315 = vsel %vm5303, %v5312, %v5314
      %v5316 = vrot.slane %v4822, 6
      %v5317 = vsel %vm5303, %v5314, %v5316
      %v5318 = vrot.slane %v4824, 6
      %v5319 = vsel %vm5303, %v5316, %v5318
      %v5320 = vrot.slane %v4826, 6
      %v5321 = vsel %vm5303, %v5318, %v5320
      %v5322 = vrot.slane %v4828, 6
      %v5323 = vsel %vm5303, %v5320, %v5322
      %v5324 = vrot.slane %v4830, 6
      %v5325 = vsel %vm5303, %v5322, %v5324
      %v5326 = vrot.slane %v4832, 6
      %v5327 = vsel %vm5303, %v5324, %v5326
      %v5328 = vrot.slane %v4834, 6
      %v5329 = vsel %vm5303, %v5326, %v5328
      %v5330 = vrot.slane %v4836, 6
      %v5331 = vsel %vm5303, %v5328, %v5330
      %v5332 = vrot.slane %v4838, 6
      %v5333 = vsel %vm5303, %v5330, %v5332
      %v5334 = vrot.slane %v4840, 6
      %v5335 = vsel %vm5303, %v5332, %v5334
      %v5336 = vrot.slane %v4842, 6
      %v5337 = vsel %vm5303, %v5334, %v5336
      %v5338 = vrot.slane %v4844, 6
      %v5339 = vsel %vm5303, %v5336, %v5338
      %v5340 = vrot.slane %v4846, 6
      %v5341 = vsel %vm5303, %v5338, %v5340
      %v5342 = vrot.slane %v4848, 6
      %v5343 = vsel %vm5303, %v5340, %v5342
      %v5344 = vrot.slane %v4850, 6
      %v5345 = vsel %vm5303, %v5342, %v5344
      %v5346 = vrot.slane %v4852, 6
      %v5347 = vsel %vm5303, %v5344, %v5346
      %v5348 = vrot.slane %v4854, 6
      %v5349 = vsel %vm5303, %v5346, %v5348
      %v5350 = vrot.slane %v4856, 6
      %v5351 = vsel %vm5303, %v5348, %v5350
      %v5352 = vrot.slane %v4858, 6
      %v5353 = vsel %vm5303, %v5350, %v5352
      %v5354 = vrot.slane %v4860, 6
      %v5355 = vsel %vm5303, %v5352, %v5354
      %v5356 = vrot.slane %v4862, 6
      %v5357 = vsel %vm5303, %v5354, %v5356
      %v5358 = vrot.slane %v4864, 6
      %v5359 = vsel %vm5303, %v5356, %v5358
      %v5360 = vrot.slane %v4866, 6
      %v5361 = vsel %vm5303, %v5358, %v5360
      %v5362 = vrot.slane %v4868, 6
      %v5363 = vsel %vm5303, %v5360, %v5362
      %v5364 = vrot.slane %v4870, 6
      %v5365 = vsel %vm5303, %v5362, %v5364
      %v5366 = vrot.slane %v4872, 6
      %v5367 = vsel %vm5303, %v5364, %v5366
      %v5368 = vrot.slane %v4874, 6
      %v5369 = vsel %vm5303, %v5366, %v5368
      %v5370 = vrot.slane %v4876, 6
      %v5371 = vsel %vm5303, %v5368, %v5370
      %v5372 = vrot.slane %v4878, 6
      %v5373 = vsel %vm5303, %v5370, %v5372
      %v5374 = vrot.slane %v4880, 6
      %v5375 = vsel %vm5303, %v5372, %v5374
      %v5376 = vrot.slane %v4882, 6
      %v5377 = vsel %vm5303, %v5374, %v5376
      %v5378 = vrot.slane %v4921, 6
      %v5379 = vsel %vm5303, %v5376, %v5378
      %v5380 = vsel %vm5303, %v5378, %v5304
      %v5421 = vsel %vm5303, %v5259, %v5304
      %v5422 = vsel %vm5262, 1, 0
      %v5423 = vsel %vm5263, 1, 0
      %v5424 = vsel %vm5264, 1, 0
      %v5425 = vsel %vm5265, 1, 0
      %v5426 = vsel %vm5266, 1, 0
      %v5427 = vsel %vm5267, 1, 0
      %v5428 = vsel %vm5268, 1, 0
      %v5429 = vsel %vm5269, 1, 0
      %v5430 = vsel %vm5270, 1, 0
      %v5431 = vsel %vm5271, 1, 0
      %v5432 = vsel %vm5272, 1, 0
      %v5433 = vsel %vm5273, 1, 0
      %v5434 = vsel %vm5274, 1, 0
      %v5435 = vsel %vm5275, 1, 0
      %v5436 = vsel %vm5276, 1, 0
      %v5437 = vsel %vm5277, 1, 0
      %v5438 = vsel %vm5278, 1, 0
      %v5439 = vsel %vm5279, 1, 0
      %v5440 = vsel %vm5280, 1, 0
      %v5441 = vsel %vm5281, 1, 0
      %v5442 = vsel %vm5282, 1, 0
      %v5443 = vsel %vm5283, 1, 0
      %v5444 = vsel %vm5284, 1, 0
      %v5445 = vsel %vm5285, 1, 0
      %v5446 = vsel %vm5286, 1, 0
      %v5447 = vsel %vm5287, 1, 0
      %v5448 = vsel %vm5288, 1, 0
      %v5449 = vsel %vm5289, 1, 0
      %v5450 = vsel %vm5290, 1, 0
      %v5451 = vsel %vm5291, 1, 0
      %v5452 = vsel %vm5292, 1, 0
      %v5453 = vsel %vm5293, 1, 0
      %v5454 = vsel %vm5294, 1, 0
      %v5455 = vsel %vm5295, 1, 0
      %v5456 = vsel %vm5296, 1, 0
      %v5457 = vsel %vm5297, 1, 0
      %v5458 = vsel %vm5298, 1, 0
      %v5459 = vsel %vm5299, 1, 0
      %v5460 = vsel %vm5300, 1, 0
      %v5461 = vsel %vm5301, 1, 0
      %v5462 = vsel %vm5302, 1, 0
      %vm5463 = vcmp.eq.s32.totalorder %v5422, 1
      %vm5464 = vcmp.eq.s32.totalorder %v5423, 1
      %vm5465 = vcmp.eq.s32.totalorder %v5424, 1
      %vm5466 = vcmp.eq.s32.totalorder %v5425, 1
      %vm5467 = vcmp.eq.s32.totalorder %v5426, 1
      %vm5468 = vcmp.eq.s32.totalorder %v5427, 1
      %vm5469 = vcmp.eq.s32.totalorder %v5428, 1
      %vm5470 = vcmp.eq.s32.totalorder %v5429, 1
      %vm5471 = vcmp.eq.s32.totalorder %v5430, 1
      %vm5472 = vcmp.eq.s32.totalorder %v5431, 1
      %vm5473 = vcmp.eq.s32.totalorder %v5432, 1
      %vm5474 = vcmp.eq.s32.totalorder %v5433, 1
      %vm5475 = vcmp.eq.s32.totalorder %v5434, 1
      %vm5476 = vcmp.eq.s32.totalorder %v5435, 1
      %vm5477 = vcmp.eq.s32.totalorder %v5436, 1
      %vm5478 = vcmp.eq.s32.totalorder %v5437, 1
      %vm5479 = vcmp.eq.s32.totalorder %v5438, 1
      %vm5480 = vcmp.eq.s32.totalorder %v5439, 1
      %vm5481 = vcmp.eq.s32.totalorder %v5440, 1
      %vm5482 = vcmp.eq.s32.totalorder %v5441, 1
      %vm5483 = vcmp.eq.s32.totalorder %v5442, 1
      %vm5484 = vcmp.eq.s32.totalorder %v5443, 1
      %vm5485 = vcmp.eq.s32.totalorder %v5444, 1
      %vm5486 = vcmp.eq.s32.totalorder %v5445, 1
      %vm5487 = vcmp.eq.s32.totalorder %v5446, 1
      %vm5488 = vcmp.eq.s32.totalorder %v5447, 1
      %vm5489 = vcmp.eq.s32.totalorder %v5448, 1
      %vm5490 = vcmp.eq.s32.totalorder %v5449, 1
      %vm5491 = vcmp.eq.s32.totalorder %v5450, 1
      %vm5492 = vcmp.eq.s32.totalorder %v5451, 1
      %vm5493 = vcmp.eq.s32.totalorder %v5452, 1
      %vm5494 = vcmp.eq.s32.totalorder %v5453, 1
      %vm5495 = vcmp.eq.s32.totalorder %v5454, 1
      %vm5496 = vcmp.eq.s32.totalorder %v5455, 1
      %vm5497 = vcmp.eq.s32.totalorder %v5456, 1
      %vm5498 = vcmp.eq.s32.totalorder %v5457, 1
      %vm5499 = vcmp.eq.s32.totalorder %v5458, 1
      %vm5500 = vcmp.eq.s32.totalorder %v5459, 1
      %vm5501 = vcmp.eq.s32.totalorder %v5460, 1
      %vm5502 = vcmp.eq.s32.totalorder %v5461, 1
      %vm5503 = vcmp.eq.s32.totalorder %v5462, 1
      %v5504 = vsel %vm5463, %v5421, 0.0
      %v5505 = vsel %vm5464, %v5305, 0.0
      %v5506 = vsel %vm5465, %v5307, %v4920
      %v5507 = vsel %vm5466, %v5309, %v4814
      %v5508 = vsel %vm5467, %v5311, %v4816
      %v5509 = vsel %vm5468, %v5313, %v4818
      %v5510 = vsel %vm5469, %v5315, %v4820
      %v5511 = vsel %vm5470, %v5317, %v4822
      %v5512 = vsel %vm5471, %v5319, %v4824
      %v5513 = vsel %vm5472, %v5321, %v4826
      %v5514 = vsel %vm5473, %v5323, %v4828
      %v5515 = vsel %vm5474, %v5325, %v4830
      %v5516 = vsel %vm5475, %v5327, %v4832
      %v5517 = vsel %vm5476, %v5329, %v4834
      %v5518 = vsel %vm5477, %v5331, %v4836
      %v5519 = vsel %vm5478, %v5333, %v4838
      %v5520 = vsel %vm5479, %v5335, %v4840
      %v5521 = vsel %vm5480, %v5337, %v4842
      %v5522 = vsel %vm5481, %v5339, %v4844
      %v5523 = vsel %vm5482, %v5341, %v4846
      %v5524 = vsel %vm5483, %v5343, %v4848
      %v5525 = vsel %vm5484, %v5345, %v4850
      %v5526 = vsel %vm5485, %v5347, %v4852
      %v5527 = vsel %vm5486, %v5349, %v4854
      %v5528 = vsel %vm5487, %v5351, %v4856
      %v5529 = vsel %vm5488, %v5353, %v4858
      %v5530 = vsel %vm5489, %v5355, %v4860
      %v5531 = vsel %vm5490, %v5357, %v4862
      %v5532 = vsel %vm5491, %v5359, %v4864
      %v5533 = vsel %vm5492, %v5361, %v4866
      %v5534 = vsel %vm5493, %v5363, %v4868
      %v5535 = vsel %vm5494, %v5365, %v4870
      %v5536 = vsel %vm5495, %v5367, %v4872
      %v5537 = vsel %vm5496, %v5369, %v4874
      %v5538 = vsel %vm5497, %v5371, %v4876
      %v5539 = vsel %vm5498, %v5373, %v4878
      %v5540 = vsel %vm5499, %v5375, %v4880
      %v5541 = vsel %vm5500, %v5377, %v4882
      %v5542 = vsel %vm5501, %v5379, %v4921
      %v5543 = vsel %vm5502, %v5380, 0.0
      %v5544 = vsel %vm5503, %v5305, 0.0
      %v5545 = vsel %vm5097, 1, 0
      %v5546 = vsel %vm5098, 1, 0
      %v5547 = vsel %vm5099, 1, 0
      %v5548 = vsel %vm5100, 1, 0
      %v5549 = vsel %vm5101, 1, 0
      %v5550 = vsel %vm5102, 1, 0
      %v5551 = vsel %vm5103, 1, 0
      %v5552 = vsel %vm5104, 1, 0
      %v5553 = vsel %vm5105, 1, 0
      %v5554 = vsel %vm5106, 1, 0
      %v5555 = vsel %vm5107, 1, 0
      %v5556 = vsel %vm5108, 1, 0
      %v5557 = vsel %vm5109, 1, 0
      %v5558 = vsel %vm5110, 1, 0
      %v5559 = vsel %vm5111, 1, 0
      %v5560 = vsel %vm5112, 1, 0
      %v5561 = vsel %vm5113, 1, 0
      %v5562 = vsel %vm5114, 1, 0
      %v5563 = vsel %vm5115, 1, 0
      %v5564 = vsel %vm5116, 1, 0
      %v5565 = vsel %vm5117, 1, 0
      %v5566 = vsel %vm5118, 1, 0
      %v5567 = vsel %vm5119, 1, 0
      %v5568 = vsel %vm5120, 1, 0
      %v5569 = vsel %vm5121, 1, 0
      %v5570 = vsel %vm5122, 1, 0
      %v5571 = vsel %vm5123, 1, 0
      %v5572 = vsel %vm5124, 1, 0
      %v5573 = vsel %vm5125, 1, 0
      %v5574 = vsel %vm5126, 1, 0
      %v5575 = vsel %vm5127, 1, 0
      %v5576 = vsel %vm5128, 1, 0
      %v5577 = vsel %vm5129, 1, 0
      %v5578 = vsel %vm5130, 1, 0
      %v5579 = vsel %vm5131, 1, 0
      %v5580 = vsel %vm5132, 1, 0
      %v5581 = vsel %vm5133, 1, 0
      %v5582 = vsel %vm5134, 1, 0
      %v5583 = vsel %vm5135, 1, 0
      %v5584 = vsel %vm5136, 1, 0
      %v5585 = vsel %vm5137, 1, 0
      %vm5586 = vcmp.eq.s32.totalorder %v5545, 1
      %vm5587 = vcmp.eq.s32.totalorder %v5546, 1
      %vm5588 = vcmp.eq.s32.totalorder %v5547, 1
      %vm5589 = vcmp.eq.s32.totalorder %v5548, 1
      %vm5590 = vcmp.eq.s32.totalorder %v5549, 1
      %vm5591 = vcmp.eq.s32.totalorder %v5550, 1
      %vm5592 = vcmp.eq.s32.totalorder %v5551, 1
      %vm5593 = vcmp.eq.s32.totalorder %v5552, 1
      %vm5594 = vcmp.eq.s32.totalorder %v5553, 1
      %vm5595 = vcmp.eq.s32.totalorder %v5554, 1
      %vm5596 = vcmp.eq.s32.totalorder %v5555, 1
      %vm5597 = vcmp.eq.s32.totalorder %v5556, 1
      %vm5598 = vcmp.eq.s32.totalorder %v5557, 1
      %vm5599 = vcmp.eq.s32.totalorder %v5558, 1
      %vm5600 = vcmp.eq.s32.totalorder %v5559, 1
      %vm5601 = vcmp.eq.s32.totalorder %v5560, 1
      %vm5602 = vcmp.eq.s32.totalorder %v5561, 1
      %vm5603 = vcmp.eq.s32.totalorder %v5562, 1
      %vm5604 = vcmp.eq.s32.totalorder %v5563, 1
      %vm5605 = vcmp.eq.s32.totalorder %v5564, 1
      %vm5606 = vcmp.eq.s32.totalorder %v5565, 1
      %vm5607 = vcmp.eq.s32.totalorder %v5566, 1
      %vm5608 = vcmp.eq.s32.totalorder %v5567, 1
      %vm5609 = vcmp.eq.s32.totalorder %v5568, 1
      %vm5610 = vcmp.eq.s32.totalorder %v5569, 1
      %vm5611 = vcmp.eq.s32.totalorder %v5570, 1
      %vm5612 = vcmp.eq.s32.totalorder %v5571, 1
      %vm5613 = vcmp.eq.s32.totalorder %v5572, 1
      %vm5614 = vcmp.eq.s32.totalorder %v5573, 1
      %vm5615 = vcmp.eq.s32.totalorder %v5574, 1
      %vm5616 = vcmp.eq.s32.totalorder %v5575, 1
      %vm5617 = vcmp.eq.s32.totalorder %v5576, 1
      %vm5618 = vcmp.eq.s32.totalorder %v5577, 1
      %vm5619 = vcmp.eq.s32.totalorder %v5578, 1
      %vm5620 = vcmp.eq.s32.totalorder %v5579, 1
      %vm5621 = vcmp.eq.s32.totalorder %v5580, 1
      %vm5622 = vcmp.eq.s32.totalorder %v5581, 1
      %vm5623 = vcmp.eq.s32.totalorder %v5582, 1
      %vm5624 = vcmp.eq.s32.totalorder %v5583, 1
      %vm5625 = vcmp.eq.s32.totalorder %v5584, 1
      %vm5626 = vcmp.eq.s32.totalorder %v5585, 1
      %v5627 = vsel %vm5586, %v5143, %v5504
      %v5628 = vsel %vm5587, %v5145, %v5505
      %v5629 = vsel %vm5588, %v5147, %v5506
      %v5630 = vsel %vm5589, %v5149, %v5507
      %v5631 = vsel %vm5590, %v5151, %v5508
      %v5632 = vsel %vm5591, %v5153, %v5509
      %v5633 = vsel %vm5592, %v5155, %v5510
      %v5634 = vsel %vm5593, %v5157, %v5511
      %v5635 = vsel %vm5594, %v5159, %v5512
      %v5636 = vsel %vm5595, %v5161, %v5513
      %v5637 = vsel %vm5596, %v5163, %v5514
      %v5638 = vsel %vm5597, %v5165, %v5515
      %v5639 = vsel %vm5598, %v5167, %v5516
      %v5640 = vsel %vm5599, %v5169, %v5517
      %v5641 = vsel %vm5600, %v5171, %v5518
      %v5642 = vsel %vm5601, %v5173, %v5519
      %v5643 = vsel %vm5602, %v5175, %v5520
      %v5644 = vsel %vm5603, %v5177, %v5521
      %v5645 = vsel %vm5604, %v5179, %v5522
      %v5646 = vsel %vm5605, %v5181, %v5523
      %v5647 = vsel %vm5606, %v5183, %v5524
      %v5648 = vsel %vm5607, %v5185, %v5525
      %v5649 = vsel %vm5608, %v5187, %v5526
      %v5650 = vsel %vm5609, %v5189, %v5527
      %v5651 = vsel %vm5610, %v5191, %v5528
      %v5652 = vsel %vm5611, %v5193, %v5529
      %v5653 = vsel %vm5612, %v5195, %v5530
      %v5654 = vsel %vm5613, %v5197, %v5531
      %v5655 = vsel %vm5614, %v5199, %v5532
      %v5656 = vsel %vm5615, %v5201, %v5533
      %v5657 = vsel %vm5616, %v5203, %v5534
      %v5658 = vsel %vm5617, %v5205, %v5535
      %v5659 = vsel %vm5618, %v5207, %v5536
      %v5660 = vsel %vm5619, %v5209, %v5537
      %v5661 = vsel %vm5620, %v5211, %v5538
      %v5662 = vsel %vm5621, %v5213, %v5539
      %v5663 = vsel %vm5622, %v5215, %v5540
      %v5664 = vsel %vm5623, %v5217, %v5541
      %v5665 = vsel %vm5624, %v5218, %v5542
      %v5666 = vsel %vm5625, %v5143, %v5543
      %v5667 = vsel %vm5626, %v5261, %v5544
      %vm5668 = vcmp.lt.s32.totalorder %v3024, 18
      %vm5669 = vcmp.lt.s32.totalorder %v3025, 18
      %vm5670 = vcmp.lt.s32.totalorder %v3026, 18
      %vm5671 = vcmp.lt.s32.totalorder %v3027, 18
      %vm5672 = vcmp.lt.s32.totalorder %v3028, 18
      %vm5673 = vcmp.lt.s32.totalorder %v3029, 18
      %vm5674 = vcmp.lt.s32.totalorder %v3030, 18
      %vm5675 = vcmp.lt.s32.totalorder %v3031, 18
      %vm5676 = vcmp.lt.s32.totalorder %v3032, 18
      %vm5677 = vcmp.lt.s32.totalorder %v3033, 18
      %vm5678 = vcmp.lt.s32.totalorder %v3034, 18
      %vm5679 = vcmp.lt.s32.totalorder %v3035, 18
      %vm5680 = vcmp.lt.s32.totalorder %v3036, 18
      %vm5681 = vcmp.lt.s32.totalorder %v3037, 18
      %vm5682 = vcmp.lt.s32.totalorder %v3038, 18
      %vm5683 = vcmp.lt.s32.totalorder %v3039, 18
      %vm5684 = vcmp.lt.s32.totalorder %v3040, 18
      %vm5685 = vcmp.lt.s32.totalorder %v3041, 18
      %vm5686 = vcmp.lt.s32.totalorder %v3042, 18
      %vm5687 = vcmp.lt.s32.totalorder %v3043, 18
      %vm5688 = vcmp.lt.s32.totalorder %v3044, 18
      %vm5689 = vcmp.lt.s32.totalorder %v3045, 18
      %vm5690 = vcmp.lt.s32.totalorder %v3046, 18
      %vm5691 = vcmp.lt.s32.totalorder %v3047, 18
      %vm5692 = vcmp.lt.s32.totalorder %v3048, 18
      %vm5693 = vcmp.lt.s32.totalorder %v3049, 18
      %vm5694 = vcmp.lt.s32.totalorder %v3050, 18
      %vm5695 = vcmp.lt.s32.totalorder %v3051, 18
      %vm5696 = vcmp.lt.s32.totalorder %v3052, 18
      %vm5697 = vcmp.lt.s32.totalorder %v3053, 18
      %vm5698 = vcmp.lt.s32.totalorder %v3054, 18
      %vm5699 = vcmp.lt.s32.totalorder %v3055, 18
      %vm5700 = vcmp.lt.s32.totalorder %v3056, 18
      %vm5701 = vcmp.lt.s32.totalorder %v3057, 18
      %vm5702 = vcmp.lt.s32.totalorder %v3058, 18
      %vm5703 = vcmp.lt.s32.totalorder %v3059, 18
      %vm5704 = vcmp.lt.s32.totalorder %v4922, 18
      %vm5705 = vcmp.lt.s32.totalorder %v4923, 18
      %vm5706 = vcmp.lt.s32.totalorder %v4924, 18
      %vm5707 = vcmp.lt.s32.totalorder %v4925, 18
      %vm5708 = vcmp.lt.s32.totalorder %v4926, 18
      %vm5709 = vcmp.ge.s32.totalorder %v3024, 306
      %vm5710 = vcmp.ge.s32.totalorder %v3025, 306
      %vm5711 = vcmp.ge.s32.totalorder %v3026, 306
      %vm5712 = vcmp.ge.s32.totalorder %v3027, 306
      %vm5713 = vcmp.ge.s32.totalorder %v3028, 306
      %vm5714 = vcmp.ge.s32.totalorder %v3029, 306
      %vm5715 = vcmp.ge.s32.totalorder %v3030, 306
      %vm5716 = vcmp.ge.s32.totalorder %v3031, 306
      %vm5717 = vcmp.ge.s32.totalorder %v3032, 306
      %vm5718 = vcmp.ge.s32.totalorder %v3033, 306
      %vm5719 = vcmp.ge.s32.totalorder %v3034, 306
      %vm5720 = vcmp.ge.s32.totalorder %v3035, 306
      %vm5721 = vcmp.ge.s32.totalorder %v3036, 306
      %vm5722 = vcmp.ge.s32.totalorder %v3037, 306
      %vm5723 = vcmp.ge.s32.totalorder %v3038, 306
      %vm5724 = vcmp.ge.s32.totalorder %v3039, 306
      %vm5725 = vcmp.ge.s32.totalorder %v3040, 306
      %vm5726 = vcmp.ge.s32.totalorder %v3041, 306
      %vm5727 = vcmp.ge.s32.totalorder %v3042, 306
      %vm5728 = vcmp.ge.s32.totalorder %v3043, 306
      %vm5729 = vcmp.ge.s32.totalorder %v3044, 306
      %vm5730 = vcmp.ge.s32.totalorder %v3045, 306
      %vm5731 = vcmp.ge.s32.totalorder %v3046, 306
      %vm5732 = vcmp.ge.s32.totalorder %v3047, 306
      %vm5733 = vcmp.ge.s32.totalorder %v3048, 306
      %vm5734 = vcmp.ge.s32.totalorder %v3049, 306
      %vm5735 = vcmp.ge.s32.totalorder %v3050, 306
      %vm5736 = vcmp.ge.s32.totalorder %v3051, 306
      %vm5737 = vcmp.ge.s32.totalorder %v3052, 306
      %vm5738 = vcmp.ge.s32.totalorder %v3053, 306
      %vm5739 = vcmp.ge.s32.totalorder %v3054, 306
      %vm5740 = vcmp.ge.s32.totalorder %v3055, 306
      %vm5741 = vcmp.ge.s32.totalorder %v3056, 306
      %vm5742 = vcmp.ge.s32.totalorder %v3057, 306
      %vm5743 = vcmp.ge.s32.totalorder %v3058, 306
      %vm5744 = vcmp.ge.s32.totalorder %v3059, 306
      %vm5745 = vcmp.ge.s32.totalorder %v4922, 306
      %vm5746 = vcmp.ge.s32.totalorder %v4923, 306
      %vm5747 = vcmp.ge.s32.totalorder %v4924, 306
      %vm5748 = vcmp.ge.s32.totalorder %v4925, 306
      %vm5749 = vcmp.ge.s32.totalorder %v4926, 306
      %vm5750 = vcmp.lt.s32.totalorder %v3024, 324
      %vm5751 = vcmp.lt.s32.totalorder %v3025, 324
      %vm5752 = vcmp.lt.s32.totalorder %v3026, 324
      %vm5753 = vcmp.lt.s32.totalorder %v3027, 324
      %vm5754 = vcmp.lt.s32.totalorder %v3028, 324
      %vm5755 = vcmp.lt.s32.totalorder %v3029, 324
      %vm5756 = vcmp.lt.s32.totalorder %v3030, 324
      %vm5757 = vcmp.lt.s32.totalorder %v3031, 324
      %vm5758 = vcmp.lt.s32.totalorder %v3032, 324
      %vm5759 = vcmp.lt.s32.totalorder %v3033, 324
      %vm5760 = vcmp.lt.s32.totalorder %v3034, 324
      %vm5761 = vcmp.lt.s32.totalorder %v3035, 324
      %vm5762 = vcmp.lt.s32.totalorder %v3036, 324
      %vm5763 = vcmp.lt.s32.totalorder %v3037, 324
      %vm5764 = vcmp.lt.s32.totalorder %v3038, 324
      %vm5765 = vcmp.lt.s32.totalorder %v3039, 324
      %vm5766 = vcmp.lt.s32.totalorder %v3040, 324
      %vm5767 = vcmp.lt.s32.totalorder %v3041, 324
      %vm5768 = vcmp.lt.s32.totalorder %v3042, 324
      %vm5769 = vcmp.lt.s32.totalorder %v3043, 324
      %vm5770 = vcmp.lt.s32.totalorder %v3044, 324
      %vm5771 = vcmp.lt.s32.totalorder %v3045, 324
      %vm5772 = vcmp.lt.s32.totalorder %v3046, 324
      %vm5773 = vcmp.lt.s32.totalorder %v3047, 324
      %vm5774 = vcmp.lt.s32.totalorder %v3048, 324
      %vm5775 = vcmp.lt.s32.totalorder %v3049, 324
      %vm5776 = vcmp.lt.s32.totalorder %v3050, 324
      %vm5777 = vcmp.lt.s32.totalorder %v3051, 324
      %vm5778 = vcmp.lt.s32.totalorder %v3052, 324
      %vm5779 = vcmp.lt.s32.totalorder %v3053, 324
      %vm5780 = vcmp.lt.s32.totalorder %v3054, 324
      %vm5781 = vcmp.lt.s32.totalorder %v3055, 324
      %vm5782 = vcmp.lt.s32.totalorder %v3056, 324
      %vm5783 = vcmp.lt.s32.totalorder %v3057, 324
      %vm5784 = vcmp.lt.s32.totalorder %v3058, 324
      %vm5785 = vcmp.lt.s32.totalorder %v3059, 324
      %vm5786 = vcmp.lt.s32.totalorder %v4922, 324
      %vm5787 = vcmp.lt.s32.totalorder %v4923, 324
      %vm5788 = vcmp.lt.s32.totalorder %v4924, 324
      %vm5789 = vcmp.lt.s32.totalorder %v4925, 324
      %vm5790 = vcmp.lt.s32.totalorder %v4926, 324
      %vm5791 = vmand %vm5709, %vm5750
      %vm5792 = vmand %vm5710, %vm5751
      %vm5793 = vmand %vm5711, %vm5752
      %vm5794 = vmand %vm5712, %vm5753
      %vm5795 = vmand %vm5713, %vm5754
      %vm5796 = vmand %vm5714, %vm5755
      %vm5797 = vmand %vm5715, %vm5756
      %vm5798 = vmand %vm5716, %vm5757
      %vm5799 = vmand %vm5717, %vm5758
      %vm5800 = vmand %vm5718, %vm5759
      %vm5801 = vmand %vm5719, %vm5760
      %vm5802 = vmand %vm5720, %vm5761
      %vm5803 = vmand %vm5721, %vm5762
      %vm5804 = vmand %vm5722, %vm5763
      %vm5805 = vmand %vm5723, %vm5764
      %vm5806 = vmand %vm5724, %vm5765
      %vm5807 = vmand %vm5725, %vm5766
      %vm5808 = vmand %vm5726, %vm5767
      %vm5809 = vmand %vm5727, %vm5768
      %vm5810 = vmand %vm5728, %vm5769
      %vm5811 = vmand %vm5729, %vm5770
      %vm5812 = vmand %vm5730, %vm5771
      %vm5813 = vmand %vm5731, %vm5772
      %vm5814 = vmand %vm5732, %vm5773
      %vm5815 = vmand %vm5733, %vm5774
      %vm5816 = vmand %vm5734, %vm5775
      %vm5817 = vmand %vm5735, %vm5776
      %vm5818 = vmand %vm5736, %vm5777
      %vm5819 = vmand %vm5737, %vm5778
      %vm5820 = vmand %vm5738, %vm5779
      %vm5821 = vmand %vm5739, %vm5780
      %vm5822 = vmand %vm5740, %vm5781
      %vm5823 = vmand %vm5741, %vm5782
      %vm5824 = vmand %vm5742, %vm5783
      %vm5825 = vmand %vm5743, %vm5784
      %vm5826 = vmand %vm5744, %vm5785
      %vm5827 = vmand %vm5745, %vm5786
      %vm5828 = vmand %vm5746, %vm5787
      %vm5829 = vmand %vm5747, %vm5788
      %vm5830 = vmand %vm5748, %vm5789
      %vm5831 = vmand %vm5749, %vm5790
      %v5869 = vrot.slane %v5631, 4
      %v5870 = vrot.slane %v5632, 4
      %v5871 = vsel %vm455, %v5869, %v5870
      %v5872 = vrot.slane %v5633, 4
      %v5873 = vsel %vm455, %v5870, %v5872
      %v5874 = vrot.slane %v5634, 4
      %v5875 = vsel %vm455, %v5872, %v5874
      %v5876 = vrot.slane %v5635, 4
      %v5877 = vsel %vm455, %v5874, %v5876
      %v5878 = vrot.slane %v5636, 4
      %v5879 = vsel %vm455, %v5876, %v5878
      %v5880 = vrot.slane %v5637, 4
      %v5881 = vsel %vm455, %v5878, %v5880
      %v5882 = vrot.slane %v5638, 4
      %v5883 = vsel %vm455, %v5880, %v5882
      %v5884 = vrot.slane %v5639, 4
      %v5885 = vsel %vm455, %v5882, %v5884
      %v5886 = vrot.slane %v5640, 4
      %v5887 = vsel %vm455, %v5884, %v5886
      %v5888 = vrot.slane %v5641, 4
      %v5889 = vsel %vm455, %v5886, %v5888
      %v5890 = vrot.slane %v5642, 4
      %v5891 = vsel %vm455, %v5888, %v5890
      %v5892 = vrot.slane %v5643, 4
      %v5893 = vsel %vm455, %v5890, %v5892
      %v5894 = vrot.slane %v5644, 4
      %v5895 = vsel %vm455, %v5892, %v5894
      %v5896 = vrot.slane %v5645, 4
      %v5897 = vsel %vm455, %v5894, %v5896
      %v5898 = vrot.slane %v5646, 4
      %v5899 = vsel %vm455, %v5896, %v5898
      %v5900 = vrot.slane %v5647, 4
      %v5901 = vsel %vm455, %v5898, %v5900
      %v5902 = vrot.slane %v5648, 4
      %v5903 = vsel %vm455, %v5900, %v5902
      %v5904 = vrot.slane %v5649, 4
      %v5905 = vsel %vm455, %v5902, %v5904
      %v5906 = vrot.slane %v5650, 4
      %v5907 = vsel %vm455, %v5904, %v5906
      %v5908 = vrot.slane %v5651, 4
      %v5909 = vsel %vm455, %v5906, %v5908
      %v5910 = vrot.slane %v5652, 4
      %v5911 = vsel %vm455, %v5908, %v5910
      %v5912 = vrot.slane %v5653, 4
      %v5913 = vsel %vm455, %v5910, %v5912
      %v5914 = vrot.slane %v5654, 4
      %v5915 = vsel %vm455, %v5912, %v5914
      %v5916 = vrot.slane %v5655, 4
      %v5917 = vsel %vm455, %v5914, %v5916
      %v5918 = vrot.slane %v5656, 4
      %v5919 = vsel %vm455, %v5916, %v5918
      %v5920 = vrot.slane %v5657, 4
      %v5921 = vsel %vm455, %v5918, %v5920
      %v5922 = vrot.slane %v5658, 4
      %v5923 = vsel %vm455, %v5920, %v5922
      %v5924 = vrot.slane %v5659, 4
      %v5925 = vsel %vm455, %v5922, %v5924
      %v5926 = vrot.slane %v5660, 4
      %v5927 = vsel %vm455, %v5924, %v5926
      %v5928 = vrot.slane %v5661, 4
      %v5929 = vsel %vm455, %v5926, %v5928
      %v5930 = vrot.slane %v5662, 4
      %v5931 = vsel %vm455, %v5928, %v5930
      %v5932 = vrot.slane %v5663, 4
      %v5933 = vsel %vm455, %v5930, %v5932
      %v5934 = vrot.slane %v5664, 4
      %v5935 = vsel %vm455, %v5932, %v5934
      %v5936 = vrot.slane %v5665, 4
      %v5937 = vsel %vm455, %v5934, %v5936
      %v5938 = vrot.slane %v5666, 4
      %v5939 = vsel %vm455, %v5936, %v5938
      %v5940 = vrot.slane %v5667, 4
      %v5941 = vsel %vm455, %v5938, %v5940
      %v5983 = vrot.slane %v5627, 6
      %v5984 = vrot.slane %v5628, 6
      %v5985 = vsel %vm5303, %v5983, %v5984
      %v5986 = vrot.slane %v5629, 6
      %v5987 = vsel %vm5303, %v5984, %v5986
      %v5988 = vrot.slane %v5630, 6
      %v5989 = vsel %vm5303, %v5986, %v5988
      %v5990 = vrot.slane %v5631, 6
      %v5991 = vsel %vm5303, %v5988, %v5990
      %v5997 = vsel %vm5303, %v5940, %v5983
      %v5998 = vrot.slane %v5663, 2
      %v5999 = vrot.slane %v5664, 2
      %v6000 = vsel %vm5141, %v5998, %v5999
      %v6001 = vrot.slane %v5665, 2
      %v6002 = vsel %vm5141, %v5999, %v6001
      %v6003 = vrot.slane %v5666, 2
      %v6004 = vsel %vm5141, %v6001, %v6003
      %v6005 = vrot.slane %v5667, 2
      %v6006 = vsel %vm5141, %v6003, %v6005
      %v6012 = vrot.slane %v5627, 4
      %v6013 = vrot.slane %v5628, 4
      %v6014 = vsel %vm455, %v6012, %v6013
      %v6015 = vrot.slane %v5629, 4
      %v6016 = vsel %vm455, %v6013, %v6015
      %v6017 = vrot.slane %v5630, 4
      %v6018 = vsel %vm455, %v6015, %v6017
      %v6019 = vsel %vm455, %v6017, %v5869
      %v6025 = vsel %vm455, %v6005, %v6012
      %v6026 = vsel %vm5791, 1, 0
      %v6027 = vsel %vm5792, 1, 0
      %v6028 = vsel %vm5793, 1, 0
      %v6029 = vsel %vm5794, 1, 0
      %v6030 = vsel %vm5795, 1, 0
      %v6031 = vsel %vm5796, 1, 0
      %v6032 = vsel %vm5797, 1, 0
      %v6033 = vsel %vm5798, 1, 0
      %v6034 = vsel %vm5799, 1, 0
      %v6035 = vsel %vm5800, 1, 0
      %v6036 = vsel %vm5801, 1, 0
      %v6037 = vsel %vm5802, 1, 0
      %v6038 = vsel %vm5803, 1, 0
      %v6039 = vsel %vm5804, 1, 0
      %v6040 = vsel %vm5805, 1, 0
      %v6041 = vsel %vm5806, 1, 0
      %v6042 = vsel %vm5807, 1, 0
      %v6043 = vsel %vm5808, 1, 0
      %v6044 = vsel %vm5809, 1, 0
      %v6045 = vsel %vm5810, 1, 0
      %v6046 = vsel %vm5811, 1, 0
      %v6047 = vsel %vm5812, 1, 0
      %v6048 = vsel %vm5813, 1, 0
      %v6049 = vsel %vm5814, 1, 0
      %v6050 = vsel %vm5815, 1, 0
      %v6051 = vsel %vm5816, 1, 0
      %v6052 = vsel %vm5817, 1, 0
      %v6053 = vsel %vm5818, 1, 0
      %v6054 = vsel %vm5819, 1, 0
      %v6055 = vsel %vm5820, 1, 0
      %v6056 = vsel %vm5821, 1, 0
      %v6057 = vsel %vm5822, 1, 0
      %v6058 = vsel %vm5823, 1, 0
      %v6059 = vsel %vm5824, 1, 0
      %v6060 = vsel %vm5825, 1, 0
      %v6061 = vsel %vm5826, 1, 0
      %v6062 = vsel %vm5827, 1, 0
      %v6063 = vsel %vm5828, 1, 0
      %v6064 = vsel %vm5829, 1, 0
      %v6065 = vsel %vm5830, 1, 0
      %v6066 = vsel %vm5831, 1, 0
      %vm6067 = vcmp.eq.s32.totalorder %v6026, 1
      %vm6068 = vcmp.eq.s32.totalorder %v6027, 1
      %vm6069 = vcmp.eq.s32.totalorder %v6028, 1
      %vm6070 = vcmp.eq.s32.totalorder %v6029, 1
      %vm6071 = vcmp.eq.s32.totalorder %v6030, 1
      %vm6072 = vcmp.eq.s32.totalorder %v6031, 1
      %vm6073 = vcmp.eq.s32.totalorder %v6032, 1
      %vm6074 = vcmp.eq.s32.totalorder %v6033, 1
      %vm6075 = vcmp.eq.s32.totalorder %v6034, 1
      %vm6076 = vcmp.eq.s32.totalorder %v6035, 1
      %vm6077 = vcmp.eq.s32.totalorder %v6036, 1
      %vm6078 = vcmp.eq.s32.totalorder %v6037, 1
      %vm6079 = vcmp.eq.s32.totalorder %v6038, 1
      %vm6080 = vcmp.eq.s32.totalorder %v6039, 1
      %vm6081 = vcmp.eq.s32.totalorder %v6040, 1
      %vm6082 = vcmp.eq.s32.totalorder %v6041, 1
      %vm6083 = vcmp.eq.s32.totalorder %v6042, 1
      %vm6084 = vcmp.eq.s32.totalorder %v6043, 1
      %vm6085 = vcmp.eq.s32.totalorder %v6044, 1
      %vm6086 = vcmp.eq.s32.totalorder %v6045, 1
      %vm6087 = vcmp.eq.s32.totalorder %v6046, 1
      %vm6088 = vcmp.eq.s32.totalorder %v6047, 1
      %vm6089 = vcmp.eq.s32.totalorder %v6048, 1
      %vm6090 = vcmp.eq.s32.totalorder %v6049, 1
      %vm6091 = vcmp.eq.s32.totalorder %v6050, 1
      %vm6092 = vcmp.eq.s32.totalorder %v6051, 1
      %vm6093 = vcmp.eq.s32.totalorder %v6052, 1
      %vm6094 = vcmp.eq.s32.totalorder %v6053, 1
      %vm6095 = vcmp.eq.s32.totalorder %v6054, 1
      %vm6096 = vcmp.eq.s32.totalorder %v6055, 1
      %vm6097 = vcmp.eq.s32.totalorder %v6056, 1
      %vm6098 = vcmp.eq.s32.totalorder %v6057, 1
      %vm6099 = vcmp.eq.s32.totalorder %v6058, 1
      %vm6100 = vcmp.eq.s32.totalorder %v6059, 1
      %vm6101 = vcmp.eq.s32.totalorder %v6060, 1
      %vm6102 = vcmp.eq.s32.totalorder %v6061, 1
      %vm6103 = vcmp.eq.s32.totalorder %v6062, 1
      %vm6104 = vcmp.eq.s32.totalorder %v6063, 1
      %vm6105 = vcmp.eq.s32.totalorder %v6064, 1
      %vm6106 = vcmp.eq.s32.totalorder %v6065, 1
      %vm6107 = vcmp.eq.s32.totalorder %v6066, 1
      %v6108 = vsel %vm6067, %v6000, %v5627
      %v6109 = vsel %vm6068, %v6002, %v5628
      %v6110 = vsel %vm6069, %v6004, %v5629
      %v6111 = vsel %vm6070, %v6006, %v5630
      %v6112 = vsel %vm6071, %v6025, %v5631
      %v6113 = vsel %vm6072, %v6014, %v5632
      %v6114 = vsel %vm6073, %v6016, %v5633
      %v6115 = vsel %vm6074, %v6018, %v5634
      %v6116 = vsel %vm6075, %v6019, %v5635
      %v6117 = vsel %vm6076, %v5871, %v5636
      %v6118 = vsel %vm6077, %v5873, %v5637
      %v6119 = vsel %vm6078, %v5875, %v5638
      %v6120 = vsel %vm6079, %v5877, %v5639
      %v6121 = vsel %vm6080, %v5879, %v5640
      %v6122 = vsel %vm6081, %v5881, %v5641
      %v6123 = vsel %vm6082, %v5883, %v5642
      %v6124 = vsel %vm6083, %v5885, %v5643
      %v6125 = vsel %vm6084, %v5887, %v5644
      %v6126 = vsel %vm6085, %v5889, %v5645
      %v6127 = vsel %vm6086, %v5891, %v5646
      %v6128 = vsel %vm6087, %v5893, %v5647
      %v6129 = vsel %vm6088, %v5895, %v5648
      %v6130 = vsel %vm6089, %v5897, %v5649
      %v6131 = vsel %vm6090, %v5899, %v5650
      %v6132 = vsel %vm6091, %v5901, %v5651
      %v6133 = vsel %vm6092, %v5903, %v5652
      %v6134 = vsel %vm6093, %v5905, %v5653
      %v6135 = vsel %vm6094, %v5907, %v5654
      %v6136 = vsel %vm6095, %v5909, %v5655
      %v6137 = vsel %vm6096, %v5911, %v5656
      %v6138 = vsel %vm6097, %v5913, %v5657
      %v6139 = vsel %vm6098, %v5915, %v5658
      %v6140 = vsel %vm6099, %v5917, %v5659
      %v6141 = vsel %vm6100, %v5919, %v5660
      %v6142 = vsel %vm6101, %v5921, %v5661
      %v6143 = vsel %vm6102, %v5923, %v5662
      %v6144 = vsel %vm6103, %v5925, %v5663
      %v6145 = vsel %vm6104, %v5927, %v5664
      %v6146 = vsel %vm6105, %v5929, %v5665
      %v6147 = vsel %vm6106, %v5931, %v5666
      %v6148 = vsel %vm6107, %v5933, %v5667
      %v6149 = vsel %vm5668, 1, 0
      %v6150 = vsel %vm5669, 1, 0
      %v6151 = vsel %vm5670, 1, 0
      %v6152 = vsel %vm5671, 1, 0
      %v6153 = vsel %vm5672, 1, 0
      %v6154 = vsel %vm5673, 1, 0
      %v6155 = vsel %vm5674, 1, 0
      %v6156 = vsel %vm5675, 1, 0
      %v6157 = vsel %vm5676, 1, 0
      %v6158 = vsel %vm5677, 1, 0
      %v6159 = vsel %vm5678, 1, 0
      %v6160 = vsel %vm5679, 1, 0
      %v6161 = vsel %vm5680, 1, 0
      %v6162 = vsel %vm5681, 1, 0
      %v6163 = vsel %vm5682, 1, 0
      %v6164 = vsel %vm5683, 1, 0
      %v6165 = vsel %vm5684, 1, 0
      %v6166 = vsel %vm5685, 1, 0
      %v6167 = vsel %vm5686, 1, 0
      %v6168 = vsel %vm5687, 1, 0
      %v6169 = vsel %vm5688, 1, 0
      %v6170 = vsel %vm5689, 1, 0
      %v6171 = vsel %vm5690, 1, 0
      %v6172 = vsel %vm5691, 1, 0
      %v6173 = vsel %vm5692, 1, 0
      %v6174 = vsel %vm5693, 1, 0
      %v6175 = vsel %vm5694, 1, 0
      %v6176 = vsel %vm5695, 1, 0
      %v6177 = vsel %vm5696, 1, 0
      %v6178 = vsel %vm5697, 1, 0
      %v6179 = vsel %vm5698, 1, 0
      %v6180 = vsel %vm5699, 1, 0
      %v6181 = vsel %vm5700, 1, 0
      %v6182 = vsel %vm5701, 1, 0
      %v6183 = vsel %vm5702, 1, 0
      %v6184 = vsel %vm5703, 1, 0
      %v6185 = vsel %vm5704, 1, 0
      %v6186 = vsel %vm5705, 1, 0
      %v6187 = vsel %vm5706, 1, 0
      %v6188 = vsel %vm5707, 1, 0
      %v6189 = vsel %vm5708, 1, 0
      %vm6190 = vcmp.eq.s32.totalorder %v6149, 1
      %vm6191 = vcmp.eq.s32.totalorder %v6150, 1
      %vm6192 = vcmp.eq.s32.totalorder %v6151, 1
      %vm6193 = vcmp.eq.s32.totalorder %v6152, 1
      %vm6194 = vcmp.eq.s32.totalorder %v6153, 1
      %vm6195 = vcmp.eq.s32.totalorder %v6154, 1
      %vm6196 = vcmp.eq.s32.totalorder %v6155, 1
      %vm6197 = vcmp.eq.s32.totalorder %v6156, 1
      %vm6198 = vcmp.eq.s32.totalorder %v6157, 1
      %vm6199 = vcmp.eq.s32.totalorder %v6158, 1
      %vm6200 = vcmp.eq.s32.totalorder %v6159, 1
      %vm6201 = vcmp.eq.s32.totalorder %v6160, 1
      %vm6202 = vcmp.eq.s32.totalorder %v6161, 1
      %vm6203 = vcmp.eq.s32.totalorder %v6162, 1
      %vm6204 = vcmp.eq.s32.totalorder %v6163, 1
      %vm6205 = vcmp.eq.s32.totalorder %v6164, 1
      %vm6206 = vcmp.eq.s32.totalorder %v6165, 1
      %vm6207 = vcmp.eq.s32.totalorder %v6166, 1
      %vm6208 = vcmp.eq.s32.totalorder %v6167, 1
      %vm6209 = vcmp.eq.s32.totalorder %v6168, 1
      %vm6210 = vcmp.eq.s32.totalorder %v6169, 1
      %vm6211 = vcmp.eq.s32.totalorder %v6170, 1
      %vm6212 = vcmp.eq.s32.totalorder %v6171, 1
      %vm6213 = vcmp.eq.s32.totalorder %v6172, 1
      %vm6214 = vcmp.eq.s32.totalorder %v6173, 1
      %vm6215 = vcmp.eq.s32.totalorder %v6174, 1
      %vm6216 = vcmp.eq.s32.totalorder %v6175, 1
      %vm6217 = vcmp.eq.s32.totalorder %v6176, 1
      %vm6218 = vcmp.eq.s32.totalorder %v6177, 1
      %vm6219 = vcmp.eq.s32.totalorder %v6178, 1
      %vm6220 = vcmp.eq.s32.totalorder %v6179, 1
      %vm6221 = vcmp.eq.s32.totalorder %v6180, 1
      %vm6222 = vcmp.eq.s32.totalorder %v6181, 1
      %vm6223 = vcmp.eq.s32.totalorder %v6182, 1
      %vm6224 = vcmp.eq.s32.totalorder %v6183, 1
      %vm6225 = vcmp.eq.s32.totalorder %v6184, 1
      %vm6226 = vcmp.eq.s32.totalorder %v6185, 1
      %vm6227 = vcmp.eq.s32.totalorder %v6186, 1
      %vm6228 = vcmp.eq.s32.totalorder %v6187, 1
      %vm6229 = vcmp.eq.s32.totalorder %v6188, 1
      %vm6230 = vcmp.eq.s32.totalorder %v6189, 1
      %v6231 = vsel %vm6190, %v5871, %v6108
      %v6232 = vsel %vm6191, %v5873, %v6109
      %v6233 = vsel %vm6192, %v5875, %v6110
      %v6234 = vsel %vm6193, %v5877, %v6111
      %v6235 = vsel %vm6194, %v5879, %v6112
      %v6236 = vsel %vm6195, %v5881, %v6113
      %v6237 = vsel %vm6196, %v5883, %v6114
      %v6238 = vsel %vm6197, %v5885, %v6115
      %v6239 = vsel %vm6198, %v5887, %v6116
      %v6240 = vsel %vm6199, %v5889, %v6117
      %v6241 = vsel %vm6200, %v5891, %v6118
      %v6242 = vsel %vm6201, %v5893, %v6119
      %v6243 = vsel %vm6202, %v5895, %v6120
      %v6244 = vsel %vm6203, %v5897, %v6121
      %v6245 = vsel %vm6204, %v5899, %v6122
      %v6246 = vsel %vm6205, %v5901, %v6123
      %v6247 = vsel %vm6206, %v5903, %v6124
      %v6248 = vsel %vm6207, %v5905, %v6125
      %v6249 = vsel %vm6208, %v5907, %v6126
      %v6250 = vsel %vm6209, %v5909, %v6127
      %v6251 = vsel %vm6210, %v5911, %v6128
      %v6252 = vsel %vm6211, %v5913, %v6129
      %v6253 = vsel %vm6212, %v5915, %v6130
      %v6254 = vsel %vm6213, %v5917, %v6131
      %v6255 = vsel %vm6214, %v5919, %v6132
      %v6256 = vsel %vm6215, %v5921, %v6133
      %v6257 = vsel %vm6216, %v5923, %v6134
      %v6258 = vsel %vm6217, %v5925, %v6135
      %v6259 = vsel %vm6218, %v5927, %v6136
      %v6260 = vsel %vm6219, %v5929, %v6137
      %v6261 = vsel %vm6220, %v5931, %v6138
      %v6262 = vsel %vm6221, %v5933, %v6139
      %v6263 = vsel %vm6222, %v5935, %v6140
      %v6264 = vsel %vm6223, %v5937, %v6141
      %v6265 = vsel %vm6224, %v5939, %v6142
      %v6266 = vsel %vm6225, %v5941, %v6143
      %v6267 = vsel %vm6226, %v5997, %v6144
      %v6268 = vsel %vm6227, %v5985, %v6145
      %v6269 = vsel %vm6228, %v5987, %v6146
      %v6270 = vsel %vm6229, %v5989, %v6147
      %v6271 = vsel %vm6230, %v5991, %v6148
      %v6272 = vld [vmem:[%s4] sm:$0xf]
      %v6273 = vld [vmem:[%s4 + $0x4] sm:$0xf]
      %vm6311 = vcmask 1046528
      %v6312 = vrot.slane %v6231, 1
      %v6313 = vrot.slane %v6232, 1
      %v6314 = vsel %vm6311, %v6312, %v6313
      %v6315 = vrot.slane %v6233, 1
      %v6316 = vsel %vm6311, %v6313, %v6315
      %v6317 = vrot.slane %v6234, 1
      %v6318 = vsel %vm6311, %v6315, %v6317
      %v6319 = vrot.slane %v6235, 1
      %v6320 = vsel %vm6311, %v6317, %v6319
      %v6321 = vrot.slane %v6236, 1
      %v6322 = vsel %vm6311, %v6319, %v6321
      %v6323 = vrot.slane %v6237, 1
      %v6324 = vsel %vm6311, %v6321, %v6323
      %v6325 = vrot.slane %v6238, 1
      %v6326 = vsel %vm6311, %v6323, %v6325
      %v6327 = vrot.slane %v6239, 1
      %v6328 = vsel %vm6311, %v6325, %v6327
      %v6329 = vrot.slane %v6240, 1
      %v6330 = vsel %vm6311, %v6327, %v6329
      %v6331 = vrot.slane %v6241, 1
      %v6332 = vsel %vm6311, %v6329, %v6331
      %v6333 = vrot.slane %v6242, 1
      %v6334 = vsel %vm6311, %v6331, %v6333
      %v6335 = vrot.slane %v6243, 1
      %v6336 = vsel %vm6311, %v6333, %v6335
      %v6337 = vrot.slane %v6244, 1
      %v6338 = vsel %vm6311, %v6335, %v6337
      %v6339 = vrot.slane %v6245, 1
      %v6340 = vsel %vm6311, %v6337, %v6339
      %v6341 = vrot.slane %v6246, 1
      %v6342 = vsel %vm6311, %v6339, %v6341
      %v6343 = vrot.slane %v6247, 1
      %v6344 = vsel %vm6311, %v6341, %v6343
      %v6345 = vrot.slane %v6248, 1
      %v6346 = vsel %vm6311, %v6343, %v6345
      %v6347 = vrot.slane %v6249, 1
      %v6348 = vsel %vm6311, %v6345, %v6347
      %v6349 = vrot.slane %v6250, 1
      %v6350 = vsel %vm6311, %v6347, %v6349
      %v6351 = vrot.slane %v6251, 1
      %v6352 = vsel %vm6311, %v6349, %v6351
      %v6353 = vrot.slane %v6252, 1
      %v6354 = vsel %vm6311, %v6351, %v6353
      %v6355 = vrot.slane %v6253, 1
      %v6356 = vsel %vm6311, %v6353, %v6355
      %v6357 = vrot.slane %v6254, 1
      %v6358 = vsel %vm6311, %v6355, %v6357
      %v6359 = vrot.slane %v6255, 1
      %v6360 = vsel %vm6311, %v6357, %v6359
      %v6361 = vrot.slane %v6256, 1
      %v6362 = vsel %vm6311, %v6359, %v6361
      %v6363 = vrot.slane %v6257, 1
      %v6364 = vsel %vm6311, %v6361, %v6363
      %v6365 = vrot.slane %v6258, 1
      %v6366 = vsel %vm6311, %v6363, %v6365
      %v6367 = vrot.slane %v6259, 1
      %v6368 = vsel %vm6311, %v6365, %v6367
      %v6369 = vrot.slane %v6260, 1
      %v6370 = vsel %vm6311, %v6367, %v6369
      %v6371 = vrot.slane %v6261, 1
      %v6372 = vsel %vm6311, %v6369, %v6371
      %v6373 = vrot.slane %v6262, 1
      %v6374 = vsel %vm6311, %v6371, %v6373
      %v6375 = vrot.slane %v6263, 1
      %v6376 = vsel %vm6311, %v6373, %v6375
      %v6377 = vrot.slane %v6264, 1
      %v6378 = vsel %vm6311, %v6375, %v6377
      %v6379 = vrot.slane %v6265, 1
      %v6380 = vsel %vm6311, %v6377, %v6379
      %v6381 = vrot.slane %v6266, 1
      %v6382 = vsel %vm6311, %v6379, %v6381
      %v6383 = vrot.slane %v6267, 1
      %v6384 = vsel %vm6311, %v6381, %v6383
      %v6385 = vsel %vm346, %v6314, 0
      %v6387 = vsel %vm346, %v6316, 0
      %v6389 = vsel %vm346, %v6318, 0
      %v6391 = vsel %vm346, %v6320, 0
      %v6393 = vsel %vm346, %v6322, 0
      %v6395 = vsel %vm346, %v6324, 0
      %v6397 = vsel %vm346, %v6326, 0
      %v6399 = vsel %vm346, %v6328, 0
      %v6401 = vsel %vm346, %v6330, 0
      %v6403 = vsel %vm346, %v6332, 0
      %v6405 = vsel %vm346, %v6334, 0
      %v6407 = vsel %vm346, %v6336, 0
      %v6409 = vsel %vm346, %v6338, 0
      %v6411 = vsel %vm346, %v6340, 0
      %v6413 = vsel %vm346, %v6342, 0
      %v6415 = vsel %vm346, %v6344, 0
      %v6417 = vsel %vm346, %v6346, 0
      %v6419 = vsel %vm346, %v6348, 0
      %v6421 = vsel %vm346, %v6350, 0
      %v6423 = vsel %vm346, %v6352, 0
      %v6425 = vsel %vm346, %v6354, 0
      %v6427 = vsel %vm346, %v6356, 0
      %v6429 = vsel %vm346, %v6358, 0
      %v6431 = vsel %vm346, %v6360, 0
      %v6433 = vsel %vm346, %v6362, 0
      %v6435 = vsel %vm346, %v6364, 0
      %v6437 = vsel %vm346, %v6366, 0
      %v6439 = vsel %vm346, %v6368, 0
      %v6441 = vsel %vm346, %v6370, 0
      %v6443 = vsel %vm346, %v6372, 0
      %v6445 = vsel %vm346, %v6374, 0
      %v6447 = vsel %vm346, %v6376, 0
      %v6449 = vsel %vm346, %v6378, 0
      %v6451 = vsel %vm346, %v6380, 0
      %v6453 = vsel %vm346, %v6382, 0
      %v6455 = vsel %vm346, %v6384, 0
      %v6458 = vsel %vm455, %v6273, 0
      %6460 = vmatpush.msra.mxu0 0.0
      %6461 = vmatpush.msra.mxu0 0.0
      %6462 = vmatpush.msra.mxu0 0.0
      %6463 = vmatpush.msra.mxu0 0.0
      %6464 = vmatpush.msra.mxu0 0.0
      %6465 = vmatpush.msra.mxu0 0.0
      %6466 = vmatpush.msra.mxu0 0.0
      %6467 = vmatpush.msra.mxu0 0.0
      %6468 = vmatpush.msra.mxu0 0.0
      %6469 = vmatpush.msra.mxu0 0.0
      %6470 = vmatpush.msra.mxu0 0.0
      %6471 = vmatpush.msra.mxu0 0.0
      %6472 = vmatpush.msra.mxu0 0.0
      %6473 = vmatpush.msra.mxu0 0.0
      %6474 = vmatpush.msra.mxu0 0.0
      %6475 = vmatpush.msra.mxu0 %v6458
      %6476 = vmatmul.f32.gmra.mxu0 %v6385
      %v6477 = vpop.f32.mrf.mxu0
      %v6478 = vadd.f32 0.0, %v6477
      %6479 = vmatmul.f32.gmra.mxu0 %v6387
      %v6480 = vpop.f32.mrf.mxu0
      %v6481 = vadd.f32 0.0, %v6480
      %6482 = vmatmul.f32.gmra.mxu0 %v6389
      %v6483 = vpop.f32.mrf.mxu0
      %v6484 = vadd.f32 0.0, %v6483
      %6485 = vmatmul.f32.gmra.mxu0 %v6391
      %v6486 = vpop.f32.mrf.mxu0
      %v6487 = vadd.f32 0.0, %v6486
      %6488 = vmatmul.f32.gmra.mxu0 %v6393
      %v6489 = vpop.f32.mrf.mxu0
      %v6490 = vadd.f32 0.0, %v6489
      %6491 = vmatmul.f32.gmra.mxu0 %v6395
      %v6492 = vpop.f32.mrf.mxu0
      %v6493 = vadd.f32 0.0, %v6492
      %6494 = vmatmul.f32.gmra.mxu0 %v6397
      %v6495 = vpop.f32.mrf.mxu0
      %v6496 = vadd.f32 0.0, %v6495
      %6497 = vmatmul.f32.gmra.mxu0 %v6399
      %v6498 = vpop.f32.mrf.mxu0
      %v6499 = vadd.f32 0.0, %v6498
      %6500 = vmatmul.f32.gmra.mxu0 %v6401
      %v6501 = vpop.f32.mrf.mxu0
      %v6502 = vadd.f32 0.0, %v6501
      %6503 = vmatmul.f32.gmra.mxu0 %v6403
      %v6504 = vpop.f32.mrf.mxu0
      %v6505 = vadd.f32 0.0, %v6504
      %6506 = vmatmul.f32.gmra.mxu0 %v6405
      %v6507 = vpop.f32.mrf.mxu0
      %v6508 = vadd.f32 0.0, %v6507
      %6509 = vmatmul.f32.gmra.mxu0 %v6407
      %v6510 = vpop.f32.mrf.mxu0
      %v6511 = vadd.f32 0.0, %v6510
      %6512 = vmatmul.f32.gmra.mxu0 %v6409
      %v6513 = vpop.f32.mrf.mxu0
      %v6514 = vadd.f32 0.0, %v6513
      %6515 = vmatmul.f32.gmra.mxu0 %v6411
      %v6516 = vpop.f32.mrf.mxu0
      %v6517 = vadd.f32 0.0, %v6516
      %6518 = vmatmul.f32.gmra.mxu0 %v6413
      %v6519 = vpop.f32.mrf.mxu0
      %v6520 = vadd.f32 0.0, %v6519
      %6521 = vmatmul.f32.gmra.mxu0 %v6415
      %v6522 = vpop.f32.mrf.mxu0
      %v6523 = vadd.f32 0.0, %v6522
      %6524 = vmatmul.f32.gmra.mxu0 %v6417
      %v6525 = vpop.f32.mrf.mxu0
      %v6526 = vadd.f32 0.0, %v6525
      %6527 = vmatmul.f32.gmra.mxu0 %v6419
      %v6528 = vpop.f32.mrf.mxu0
      %v6529 = vadd.f32 0.0, %v6528
      %6530 = vmatmul.f32.gmra.mxu0 %v6421
      %v6531 = vpop.f32.mrf.mxu0
      %v6532 = vadd.f32 0.0, %v6531
      %6533 = vmatmul.f32.gmra.mxu0 %v6423
      %v6534 = vpop.f32.mrf.mxu0
      %v6535 = vadd.f32 0.0, %v6534
      %6536 = vmatmul.f32.gmra.mxu0 %v6425
      %v6537 = vpop.f32.mrf.mxu0
      %v6538 = vadd.f32 0.0, %v6537
      %6539 = vmatmul.f32.gmra.mxu0 %v6427
      %v6540 = vpop.f32.mrf.mxu0
      %v6541 = vadd.f32 0.0, %v6540
      %6542 = vmatmul.f32.gmra.mxu0 %v6429
      %v6543 = vpop.f32.mrf.mxu0
      %v6544 = vadd.f32 0.0, %v6543
      %6545 = vmatmul.f32.gmra.mxu0 %v6431
      %v6546 = vpop.f32.mrf.mxu0
      %v6547 = vadd.f32 0.0, %v6546
      %6548 = vmatmul.f32.gmra.mxu0 %v6433
      %v6549 = vpop.f32.mrf.mxu0
      %v6550 = vadd.f32 0.0, %v6549
      %6551 = vmatmul.f32.gmra.mxu0 %v6435
      %v6552 = vpop.f32.mrf.mxu0
      %v6553 = vadd.f32 0.0, %v6552
      %6554 = vmatmul.f32.gmra.mxu0 %v6437
      %v6555 = vpop.f32.mrf.mxu0
      %v6556 = vadd.f32 0.0, %v6555
      %6557 = vmatmul.f32.gmra.mxu0 %v6439
      %v6558 = vpop.f32.mrf.mxu0
      %v6559 = vadd.f32 0.0, %v6558
      %6560 = vmatmul.f32.gmra.mxu0 %v6441
      %v6561 = vpop.f32.mrf.mxu0
      %v6562 = vadd.f32 0.0, %v6561
      %6563 = vmatmul.f32.gmra.mxu0 %v6443
      %v6564 = vpop.f32.mrf.mxu0
      %v6565 = vadd.f32 0.0, %v6564
      %6566 = vmatmul.f32.gmra.mxu0 %v6445
      %v6567 = vpop.f32.mrf.mxu0
      %v6568 = vadd.f32 0.0, %v6567
      %6569 = vmatmul.f32.gmra.mxu0 %v6447
      %v6570 = vpop.f32.mrf.mxu0
      %v6571 = vadd.f32 0.0, %v6570
      %6572 = vmatmul.f32.gmra.mxu0 %v6449
      %v6573 = vpop.f32.mrf.mxu0
      %v6574 = vadd.f32 0.0, %v6573
      %6575 = vmatmul.f32.gmra.mxu0 %v6451
      %v6576 = vpop.f32.mrf.mxu0
      %v6577 = vadd.f32 0.0, %v6576
      %6578 = vmatmul.f32.gmra.mxu0 %v6453
      %v6579 = vpop.f32.mrf.mxu0
      %v6580 = vadd.f32 0.0, %v6579
      %6581 = vmatmul.f32.gmra.mxu0 %v6455
      %v6582 = vpop.f32.mrf.mxu0
      %v6583 = vadd.f32 0.0, %v6582
      %6584 = vdwg.mxu0
      %v6585 = vsel %vm346, %v6231, 0
      %v6587 = vsel %vm346, %v6232, 0
      %v6589 = vsel %vm346, %v6233, 0
      %v6591 = vsel %vm346, %v6234, 0
      %v6593 = vsel %vm346, %v6235, 0
      %v6595 = vsel %vm346, %v6236, 0
      %v6597 = vsel %vm346, %v6237, 0
      %v6599 = vsel %vm346, %v6238, 0
      %v6601 = vsel %vm346, %v6239, 0
      %v6603 = vsel %vm346, %v6240, 0
      %v6605 = vsel %vm346, %v6241, 0
      %v6607 = vsel %vm346, %v6242, 0
      %v6609 = vsel %vm346, %v6243, 0
      %v6611 = vsel %vm346, %v6244, 0
      %v6613 = vsel %vm346, %v6245, 0
      %v6615 = vsel %vm346, %v6246, 0
      %v6617 = vsel %vm346, %v6247, 0
      %v6619 = vsel %vm346, %v6248, 0
      %v6621 = vsel %vm346, %v6249, 0
      %v6623 = vsel %vm346, %v6250, 0
      %v6625 = vsel %vm346, %v6251, 0
      %v6627 = vsel %vm346, %v6252, 0
      %v6629 = vsel %vm346, %v6253, 0
      %v6631 = vsel %vm346, %v6254, 0
      %v6633 = vsel %vm346, %v6255, 0
      %v6635 = vsel %vm346, %v6256, 0
      %v6637 = vsel %vm346, %v6257, 0
      %v6639 = vsel %vm346, %v6258, 0
      %v6641 = vsel %vm346, %v6259, 0
      %v6643 = vsel %vm346, %v6260, 0
      %v6645 = vsel %vm346, %v6261, 0
      %v6647 = vsel %vm346, %v6262, 0
      %v6649 = vsel %vm346, %v6263, 0
      %v6651 = vsel %vm346, %v6264, 0
      %v6653 = vsel %vm346, %v6265, 0
      %v6655 = vsel %vm346, %v6266, 0
      %v6658 = vsel %vm455, %v6272, 0
      %6660 = vmatpush.msra.mxu0 0.0
      %6661 = vmatpush.msra.mxu0 0.0
      %6662 = vmatpush.msra.mxu0 0.0
      %6663 = vmatpush.msra.mxu0 0.0
      %6664 = vmatpush.msra.mxu0 0.0
      %6665 = vmatpush.msra.mxu0 0.0
      %6666 = vmatpush.msra.mxu0 0.0
      %6667 = vmatpush.msra.mxu0 0.0
      %6668 = vmatpush.msra.mxu0 0.0
      %6669 = vmatpush.msra.mxu0 0.0
      %6670 = vmatpush.msra.mxu0 0.0
      %6671 = vmatpush.msra.mxu0 0.0
      %6672 = vmatpush.msra.mxu0 0.0
      %6673 = vmatpush.msra.mxu0 0.0
      %6674 = vmatpush.msra.mxu0 0.0
      %6675 = vmatpush.msra.mxu0 %v6658
      %6676 = vmatmul.f32.gmra.mxu0 %v6585
      %v6677 = vpop.f32.mrf.mxu0
      %v6678 = vadd.f32 %v6478, %v6677
      %6679 = vmatmul.f32.gmra.mxu0 %v6587
      %v6680 = vpop.f32.mrf.mxu0
      %v6681 = vadd.f32 %v6481, %v6680
      %6682 = vmatmul.f32.gmra.mxu0 %v6589
      %v6683 = vpop.f32.mrf.mxu0
      %v6684 = vadd.f32 %v6484, %v6683
      %6685 = vmatmul.f32.gmra.mxu0 %v6591
      %v6686 = vpop.f32.mrf.mxu0
      %v6687 = vadd.f32 %v6487, %v6686
      %6688 = vmatmul.f32.gmra.mxu0 %v6593
      %v6689 = vpop.f32.mrf.mxu0
      %v6690 = vadd.f32 %v6490, %v6689
      %6691 = vmatmul.f32.gmra.mxu0 %v6595
      %v6692 = vpop.f32.mrf.mxu0
      %v6693 = vadd.f32 %v6493, %v6692
      %6694 = vmatmul.f32.gmra.mxu0 %v6597
      %v6695 = vpop.f32.mrf.mxu0
      %v6696 = vadd.f32 %v6496, %v6695
      %6697 = vmatmul.f32.gmra.mxu0 %v6599
      %v6698 = vpop.f32.mrf.mxu0
      %v6699 = vadd.f32 %v6499, %v6698
      %6700 = vmatmul.f32.gmra.mxu0 %v6601
      %v6701 = vpop.f32.mrf.mxu0
      %v6702 = vadd.f32 %v6502, %v6701
      %6703 = vmatmul.f32.gmra.mxu0 %v6603
      %v6704 = vpop.f32.mrf.mxu0
      %v6705 = vadd.f32 %v6505, %v6704
      %6706 = vmatmul.f32.gmra.mxu0 %v6605
      %v6707 = vpop.f32.mrf.mxu0
      %v6708 = vadd.f32 %v6508, %v6707
      %6709 = vmatmul.f32.gmra.mxu0 %v6607
      %v6710 = vpop.f32.mrf.mxu0
      %v6711 = vadd.f32 %v6511, %v6710
      %6712 = vmatmul.f32.gmra.mxu0 %v6609
      %v6713 = vpop.f32.mrf.mxu0
      %v6714 = vadd.f32 %v6514, %v6713
      %6715 = vmatmul.f32.gmra.mxu0 %v6611
      %v6716 = vpop.f32.mrf.mxu0
      %v6717 = vadd.f32 %v6517, %v6716
      %6718 = vmatmul.f32.gmra.mxu0 %v6613
      %v6719 = vpop.f32.mrf.mxu0
      %v6720 = vadd.f32 %v6520, %v6719
      %6721 = vmatmul.f32.gmra.mxu0 %v6615
      %v6722 = vpop.f32.mrf.mxu0
      %v6723 = vadd.f32 %v6523, %v6722
      %6724 = vmatmul.f32.gmra.mxu0 %v6617
      %v6725 = vpop.f32.mrf.mxu0
      %v6726 = vadd.f32 %v6526, %v6725
      %6727 = vmatmul.f32.gmra.mxu0 %v6619
      %v6728 = vpop.f32.mrf.mxu0
      %v6729 = vadd.f32 %v6529, %v6728
      %6730 = vmatmul.f32.gmra.mxu0 %v6621
      %v6731 = vpop.f32.mrf.mxu0
      %v6732 = vadd.f32 %v6532, %v6731
      %6733 = vmatmul.f32.gmra.mxu0 %v6623
      %v6734 = vpop.f32.mrf.mxu0
      %v6735 = vadd.f32 %v6535, %v6734
      %6736 = vmatmul.f32.gmra.mxu0 %v6625
      %v6737 = vpop.f32.mrf.mxu0
      %v6738 = vadd.f32 %v6538, %v6737
      %6739 = vmatmul.f32.gmra.mxu0 %v6627
      %v6740 = vpop.f32.mrf.mxu0
      %v6741 = vadd.f32 %v6541, %v6740
      %6742 = vmatmul.f32.gmra.mxu0 %v6629
      %v6743 = vpop.f32.mrf.mxu0
      %v6744 = vadd.f32 %v6544, %v6743
      %6745 = vmatmul.f32.gmra.mxu0 %v6631
      %v6746 = vpop.f32.mrf.mxu0
      %v6747 = vadd.f32 %v6547, %v6746
      %6748 = vmatmul.f32.gmra.mxu0 %v6633
      %v6749 = vpop.f32.mrf.mxu0
      %v6750 = vadd.f32 %v6550, %v6749
      %6751 = vmatmul.f32.gmra.mxu0 %v6635
      %v6752 = vpop.f32.mrf.mxu0
      %v6753 = vadd.f32 %v6553, %v6752
      %6754 = vmatmul.f32.gmra.mxu0 %v6637
      %v6755 = vpop.f32.mrf.mxu0
      %v6756 = vadd.f32 %v6556, %v6755
      %6757 = vmatmul.f32.gmra.mxu0 %v6639
      %v6758 = vpop.f32.mrf.mxu0
      %v6759 = vadd.f32 %v6559, %v6758
      %6760 = vmatmul.f32.gmra.mxu0 %v6641
      %v6761 = vpop.f32.mrf.mxu0
      %v6762 = vadd.f32 %v6562, %v6761
      %6763 = vmatmul.f32.gmra.mxu0 %v6643
      %v6764 = vpop.f32.mrf.mxu0
      %v6765 = vadd.f32 %v6565, %v6764
      %6766 = vmatmul.f32.gmra.mxu0 %v6645
      %v6767 = vpop.f32.mrf.mxu0
      %v6768 = vadd.f32 %v6568, %v6767
      %6769 = vmatmul.f32.gmra.mxu0 %v6647
      %v6770 = vpop.f32.mrf.mxu0
      %v6771 = vadd.f32 %v6571, %v6770
      %6772 = vmatmul.f32.gmra.mxu0 %v6649
      %v6773 = vpop.f32.mrf.mxu0
      %v6774 = vadd.f32 %v6574, %v6773
      %6775 = vmatmul.f32.gmra.mxu0 %v6651
      %v6776 = vpop.f32.mrf.mxu0
      %v6777 = vadd.f32 %v6577, %v6776
      %6778 = vmatmul.f32.gmra.mxu0 %v6653
      %v6779 = vpop.f32.mrf.mxu0
      %v6780 = vadd.f32 %v6580, %v6779
      %6781 = vmatmul.f32.gmra.mxu0 %v6655
      %v6782 = vpop.f32.mrf.mxu0
      %v6783 = vadd.f32 %v6583, %v6782
      %6784 = vdwg.mxu0
      %v6785 = vld [vmem:[%s4 + $0x8] sm:$0xf]
      %v6786 = vrot.slane %v6231, 2
      %v6787 = vrot.slane %v6232, 2
      %v6788 = vsel %vm5141, %v6786, %v6787
      %v6789 = vrot.slane %v6233, 2
      %v6790 = vsel %vm5141, %v6787, %v6789
      %v6791 = vrot.slane %v6234, 2
      %v6792 = vsel %vm5141, %v6789, %v6791
      %v6793 = vrot.slane %v6235, 2
      %v6794 = vsel %vm5141, %v6791, %v6793
      %v6795 = vrot.slane %v6236, 2
      %v6796 = vsel %vm5141, %v6793, %v6795
      %v6797 = vrot.slane %v6237, 2
      %v6798 = vsel %vm5141, %v6795, %v6797
      %v6799 = vrot.slane %v6238, 2
      %v6800 = vsel %vm5141, %v6797, %v6799
      %v6801 = vrot.slane %v6239, 2
      %v6802 = vsel %vm5141, %v6799, %v6801
      %v6803 = vrot.slane %v6240, 2
      %v6804 = vsel %vm5141, %v6801, %v6803
      %v6805 = vrot.slane %v6241, 2
      %v6806 = vsel %vm5141, %v6803, %v6805
      %v6807 = vrot.slane %v6242, 2
      %v6808 = vsel %vm5141, %v6805, %v6807
      %v6809 = vrot.slane %v6243, 2
      %v6810 = vsel %vm5141, %v6807, %v6809
      %v6811 = vrot.slane %v6244, 2
      %v6812 = vsel %vm5141, %v6809, %v6811
      %v6813 = vrot.slane %v6245, 2
      %v6814 = vsel %vm5141, %v6811, %v6813
      %v6815 = vrot.slane %v6246, 2
      %v6816 = vsel %vm5141, %v6813, %v6815
      %v6817 = vrot.slane %v6247, 2
      %v6818 = vsel %vm5141, %v6815, %v6817
      %v6819 = vrot.slane %v6248, 2
      %v6820 = vsel %vm5141, %v6817, %v6819
      %v6821 = vrot.slane %v6249, 2
      %v6822 = vsel %vm5141, %v6819, %v6821
      %v6823 = vrot.slane %v6250, 2
      %v6824 = vsel %vm5141, %v6821, %v6823
      %v6825 = vrot.slane %v6251, 2
      %v6826 = vsel %vm5141, %v6823, %v6825
      %v6827 = vrot.slane %v6252, 2
      %v6828 = vsel %vm5141, %v6825, %v6827
      %v6829 = vrot.slane %v6253, 2
      %v6830 = vsel %vm5141, %v6827, %v6829
      %v6831 = vrot.slane %v6254, 2
      %v6832 = vsel %vm5141, %v6829, %v6831
      %v6833 = vrot.slane %v6255, 2
      %v6834 = vsel %vm5141, %v6831, %v6833
      %v6835 = vrot.slane %v6256, 2
      %v6836 = vsel %vm5141, %v6833, %v6835
      %v6837 = vrot.slane %v6257, 2
      %v6838 = vsel %vm5141, %v6835, %v6837
      %v6839 = vrot.slane %v6258, 2
      %v6840 = vsel %vm5141, %v6837, %v6839
      %v6841 = vrot.slane %v6259, 2
      %v6842 = vsel %vm5141, %v6839, %v6841
      %v6843 = vrot.slane %v6260, 2
      %v6844 = vsel %vm5141, %v6841, %v6843
      %v6845 = vrot.slane %v6261, 2
      %v6846 = vsel %vm5141, %v6843, %v6845
      %v6847 = vrot.slane %v6262, 2
      %v6848 = vsel %vm5141, %v6845, %v6847
      %v6849 = vrot.slane %v6263, 2
      %v6850 = vsel %vm5141, %v6847, %v6849
      %v6851 = vrot.slane %v6264, 2
      %v6852 = vsel %vm5141, %v6849, %v6851
      %v6853 = vrot.slane %v6265, 2
      %v6854 = vsel %vm5141, %v6851, %v6853
      %v6855 = vrot.slane %v6266, 2
      %v6856 = vsel %vm5141, %v6853, %v6855
      %v6857 = vrot.slane %v6267, 2
      %v6858 = vsel %vm5141, %v6855, %v6857
      %v6859 = vsel %vm346, %v6788, 0
      %v6861 = vsel %vm346, %v6790, 0
      %v6863 = vsel %vm346, %v6792, 0
      %v6865 = vsel %vm346, %v6794, 0
      %v6867 = vsel %vm346, %v6796, 0
      %v6869 = vsel %vm346, %v6798, 0
      %v6871 = vsel %vm346, %v6800, 0
      %v6873 = vsel %vm346, %v6802, 0
      %v6875 = vsel %vm346, %v6804, 0
      %v6877 = vsel %vm346, %v6806, 0
      %v6879 = vsel %vm346, %v6808, 0
      %v6881 = vsel %vm346, %v6810, 0
      %v6883 = vsel %vm346, %v6812, 0
      %v6885 = vsel %vm346, %v6814, 0
      %v6887 = vsel %vm346, %v6816, 0
      %v6889 = vsel %vm346, %v6818, 0
      %v6891 = vsel %vm346, %v6820, 0
      %v6893 = vsel %vm346, %v6822, 0
      %v6895 = vsel %vm346, %v6824, 0
      %v6897 = vsel %vm346, %v6826, 0
      %v6899 = vsel %vm346, %v6828, 0
      %v6901 = vsel %vm346, %v6830, 0
      %v6903 = vsel %vm346, %v6832, 0
      %v6905 = vsel %vm346, %v6834, 0
      %v6907 = vsel %vm346, %v6836, 0
      %v6909 = vsel %vm346, %v6838, 0
      %v6911 = vsel %vm346, %v6840, 0
      %v6913 = vsel %vm346, %v6842, 0
      %v6915 = vsel %vm346, %v6844, 0
      %v6917 = vsel %vm346, %v6846, 0
      %v6919 = vsel %vm346, %v6848, 0
      %v6921 = vsel %vm346, %v6850, 0
      %v6923 = vsel %vm346, %v6852, 0
      %v6925 = vsel %vm346, %v6854, 0
      %v6927 = vsel %vm346, %v6856, 0
      %v6929 = vsel %vm346, %v6858, 0
      %v6932 = vsel %vm455, %v6785, 0
      %6934 = vmatpush.msra.mxu0 0.0
      %6935 = vmatpush.msra.mxu0 0.0
      %6936 = vmatpush.msra.mxu0 0.0
      %6937 = vmatpush.msra.mxu0 0.0
      %6938 = vmatpush.msra.mxu0 0.0
      %6939 = vmatpush.msra.mxu0 0.0
      %6940 = vmatpush.msra.mxu0 0.0
      %6941 = vmatpush.msra.mxu0 0.0
      %6942 = vmatpush.msra.mxu0 0.0
      %6943 = vmatpush.msra.mxu0 0.0
      %6944 = vmatpush.msra.mxu0 0.0
      %6945 = vmatpush.msra.mxu0 0.0
      %6946 = vmatpush.msra.mxu0 0.0
      %6947 = vmatpush.msra.mxu0 0.0
      %6948 = vmatpush.msra.mxu0 0.0
      %6949 = vmatpush.msra.mxu0 %v6932
      %6950 = vmatmul.f32.gmra.mxu0 %v6859
      %v6951 = vpop.f32.mrf.mxu0
      %v6952 = vadd.f32 0.0, %v6951
      %6953 = vmatmul.f32.gmra.mxu0 %v6861
      %v6954 = vpop.f32.mrf.mxu0
      %v6955 = vadd.f32 0.0, %v6954
      %6956 = vmatmul.f32.gmra.mxu0 %v6863
      %v6957 = vpop.f32.mrf.mxu0
      %v6958 = vadd.f32 0.0, %v6957
      %6959 = vmatmul.f32.gmra.mxu0 %v6865
      %v6960 = vpop.f32.mrf.mxu0
      %v6961 = vadd.f32 0.0, %v6960
      %6962 = vmatmul.f32.gmra.mxu0 %v6867
      %v6963 = vpop.f32.mrf.mxu0
      %v6964 = vadd.f32 0.0, %v6963
      %6965 = vmatmul.f32.gmra.mxu0 %v6869
      %v6966 = vpop.f32.mrf.mxu0
      %v6967 = vadd.f32 0.0, %v6966
      %6968 = vmatmul.f32.gmra.mxu0 %v6871
      %v6969 = vpop.f32.mrf.mxu0
      %v6970 = vadd.f32 0.0, %v6969
      %6971 = vmatmul.f32.gmra.mxu0 %v6873
      %v6972 = vpop.f32.mrf.mxu0
      %v6973 = vadd.f32 0.0, %v6972
      %6974 = vmatmul.f32.gmra.mxu0 %v6875
      %v6975 = vpop.f32.mrf.mxu0
      %v6976 = vadd.f32 0.0, %v6975
      %6977 = vmatmul.f32.gmra.mxu0 %v6877
      %v6978 = vpop.f32.mrf.mxu0
      %v6979 = vadd.f32 0.0, %v6978
      %6980 = vmatmul.f32.gmra.mxu0 %v6879
      %v6981 = vpop.f32.mrf.mxu0
      %v6982 = vadd.f32 0.0, %v6981
      %6983 = vmatmul.f32.gmra.mxu0 %v6881
      %v6984 = vpop.f32.mrf.mxu0
      %v6985 = vadd.f32 0.0, %v6984
      %6986 = vmatmul.f32.gmra.mxu0 %v6883
      %v6987 = vpop.f32.mrf.mxu0
      %v6988 = vadd.f32 0.0, %v6987
      %6989 = vmatmul.f32.gmra.mxu0 %v6885
      %v6990 = vpop.f32.mrf.mxu0
      %v6991 = vadd.f32 0.0, %v6990
      %6992 = vmatmul.f32.gmra.mxu0 %v6887
      %v6993 = vpop.f32.mrf.mxu0
      %v6994 = vadd.f32 0.0, %v6993
      %6995 = vmatmul.f32.gmra.mxu0 %v6889
      %v6996 = vpop.f32.mrf.mxu0
      %v6997 = vadd.f32 0.0, %v6996
      %6998 = vmatmul.f32.gmra.mxu0 %v6891
      %v6999 = vpop.f32.mrf.mxu0
      %v7000 = vadd.f32 0.0, %v6999
      %7001 = vmatmul.f32.gmra.mxu0 %v6893
      %v7002 = vpop.f32.mrf.mxu0
      %v7003 = vadd.f32 0.0, %v7002
      %7004 = vmatmul.f32.gmra.mxu0 %v6895
      %v7005 = vpop.f32.mrf.mxu0
      %v7006 = vadd.f32 0.0, %v7005
      %7007 = vmatmul.f32.gmra.mxu0 %v6897
      %v7008 = vpop.f32.mrf.mxu0
      %v7009 = vadd.f32 0.0, %v7008
      %7010 = vmatmul.f32.gmra.mxu0 %v6899
      %v7011 = vpop.f32.mrf.mxu0
      %v7012 = vadd.f32 0.0, %v7011
      %7013 = vmatmul.f32.gmra.mxu0 %v6901
      %v7014 = vpop.f32.mrf.mxu0
      %v7015 = vadd.f32 0.0, %v7014
      %7016 = vmatmul.f32.gmra.mxu0 %v6903
      %v7017 = vpop.f32.mrf.mxu0
      %v7018 = vadd.f32 0.0, %v7017
      %7019 = vmatmul.f32.gmra.mxu0 %v6905
      %v7020 = vpop.f32.mrf.mxu0
      %v7021 = vadd.f32 0.0, %v7020
      %7022 = vmatmul.f32.gmra.mxu0 %v6907
      %v7023 = vpop.f32.mrf.mxu0
      %v7024 = vadd.f32 0.0, %v7023
      %7025 = vmatmul.f32.gmra.mxu0 %v6909
      %v7026 = vpop.f32.mrf.mxu0
      %v7027 = vadd.f32 0.0, %v7026
      %7028 = vmatmul.f32.gmra.mxu0 %v6911
      %v7029 = vpop.f32.mrf.mxu0
      %v7030 = vadd.f32 0.0, %v7029
      %7031 = vmatmul.f32.gmra.mxu0 %v6913
      %v7032 = vpop.f32.mrf.mxu0
      %v7033 = vadd.f32 0.0, %v7032
      %7034 = vmatmul.f32.gmra.mxu0 %v6915
      %v7035 = vpop.f32.mrf.mxu0
      %v7036 = vadd.f32 0.0, %v7035
      %7037 = vmatmul.f32.gmra.mxu0 %v6917
      %v7038 = vpop.f32.mrf.mxu0
      %v7039 = vadd.f32 0.0, %v7038
      %7040 = vmatmul.f32.gmra.mxu0 %v6919
      %v7041 = vpop.f32.mrf.mxu0
      %v7042 = vadd.f32 0.0, %v7041
      %7043 = vmatmul.f32.gmra.mxu0 %v6921
      %v7044 = vpop.f32.mrf.mxu0
      %v7045 = vadd.f32 0.0, %v7044
      %7046 = vmatmul.f32.gmra.mxu0 %v6923
      %v7047 = vpop.f32.mrf.mxu0
      %v7048 = vadd.f32 0.0, %v7047
      %7049 = vmatmul.f32.gmra.mxu0 %v6925
      %v7050 = vpop.f32.mrf.mxu0
      %v7051 = vadd.f32 0.0, %v7050
      %7052 = vmatmul.f32.gmra.mxu0 %v6927
      %v7053 = vpop.f32.mrf.mxu0
      %v7054 = vadd.f32 0.0, %v7053
      %7055 = vmatmul.f32.gmra.mxu0 %v6929
      %v7056 = vpop.f32.mrf.mxu0
      %v7057 = vadd.f32 0.0, %v7056
      %7058 = vdwg.mxu0
      %v7059 = vadd.f32 %v6678, %v6952
      %v7060 = vadd.f32 %v6681, %v6955
      %v7061 = vadd.f32 %v6684, %v6958
      %v7062 = vadd.f32 %v6687, %v6961
      %v7063 = vadd.f32 %v6690, %v6964
      %v7064 = vadd.f32 %v6693, %v6967
      %v7065 = vadd.f32 %v6696, %v6970
      %v7066 = vadd.f32 %v6699, %v6973
      %v7067 = vadd.f32 %v6702, %v6976
      %v7068 = vadd.f32 %v6705, %v6979
      %v7069 = vadd.f32 %v6708, %v6982
      %v7070 = vadd.f32 %v6711, %v6985
      %v7071 = vadd.f32 %v6714, %v6988
      %v7072 = vadd.f32 %v6717, %v6991
      %v7073 = vadd.f32 %v6720, %v6994
      %v7074 = vadd.f32 %v6723, %v6997
      %v7075 = vadd.f32 %v6726, %v7000
      %v7076 = vadd.f32 %v6729, %v7003
      %v7077 = vadd.f32 %v6732, %v7006
      %v7078 = vadd.f32 %v6735, %v7009
      %v7079 = vadd.f32 %v6738, %v7012
      %v7080 = vadd.f32 %v6741, %v7015
      %v7081 = vadd.f32 %v6744, %v7018
      %v7082 = vadd.f32 %v6747, %v7021
      %v7083 = vadd.f32 %v6750, %v7024
      %v7084 = vadd.f32 %v6753, %v7027
      %v7085 = vadd.f32 %v6756, %v7030
      %v7086 = vadd.f32 %v6759, %v7033
      %v7087 = vadd.f32 %v6762, %v7036
      %v7088 = vadd.f32 %v6765, %v7039
      %v7089 = vadd.f32 %v6768, %v7042
      %v7090 = vadd.f32 %v6771, %v7045
      %v7091 = vadd.f32 %v6774, %v7048
      %v7092 = vadd.f32 %v6777, %v7051
      %v7093 = vadd.f32 %v6780, %v7054
      %v7094 = vadd.f32 %v6783, %v7057
      %v7095 = vld [vmem:[%s4 + $0xc] sm:$0xf]
      %v7098 = vrot.slane %v6268, 2
      %v7099 = vsel %vm5141, %v6857, %v7098
      %v7100 = vrot.slane %v6269, 2
      %v7101 = vsel %vm5141, %v7098, %v7100
      %v7102 = vsel %vm346, %v7099, 0
      %v7104 = vsel %vm346, %v7101, 0
      %v7107 = vsel %vm455, %v7095, 0
      %7109 = vmatpush.msra.mxu0 0.0
      %7110 = vmatpush.msra.mxu0 0.0
      %7111 = vmatpush.msra.mxu0 0.0
      %7112 = vmatpush.msra.mxu0 0.0
      %7113 = vmatpush.msra.mxu0 0.0
      %7114 = vmatpush.msra.mxu0 0.0
      %7115 = vmatpush.msra.mxu0 0.0
      %7116 = vmatpush.msra.mxu0 0.0
      %7117 = vmatpush.msra.mxu0 0.0
      %7118 = vmatpush.msra.mxu0 0.0
      %7119 = vmatpush.msra.mxu0 0.0
      %7120 = vmatpush.msra.mxu0 0.0
      %7121 = vmatpush.msra.mxu0 0.0
      %7122 = vmatpush.msra.mxu0 0.0
      %7123 = vmatpush.msra.mxu0 0.0
      %7124 = vmatpush.msra.mxu0 %v7107
      %7125 = vmatmul.f32.gmra.mxu0 %v6863
      %v7126 = vpop.f32.mrf.mxu0
      %v7127 = vadd.f32 0.0, %v7126
      %7128 = vmatmul.f32.gmra.mxu0 %v6865
      %v7129 = vpop.f32.mrf.mxu0
      %v7130 = vadd.f32 0.0, %v7129
      %7131 = vmatmul.f32.gmra.mxu0 %v6867
      %v7132 = vpop.f32.mrf.mxu0
      %v7133 = vadd.f32 0.0, %v7132
      %7134 = vmatmul.f32.gmra.mxu0 %v6869
      %v7135 = vpop.f32.mrf.mxu0
      %v7136 = vadd.f32 0.0, %v7135
      %7137 = vmatmul.f32.gmra.mxu0 %v6871
      %v7138 = vpop.f32.mrf.mxu0
      %v7139 = vadd.f32 0.0, %v7138
      %7140 = vmatmul.f32.gmra.mxu0 %v6873
      %v7141 = vpop.f32.mrf.mxu0
      %v7142 = vadd.f32 0.0, %v7141
      %7143 = vmatmul.f32.gmra.mxu0 %v6875
      %v7144 = vpop.f32.mrf.mxu0
      %v7145 = vadd.f32 0.0, %v7144
      %7146 = vmatmul.f32.gmra.mxu0 %v6877
      %v7147 = vpop.f32.mrf.mxu0
      %v7148 = vadd.f32 0.0, %v7147
      %7149 = vmatmul.f32.gmra.mxu0 %v6879
      %v7150 = vpop.f32.mrf.mxu0
      %v7151 = vadd.f32 0.0, %v7150
      %7152 = vmatmul.f32.gmra.mxu0 %v6881
      %v7153 = vpop.f32.mrf.mxu0
      %v7154 = vadd.f32 0.0, %v7153
      %7155 = vmatmul.f32.gmra.mxu0 %v6883
      %v7156 = vpop.f32.mrf.mxu0
      %v7157 = vadd.f32 0.0, %v7156
      %7158 = vmatmul.f32.gmra.mxu0 %v6885
      %v7159 = vpop.f32.mrf.mxu0
      %v7160 = vadd.f32 0.0, %v7159
      %7161 = vmatmul.f32.gmra.mxu0 %v6887
      %v7162 = vpop.f32.mrf.mxu0
      %v7163 = vadd.f32 0.0, %v7162
      %7164 = vmatmul.f32.gmra.mxu0 %v6889
      %v7165 = vpop.f32.mrf.mxu0
      %v7166 = vadd.f32 0.0, %v7165
      %7167 = vmatmul.f32.gmra.mxu0 %v6891
      %v7168 = vpop.f32.mrf.mxu0
      %v7169 = vadd.f32 0.0, %v7168
      %7170 = vmatmul.f32.gmra.mxu0 %v6893
      %v7171 = vpop.f32.mrf.mxu0
      %v7172 = vadd.f32 0.0, %v7171
      %7173 = vmatmul.f32.gmra.mxu0 %v6895
      %v7174 = vpop.f32.mrf.mxu0
      %v7175 = vadd.f32 0.0, %v7174
      %7176 = vmatmul.f32.gmra.mxu0 %v6897
      %v7177 = vpop.f32.mrf.mxu0
      %v7178 = vadd.f32 0.0, %v7177
      %7179 = vmatmul.f32.gmra.mxu0 %v6899
      %v7180 = vpop.f32.mrf.mxu0
      %v7181 = vadd.f32 0.0, %v7180
      %7182 = vmatmul.f32.gmra.mxu0 %v6901
      %v7183 = vpop.f32.mrf.mxu0
      %v7184 = vadd.f32 0.0, %v7183
      %7185 = vmatmul.f32.gmra.mxu0 %v6903
      %v7186 = vpop.f32.mrf.mxu0
      %v7187 = vadd.f32 0.0, %v7186
      %7188 = vmatmul.f32.gmra.mxu0 %v6905
      %v7189 = vpop.f32.mrf.mxu0
      %v7190 = vadd.f32 0.0, %v7189
      %7191 = vmatmul.f32.gmra.mxu0 %v6907
      %v7192 = vpop.f32.mrf.mxu0
      %v7193 = vadd.f32 0.0, %v7192
      %7194 = vmatmul.f32.gmra.mxu0 %v6909
      %v7195 = vpop.f32.mrf.mxu0
      %v7196 = vadd.f32 0.0, %v7195
      %7197 = vmatmul.f32.gmra.mxu0 %v6911
      %v7198 = vpop.f32.mrf.mxu0
      %v7199 = vadd.f32 0.0, %v7198
      %7200 = vmatmul.f32.gmra.mxu0 %v6913
      %v7201 = vpop.f32.mrf.mxu0
      %v7202 = vadd.f32 0.0, %v7201
      %7203 = vmatmul.f32.gmra.mxu0 %v6915
      %v7204 = vpop.f32.mrf.mxu0
      %v7205 = vadd.f32 0.0, %v7204
      %7206 = vmatmul.f32.gmra.mxu0 %v6917
      %v7207 = vpop.f32.mrf.mxu0
      %v7208 = vadd.f32 0.0, %v7207
      %7209 = vmatmul.f32.gmra.mxu0 %v6919
      %v7210 = vpop.f32.mrf.mxu0
      %v7211 = vadd.f32 0.0, %v7210
      %7212 = vmatmul.f32.gmra.mxu0 %v6921
      %v7213 = vpop.f32.mrf.mxu0
      %v7214 = vadd.f32 0.0, %v7213
      %7215 = vmatmul.f32.gmra.mxu0 %v6923
      %v7216 = vpop.f32.mrf.mxu0
      %v7217 = vadd.f32 0.0, %v7216
      %7218 = vmatmul.f32.gmra.mxu0 %v6925
      %v7219 = vpop.f32.mrf.mxu0
      %v7220 = vadd.f32 0.0, %v7219
      %7221 = vmatmul.f32.gmra.mxu0 %v6927
      %v7222 = vpop.f32.mrf.mxu0
      %v7223 = vadd.f32 0.0, %v7222
      %7224 = vmatmul.f32.gmra.mxu0 %v6929
      %v7225 = vpop.f32.mrf.mxu0
      %v7226 = vadd.f32 0.0, %v7225
      %7227 = vmatmul.f32.gmra.mxu0 %v7102
      %v7228 = vpop.f32.mrf.mxu0
      %v7229 = vadd.f32 0.0, %v7228
      %7230 = vmatmul.f32.gmra.mxu0 %v7104
      %v7231 = vpop.f32.mrf.mxu0
      %v7232 = vadd.f32 0.0, %v7231
      %7233 = vdwg.mxu0
      %v7234 = vadd.f32 %v7059, %v7127
      %v7235 = vadd.f32 %v7060, %v7130
      %v7236 = vadd.f32 %v7061, %v7133
      %v7237 = vadd.f32 %v7062, %v7136
      %v7238 = vadd.f32 %v7063, %v7139
      %v7239 = vadd.f32 %v7064, %v7142
      %v7240 = vadd.f32 %v7065, %v7145
      %v7241 = vadd.f32 %v7066, %v7148
      %v7242 = vadd.f32 %v7067, %v7151
      %v7243 = vadd.f32 %v7068, %v7154
      %v7244 = vadd.f32 %v7069, %v7157
      %v7245 = vadd.f32 %v7070, %v7160
      %v7246 = vadd.f32 %v7071, %v7163
      %v7247 = vadd.f32 %v7072, %v7166
      %v7248 = vadd.f32 %v7073, %v7169
      %v7249 = vadd.f32 %v7074, %v7172
      %v7250 = vadd.f32 %v7075, %v7175
      %v7251 = vadd.f32 %v7076, %v7178
      %v7252 = vadd.f32 %v7077, %v7181
      %v7253 = vadd.f32 %v7078, %v7184
      %v7254 = vadd.f32 %v7079, %v7187
      %v7255 = vadd.f32 %v7080, %v7190
      %v7256 = vadd.f32 %v7081, %v7193
      %v7257 = vadd.f32 %v7082, %v7196
      %v7258 = vadd.f32 %v7083, %v7199
      %v7259 = vadd.f32 %v7084, %v7202
      %v7260 = vadd.f32 %v7085, %v7205
      %v7261 = vadd.f32 %v7086, %v7208
      %v7262 = vadd.f32 %v7087, %v7211
      %v7263 = vadd.f32 %v7088, %v7214
      %v7264 = vadd.f32 %v7089, %v7217
      %v7265 = vadd.f32 %v7090, %v7220
      %v7266 = vadd.f32 %v7091, %v7223
      %v7267 = vadd.f32 %v7092, %v7226
      %v7268 = vadd.f32 %v7093, %v7229
      %v7269 = vadd.f32 %v7094, %v7232
      %v7270 = vld [vmem:[%s4 + $0x10] sm:$0xf]
      %vm7271 = vcmask 1044480
      %v7272 = vrot.slane %v6233, 3
      %v7273 = vrot.slane %v6234, 3
      %v7274 = vsel %vm7271, %v7272, %v7273
      %v7275 = vrot.slane %v6235, 3
      %v7276 = vsel %vm7271, %v7273, %v7275
      %v7277 = vrot.slane %v6236, 3
      %v7278 = vsel %vm7271, %v7275, %v7277
      %v7279 = vrot.slane %v6237, 3
      %v7280 = vsel %vm7271, %v7277, %v7279
      %v7281 = vrot.slane %v6238, 3
      %v7282 = vsel %vm7271, %v7279, %v7281
      %v7283 = vrot.slane %v6239, 3
      %v7284 = vsel %vm7271, %v7281, %v7283
      %v7285 = vrot.slane %v6240, 3
      %v7286 = vsel %vm7271, %v7283, %v7285
      %v7287 = vrot.slane %v6241, 3
      %v7288 = vsel %vm7271, %v7285, %v7287
      %v7289 = vrot.slane %v6242, 3
      %v7290 = vsel %vm7271, %v7287, %v7289
      %v7291 = vrot.slane %v6243, 3
      %v7292 = vsel %vm7271, %v7289, %v7291
      %v7293 = vrot.slane %v6244, 3
      %v7294 = vsel %vm7271, %v7291, %v7293
      %v7295 = vrot.slane %v6245, 3
      %v7296 = vsel %vm7271, %v7293, %v7295
      %v7297 = vrot.slane %v6246, 3
      %v7298 = vsel %vm7271, %v7295, %v7297
      %v7299 = vrot.slane %v6247, 3
      %v7300 = vsel %vm7271, %v7297, %v7299
      %v7301 = vrot.slane %v6248, 3
      %v7302 = vsel %vm7271, %v7299, %v7301
      %v7303 = vrot.slane %v6249, 3
      %v7304 = vsel %vm7271, %v7301, %v7303
      %v7305 = vrot.slane %v6250, 3
      %v7306 = vsel %vm7271, %v7303, %v7305
      %v7307 = vrot.slane %v6251, 3
      %v7308 = vsel %vm7271, %v7305, %v7307
      %v7309 = vrot.slane %v6252, 3
      %v7310 = vsel %vm7271, %v7307, %v7309
      %v7311 = vrot.slane %v6253, 3
      %v7312 = vsel %vm7271, %v7309, %v7311
      %v7313 = vrot.slane %v6254, 3
      %v7314 = vsel %vm7271, %v7311, %v7313
      %v7315 = vrot.slane %v6255, 3
      %v7316 = vsel %vm7271, %v7313, %v7315
      %v7317 = vrot.slane %v6256, 3
      %v7318 = vsel %vm7271, %v7315, %v7317
      %v7319 = vrot.slane %v6257, 3
      %v7320 = vsel %vm7271, %v7317, %v7319
      %v7321 = vrot.slane %v6258, 3
      %v7322 = vsel %vm7271, %v7319, %v7321
      %v7323 = vrot.slane %v6259, 3
      %v7324 = vsel %vm7271, %v7321, %v7323
      %v7325 = vrot.slane %v6260, 3
      %v7326 = vsel %vm7271, %v7323, %v7325
      %v7327 = vrot.slane %v6261, 3
      %v7328 = vsel %vm7271, %v7325, %v7327
      %v7329 = vrot.slane %v6262, 3
      %v7330 = vsel %vm7271, %v7327, %v7329
      %v7331 = vrot.slane %v6263, 3
      %v7332 = vsel %vm7271, %v7329, %v7331
      %v7333 = vrot.slane %v6264, 3
      %v7334 = vsel %vm7271, %v7331, %v7333
      %v7335 = vrot.slane %v6265, 3
      %v7336 = vsel %vm7271, %v7333, %v7335
      %v7337 = vrot.slane %v6266, 3
      %v7338 = vsel %vm7271, %v7335, %v7337
      %v7339 = vrot.slane %v6267, 3
      %v7340 = vsel %vm7271, %v7337, %v7339
      %v7341 = vrot.slane %v6268, 3
      %v7342 = vsel %vm7271, %v7339, %v7341
      %v7343 = vrot.slane %v6269, 3
      %v7344 = vsel %vm7271, %v7341, %v7343
      %v7345 = vsel %vm346, %v7274, 0
      %v7347 = vsel %vm346, %v7276, 0
      %v7349 = vsel %vm346, %v7278, 0
      %v7351 = vsel %vm346, %v7280, 0
      %v7353 = vsel %vm346, %v7282, 0
      %v7355 = vsel %vm346, %v7284, 0
      %v7357 = vsel %vm346, %v7286, 0
      %v7359 = vsel %vm346, %v7288, 0
      %v7361 = vsel %vm346, %v7290, 0
      %v7363 = vsel %vm346, %v7292, 0
      %v7365 = vsel %vm346, %v7294, 0
      %v7367 = vsel %vm346, %v7296, 0
      %v7369 = vsel %vm346, %v7298, 0
      %v7371 = vsel %vm346, %v7300, 0
      %v7373 = vsel %vm346, %v7302, 0
      %v7375 = vsel %vm346, %v7304, 0
      %v7377 = vsel %vm346, %v7306, 0
      %v7379 = vsel %vm346, %v7308, 0
      %v7381 = vsel %vm346, %v7310, 0
      %v7383 = vsel %vm346, %v7312, 0
      %v7385 = vsel %vm346, %v7314, 0
      %v7387 = vsel %vm346, %v7316, 0
      %v7389 = vsel %vm346, %v7318, 0
      %v7391 = vsel %vm346, %v7320, 0
      %v7393 = vsel %vm346, %v7322, 0
      %v7395 = vsel %vm346, %v7324, 0
      %v7397 = vsel %vm346, %v7326, 0
      %v7399 = vsel %vm346, %v7328, 0
      %v7401 = vsel %vm346, %v7330, 0
      %v7403 = vsel %vm346, %v7332, 0
      %v7405 = vsel %vm346, %v7334, 0
      %v7407 = vsel %vm346, %v7336, 0
      %v7409 = vsel %vm346, %v7338, 0
      %v7411 = vsel %vm346, %v7340, 0
      %v7413 = vsel %vm346, %v7342, 0
      %v7415 = vsel %vm346, %v7344, 0
      %v7418 = vsel %vm455, %v7270, 0
      %7420 = vmatpush.msra.mxu0 0.0
      %7421 = vmatpush.msra.mxu0 0.0
      %7422 = vmatpush.msra.mxu0 0.0
      %7423 = vmatpush.msra.mxu0 0.0
      %7424 = vmatpush.msra.mxu0 0.0
      %7425 = vmatpush.msra.mxu0 0.0
      %7426 = vmatpush.msra.mxu0 0.0
      %7427 = vmatpush.msra.mxu0 0.0
      %7428 = vmatpush.msra.mxu0 0.0
      %7429 = vmatpush.msra.mxu0 0.0
      %7430 = vmatpush.msra.mxu0 0.0
      %7431 = vmatpush.msra.mxu0 0.0
      %7432 = vmatpush.msra.mxu0 0.0
      %7433 = vmatpush.msra.mxu0 0.0
      %7434 = vmatpush.msra.mxu0 0.0
      %7435 = vmatpush.msra.mxu0 %v7418
      %7436 = vmatmul.f32.gmra.mxu0 %v7345
      %v7437 = vpop.f32.mrf.mxu0
      %v7438 = vadd.f32 0.0, %v7437
      %7439 = vmatmul.f32.gmra.mxu0 %v7347
      %v7440 = vpop.f32.mrf.mxu0
      %v7441 = vadd.f32 0.0, %v7440
      %7442 = vmatmul.f32.gmra.mxu0 %v7349
      %v7443 = vpop.f32.mrf.mxu0
      %v7444 = vadd.f32 0.0, %v7443
      %7445 = vmatmul.f32.gmra.mxu0 %v7351
      %v7446 = vpop.f32.mrf.mxu0
      %v7447 = vadd.f32 0.0, %v7446
      %7448 = vmatmul.f32.gmra.mxu0 %v7353
      %v7449 = vpop.f32.mrf.mxu0
      %v7450 = vadd.f32 0.0, %v7449
      %7451 = vmatmul.f32.gmra.mxu0 %v7355
      %v7452 = vpop.f32.mrf.mxu0
      %v7453 = vadd.f32 0.0, %v7452
      %7454 = vmatmul.f32.gmra.mxu0 %v7357
      %v7455 = vpop.f32.mrf.mxu0
      %v7456 = vadd.f32 0.0, %v7455
      %7457 = vmatmul.f32.gmra.mxu0 %v7359
      %v7458 = vpop.f32.mrf.mxu0
      %v7459 = vadd.f32 0.0, %v7458
      %7460 = vmatmul.f32.gmra.mxu0 %v7361
      %v7461 = vpop.f32.mrf.mxu0
      %v7462 = vadd.f32 0.0, %v7461
      %7463 = vmatmul.f32.gmra.mxu0 %v7363
      %v7464 = vpop.f32.mrf.mxu0
      %v7465 = vadd.f32 0.0, %v7464
      %7466 = vmatmul.f32.gmra.mxu0 %v7365
      %v7467 = vpop.f32.mrf.mxu0
      %v7468 = vadd.f32 0.0, %v7467
      %7469 = vmatmul.f32.gmra.mxu0 %v7367
      %v7470 = vpop.f32.mrf.mxu0
      %v7471 = vadd.f32 0.0, %v7470
      %7472 = vmatmul.f32.gmra.mxu0 %v7369
      %v7473 = vpop.f32.mrf.mxu0
      %v7474 = vadd.f32 0.0, %v7473
      %7475 = vmatmul.f32.gmra.mxu0 %v7371
      %v7476 = vpop.f32.mrf.mxu0
      %v7477 = vadd.f32 0.0, %v7476
      %7478 = vmatmul.f32.gmra.mxu0 %v7373
      %v7479 = vpop.f32.mrf.mxu0
      %v7480 = vadd.f32 0.0, %v7479
      %7481 = vmatmul.f32.gmra.mxu0 %v7375
      %v7482 = vpop.f32.mrf.mxu0
      %v7483 = vadd.f32 0.0, %v7482
      %7484 = vmatmul.f32.gmra.mxu0 %v7377
      %v7485 = vpop.f32.mrf.mxu0
      %v7486 = vadd.f32 0.0, %v7485
      %7487 = vmatmul.f32.gmra.mxu0 %v7379
      %v7488 = vpop.f32.mrf.mxu0
      %v7489 = vadd.f32 0.0, %v7488
      %7490 = vmatmul.f32.gmra.mxu0 %v7381
      %v7491 = vpop.f32.mrf.mxu0
      %v7492 = vadd.f32 0.0, %v7491
      %7493 = vmatmul.f32.gmra.mxu0 %v7383
      %v7494 = vpop.f32.mrf.mxu0
      %v7495 = vadd.f32 0.0, %v7494
      %7496 = vmatmul.f32.gmra.mxu0 %v7385
      %v7497 = vpop.f32.mrf.mxu0
      %v7498 = vadd.f32 0.0, %v7497
      %7499 = vmatmul.f32.gmra.mxu0 %v7387
      %v7500 = vpop.f32.mrf.mxu0
      %v7501 = vadd.f32 0.0, %v7500
      %7502 = vmatmul.f32.gmra.mxu0 %v7389
      %v7503 = vpop.f32.mrf.mxu0
      %v7504 = vadd.f32 0.0, %v7503
      %7505 = vmatmul.f32.gmra.mxu0 %v7391
      %v7506 = vpop.f32.mrf.mxu0
      %v7507 = vadd.f32 0.0, %v7506
      %7508 = vmatmul.f32.gmra.mxu0 %v7393
      %v7509 = vpop.f32.mrf.mxu0
      %v7510 = vadd.f32 0.0, %v7509
      %7511 = vmatmul.f32.gmra.mxu0 %v7395
      %v7512 = vpop.f32.mrf.mxu0
      %v7513 = vadd.f32 0.0, %v7512
      %7514 = vmatmul.f32.gmra.mxu0 %v7397
      %v7515 = vpop.f32.mrf.mxu0
      %v7516 = vadd.f32 0.0, %v7515
      %7517 = vmatmul.f32.gmra.mxu0 %v7399
      %v7518 = vpop.f32.mrf.mxu0
      %v7519 = vadd.f32 0.0, %v7518
      %7520 = vmatmul.f32.gmra.mxu0 %v7401
      %v7521 = vpop.f32.mrf.mxu0
      %v7522 = vadd.f32 0.0, %v7521
      %7523 = vmatmul.f32.gmra.mxu0 %v7403
      %v7524 = vpop.f32.mrf.mxu0
      %v7525 = vadd.f32 0.0, %v7524
      %7526 = vmatmul.f32.gmra.mxu0 %v7405
      %v7527 = vpop.f32.mrf.mxu0
      %v7528 = vadd.f32 0.0, %v7527
      %7529 = vmatmul.f32.gmra.mxu0 %v7407
      %v7530 = vpop.f32.mrf.mxu0
      %v7531 = vadd.f32 0.0, %v7530
      %7532 = vmatmul.f32.gmra.mxu0 %v7409
      %v7533 = vpop.f32.mrf.mxu0
      %v7534 = vadd.f32 0.0, %v7533
      %7535 = vmatmul.f32.gmra.mxu0 %v7411
      %v7536 = vpop.f32.mrf.mxu0
      %v7537 = vadd.f32 0.0, %v7536
      %7538 = vmatmul.f32.gmra.mxu0 %v7413
      %v7539 = vpop.f32.mrf.mxu0
      %v7540 = vadd.f32 0.0, %v7539
      %7541 = vmatmul.f32.gmra.mxu0 %v7415
      %v7542 = vpop.f32.mrf.mxu0
      %v7543 = vadd.f32 0.0, %v7542
      %7544 = vdwg.mxu0
      %v7545 = vadd.f32 %v7234, %v7438
      %v7546 = vadd.f32 %v7235, %v7441
      %v7547 = vadd.f32 %v7236, %v7444
      %v7548 = vadd.f32 %v7237, %v7447
      %v7549 = vadd.f32 %v7238, %v7450
      %v7550 = vadd.f32 %v7239, %v7453
      %v7551 = vadd.f32 %v7240, %v7456
      %v7552 = vadd.f32 %v7241, %v7459
      %v7553 = vadd.f32 %v7242, %v7462
      %v7554 = vadd.f32 %v7243, %v7465
      %v7555 = vadd.f32 %v7244, %v7468
      %v7556 = vadd.f32 %v7245, %v7471
      %v7557 = vadd.f32 %v7246, %v7474
      %v7558 = vadd.f32 %v7247, %v7477
      %v7559 = vadd.f32 %v7248, %v7480
      %v7560 = vadd.f32 %v7249, %v7483
      %v7561 = vadd.f32 %v7250, %v7486
      %v7562 = vadd.f32 %v7251, %v7489
      %v7563 = vadd.f32 %v7252, %v7492
      %v7564 = vadd.f32 %v7253, %v7495
      %v7565 = vadd.f32 %v7254, %v7498
      %v7566 = vadd.f32 %v7255, %v7501
      %v7567 = vadd.f32 %v7256, %v7504
      %v7568 = vadd.f32 %v7257, %v7507
      %v7569 = vadd.f32 %v7258, %v7510
      %v7570 = vadd.f32 %v7259, %v7513
      %v7571 = vadd.f32 %v7260, %v7516
      %v7572 = vadd.f32 %v7261, %v7519
      %v7573 = vadd.f32 %v7262, %v7522
      %v7574 = vadd.f32 %v7263, %v7525
      %v7575 = vadd.f32 %v7264, %v7528
      %v7576 = vadd.f32 %v7265, %v7531
      %v7577 = vadd.f32 %v7266, %v7534
      %v7578 = vadd.f32 %v7267, %v7537
      %v7579 = vadd.f32 %v7268, %v7540
      %v7580 = vadd.f32 %v7269, %v7543
      %v7581 = vld [vmem:[%s4 + $0x14] sm:$0xf]
      %v7582 = vrot.slane %v6233, 4
      %v7583 = vrot.slane %v6234, 4
      %v7584 = vsel %vm455, %v7582, %v7583
      %v7585 = vrot.slane %v6235, 4
      %v7586 = vsel %vm455, %v7583, %v7585
      %v7587 = vrot.slane %v6236, 4
      %v7588 = vsel %vm455, %v7585, %v7587
      %v7589 = vrot.slane %v6237, 4
      %v7590 = vsel %vm455, %v7587, %v7589
      %v7591 = vrot.slane %v6238, 4
      %v7592 = vsel %vm455, %v7589, %v7591
      %v7593 = vrot.slane %v6239, 4
      %v7594 = vsel %vm455, %v7591, %v7593
      %v7595 = vrot.slane %v6240, 4
      %v7596 = vsel %vm455, %v7593, %v7595
      %v7597 = vrot.slane %v6241, 4
      %v7598 = vsel %vm455, %v7595, %v7597
      %v7599 = vrot.slane %v6242, 4
      %v7600 = vsel %vm455, %v7597, %v7599
      %v7601 = vrot.slane %v6243, 4
      %v7602 = vsel %vm455, %v7599, %v7601
      %v7603 = vrot.slane %v6244, 4
      %v7604 = vsel %vm455, %v7601, %v7603
      %v7605 = vrot.slane %v6245, 4
      %v7606 = vsel %vm455, %v7603, %v7605
      %v7607 = vrot.slane %v6246, 4
      %v7608 = vsel %vm455, %v7605, %v7607
      %v7609 = vrot.slane %v6247, 4
      %v7610 = vsel %vm455, %v7607, %v7609
      %v7611 = vrot.slane %v6248, 4
      %v7612 = vsel %vm455, %v7609, %v7611
      %v7613 = vrot.slane %v6249, 4
      %v7614 = vsel %vm455, %v7611, %v7613
      %v7615 = vrot.slane %v6250, 4
      %v7616 = vsel %vm455, %v7613, %v7615
      %v7617 = vrot.slane %v6251, 4
      %v7618 = vsel %vm455, %v7615, %v7617
      %v7619 = vrot.slane %v6252, 4
      %v7620 = vsel %vm455, %v7617, %v7619
      %v7621 = vrot.slane %v6253, 4
      %v7622 = vsel %vm455, %v7619, %v7621
      %v7623 = vrot.slane %v6254, 4
      %v7624 = vsel %vm455, %v7621, %v7623
      %v7625 = vrot.slane %v6255, 4
      %v7626 = vsel %vm455, %v7623, %v7625
      %v7627 = vrot.slane %v6256, 4
      %v7628 = vsel %vm455, %v7625, %v7627
      %v7629 = vrot.slane %v6257, 4
      %v7630 = vsel %vm455, %v7627, %v7629
      %v7631 = vrot.slane %v6258, 4
      %v7632 = vsel %vm455, %v7629, %v7631
      %v7633 = vrot.slane %v6259, 4
      %v7634 = vsel %vm455, %v7631, %v7633
      %v7635 = vrot.slane %v6260, 4
      %v7636 = vsel %vm455, %v7633, %v7635
      %v7637 = vrot.slane %v6261, 4
      %v7638 = vsel %vm455, %v7635, %v7637
      %v7639 = vrot.slane %v6262, 4
      %v7640 = vsel %vm455, %v7637, %v7639
      %v7641 = vrot.slane %v6263, 4
      %v7642 = vsel %vm455, %v7639, %v7641
      %v7643 = vrot.slane %v6264, 4
      %v7644 = vsel %vm455, %v7641, %v7643
      %v7645 = vrot.slane %v6265, 4
      %v7646 = vsel %vm455, %v7643, %v7645
      %v7647 = vrot.slane %v6266, 4
      %v7648 = vsel %vm455, %v7645, %v7647
      %v7649 = vrot.slane %v6267, 4
      %v7650 = vsel %vm455, %v7647, %v7649
      %v7651 = vrot.slane %v6268, 4
      %v7652 = vsel %vm455, %v7649, %v7651
      %v7653 = vrot.slane %v6269, 4
      %v7654 = vsel %vm455, %v7651, %v7653
      %v7655 = vsel %vm346, %v7584, 0
      %v7657 = vsel %vm346, %v7586, 0
      %v7659 = vsel %vm346, %v7588, 0
      %v7661 = vsel %vm346, %v7590, 0
      %v7663 = vsel %vm346, %v7592, 0
      %v7665 = vsel %vm346, %v7594, 0
      %v7667 = vsel %vm346, %v7596, 0
      %v7669 = vsel %vm346, %v7598, 0
      %v7671 = vsel %vm346, %v7600, 0
      %v7673 = vsel %vm346, %v7602, 0
      %v7675 = vsel %vm346, %v7604, 0
      %v7677 = vsel %vm346, %v7606, 0
      %v7679 = vsel %vm346, %v7608, 0
      %v7681 = vsel %vm346, %v7610, 0
      %v7683 = vsel %vm346, %v7612, 0
      %v7685 = vsel %vm346, %v7614, 0
      %v7687 = vsel %vm346, %v7616, 0
      %v7689 = vsel %vm346, %v7618, 0
      %v7691 = vsel %vm346, %v7620, 0
      %v7693 = vsel %vm346, %v7622, 0
      %v7695 = vsel %vm346, %v7624, 0
      %v7697 = vsel %vm346, %v7626, 0
      %v7699 = vsel %vm346, %v7628, 0
      %v7701 = vsel %vm346, %v7630, 0
      %v7703 = vsel %vm346, %v7632, 0
      %v7705 = vsel %vm346, %v7634, 0
      %v7707 = vsel %vm346, %v7636, 0
      %v7709 = vsel %vm346, %v7638, 0
      %v7711 = vsel %vm346, %v7640, 0
      %v7713 = vsel %vm346, %v7642, 0
      %v7715 = vsel %vm346, %v7644, 0
      %v7717 = vsel %vm346, %v7646, 0
      %v7719 = vsel %vm346, %v7648, 0
      %v7721 = vsel %vm346, %v7650, 0
      %v7723 = vsel %vm346, %v7652, 0
      %v7725 = vsel %vm346, %v7654, 0
      %v7728 = vsel %vm455, %v7581, 0
      %7730 = vmatpush.msra.mxu0 0.0
      %7731 = vmatpush.msra.mxu0 0.0
      %7732 = vmatpush.msra.mxu0 0.0
      %7733 = vmatpush.msra.mxu0 0.0
      %7734 = vmatpush.msra.mxu0 0.0
      %7735 = vmatpush.msra.mxu0 0.0
      %7736 = vmatpush.msra.mxu0 0.0
      %7737 = vmatpush.msra.mxu0 0.0
      %7738 = vmatpush.msra.mxu0 0.0
      %7739 = vmatpush.msra.mxu0 0.0
      %7740 = vmatpush.msra.mxu0 0.0
      %7741 = vmatpush.msra.mxu0 0.0
      %7742 = vmatpush.msra.mxu0 0.0
      %7743 = vmatpush.msra.mxu0 0.0
      %7744 = vmatpush.msra.mxu0 0.0
      %7745 = vmatpush.msra.mxu0 %v7728
      %7746 = vmatmul.f32.gmra.mxu0 %v7655
      %v7747 = vpop.f32.mrf.mxu0
      %v7748 = vadd.f32 0.0, %v7747
      %7749 = vmatmul.f32.gmra.mxu0 %v7657
      %v7750 = vpop.f32.mrf.mxu0
      %v7751 = vadd.f32 0.0, %v7750
      %7752 = vmatmul.f32.gmra.mxu0 %v7659
      %v7753 = vpop.f32.mrf.mxu0
      %v7754 = vadd.f32 0.0, %v7753
      %7755 = vmatmul.f32.gmra.mxu0 %v7661
      %v7756 = vpop.f32.mrf.mxu0
      %v7757 = vadd.f32 0.0, %v7756
      %7758 = vmatmul.f32.gmra.mxu0 %v7663
      %v7759 = vpop.f32.mrf.mxu0
      %v7760 = vadd.f32 0.0, %v7759
      %7761 = vmatmul.f32.gmra.mxu0 %v7665
      %v7762 = vpop.f32.mrf.mxu0
      %v7763 = vadd.f32 0.0, %v7762
      %7764 = vmatmul.f32.gmra.mxu0 %v7667
      %v7765 = vpop.f32.mrf.mxu0
      %v7766 = vadd.f32 0.0, %v7765
      %7767 = vmatmul.f32.gmra.mxu0 %v7669
      %v7768 = vpop.f32.mrf.mxu0
      %v7769 = vadd.f32 0.0, %v7768
      %7770 = vmatmul.f32.gmra.mxu0 %v7671
      %v7771 = vpop.f32.mrf.mxu0
      %v7772 = vadd.f32 0.0, %v7771
      %7773 = vmatmul.f32.gmra.mxu0 %v7673
      %v7774 = vpop.f32.mrf.mxu0
      %v7775 = vadd.f32 0.0, %v7774
      %7776 = vmatmul.f32.gmra.mxu0 %v7675
      %v7777 = vpop.f32.mrf.mxu0
      %v7778 = vadd.f32 0.0, %v7777
      %7779 = vmatmul.f32.gmra.mxu0 %v7677
      %v7780 = vpop.f32.mrf.mxu0
      %v7781 = vadd.f32 0.0, %v7780
      %7782 = vmatmul.f32.gmra.mxu0 %v7679
      %v7783 = vpop.f32.mrf.mxu0
      %v7784 = vadd.f32 0.0, %v7783
      %7785 = vmatmul.f32.gmra.mxu0 %v7681
      %v7786 = vpop.f32.mrf.mxu0
      %v7787 = vadd.f32 0.0, %v7786
      %7788 = vmatmul.f32.gmra.mxu0 %v7683
      %v7789 = vpop.f32.mrf.mxu0
      %v7790 = vadd.f32 0.0, %v7789
      %7791 = vmatmul.f32.gmra.mxu0 %v7685
      %v7792 = vpop.f32.mrf.mxu0
      %v7793 = vadd.f32 0.0, %v7792
      %7794 = vmatmul.f32.gmra.mxu0 %v7687
      %v7795 = vpop.f32.mrf.mxu0
      %v7796 = vadd.f32 0.0, %v7795
      %7797 = vmatmul.f32.gmra.mxu0 %v7689
      %v7798 = vpop.f32.mrf.mxu0
      %v7799 = vadd.f32 0.0, %v7798
      %7800 = vmatmul.f32.gmra.mxu0 %v7691
      %v7801 = vpop.f32.mrf.mxu0
      %v7802 = vadd.f32 0.0, %v7801
      %7803 = vmatmul.f32.gmra.mxu0 %v7693
      %v7804 = vpop.f32.mrf.mxu0
      %v7805 = vadd.f32 0.0, %v7804
      %7806 = vmatmul.f32.gmra.mxu0 %v7695
      %v7807 = vpop.f32.mrf.mxu0
      %v7808 = vadd.f32 0.0, %v7807
      %7809 = vmatmul.f32.gmra.mxu0 %v7697
      %v7810 = vpop.f32.mrf.mxu0
      %v7811 = vadd.f32 0.0, %v7810
      %7812 = vmatmul.f32.gmra.mxu0 %v7699
      %v7813 = vpop.f32.mrf.mxu0
      %v7814 = vadd.f32 0.0, %v7813
      %7815 = vmatmul.f32.gmra.mxu0 %v7701
      %v7816 = vpop.f32.mrf.mxu0
      %v7817 = vadd.f32 0.0, %v7816
      %7818 = vmatmul.f32.gmra.mxu0 %v7703
      %v7819 = vpop.f32.mrf.mxu0
      %v7820 = vadd.f32 0.0, %v7819
      %7821 = vmatmul.f32.gmra.mxu0 %v7705
      %v7822 = vpop.f32.mrf.mxu0
      %v7823 = vadd.f32 0.0, %v7822
      %7824 = vmatmul.f32.gmra.mxu0 %v7707
      %v7825 = vpop.f32.mrf.mxu0
      %v7826 = vadd.f32 0.0, %v7825
      %7827 = vmatmul.f32.gmra.mxu0 %v7709
      %v7828 = vpop.f32.mrf.mxu0
      %v7829 = vadd.f32 0.0, %v7828
      %7830 = vmatmul.f32.gmra.mxu0 %v7711
      %v7831 = vpop.f32.mrf.mxu0
      %v7832 = vadd.f32 0.0, %v7831
      %7833 = vmatmul.f32.gmra.mxu0 %v7713
      %v7834 = vpop.f32.mrf.mxu0
      %v7835 = vadd.f32 0.0, %v7834
      %7836 = vmatmul.f32.gmra.mxu0 %v7715
      %v7837 = vpop.f32.mrf.mxu0
      %v7838 = vadd.f32 0.0, %v7837
      %7839 = vmatmul.f32.gmra.mxu0 %v7717
      %v7840 = vpop.f32.mrf.mxu0
      %v7841 = vadd.f32 0.0, %v7840
      %7842 = vmatmul.f32.gmra.mxu0 %v7719
      %v7843 = vpop.f32.mrf.mxu0
      %v7844 = vadd.f32 0.0, %v7843
      %7845 = vmatmul.f32.gmra.mxu0 %v7721
      %v7846 = vpop.f32.mrf.mxu0
      %v7847 = vadd.f32 0.0, %v7846
      %7848 = vmatmul.f32.gmra.mxu0 %v7723
      %v7849 = vpop.f32.mrf.mxu0
      %v7850 = vadd.f32 0.0, %v7849
      %7851 = vmatmul.f32.gmra.mxu0 %v7725
      %v7852 = vpop.f32.mrf.mxu0
      %v7853 = vadd.f32 0.0, %v7852
      %7854 = vdwg.mxu0
      %v7855 = vadd.f32 %v7545, %v7748
      %v7856 = vadd.f32 %v7546, %v7751
      %v7857 = vadd.f32 %v7547, %v7754
      %v7858 = vadd.f32 %v7548, %v7757
      %v7859 = vadd.f32 %v7549, %v7760
      %v7860 = vadd.f32 %v7550, %v7763
      %v7861 = vadd.f32 %v7551, %v7766
      %v7862 = vadd.f32 %v7552, %v7769
      %v7863 = vadd.f32 %v7553, %v7772
      %v7864 = vadd.f32 %v7554, %v7775
      %v7865 = vadd.f32 %v7555, %v7778
      %v7866 = vadd.f32 %v7556, %v7781
      %v7867 = vadd.f32 %v7557, %v7784
      %v7868 = vadd.f32 %v7558, %v7787
      %v7869 = vadd.f32 %v7559, %v7790
      %v7870 = vadd.f32 %v7560, %v7793
      %v7871 = vadd.f32 %v7561, %v7796
      %v7872 = vadd.f32 %v7562, %v7799
      %v7873 = vadd.f32 %v7563, %v7802
      %v7874 = vadd.f32 %v7564, %v7805
      %v7875 = vadd.f32 %v7565, %v7808
      %v7876 = vadd.f32 %v7566, %v7811
      %v7877 = vadd.f32 %v7567, %v7814
      %v7878 = vadd.f32 %v7568, %v7817
      %v7879 = vadd.f32 %v7569, %v7820
      %v7880 = vadd.f32 %v7570, %v7823
      %v7881 = vadd.f32 %v7571, %v7826
      %v7882 = vadd.f32 %v7572, %v7829
      %v7883 = vadd.f32 %v7573, %v7832
      %v7884 = vadd.f32 %v7574, %v7835
      %v7885 = vadd.f32 %v7575, %v7838
      %v7886 = vadd.f32 %v7576, %v7841
      %v7887 = vadd.f32 %v7577, %v7844
      %v7888 = vadd.f32 %v7578, %v7847
      %v7889 = vadd.f32 %v7579, %v7850
      %v7890 = vadd.f32 %v7580, %v7853
      %v7891 = vld [vmem:[%s4 + $0x18] sm:$0xf]
      %v7894 = vrot.slane %v6270, 4
      %v7895 = vsel %vm455, %v7653, %v7894
      %v7896 = vrot.slane %v6271, 4
      %v7897 = vsel %vm455, %v7894, %v7896
      %v7898 = vsel %vm346, %v7895, 0
      %v7900 = vsel %vm346, %v7897, 0
      %v7903 = vsel %vm455, %v7891, 0
      %7905 = vmatpush.msra.mxu0 0.0
      %7906 = vmatpush.msra.mxu0 0.0
      %7907 = vmatpush.msra.mxu0 0.0
      %7908 = vmatpush.msra.mxu0 0.0
      %7909 = vmatpush.msra.mxu0 0.0
      %7910 = vmatpush.msra.mxu0 0.0
      %7911 = vmatpush.msra.mxu0 0.0
      %7912 = vmatpush.msra.mxu0 0.0
      %7913 = vmatpush.msra.mxu0 0.0
      %7914 = vmatpush.msra.mxu0 0.0
      %7915 = vmatpush.msra.mxu0 0.0
      %7916 = vmatpush.msra.mxu0 0.0
      %7917 = vmatpush.msra.mxu0 0.0
      %7918 = vmatpush.msra.mxu0 0.0
      %7919 = vmatpush.msra.mxu0 0.0
      %7920 = vmatpush.msra.mxu0 %v7903
      %7921 = vmatmul.f32.gmra.mxu0 %v7659
      %v7922 = vpop.f32.mrf.mxu0
      %v7923 = vadd.f32 0.0, %v7922
      %7924 = vmatmul.f32.gmra.mxu0 %v7661
      %v7925 = vpop.f32.mrf.mxu0
      %v7926 = vadd.f32 0.0, %v7925
      %7927 = vmatmul.f32.gmra.mxu0 %v7663
      %v7928 = vpop.f32.mrf.mxu0
      %v7929 = vadd.f32 0.0, %v7928
      %7930 = vmatmul.f32.gmra.mxu0 %v7665
      %v7931 = vpop.f32.mrf.mxu0
      %v7932 = vadd.f32 0.0, %v7931
      %7933 = vmatmul.f32.gmra.mxu0 %v7667
      %v7934 = vpop.f32.mrf.mxu0
      %v7935 = vadd.f32 0.0, %v7934
      %7936 = vmatmul.f32.gmra.mxu0 %v7669
      %v7937 = vpop.f32.mrf.mxu0
      %v7938 = vadd.f32 0.0, %v7937
      %7939 = vmatmul.f32.gmra.mxu0 %v7671
      %v7940 = vpop.f32.mrf.mxu0
      %v7941 = vadd.f32 0.0, %v7940
      %7942 = vmatmul.f32.gmra.mxu0 %v7673
      %v7943 = vpop.f32.mrf.mxu0
      %v7944 = vadd.f32 0.0, %v7943
      %7945 = vmatmul.f32.gmra.mxu0 %v7675
      %v7946 = vpop.f32.mrf.mxu0
      %v7947 = vadd.f32 0.0, %v7946
      %7948 = vmatmul.f32.gmra.mxu0 %v7677
      %v7949 = vpop.f32.mrf.mxu0
      %v7950 = vadd.f32 0.0, %v7949
      %7951 = vmatmul.f32.gmra.mxu0 %v7679
      %v7952 = vpop.f32.mrf.mxu0
      %v7953 = vadd.f32 0.0, %v7952
      %7954 = vmatmul.f32.gmra.mxu0 %v7681
      %v7955 = vpop.f32.mrf.mxu0
      %v7956 = vadd.f32 0.0, %v7955
      %7957 = vmatmul.f32.gmra.mxu0 %v7683
      %v7958 = vpop.f32.mrf.mxu0
      %v7959 = vadd.f32 0.0, %v7958
      %7960 = vmatmul.f32.gmra.mxu0 %v7685
      %v7961 = vpop.f32.mrf.mxu0
      %v7962 = vadd.f32 0.0, %v7961
      %7963 = vmatmul.f32.gmra.mxu0 %v7687
      %v7964 = vpop.f32.mrf.mxu0
      %v7965 = vadd.f32 0.0, %v7964
      %7966 = vmatmul.f32.gmra.mxu0 %v7689
      %v7967 = vpop.f32.mrf.mxu0
      %v7968 = vadd.f32 0.0, %v7967
      %7969 = vmatmul.f32.gmra.mxu0 %v7691
      %v7970 = vpop.f32.mrf.mxu0
      %v7971 = vadd.f32 0.0, %v7970
      %7972 = vmatmul.f32.gmra.mxu0 %v7693
      %v7973 = vpop.f32.mrf.mxu0
      %v7974 = vadd.f32 0.0, %v7973
      %7975 = vmatmul.f32.gmra.mxu0 %v7695
      %v7976 = vpop.f32.mrf.mxu0
      %v7977 = vadd.f32 0.0, %v7976
      %7978 = vmatmul.f32.gmra.mxu0 %v7697
      %v7979 = vpop.f32.mrf.mxu0
      %v7980 = vadd.f32 0.0, %v7979
      %7981 = vmatmul.f32.gmra.mxu0 %v7699
      %v7982 = vpop.f32.mrf.mxu0
      %v7983 = vadd.f32 0.0, %v7982
      %7984 = vmatmul.f32.gmra.mxu0 %v7701
      %v7985 = vpop.f32.mrf.mxu0
      %v7986 = vadd.f32 0.0, %v7985
      %7987 = vmatmul.f32.gmra.mxu0 %v7703
      %v7988 = vpop.f32.mrf.mxu0
      %v7989 = vadd.f32 0.0, %v7988
      %7990 = vmatmul.f32.gmra.mxu0 %v7705
      %v7991 = vpop.f32.mrf.mxu0
      %v7992 = vadd.f32 0.0, %v7991
      %7993 = vmatmul.f32.gmra.mxu0 %v7707
      %v7994 = vpop.f32.mrf.mxu0
      %v7995 = vadd.f32 0.0, %v7994
      %7996 = vmatmul.f32.gmra.mxu0 %v7709
      %v7997 = vpop.f32.mrf.mxu0
      %v7998 = vadd.f32 0.0, %v7997
      %7999 = vmatmul.f32.gmra.mxu0 %v7711
      %v8000 = vpop.f32.mrf.mxu0
      %v8001 = vadd.f32 0.0, %v8000
      %8002 = vmatmul.f32.gmra.mxu0 %v7713
      %v8003 = vpop.f32.mrf.mxu0
      %v8004 = vadd.f32 0.0, %v8003
      %8005 = vmatmul.f32.gmra.mxu0 %v7715
      %v8006 = vpop.f32.mrf.mxu0
      %v8007 = vadd.f32 0.0, %v8006
      %8008 = vmatmul.f32.gmra.mxu0 %v7717
      %v8009 = vpop.f32.mrf.mxu0
      %v8010 = vadd.f32 0.0, %v8009
      %8011 = vmatmul.f32.gmra.mxu0 %v7719
      %v8012 = vpop.f32.mrf.mxu0
      %v8013 = vadd.f32 0.0, %v8012
      %8014 = vmatmul.f32.gmra.mxu0 %v7721
      %v8015 = vpop.f32.mrf.mxu0
      %v8016 = vadd.f32 0.0, %v8015
      %8017 = vmatmul.f32.gmra.mxu0 %v7723
      %v8018 = vpop.f32.mrf.mxu0
      %v8019 = vadd.f32 0.0, %v8018
      %8020 = vmatmul.f32.gmra.mxu0 %v7725
      %v8021 = vpop.f32.mrf.mxu0
      %v8022 = vadd.f32 0.0, %v8021
      %8023 = vmatmul.f32.gmra.mxu0 %v7898
      %v8024 = vpop.f32.mrf.mxu0
      %v8025 = vadd.f32 0.0, %v8024
      %8026 = vmatmul.f32.gmra.mxu0 %v7900
      %v8027 = vpop.f32.mrf.mxu0
      %v8028 = vadd.f32 0.0, %v8027
      %8029 = vdwg.mxu0
      %v8030 = vadd.f32 %v7855, %v7923
      %v8031 = vadd.f32 %v7856, %v7926
      %v8032 = vadd.f32 %v7857, %v7929
      %v8033 = vadd.f32 %v7858, %v7932
      %v8034 = vadd.f32 %v7859, %v7935
      %v8035 = vadd.f32 %v7860, %v7938
      %v8036 = vadd.f32 %v7861, %v7941
      %v8037 = vadd.f32 %v7862, %v7944
      %v8038 = vadd.f32 %v7863, %v7947
      %v8039 = vadd.f32 %v7864, %v7950
      %v8040 = vadd.f32 %v7865, %v7953
      %v8041 = vadd.f32 %v7866, %v7956
      %v8042 = vadd.f32 %v7867, %v7959
      %v8043 = vadd.f32 %v7868, %v7962
      %v8044 = vadd.f32 %v7869, %v7965
      %v8045 = vadd.f32 %v7870, %v7968
      %v8046 = vadd.f32 %v7871, %v7971
      %v8047 = vadd.f32 %v7872, %v7974
      %v8048 = vadd.f32 %v7873, %v7977
      %v8049 = vadd.f32 %v7874, %v7980
      %v8050 = vadd.f32 %v7875, %v7983
      %v8051 = vadd.f32 %v7876, %v7986
      %v8052 = vadd.f32 %v7877, %v7989
      %v8053 = vadd.f32 %v7878, %v7992
      %v8054 = vadd.f32 %v7879, %v7995
      %v8055 = vadd.f32 %v7880, %v7998
      %v8056 = vadd.f32 %v7881, %v8001
      %v8057 = vadd.f32 %v7882, %v8004
      %v8058 = vadd.f32 %v7883, %v8007
      %v8059 = vadd.f32 %v7884, %v8010
      %v8060 = vadd.f32 %v7885, %v8013
      %v8061 = vadd.f32 %v7886, %v8016
      %v8062 = vadd.f32 %v7887, %v8019
      %v8063 = vadd.f32 %v7888, %v8022
      %v8064 = vadd.f32 %v7889, %v8025
      %v8065 = vadd.f32 %v7890, %v8028
      %v8066 = vld [vmem:[%s4 + $0x1c] sm:$0xf]
      %v8067 = vrot.slane %v6235, 5
      %v8068 = vrot.slane %v6236, 5
      %v8069 = vsel %vm4811, %v8067, %v8068
      %v8070 = vrot.slane %v6237, 5
      %v8071 = vsel %vm4811, %v8068, %v8070
      %v8072 = vrot.slane %v6238, 5
      %v8073 = vsel %vm4811, %v8070, %v8072
      %v8074 = vrot.slane %v6239, 5
      %v8075 = vsel %vm4811, %v8072, %v8074
      %v8076 = vrot.slane %v6240, 5
      %v8077 = vsel %vm4811, %v8074, %v8076
      %v8078 = vrot.slane %v6241, 5
      %v8079 = vsel %vm4811, %v8076, %v8078
      %v8080 = vrot.slane %v6242, 5
      %v8081 = vsel %vm4811, %v8078, %v8080
      %v8082 = vrot.slane %v6243, 5
      %v8083 = vsel %vm4811, %v8080, %v8082
      %v8084 = vrot.slane %v6244, 5
      %v8085 = vsel %vm4811, %v8082, %v8084
      %v8086 = vrot.slane %v6245, 5
      %v8087 = vsel %vm4811, %v8084, %v8086
      %v8088 = vrot.slane %v6246, 5
      %v8089 = vsel %vm4811, %v8086, %v8088
      %v8090 = vrot.slane %v6247, 5
      %v8091 = vsel %vm4811, %v8088, %v8090
      %v8092 = vrot.slane %v6248, 5
      %v8093 = vsel %vm4811, %v8090, %v8092
      %v8094 = vrot.slane %v6249, 5
      %v8095 = vsel %vm4811, %v8092, %v8094
      %v8096 = vrot.slane %v6250, 5
      %v8097 = vsel %vm4811, %v8094, %v8096
      %v8098 = vrot.slane %v6251, 5
      %v8099 = vsel %vm4811, %v8096, %v8098
      %v8100 = vrot.slane %v6252, 5
      %v8101 = vsel %vm4811, %v8098, %v8100
      %v8102 = vrot.slane %v6253, 5
      %v8103 = vsel %vm4811, %v8100, %v8102
      %v8104 = vrot.slane %v6254, 5
      %v8105 = vsel %vm4811, %v8102, %v8104
      %v8106 = vrot.slane %v6255, 5
      %v8107 = vsel %vm4811, %v8104, %v8106
      %v8108 = vrot.slane %v6256, 5
      %v8109 = vsel %vm4811, %v8106, %v8108
      %v8110 = vrot.slane %v6257, 5
      %v8111 = vsel %vm4811, %v8108, %v8110
      %v8112 = vrot.slane %v6258, 5
      %v8113 = vsel %vm4811, %v8110, %v8112
      %v8114 = vrot.slane %v6259, 5
      %v8115 = vsel %vm4811, %v8112, %v8114
      %v8116 = vrot.slane %v6260, 5
      %v8117 = vsel %vm4811, %v8114, %v8116
      %v8118 = vrot.slane %v6261, 5
      %v8119 = vsel %vm4811, %v8116, %v8118
      %v8120 = vrot.slane %v6262, 5
      %v8121 = vsel %vm4811, %v8118, %v8120
      %v8122 = vrot.slane %v6263, 5
      %v8123 = vsel %vm4811, %v8120, %v8122
      %v8124 = vrot.slane %v6264, 5
      %v8125 = vsel %vm4811, %v8122, %v8124
      %v8126 = vrot.slane %v6265, 5
      %v8127 = vsel %vm4811, %v8124, %v8126
      %v8128 = vrot.slane %v6266, 5
      %v8129 = vsel %vm4811, %v8126, %v8128
      %v8130 = vrot.slane %v6267, 5
      %v8131 = vsel %vm4811, %v8128, %v8130
      %v8132 = vrot.slane %v6268, 5
      %v8133 = vsel %vm4811, %v8130, %v8132
      %v8134 = vrot.slane %v6269, 5
      %v8135 = vsel %vm4811, %v8132, %v8134
      %v8136 = vrot.slane %v6270, 5
      %v8137 = vsel %vm4811, %v8134, %v8136
      %v8138 = vrot.slane %v6271, 5
      %v8139 = vsel %vm4811, %v8136, %v8138
      %v8140 = vsel %vm346, %v8069, 0
      %v8142 = vsel %vm346, %v8071, 0
      %v8144 = vsel %vm346, %v8073, 0
      %v8146 = vsel %vm346, %v8075, 0
      %v8148 = vsel %vm346, %v8077, 0
      %v8150 = vsel %vm346, %v8079, 0
      %v8152 = vsel %vm346, %v8081, 0
      %v8154 = vsel %vm346, %v8083, 0
      %v8156 = vsel %vm346, %v8085, 0
      %v8158 = vsel %vm346, %v8087, 0
      %v8160 = vsel %vm346, %v8089, 0
      %v8162 = vsel %vm346, %v8091, 0
      %v8164 = vsel %vm346, %v8093, 0
      %v8166 = vsel %vm346, %v8095, 0
      %v8168 = vsel %vm346, %v8097, 0
      %v8170 = vsel %vm346, %v8099, 0
      %v8172 = vsel %vm346, %v8101, 0
      %v8174 = vsel %vm346, %v8103, 0
      %v8176 = vsel %vm346, %v8105, 0
      %v8178 = vsel %vm346, %v8107, 0
      %v8180 = vsel %vm346, %v8109, 0
      %v8182 = vsel %vm346, %v8111, 0
      %v8184 = vsel %vm346, %v8113, 0
      %v8186 = vsel %vm346, %v8115, 0
      %v8188 = vsel %vm346, %v8117, 0
      %v8190 = vsel %vm346, %v8119, 0
      %v8192 = vsel %vm346, %v8121, 0
      %v8194 = vsel %vm346, %v8123, 0
      %v8196 = vsel %vm346, %v8125, 0
      %v8198 = vsel %vm346, %v8127, 0
      %v8200 = vsel %vm346, %v8129, 0
      %v8202 = vsel %vm346, %v8131, 0
      %v8204 = vsel %vm346, %v8133, 0
      %v8206 = vsel %vm346, %v8135, 0
      %v8208 = vsel %vm346, %v8137, 0
      %v8210 = vsel %vm346, %v8139, 0
      %v8213 = vsel %vm455, %v8066, 0
      %8215 = vmatpush.msra.mxu0 0.0
      %8216 = vmatpush.msra.mxu0 0.0
      %8217 = vmatpush.msra.mxu0 0.0
      %8218 = vmatpush.msra.mxu0 0.0
      %8219 = vmatpush.msra.mxu0 0.0
      %8220 = vmatpush.msra.mxu0 0.0
      %8221 = vmatpush.msra.mxu0 0.0
      %8222 = vmatpush.msra.mxu0 0.0
      %8223 = vmatpush.msra.mxu0 0.0
      %8224 = vmatpush.msra.mxu0 0.0
      %8225 = vmatpush.msra.mxu0 0.0
      %8226 = vmatpush.msra.mxu0 0.0
      %8227 = vmatpush.msra.mxu0 0.0
      %8228 = vmatpush.msra.mxu0 0.0
      %8229 = vmatpush.msra.mxu0 0.0
      %8230 = vmatpush.msra.mxu0 %v8213
      %8231 = vmatmul.f32.gmra.mxu0 %v8140
      %v8232 = vpop.f32.mrf.mxu0
      %v8233 = vadd.f32 0.0, %v8232
      %8234 = vmatmul.f32.gmra.mxu0 %v8142
      %v8235 = vpop.f32.mrf.mxu0
      %v8236 = vadd.f32 0.0, %v8235
      %8237 = vmatmul.f32.gmra.mxu0 %v8144
      %v8238 = vpop.f32.mrf.mxu0
      %v8239 = vadd.f32 0.0, %v8238
      %8240 = vmatmul.f32.gmra.mxu0 %v8146
      %v8241 = vpop.f32.mrf.mxu0
      %v8242 = vadd.f32 0.0, %v8241
      %8243 = vmatmul.f32.gmra.mxu0 %v8148
      %v8244 = vpop.f32.mrf.mxu0
      %v8245 = vadd.f32 0.0, %v8244
      %8246 = vmatmul.f32.gmra.mxu0 %v8150
      %v8247 = vpop.f32.mrf.mxu0
      %v8248 = vadd.f32 0.0, %v8247
      %8249 = vmatmul.f32.gmra.mxu0 %v8152
      %v8250 = vpop.f32.mrf.mxu0
      %v8251 = vadd.f32 0.0, %v8250
      %8252 = vmatmul.f32.gmra.mxu0 %v8154
      %v8253 = vpop.f32.mrf.mxu0
      %v8254 = vadd.f32 0.0, %v8253
      %8255 = vmatmul.f32.gmra.mxu0 %v8156
      %v8256 = vpop.f32.mrf.mxu0
      %v8257 = vadd.f32 0.0, %v8256
      %8258 = vmatmul.f32.gmra.mxu0 %v8158
      %v8259 = vpop.f32.mrf.mxu0
      %v8260 = vadd.f32 0.0, %v8259
      %8261 = vmatmul.f32.gmra.mxu0 %v8160
      %v8262 = vpop.f32.mrf.mxu0
      %v8263 = vadd.f32 0.0, %v8262
      %8264 = vmatmul.f32.gmra.mxu0 %v8162
      %v8265 = vpop.f32.mrf.mxu0
      %v8266 = vadd.f32 0.0, %v8265
      %8267 = vmatmul.f32.gmra.mxu0 %v8164
      %v8268 = vpop.f32.mrf.mxu0
      %v8269 = vadd.f32 0.0, %v8268
      %8270 = vmatmul.f32.gmra.mxu0 %v8166
      %v8271 = vpop.f32.mrf.mxu0
      %v8272 = vadd.f32 0.0, %v8271
      %8273 = vmatmul.f32.gmra.mxu0 %v8168
      %v8274 = vpop.f32.mrf.mxu0
      %v8275 = vadd.f32 0.0, %v8274
      %8276 = vmatmul.f32.gmra.mxu0 %v8170
      %v8277 = vpop.f32.mrf.mxu0
      %v8278 = vadd.f32 0.0, %v8277
      %8279 = vmatmul.f32.gmra.mxu0 %v8172
      %v8280 = vpop.f32.mrf.mxu0
      %v8281 = vadd.f32 0.0, %v8280
      %8282 = vmatmul.f32.gmra.mxu0 %v8174
      %v8283 = vpop.f32.mrf.mxu0
      %v8284 = vadd.f32 0.0, %v8283
      %8285 = vmatmul.f32.gmra.mxu0 %v8176
      %v8286 = vpop.f32.mrf.mxu0
      %v8287 = vadd.f32 0.0, %v8286
      %8288 = vmatmul.f32.gmra.mxu0 %v8178
      %v8289 = vpop.f32.mrf.mxu0
      %v8290 = vadd.f32 0.0, %v8289
      %8291 = vmatmul.f32.gmra.mxu0 %v8180
      %v8292 = vpop.f32.mrf.mxu0
      %v8293 = vadd.f32 0.0, %v8292
      %8294 = vmatmul.f32.gmra.mxu0 %v8182
      %v8295 = vpop.f32.mrf.mxu0
      %v8296 = vadd.f32 0.0, %v8295
      %8297 = vmatmul.f32.gmra.mxu0 %v8184
      %v8298 = vpop.f32.mrf.mxu0
      %v8299 = vadd.f32 0.0, %v8298
      %8300 = vmatmul.f32.gmra.mxu0 %v8186
      %v8301 = vpop.f32.mrf.mxu0
      %v8302 = vadd.f32 0.0, %v8301
      %8303 = vmatmul.f32.gmra.mxu0 %v8188
      %v8304 = vpop.f32.mrf.mxu0
      %v8305 = vadd.f32 0.0, %v8304
      %8306 = vmatmul.f32.gmra.mxu0 %v8190
      %v8307 = vpop.f32.mrf.mxu0
      %v8308 = vadd.f32 0.0, %v8307
      %8309 = vmatmul.f32.gmra.mxu0 %v8192
      %v8310 = vpop.f32.mrf.mxu0
      %v8311 = vadd.f32 0.0, %v8310
      %8312 = vmatmul.f32.gmra.mxu0 %v8194
      %v8313 = vpop.f32.mrf.mxu0
      %v8314 = vadd.f32 0.0, %v8313
      %8315 = vmatmul.f32.gmra.mxu0 %v8196
      %v8316 = vpop.f32.mrf.mxu0
      %v8317 = vadd.f32 0.0, %v8316
      %8318 = vmatmul.f32.gmra.mxu0 %v8198
      %v8319 = vpop.f32.mrf.mxu0
      %v8320 = vadd.f32 0.0, %v8319
      %8321 = vmatmul.f32.gmra.mxu0 %v8200
      %v8322 = vpop.f32.mrf.mxu0
      %v8323 = vadd.f32 0.0, %v8322
      %8324 = vmatmul.f32.gmra.mxu0 %v8202
      %v8325 = vpop.f32.mrf.mxu0
      %v8326 = vadd.f32 0.0, %v8325
      %8327 = vmatmul.f32.gmra.mxu0 %v8204
      %v8328 = vpop.f32.mrf.mxu0
      %v8329 = vadd.f32 0.0, %v8328
      %8330 = vmatmul.f32.gmra.mxu0 %v8206
      %v8331 = vpop.f32.mrf.mxu0
      %v8332 = vadd.f32 0.0, %v8331
      %8333 = vmatmul.f32.gmra.mxu0 %v8208
      %v8334 = vpop.f32.mrf.mxu0
      %v8335 = vadd.f32 0.0, %v8334
      %8336 = vmatmul.f32.gmra.mxu0 %v8210
      %v8337 = vpop.f32.mrf.mxu0
      %v8338 = vadd.f32 0.0, %v8337
      %8339 = vdwg.mxu0
      %v8340 = vadd.f32 %v8030, %v8233
      %v8341 = vadd.f32 %v8031, %v8236
      %v8342 = vadd.f32 %v8032, %v8239
      %v8343 = vadd.f32 %v8033, %v8242
      %v8344 = vadd.f32 %v8034, %v8245
      %v8345 = vadd.f32 %v8035, %v8248
      %v8346 = vadd.f32 %v8036, %v8251
      %v8347 = vadd.f32 %v8037, %v8254
      %v8348 = vadd.f32 %v8038, %v8257
      %v8349 = vadd.f32 %v8039, %v8260
      %v8350 = vadd.f32 %v8040, %v8263
      %v8351 = vadd.f32 %v8041, %v8266
      %v8352 = vadd.f32 %v8042, %v8269
      %v8353 = vadd.f32 %v8043, %v8272
      %v8354 = vadd.f32 %v8044, %v8275
      %v8355 = vadd.f32 %v8045, %v8278
      %v8356 = vadd.f32 %v8046, %v8281
      %v8357 = vadd.f32 %v8047, %v8284
      %v8358 = vadd.f32 %v8048, %v8287
      %v8359 = vadd.f32 %v8049, %v8290
      %v8360 = vadd.f32 %v8050, %v8293
      %v8361 = vadd.f32 %v8051, %v8296
      %v8362 = vadd.f32 %v8052, %v8299
      %v8363 = vadd.f32 %v8053, %v8302
      %v8364 = vadd.f32 %v8054, %v8305
      %v8365 = vadd.f32 %v8055, %v8308
      %v8366 = vadd.f32 %v8056, %v8311
      %v8367 = vadd.f32 %v8057, %v8314
      %v8368 = vadd.f32 %v8058, %v8317
      %v8369 = vadd.f32 %v8059, %v8320
      %v8370 = vadd.f32 %v8060, %v8323
      %v8371 = vadd.f32 %v8061, %v8326
      %v8372 = vadd.f32 %v8062, %v8329
      %v8373 = vadd.f32 %v8063, %v8332
      %v8374 = vadd.f32 %v8064, %v8335
      %v8375 = vadd.f32 %v8065, %v8338
      %v8376 = vld [vmem:[%s4 + $0x20] sm:$0xf]
      %v8377 = vrot.slane %v6235, 6
      %v8378 = vrot.slane %v6236, 6
      %v8379 = vsel %vm5303, %v8377, %v8378
      %v8380 = vrot.slane %v6237, 6
      %v8381 = vsel %vm5303, %v8378, %v8380
      %v8382 = vrot.slane %v6238, 6
      %v8383 = vsel %vm5303, %v8380, %v8382
      %v8384 = vrot.slane %v6239, 6
      %v8385 = vsel %vm5303, %v8382, %v8384
      %v8386 = vrot.slane %v6240, 6
      %v8387 = vsel %vm5303, %v8384, %v8386
      %v8388 = vrot.slane %v6241, 6
      %v8389 = vsel %vm5303, %v8386, %v8388
      %v8390 = vrot.slane %v6242, 6
      %v8391 = vsel %vm5303, %v8388, %v8390
      %v8392 = vrot.slane %v6243, 6
      %v8393 = vsel %vm5303, %v8390, %v8392
      %v8394 = vrot.slane %v6244, 6
      %v8395 = vsel %vm5303, %v8392, %v8394
      %v8396 = vrot.slane %v6245, 6
      %v8397 = vsel %vm5303, %v8394, %v8396
      %v8398 = vrot.slane %v6246, 6
      %v8399 = vsel %vm5303, %v8396, %v8398
      %v8400 = vrot.slane %v6247, 6
      %v8401 = vsel %vm5303, %v8398, %v8400
      %v8402 = vrot.slane %v6248, 6
      %v8403 = vsel %vm5303, %v8400, %v8402
      %v8404 = vrot.slane %v6249, 6
      %v8405 = vsel %vm5303, %v8402, %v8404
      %v8406 = vrot.slane %v6250, 6
      %v8407 = vsel %vm5303, %v8404, %v8406
      %v8408 = vrot.slane %v6251, 6
      %v8409 = vsel %vm5303, %v8406, %v8408
      %v8410 = vrot.slane %v6252, 6
      %v8411 = vsel %vm5303, %v8408, %v8410
      %v8412 = vrot.slane %v6253, 6
      %v8413 = vsel %vm5303, %v8410, %v8412
      %v8414 = vrot.slane %v6254, 6
      %v8415 = vsel %vm5303, %v8412, %v8414
      %v8416 = vrot.slane %v6255, 6
      %v8417 = vsel %vm5303, %v8414, %v8416
      %v8418 = vrot.slane %v6256, 6
      %v8419 = vsel %vm5303, %v8416, %v8418
      %v8420 = vrot.slane %v6257, 6
      %v8421 = vsel %vm5303, %v8418, %v8420
      %v8422 = vrot.slane %v6258, 6
      %v8423 = vsel %vm5303, %v8420, %v8422
      %v8424 = vrot.slane %v6259, 6
      %v8425 = vsel %vm5303, %v8422, %v8424
      %v8426 = vrot.slane %v6260, 6
      %v8427 = vsel %vm5303, %v8424, %v8426
      %v8428 = vrot.slane %v6261, 6
      %v8429 = vsel %vm5303, %v8426, %v8428
      %v8430 = vrot.slane %v6262, 6
      %v8431 = vsel %vm5303, %v8428, %v8430
      %v8432 = vrot.slane %v6263, 6
      %v8433 = vsel %vm5303, %v8430, %v8432
      %v8434 = vrot.slane %v6264, 6
      %v8435 = vsel %vm5303, %v8432, %v8434
      %v8436 = vrot.slane %v6265, 6
      %v8437 = vsel %vm5303, %v8434, %v8436
      %v8438 = vrot.slane %v6266, 6
      %v8439 = vsel %vm5303, %v8436, %v8438
      %v8440 = vrot.slane %v6267, 6
      %v8441 = vsel %vm5303, %v8438, %v8440
      %v8442 = vrot.slane %v6268, 6
      %v8443 = vsel %vm5303, %v8440, %v8442
      %v8444 = vrot.slane %v6269, 6
      %v8445 = vsel %vm5303, %v8442, %v8444
      %v8446 = vrot.slane %v6270, 6
      %v8447 = vsel %vm5303, %v8444, %v8446
      %v8448 = vrot.slane %v6271, 6
      %v8449 = vsel %vm5303, %v8446, %v8448
      %v8450 = vsel %vm346, %v8379, 0
      %v8452 = vsel %vm346, %v8381, 0
      %v8454 = vsel %vm346, %v8383, 0
      %v8456 = vsel %vm346, %v8385, 0
      %v8458 = vsel %vm346, %v8387, 0
      %v8460 = vsel %vm346, %v8389, 0
      %v8462 = vsel %vm346, %v8391, 0
      %v8464 = vsel %vm346, %v8393, 0
      %v8466 = vsel %vm346, %v8395, 0
      %v8468 = vsel %vm346, %v8397, 0
      %v8470 = vsel %vm346, %v8399, 0
      %v8472 = vsel %vm346, %v8401, 0
      %v8474 = vsel %vm346, %v8403, 0
      %v8476 = vsel %vm346, %v8405, 0
      %v8478 = vsel %vm346, %v8407, 0
      %v8480 = vsel %vm346, %v8409, 0
      %v8482 = vsel %vm346, %v8411, 0
      %v8484 = vsel %vm346, %v8413, 0
      %v8486 = vsel %vm346, %v8415, 0
      %v8488 = vsel %vm346, %v8417, 0
      %v8490 = vsel %vm346, %v8419, 0
      %v8492 = vsel %vm346, %v8421, 0
      %v8494 = vsel %vm346, %v8423, 0
      %v8496 = vsel %vm346, %v8425, 0
      %v8498 = vsel %vm346, %v8427, 0
      %v8500 = vsel %vm346, %v8429, 0
      %v8502 = vsel %vm346, %v8431, 0
      %v8504 = vsel %vm346, %v8433, 0
      %v8506 = vsel %vm346, %v8435, 0
      %v8508 = vsel %vm346, %v8437, 0
      %v8510 = vsel %vm346, %v8439, 0
      %v8512 = vsel %vm346, %v8441, 0
      %v8514 = vsel %vm346, %v8443, 0
      %v8516 = vsel %vm346, %v8445, 0
      %v8518 = vsel %vm346, %v8447, 0
      %v8520 = vsel %vm346, %v8449, 0
      %v8523 = vsel %vm455, %v8376, 0
      %8525 = vmatpush.msra.mxu0 0.0
      %8526 = vmatpush.msra.mxu0 0.0
      %8527 = vmatpush.msra.mxu0 0.0
      %8528 = vmatpush.msra.mxu0 0.0
      %8529 = vmatpush.msra.mxu0 0.0
      %8530 = vmatpush.msra.mxu0 0.0
      %8531 = vmatpush.msra.mxu0 0.0
      %8532 = vmatpush.msra.mxu0 0.0
      %8533 = vmatpush.msra.mxu0 0.0
      %8534 = vmatpush.msra.mxu0 0.0
      %8535 = vmatpush.msra.mxu0 0.0
      %8536 = vmatpush.msra.mxu0 0.0
      %8537 = vmatpush.msra.mxu0 0.0
      %8538 = vmatpush.msra.mxu0 0.0
      %8539 = vmatpush.msra.mxu0 0.0
      %8540 = vmatpush.msra.mxu0 %v8523
      %8541 = vmatmul.f32.gmra.mxu0 %v8450
      %v8542 = vpop.f32.mrf.mxu0
      %v8543 = vadd.f32 0.0, %v8542
      %8544 = vmatmul.f32.gmra.mxu0 %v8452
      %v8545 = vpop.f32.mrf.mxu0
      %v8546 = vadd.f32 0.0, %v8545
      %8547 = vmatmul.f32.gmra.mxu0 %v8454
      %v8548 = vpop.f32.mrf.mxu0
      %v8549 = vadd.f32 0.0, %v8548
      %8550 = vmatmul.f32.gmra.mxu0 %v8456
      %v8551 = vpop.f32.mrf.mxu0
      %v8552 = vadd.f32 0.0, %v8551
      %8553 = vmatmul.f32.gmra.mxu0 %v8458
      %v8554 = vpop.f32.mrf.mxu0
      %v8555 = vadd.f32 0.0, %v8554
      %8556 = vmatmul.f32.gmra.mxu0 %v8460
      %v8557 = vpop.f32.mrf.mxu0
      %v8558 = vadd.f32 0.0, %v8557
      %8559 = vmatmul.f32.gmra.mxu0 %v8462
      %v8560 = vpop.f32.mrf.mxu0
      %v8561 = vadd.f32 0.0, %v8560
      %8562 = vmatmul.f32.gmra.mxu0 %v8464
      %v8563 = vpop.f32.mrf.mxu0
      %v8564 = vadd.f32 0.0, %v8563
      %8565 = vmatmul.f32.gmra.mxu0 %v8466
      %v8566 = vpop.f32.mrf.mxu0
      %v8567 = vadd.f32 0.0, %v8566
      %8568 = vmatmul.f32.gmra.mxu0 %v8468
      %v8569 = vpop.f32.mrf.mxu0
      %v8570 = vadd.f32 0.0, %v8569
      %8571 = vmatmul.f32.gmra.mxu0 %v8470
      %v8572 = vpop.f32.mrf.mxu0
      %v8573 = vadd.f32 0.0, %v8572
      %8574 = vmatmul.f32.gmra.mxu0 %v8472
      %v8575 = vpop.f32.mrf.mxu0
      %v8576 = vadd.f32 0.0, %v8575
      %8577 = vmatmul.f32.gmra.mxu0 %v8474
      %v8578 = vpop.f32.mrf.mxu0
      %v8579 = vadd.f32 0.0, %v8578
      %8580 = vmatmul.f32.gmra.mxu0 %v8476
      %v8581 = vpop.f32.mrf.mxu0
      %v8582 = vadd.f32 0.0, %v8581
      %8583 = vmatmul.f32.gmra.mxu0 %v8478
      %v8584 = vpop.f32.mrf.mxu0
      %v8585 = vadd.f32 0.0, %v8584
      %8586 = vmatmul.f32.gmra.mxu0 %v8480
      %v8587 = vpop.f32.mrf.mxu0
      %v8588 = vadd.f32 0.0, %v8587
      %8589 = vmatmul.f32.gmra.mxu0 %v8482
      %v8590 = vpop.f32.mrf.mxu0
      %v8591 = vadd.f32 0.0, %v8590
      %8592 = vmatmul.f32.gmra.mxu0 %v8484
      %v8593 = vpop.f32.mrf.mxu0
      %v8594 = vadd.f32 0.0, %v8593
      %8595 = vmatmul.f32.gmra.mxu0 %v8486
      %v8596 = vpop.f32.mrf.mxu0
      %v8597 = vadd.f32 0.0, %v8596
      %8598 = vmatmul.f32.gmra.mxu0 %v8488
      %v8599 = vpop.f32.mrf.mxu0
      %v8600 = vadd.f32 0.0, %v8599
      %8601 = vmatmul.f32.gmra.mxu0 %v8490
      %v8602 = vpop.f32.mrf.mxu0
      %v8603 = vadd.f32 0.0, %v8602
      %8604 = vmatmul.f32.gmra.mxu0 %v8492
      %v8605 = vpop.f32.mrf.mxu0
      %v8606 = vadd.f32 0.0, %v8605
      %8607 = vmatmul.f32.gmra.mxu0 %v8494
      %v8608 = vpop.f32.mrf.mxu0
      %v8609 = vadd.f32 0.0, %v8608
      %8610 = vmatmul.f32.gmra.mxu0 %v8496
      %v8611 = vpop.f32.mrf.mxu0
      %v8612 = vadd.f32 0.0, %v8611
      %8613 = vmatmul.f32.gmra.mxu0 %v8498
      %v8614 = vpop.f32.mrf.mxu0
      %v8615 = vadd.f32 0.0, %v8614
      %8616 = vmatmul.f32.gmra.mxu0 %v8500
      %v8617 = vpop.f32.mrf.mxu0
      %v8618 = vadd.f32 0.0, %v8617
      %8619 = vmatmul.f32.gmra.mxu0 %v8502
      %v8620 = vpop.f32.mrf.mxu0
      %v8621 = vadd.f32 0.0, %v8620
      %8622 = vmatmul.f32.gmra.mxu0 %v8504
      %v8623 = vpop.f32.mrf.mxu0
      %v8624 = vadd.f32 0.0, %v8623
      %8625 = vmatmul.f32.gmra.mxu0 %v8506
      %v8626 = vpop.f32.mrf.mxu0
      %v8627 = vadd.f32 0.0, %v8626
      %8628 = vmatmul.f32.gmra.mxu0 %v8508
      %v8629 = vpop.f32.mrf.mxu0
      %v8630 = vadd.f32 0.0, %v8629
      %8631 = vmatmul.f32.gmra.mxu0 %v8510
      %v8632 = vpop.f32.mrf.mxu0
      %v8633 = vadd.f32 0.0, %v8632
      %8634 = vmatmul.f32.gmra.mxu0 %v8512
      %v8635 = vpop.f32.mrf.mxu0
      %v8636 = vadd.f32 0.0, %v8635
      %8637 = vmatmul.f32.gmra.mxu0 %v8514
      %v8638 = vpop.f32.mrf.mxu0
      %v8639 = vadd.f32 0.0, %v8638
      %8640 = vmatmul.f32.gmra.mxu0 %v8516
      %v8641 = vpop.f32.mrf.mxu0
      %v8642 = vadd.f32 0.0, %v8641
      %8643 = vmatmul.f32.gmra.mxu0 %v8518
      %v8644 = vpop.f32.mrf.mxu0
      %v8645 = vadd.f32 0.0, %v8644
      %8646 = vmatmul.f32.gmra.mxu0 %v8520
      %v8647 = vpop.f32.mrf.mxu0
      %v8648 = vadd.f32 0.0, %v8647
      %8649 = vdwg.mxu0
      %v8650 = vadd.f32 %v8340, %v8543
      %v8651 = vadd.f32 %v8341, %v8546
      %v8652 = vadd.f32 %v8342, %v8549
      %v8653 = vadd.f32 %v8343, %v8552
      %v8654 = vadd.f32 %v8344, %v8555
      %v8655 = vadd.f32 %v8345, %v8558
      %v8656 = vadd.f32 %v8346, %v8561
      %v8657 = vadd.f32 %v8347, %v8564
      %v8658 = vadd.f32 %v8348, %v8567
      %v8659 = vadd.f32 %v8349, %v8570
      %v8660 = vadd.f32 %v8350, %v8573
      %v8661 = vadd.f32 %v8351, %v8576
      %v8662 = vadd.f32 %v8352, %v8579
      %v8663 = vadd.f32 %v8353, %v8582
      %v8664 = vadd.f32 %v8354, %v8585
      %v8665 = vadd.f32 %v8355, %v8588
      %v8666 = vadd.f32 %v8356, %v8591
      %v8667 = vadd.f32 %v8357, %v8594
      %v8668 = vadd.f32 %v8358, %v8597
      %v8669 = vadd.f32 %v8359, %v8600
      %v8670 = vadd.f32 %v8360, %v8603
      %v8671 = vadd.f32 %v8361, %v8606
      %v8672 = vadd.f32 %v8362, %v8609
      %v8673 = vadd.f32 %v8363, %v8612
      %v8674 = vadd.f32 %v8364, %v8615
      %v8675 = vadd.f32 %v8365, %v8618
      %v8676 = vadd.f32 %v8366, %v8621
      %v8677 = vadd.f32 %v8367, %v8624
      %v8678 = vadd.f32 %v8368, %v8627
      %v8679 = vadd.f32 %v8369, %v8630
      %v8680 = vadd.f32 %v8370, %v8633
      %v8681 = vadd.f32 %v8371, %v8636
      %v8682 = vadd.f32 %v8372, %v8639
      %v8683 = vadd.f32 %v8373, %v8642
      %v8684 = vadd.f32 %v8374, %v8645
      %v8685 = vadd.f32 %v8375, %v8648
      %v8686 = vld [vmem:[%s5] sm:$0x1]
      %v8688 = vperm.slane %v8686, 0
      %v8690 = vadd.f32 %v8650, %v8688
      %v8691 = vadd.f32 %v8651, %v8688
      %v8692 = vadd.f32 %v8652, %v8688
      %v8693 = vadd.f32 %v8653, %v8688
      %v8694 = vadd.f32 %v8654, %v8688
      %v8695 = vadd.f32 %v8655, %v8688
      %v8696 = vadd.f32 %v8656, %v8688
      %v8697 = vadd.f32 %v8657, %v8688
      %v8698 = vadd.f32 %v8658, %v8688
      %v8699 = vadd.f32 %v8659, %v8688
      %v8700 = vadd.f32 %v8660, %v8688
      %v8701 = vadd.f32 %v8661, %v8688
      %v8702 = vadd.f32 %v8662, %v8688
      %v8703 = vadd.f32 %v8663, %v8688
      %v8704 = vadd.f32 %v8664, %v8688
      %v8705 = vadd.f32 %v8665, %v8688
      %v8706 = vadd.f32 %v8666, %v8688
      %v8707 = vadd.f32 %v8667, %v8688
      %v8708 = vadd.f32 %v8668, %v8688
      %v8709 = vadd.f32 %v8669, %v8688
      %v8710 = vadd.f32 %v8670, %v8688
      %v8711 = vadd.f32 %v8671, %v8688
      %v8712 = vadd.f32 %v8672, %v8688
      %v8713 = vadd.f32 %v8673, %v8688
      %v8714 = vadd.f32 %v8674, %v8688
      %v8715 = vadd.f32 %v8675, %v8688
      %v8716 = vadd.f32 %v8676, %v8688
      %v8717 = vadd.f32 %v8677, %v8688
      %v8718 = vadd.f32 %v8678, %v8688
      %v8719 = vadd.f32 %v8679, %v8688
      %v8720 = vadd.f32 %v8680, %v8688
      %v8721 = vadd.f32 %v8681, %v8688
      %v8722 = vadd.f32 %v8682, %v8688
      %v8723 = vadd.f32 %v8683, %v8688
      %v8724 = vadd.f32 %v8684, %v8688
      %v8725 = vadd.f32 %v8685, %v8688
      %v8726 = vmul.f32 %v8690, %v4356
      %v8727 = vmul.f32 %v8691, %v4357
      %v8728 = vmul.f32 %v8692, %v4358
      %v8729 = vmul.f32 %v8693, %v4359
      %v8730 = vmul.f32 %v8694, %v4360
      %v8731 = vmul.f32 %v8695, %v4361
      %v8732 = vmul.f32 %v8696, %v4362
      %v8733 = vmul.f32 %v8697, %v4363
      %v8734 = vmul.f32 %v8698, %v4364
      %v8735 = vmul.f32 %v8699, %v4365
      %v8736 = vmul.f32 %v8700, %v4366
      %v8737 = vmul.f32 %v8701, %v4367
      %v8738 = vmul.f32 %v8702, %v4368
      %v8739 = vmul.f32 %v8703, %v4369
      %v8740 = vmul.f32 %v8704, %v4370
      %v8741 = vmul.f32 %v8705, %v4371
      %v8742 = vmul.f32 %v8706, %v4372
      %v8743 = vmul.f32 %v8707, %v4373
      %v8744 = vmul.f32 %v8708, %v4374
      %v8745 = vmul.f32 %v8709, %v4375
      %v8746 = vmul.f32 %v8710, %v4376
      %v8747 = vmul.f32 %v8711, %v4377
      %v8748 = vmul.f32 %v8712, %v4378
      %v8749 = vmul.f32 %v8713, %v4379
      %v8750 = vmul.f32 %v8714, %v4380
      %v8751 = vmul.f32 %v8715, %v4381
      %v8752 = vmul.f32 %v8716, %v4382
      %v8753 = vmul.f32 %v8717, %v4383
      %v8754 = vmul.f32 %v8718, %v4384
      %v8755 = vmul.f32 %v8719, %v4385
      %v8756 = vmul.f32 %v8720, %v4386
      %v8757 = vmul.f32 %v8721, %v4387
      %v8758 = vmul.f32 %v8722, %v4388
      %v8759 = vmul.f32 %v8723, %v4389
      %v8760 = vmul.f32 %v8724, %v4390
      %v8761 = vmul.f32 %v8725, %v4391
      %v8762 = vsel %vm346, %v8726, 0.0
      %v8763 = vsel %vm346, %v8727, 0.0
      %v8764 = vadd.f32 %v8762, %v8763
      %v8765 = vsel %vm346, %v8728, 0.0
      %v8766 = vadd.f32 %v8764, %v8765
      %v8767 = vsel %vm346, %v8729, 0.0
      %v8768 = vadd.f32 %v8766, %v8767
      %v8769 = vsel %vm346, %v8730, 0.0
      %v8770 = vadd.f32 %v8768, %v8769
      %v8771 = vsel %vm346, %v8731, 0.0
      %v8772 = vadd.f32 %v8770, %v8771
      %v8773 = vsel %vm346, %v8732, 0.0
      %v8774 = vadd.f32 %v8772, %v8773
      %v8775 = vsel %vm346, %v8733, 0.0
      %v8776 = vadd.f32 %v8774, %v8775
      %v8777 = vsel %vm346, %v8734, 0.0
      %v8778 = vadd.f32 %v8776, %v8777
      %v8779 = vsel %vm346, %v8735, 0.0
      %v8780 = vadd.f32 %v8778, %v8779
      %v8781 = vsel %vm346, %v8736, 0.0
      %v8782 = vadd.f32 %v8780, %v8781
      %v8783 = vsel %vm346, %v8737, 0.0
      %v8784 = vadd.f32 %v8782, %v8783
      %v8785 = vsel %vm346, %v8738, 0.0
      %v8786 = vadd.f32 %v8784, %v8785
      %v8787 = vsel %vm346, %v8739, 0.0
      %v8788 = vadd.f32 %v8786, %v8787
      %v8789 = vsel %vm346, %v8740, 0.0
      %v8790 = vadd.f32 %v8788, %v8789
      %v8791 = vsel %vm346, %v8741, 0.0
      %v8792 = vadd.f32 %v8790, %v8791
      %v8793 = vsel %vm346, %v8742, 0.0
      %v8794 = vadd.f32 %v8792, %v8793
      %v8795 = vsel %vm346, %v8743, 0.0
      %v8796 = vadd.f32 %v8794, %v8795
      %v8797 = vsel %vm346, %v8744, 0.0
      %v8798 = vadd.f32 %v8796, %v8797
      %v8799 = vsel %vm346, %v8745, 0.0
      %v8800 = vadd.f32 %v8798, %v8799
      %v8801 = vsel %vm346, %v8746, 0.0
      %v8802 = vadd.f32 %v8800, %v8801
      %v8803 = vsel %vm346, %v8747, 0.0
      %v8804 = vadd.f32 %v8802, %v8803
      %v8805 = vsel %vm346, %v8748, 0.0
      %v8806 = vadd.f32 %v8804, %v8805
      %v8807 = vsel %vm346, %v8749, 0.0
      %v8808 = vadd.f32 %v8806, %v8807
      %v8809 = vsel %vm346, %v8750, 0.0
      %v8810 = vadd.f32 %v8808, %v8809
      %v8811 = vsel %vm346, %v8751, 0.0
      %v8812 = vadd.f32 %v8810, %v8811
      %v8813 = vsel %vm346, %v8752, 0.0
      %v8814 = vadd.f32 %v8812, %v8813
      %v8815 = vsel %vm346, %v8753, 0.0
      %v8816 = vadd.f32 %v8814, %v8815
      %v8817 = vsel %vm346, %v8754, 0.0
      %v8818 = vadd.f32 %v8816, %v8817
      %v8819 = vsel %vm346, %v8755, 0.0
      %v8820 = vadd.f32 %v8818, %v8819
      %v8821 = vsel %vm346, %v8756, 0.0
      %v8822 = vadd.f32 %v8820, %v8821
      %v8823 = vsel %vm346, %v8757, 0.0
      %v8824 = vadd.f32 %v8822, %v8823
      %v8825 = vsel %vm346, %v8758, 0.0
      %v8826 = vadd.f32 %v8824, %v8825
      %v8827 = vsel %vm346, %v8759, 0.0
      %v8828 = vadd.f32 %v8826, %v8827
      %v8829 = vsel %vm346, %v8760, 0.0
      %v8830 = vadd.f32 %v8828, %v8829
      %v8831 = vsel %vm346, %v8761, 0.0
      %v8832 = vadd.f32 %v8830, %v8831
      %v8833 = vrot.slane %v8832, 4
      %v8834 = vadd.f32 %v8832, %v8833
      %v8835 = vrot.slane %v8834, 2
      %v8836 = vadd.f32 %v8834, %v8835
      %v8837 = vrot.slane %v8836, 1
      %v8838 = vadd.f32 %v8836, %v8837
      %v8839 = vmul.f32 %v8838, 0.00390625
      %v8840 = vsub.f32 %v8690, %v8839
      %v8841 = vsub.f32 %v8691, %v8839
      %v8842 = vsub.f32 %v8692, %v8839
      %v8843 = vsub.f32 %v8693, %v8839
      %v8844 = vsub.f32 %v8694, %v8839
      %v8845 = vsub.f32 %v8695, %v8839
      %v8846 = vsub.f32 %v8696, %v8839
      %v8847 = vsub.f32 %v8697, %v8839
      %v8848 = vsub.f32 %v8698, %v8839
      %v8849 = vsub.f32 %v8699, %v8839
      %v8850 = vsub.f32 %v8700, %v8839
      %v8851 = vsub.f32 %v8701, %v8839
      %v8852 = vsub.f32 %v8702, %v8839
      %v8853 = vsub.f32 %v8703, %v8839
      %v8854 = vsub.f32 %v8704, %v8839
      %v8855 = vsub.f32 %v8705, %v8839
      %v8856 = vsub.f32 %v8706, %v8839
      %v8857 = vsub.f32 %v8707, %v8839
      %v8858 = vsub.f32 %v8708, %v8839
      %v8859 = vsub.f32 %v8709, %v8839
      %v8860 = vsub.f32 %v8710, %v8839
      %v8861 = vsub.f32 %v8711, %v8839
      %v8862 = vsub.f32 %v8712, %v8839
      %v8863 = vsub.f32 %v8713, %v8839
      %v8864 = vsub.f32 %v8714, %v8839
      %v8865 = vsub.f32 %v8715, %v8839
      %v8866 = vsub.f32 %v8716, %v8839
      %v8867 = vsub.f32 %v8717, %v8839
      %v8868 = vsub.f32 %v8718, %v8839
      %v8869 = vsub.f32 %v8719, %v8839
      %v8870 = vsub.f32 %v8720, %v8839
      %v8871 = vsub.f32 %v8721, %v8839
      %v8872 = vsub.f32 %v8722, %v8839
      %v8873 = vsub.f32 %v8723, %v8839
      %v8874 = vsub.f32 %v8724, %v8839
      %v8875 = vsub.f32 %v8725, %v8839
      %v8876 = vmul.f32 %v8840, %v4356
      %v8877 = vmul.f32 %v8841, %v4357
      %v8878 = vmul.f32 %v8842, %v4358
      %v8879 = vmul.f32 %v8843, %v4359
      %v8880 = vmul.f32 %v8844, %v4360
      %v8881 = vmul.f32 %v8845, %v4361
      %v8882 = vmul.f32 %v8846, %v4362
      %v8883 = vmul.f32 %v8847, %v4363
      %v8884 = vmul.f32 %v8848, %v4364
      %v8885 = vmul.f32 %v8849, %v4365
      %v8886 = vmul.f32 %v8850, %v4366
      %v8887 = vmul.f32 %v8851, %v4367
      %v8888 = vmul.f32 %v8852, %v4368
      %v8889 = vmul.f32 %v8853, %v4369
      %v8890 = vmul.f32 %v8854, %v4370
      %v8891 = vmul.f32 %v8855, %v4371
      %v8892 = vmul.f32 %v8856, %v4372
      %v8893 = vmul.f32 %v8857, %v4373
      %v8894 = vmul.f32 %v8858, %v4374
      %v8895 = vmul.f32 %v8859, %v4375
      %v8896 = vmul.f32 %v8860, %v4376
      %v8897 = vmul.f32 %v8861, %v4377
      %v8898 = vmul.f32 %v8862, %v4378
      %v8899 = vmul.f32 %v8863, %v4379
      %v8900 = vmul.f32 %v8864, %v4380
      %v8901 = vmul.f32 %v8865, %v4381
      %v8902 = vmul.f32 %v8866, %v4382
      %v8903 = vmul.f32 %v8867, %v4383
      %v8904 = vmul.f32 %v8868, %v4384
      %v8905 = vmul.f32 %v8869, %v4385
      %v8906 = vmul.f32 %v8870, %v4386
      %v8907 = vmul.f32 %v8871, %v4387
      %v8908 = vmul.f32 %v8872, %v4388
      %v8909 = vmul.f32 %v8873, %v4389
      %v8910 = vmul.f32 %v8874, %v4390
      %v8911 = vmul.f32 %v8875, %v4391
      %v8912 = vmul.f32 %v8876, %v8876
      %v8913 = vmul.f32 %v8877, %v8877
      %v8914 = vmul.f32 %v8878, %v8878
      %v8915 = vmul.f32 %v8879, %v8879
      %v8916 = vmul.f32 %v8880, %v8880
      %v8917 = vmul.f32 %v8881, %v8881
      %v8918 = vmul.f32 %v8882, %v8882
      %v8919 = vmul.f32 %v8883, %v8883
      %v8920 = vmul.f32 %v8884, %v8884
      %v8921 = vmul.f32 %v8885, %v8885
      %v8922 = vmul.f32 %v8886, %v8886
      %v8923 = vmul.f32 %v8887, %v8887
      %v8924 = vmul.f32 %v8888, %v8888
      %v8925 = vmul.f32 %v8889, %v8889
      %v8926 = vmul.f32 %v8890, %v8890
      %v8927 = vmul.f32 %v8891, %v8891
      %v8928 = vmul.f32 %v8892, %v8892
      %v8929 = vmul.f32 %v8893, %v8893
      %v8930 = vmul.f32 %v8894, %v8894
      %v8931 = vmul.f32 %v8895, %v8895
      %v8932 = vmul.f32 %v8896, %v8896
      %v8933 = vmul.f32 %v8897, %v8897
      %v8934 = vmul.f32 %v8898, %v8898
      %v8935 = vmul.f32 %v8899, %v8899
      %v8936 = vmul.f32 %v8900, %v8900
      %v8937 = vmul.f32 %v8901, %v8901
      %v8938 = vmul.f32 %v8902, %v8902
      %v8939 = vmul.f32 %v8903, %v8903
      %v8940 = vmul.f32 %v8904, %v8904
      %v8941 = vmul.f32 %v8905, %v8905
      %v8942 = vmul.f32 %v8906, %v8906
      %v8943 = vmul.f32 %v8907, %v8907
      %v8944 = vmul.f32 %v8908, %v8908
      %v8945 = vmul.f32 %v8909, %v8909
      %v8946 = vmul.f32 %v8910, %v8910
      %v8947 = vmul.f32 %v8911, %v8911
      %v8948 = vsel %vm346, %v8912, 0.0
      %v8949 = vsel %vm346, %v8913, 0.0
      %v8950 = vadd.f32 %v8948, %v8949
      %v8951 = vsel %vm346, %v8914, 0.0
      %v8952 = vadd.f32 %v8950, %v8951
      %v8953 = vsel %vm346, %v8915, 0.0
      %v8954 = vadd.f32 %v8952, %v8953
      %v8955 = vsel %vm346, %v8916, 0.0
      %v8956 = vadd.f32 %v8954, %v8955
      %v8957 = vsel %vm346, %v8917, 0.0
      %v8958 = vadd.f32 %v8956, %v8957
      %v8959 = vsel %vm346, %v8918, 0.0
      %v8960 = vadd.f32 %v8958, %v8959
      %v8961 = vsel %vm346, %v8919, 0.0
      %v8962 = vadd.f32 %v8960, %v8961
      %v8963 = vsel %vm346, %v8920, 0.0
      %v8964 = vadd.f32 %v8962, %v8963
      %v8965 = vsel %vm346, %v8921, 0.0
      %v8966 = vadd.f32 %v8964, %v8965
      %v8967 = vsel %vm346, %v8922, 0.0
      %v8968 = vadd.f32 %v8966, %v8967
      %v8969 = vsel %vm346, %v8923, 0.0
      %v8970 = vadd.f32 %v8968, %v8969
      %v8971 = vsel %vm346, %v8924, 0.0
      %v8972 = vadd.f32 %v8970, %v8971
      %v8973 = vsel %vm346, %v8925, 0.0
      %v8974 = vadd.f32 %v8972, %v8973
      %v8975 = vsel %vm346, %v8926, 0.0
      %v8976 = vadd.f32 %v8974, %v8975
      %v8977 = vsel %vm346, %v8927, 0.0
      %v8978 = vadd.f32 %v8976, %v8977
      %v8979 = vsel %vm346, %v8928, 0.0
      %v8980 = vadd.f32 %v8978, %v8979
      %v8981 = vsel %vm346, %v8929, 0.0
      %v8982 = vadd.f32 %v8980, %v8981
      %v8983 = vsel %vm346, %v8930, 0.0
      %v8984 = vadd.f32 %v8982, %v8983
      %v8985 = vsel %vm346, %v8931, 0.0
      %v8986 = vadd.f32 %v8984, %v8985
      %v8987 = vsel %vm346, %v8932, 0.0
      %v8988 = vadd.f32 %v8986, %v8987
      %v8989 = vsel %vm346, %v8933, 0.0
      %v8990 = vadd.f32 %v8988, %v8989
      %v8991 = vsel %vm346, %v8934, 0.0
      %v8992 = vadd.f32 %v8990, %v8991
      %v8993 = vsel %vm346, %v8935, 0.0
      %v8994 = vadd.f32 %v8992, %v8993
      %v8995 = vsel %vm346, %v8936, 0.0
      %v8996 = vadd.f32 %v8994, %v8995
      %v8997 = vsel %vm346, %v8937, 0.0
      %v8998 = vadd.f32 %v8996, %v8997
      %v8999 = vsel %vm346, %v8938, 0.0
      %v9000 = vadd.f32 %v8998, %v8999
      %v9001 = vsel %vm346, %v8939, 0.0
      %v9002 = vadd.f32 %v9000, %v9001
      %v9003 = vsel %vm346, %v8940, 0.0
      %v9004 = vadd.f32 %v9002, %v9003
      %v9005 = vsel %vm346, %v8941, 0.0
      %v9006 = vadd.f32 %v9004, %v9005
      %v9007 = vsel %vm346, %v8942, 0.0
      %v9008 = vadd.f32 %v9006, %v9007
      %v9009 = vsel %vm346, %v8943, 0.0
      %v9010 = vadd.f32 %v9008, %v9009
      %v9011 = vsel %vm346, %v8944, 0.0
      %v9012 = vadd.f32 %v9010, %v9011
      %v9013 = vsel %vm346, %v8945, 0.0
      %v9014 = vadd.f32 %v9012, %v9013
      %v9015 = vsel %vm346, %v8946, 0.0
      %v9016 = vadd.f32 %v9014, %v9015
      %v9017 = vsel %vm346, %v8947, 0.0
      %v9018 = vadd.f32 %v9016, %v9017
      %v9019 = vrot.slane %v9018, 4
      %v9020 = vadd.f32 %v9018, %v9019
      %v9021 = vrot.slane %v9020, 2
      %v9022 = vadd.f32 %v9020, %v9021
      %v9023 = vrot.slane %v9022, 1
      %v9024 = vadd.f32 %v9022, %v9023
      %v9025 = vmul.f32 %v9024, 0.00390625
      %v9026 = vadd.f32 %v9025, 1e-05
      %v9027 = vrsqrt.pop %v9026
      %v9028 = vmul.f32 %v9027, %v9026
      %v9029 = vmul.f32 %v9028, %v9027
      %v9030 = vmul.f32 0.5, %v9029
      %v9031 = vsub.f32 1.5, %v9030
      %v9032 = vmul.f32 %v9027, %v9031
      %vm9033 = vweird.f32 %v9026
      %vm9034 = vweird.f32 %v9027
      %vm9035 = vmor %vm9033, %vm9034
      %v9036 = vsel %vm9035, %v9027, %v9032
      %v9037 = vmul.f32 %v8840, %v9036
      %v9038 = vmul.f32 %v8841, %v9036
      %v9039 = vmul.f32 %v8842, %v9036
      %v9040 = vmul.f32 %v8843, %v9036
      %v9041 = vmul.f32 %v8844, %v9036
      %v9042 = vmul.f32 %v8845, %v9036
      %v9043 = vmul.f32 %v8846, %v9036
      %v9044 = vmul.f32 %v8847, %v9036
      %v9045 = vmul.f32 %v8848, %v9036
      %v9046 = vmul.f32 %v8849, %v9036
      %v9047 = vmul.f32 %v8850, %v9036
      %v9048 = vmul.f32 %v8851, %v9036
      %v9049 = vmul.f32 %v8852, %v9036
      %v9050 = vmul.f32 %v8853, %v9036
      %v9051 = vmul.f32 %v8854, %v9036
      %v9052 = vmul.f32 %v8855, %v9036
      %v9053 = vmul.f32 %v8856, %v9036
      %v9054 = vmul.f32 %v8857, %v9036
      %v9055 = vmul.f32 %v8858, %v9036
      %v9056 = vmul.f32 %v8859, %v9036
      %v9057 = vmul.f32 %v8860, %v9036
      %v9058 = vmul.f32 %v8861, %v9036
      %v9059 = vmul.f32 %v8862, %v9036
      %v9060 = vmul.f32 %v8863, %v9036
      %v9061 = vmul.f32 %v8864, %v9036
      %v9062 = vmul.f32 %v8865, %v9036
      %v9063 = vmul.f32 %v8866, %v9036
      %v9064 = vmul.f32 %v8867, %v9036
      %v9065 = vmul.f32 %v8868, %v9036
      %v9066 = vmul.f32 %v8869, %v9036
      %v9067 = vmul.f32 %v8870, %v9036
      %v9068 = vmul.f32 %v8871, %v9036
      %v9069 = vmul.f32 %v8872, %v9036
      %v9070 = vmul.f32 %v8873, %v9036
      %v9071 = vmul.f32 %v8874, %v9036
      %v9072 = vmul.f32 %v8875, %v9036
      %v9073 = vld [vmem:[%s261] sm:$0xff]
      %v9074 = vld [vmem:[%s261 + $0x8] sm:$0xff]
      %v9075 = vadd.f32 %v9073, %v9037
      %v9076 = vadd.f32 %v9074, %v9038
      %9077 = vst.msk [vmem:[%s271] sm:$0xff] %vm346, %v9075
      %9078 = vst.msk [vmem:[%s271 + $0x8] sm:$0xff] %vm346, %v9076
      %s9079 = scalar_lea.vmem %s261, 16
      %v9080 = vld [vmem:[%s9079] sm:$0xff]
      %v9081 = vld [vmem:[%s9079 + $0x8] sm:$0xff]
      %v9085 = vrot.slane %v9039, 2
      %v9086 = vrot.slane %v9040, 2
      %v9087 = vsel %vm5141, %v9085, %v9086
      %v9088 = vrot.slane %v9041, 2
      %v9089 = vsel %vm5141, %v9086, %v9088
      %v9092 = vadd.f32 %v9080, %v9087
      %v9093 = vadd.f32 %v9081, %v9089
      %s9094 = scalar_lea.vmem %s271, 16
      %9095 = vst.msk [vmem:[%s9094] sm:$0xff] %vm346, %v9092
      %9096 = vst.msk [vmem:[%s9094 + $0x8] sm:$0xff] %vm346, %v9093
      %s9097 = scalar_lea.vmem %s261, 32
      %v9098 = vld [vmem:[%s9097] sm:$0xff]
      %v9099 = vld [vmem:[%s9097 + $0x8] sm:$0xff]
      %v9102 = vrot.slane %v9041, 4
      %v9103 = vrot.slane %v9042, 4
      %v9104 = vsel %vm455, %v9102, %v9103
      %v9105 = vrot.slane %v9043, 4
      %v9106 = vsel %vm455, %v9103, %v9105
      %v9109 = vadd.f32 %v9098, %v9104
      %v9110 = vadd.f32 %v9099, %v9106
      %s9111 = scalar_lea.vmem %s271, 32
      %9112 = vst.msk [vmem:[%s9111] sm:$0xff] %vm346, %v9109
      %9113 = vst.msk [vmem:[%s9111 + $0x8] sm:$0xff] %vm346, %v9110
      %s9114 = scalar_lea.vmem %s261, 48
      %v9115 = vld [vmem:[%s9114] sm:$0xff]
      %v9116 = vld [vmem:[%s9114 + $0x8] sm:$0xff]
      %v9119 = vrot.slane %v9043, 6
      %v9120 = vrot.slane %v9044, 6
      %v9121 = vsel %vm5303, %v9119, %v9120
      %v9122 = vrot.slane %v9045, 6
      %v9123 = vsel %vm5303, %v9120, %v9122
      %v9126 = vadd.f32 %v9115, %v9121
      %v9127 = vadd.f32 %v9116, %v9123
      %s9128 = scalar_lea.vmem %s271, 48
      %9129 = vst.msk [vmem:[%s9128] sm:$0xff] %vm346, %v9126
      %9130 = vst.msk [vmem:[%s9128 + $0x8] sm:$0xff] %vm346, %v9127
      %s9131 = scalar_lea.vmem %s261, 64
      %v9132 = vld [vmem:[%s9131] sm:$0xff]
      %v9133 = vld [vmem:[%s9131 + $0x8] sm:$0xff]
      %v9134 = vadd.f32 %v9132, %v9046
      %v9135 = vadd.f32 %v9133, %v9047
      %s9136 = scalar_lea.vmem %s271, 64
      %9137 = vst.msk [vmem:[%s9136] sm:$0xff] %vm346, %v9134
      %9138 = vst.msk [vmem:[%s9136 + $0x8] sm:$0xff] %vm346, %v9135
      %s9139 = scalar_lea.vmem %s261, 80
      %v9140 = vld [vmem:[%s9139] sm:$0xff]
      %v9141 = vld [vmem:[%s9139 + $0x8] sm:$0xff]
      %v9145 = vrot.slane %v9048, 2
      %v9146 = vrot.slane %v9049, 2
      %v9147 = vsel %vm5141, %v9145, %v9146
      %v9148 = vrot.slane %v9050, 2
      %v9149 = vsel %vm5141, %v9146, %v9148
      %v9152 = vadd.f32 %v9140, %v9147
      %v9153 = vadd.f32 %v9141, %v9149
      %s9154 = scalar_lea.vmem %s271, 80
      %9155 = vst.msk [vmem:[%s9154] sm:$0xff] %vm346, %v9152
      %9156 = vst.msk [vmem:[%s9154 + $0x8] sm:$0xff] %vm346, %v9153
      %s9157 = scalar_lea.vmem %s261, 96
      %v9158 = vld [vmem:[%s9157] sm:$0xff]
      %v9159 = vld [vmem:[%s9157 + $0x8] sm:$0xff]
      %v9162 = vrot.slane %v9050, 4
      %v9163 = vrot.slane %v9051, 4
      %v9164 = vsel %vm455, %v9162, %v9163
      %v9165 = vrot.slane %v9052, 4
      %v9166 = vsel %vm455, %v9163, %v9165
      %v9169 = vadd.f32 %v9158, %v9164
      %v9170 = vadd.f32 %v9159, %v9166
      %s9171 = scalar_lea.vmem %s271, 96
      %9172 = vst.msk [vmem:[%s9171] sm:$0xff] %vm346, %v9169
      %9173 = vst.msk [vmem:[%s9171 + $0x8] sm:$0xff] %vm346, %v9170
      %s9174 = scalar_lea.vmem %s261, 112
      %v9175 = vld [vmem:[%s9174] sm:$0xff]
      %v9176 = vld [vmem:[%s9174 + $0x8] sm:$0xff]
      %v9179 = vrot.slane %v9052, 6
      %v9180 = vrot.slane %v9053, 6
      %v9181 = vsel %vm5303, %v9179, %v9180
      %v9182 = vrot.slane %v9054, 6
      %v9183 = vsel %vm5303, %v9180, %v9182
      %v9186 = vadd.f32 %v9175, %v9181
      %v9187 = vadd.f32 %v9176, %v9183
      %s9188 = scalar_lea.vmem %s271, 112
      %9189 = vst.msk [vmem:[%s9188] sm:$0xff] %vm346, %v9186
      %9190 = vst.msk [vmem:[%s9188 + $0x8] sm:$0xff] %vm346, %v9187
      %s9191 = scalar_lea.vmem %s261, 128
      %v9192 = vld [vmem:[%s9191] sm:$0xff]
      %v9193 = vld [vmem:[%s9191 + $0x8] sm:$0xff]
      %v9194 = vadd.f32 %v9192, %v9055
      %v9195 = vadd.f32 %v9193, %v9056
      %s9196 = scalar_lea.vmem %s271, 128
      %9197 = vst.msk [vmem:[%s9196] sm:$0xff] %vm346, %v9194
      %9198 = vst.msk [vmem:[%s9196 + $0x8] sm:$0xff] %vm346, %v9195
      %s9199 = scalar_lea.vmem %s261, 144
      %v9200 = vld [vmem:[%s9199] sm:$0xff]
      %v9201 = vld [vmem:[%s9199 + $0x8] sm:$0xff]
      %v9205 = vrot.slane %v9057, 2
      %v9206 = vrot.slane %v9058, 2
      %v9207 = vsel %vm5141, %v9205, %v9206
      %v9208 = vrot.slane %v9059, 2
      %v9209 = vsel %vm5141, %v9206, %v9208
      %v9212 = vadd.f32 %v9200, %v9207
      %v9213 = vadd.f32 %v9201, %v9209
      %s9214 = scalar_lea.vmem %s271, 144
      %9215 = vst.msk [vmem:[%s9214] sm:$0xff] %vm346, %v9212
      %9216 = vst.msk [vmem:[%s9214 + $0x8] sm:$0xff] %vm346, %v9213
      %s9217 = scalar_lea.vmem %s261, 160
      %v9218 = vld [vmem:[%s9217] sm:$0xff]
      %v9219 = vld [vmem:[%s9217 + $0x8] sm:$0xff]
      %v9222 = vrot.slane %v9059, 4
      %v9223 = vrot.slane %v9060, 4
      %v9224 = vsel %vm455, %v9222, %v9223
      %v9225 = vrot.slane %v9061, 4
      %v9226 = vsel %vm455, %v9223, %v9225
      %v9229 = vadd.f32 %v9218, %v9224
      %v9230 = vadd.f32 %v9219, %v9226
      %s9231 = scalar_lea.vmem %s271, 160
      %9232 = vst.msk [vmem:[%s9231] sm:$0xff] %vm346, %v9229
      %9233 = vst.msk [vmem:[%s9231 + $0x8] sm:$0xff] %vm346, %v9230
      %s9234 = scalar_lea.vmem %s261, 176
      %v9235 = vld [vmem:[%s9234] sm:$0xff]
      %v9236 = vld [vmem:[%s9234 + $0x8] sm:$0xff]
      %v9239 = vrot.slane %v9061, 6
      %v9240 = vrot.slane %v9062, 6
      %v9241 = vsel %vm5303, %v9239, %v9240
      %v9242 = vrot.slane %v9063, 6
      %v9243 = vsel %vm5303, %v9240, %v9242
      %v9246 = vadd.f32 %v9235, %v9241
      %v9247 = vadd.f32 %v9236, %v9243
      %s9248 = scalar_lea.vmem %s271, 176
      %9249 = vst.msk [vmem:[%s9248] sm:$0xff] %vm346, %v9246
      %9250 = vst.msk [vmem:[%s9248 + $0x8] sm:$0xff] %vm346, %v9247
      %s9251 = scalar_lea.vmem %s261, 192
      %v9252 = vld [vmem:[%s9251] sm:$0xff]
      %v9253 = vld [vmem:[%s9251 + $0x8] sm:$0xff]
      %v9254 = vadd.f32 %v9252, %v9064
      %v9255 = vadd.f32 %v9253, %v9065
      %s9256 = scalar_lea.vmem %s271, 192
      %9257 = vst.msk [vmem:[%s9256] sm:$0xff] %vm346, %v9254
      %9258 = vst.msk [vmem:[%s9256 + $0x8] sm:$0xff] %vm346, %v9255
      %s9259 = scalar_lea.vmem %s261, 208
      %v9260 = vld [vmem:[%s9259] sm:$0xff]
      %v9261 = vld [vmem:[%s9259 + $0x8] sm:$0xff]
      %v9265 = vrot.slane %v9066, 2
      %v9266 = vrot.slane %v9067, 2
      %v9267 = vsel %vm5141, %v9265, %v9266
      %v9268 = vrot.slane %v9068, 2
      %v9269 = vsel %vm5141, %v9266, %v9268
      %v9272 = vadd.f32 %v9260, %v9267
      %v9273 = vadd.f32 %v9261, %v9269
      %s9274 = scalar_lea.vmem %s271, 208
      %9275 = vst.msk [vmem:[%s9274] sm:$0xff] %vm346, %v9272
      %9276 = vst.msk [vmem:[%s9274 + $0x8] sm:$0xff] %vm346, %v9273
      %s9277 = scalar_lea.vmem %s261, 224
      %v9278 = vld [vmem:[%s9277] sm:$0xff]
      %v9279 = vld [vmem:[%s9277 + $0x8] sm:$0xff]
      %v9282 = vrot.slane %v9068, 4
      %v9283 = vrot.slane %v9069, 4
      %v9284 = vsel %vm455, %v9282, %v9283
      %v9285 = vrot.slane %v9070, 4
      %v9286 = vsel %vm455, %v9283, %v9285
      %v9289 = vadd.f32 %v9278, %v9284
      %v9290 = vadd.f32 %v9279, %v9286
      %s9291 = scalar_lea.vmem %s271, 224
      %9292 = vst.msk [vmem:[%s9291] sm:$0xff] %vm346, %v9289
      %9293 = vst.msk [vmem:[%s9291 + $0x8] sm:$0xff] %vm346, %v9290
      %s9294 = scalar_lea.vmem %s261, 240
      %v9295 = vld [vmem:[%s9294] sm:$0xff]
      %v9296 = vld [vmem:[%s9294 + $0x8] sm:$0xff]
      %v9299 = vrot.slane %v9070, 6
      %v9300 = vrot.slane %v9071, 6
      %v9301 = vsel %vm5303, %v9299, %v9300
      %v9302 = vrot.slane %v9072, 6
      %v9303 = vsel %vm5303, %v9300, %v9302
      %v9306 = vadd.f32 %v9295, %v9301
      %v9307 = vadd.f32 %v9296, %v9303
      %s9308 = scalar_lea.vmem %s271, 240
      %9309 = vst.msk [vmem:[%s9308] sm:$0xff] %vm346, %v9306
      %9310 = vst.msk [vmem:[%s9308 + $0x8] sm:$0xff] %vm346, %v9307
      %p9311 = scmp.lt.s32.totalorder %s17, 1
      %s9312 = scalar_select %p9311, %s17, 1
      %s9313 = smul.addr %s9312, 32
      %s9314 = smul.addr %s9313, 8
      %s9315 = scalar_lea.vmem %s6, %s9314
      // Predicated region
      $region45: #{_resnet_block_impl.1} parent=43 // pred_check
        %p9316 = pneg %p171
      $region46: #{_resnet_block_impl.1} parent=43 // pred_check_branch
        %9318 = sbr.rel (%p9316) target = $region48
      $region47: #{_resnet_block_impl.1} parent=43 // pred_region
        _
      $region48: #{_resnet_block_impl.1} parent=43 // pred_fallthru
        _
    $region44: #{_resnet_block_impl.1} parent=5 // pred_fallthru
      _
    %p9319 = scmp.le.s32.totalorder 2, %s12
    // Predicated region
    $region49: #{_resnet_block_impl.1} parent=5 // pred_check
      %p9320 = pneg %p9319
    $region50: #{_resnet_block_impl.1} parent=5 // pred_check_branch
      %9322 = sbr.rel (%p9320) target = $region52
    $region51: #{_resnet_block_impl.1} parent=5 // pred_region
      %s9323 = ssub.s32 %s12, 2
      // Predicated region
      $region53: #{_resnet_block_impl.1} parent=51 // pred_check
        %p9324 = pneg %p177
      $region54: #{_resnet_block_impl.1} parent=51 // pred_check_branch
        %9326 = sbr.rel (%p9324) target = $region56
      $region55: #{_resnet_block_impl.1} parent=51 // pred_region
        %p9327 = scmp.lt.s32.totalorder %s18, 1
        %s9328 = scalar_select %p9327, %s18, 1
        %s9329 = smul.addr %s9328, 32
        %s9330 = smul.addr %s9329, 8
        %s9331 = scalar_lea.vmem %s6, %s9330
      $region56: #{_resnet_block_impl.1} parent=51 // pred_fallthru
        _
    $region52: #{_resnet_block_impl.1} parent=5 // pred_fallthru
      _
  $region6: #{_resnet_block_impl.1} parent=0 // loop_footer
    %s16 = sadd.s32 1, %s12
  $region7: #{_resnet_block_impl.1} parent=0 // loop_footer_branch
    %11 = sbr.rel target = $region3
  $region8: #{_resnet_block_impl.1} parent=0 // loop_exit
    _

</llo_original>
